<compile_context>
chip_gen: v6e
topology: v6e:2x2x1
jax: 0.10.0
libtpu: 0.0.40
codegen_flags: <defaults>
</compile_context>

<pallas_src>
import functools
import numpy as np
import jax
import jax.numpy as jnp
from jax import lax
from jax.experimental import pallas as pl
from jax.experimental.pallas import tpu as pltpu

# ---------------- static config (shapes consistent with the module) ----------------
EMBED_DIM   = 32
INPUT_RES   = (8, 8)           # (H, W)
DEPTH       = 2                # blocks: shift 0, then shift window_size // 2
NUM_HEADS   = 2
WINDOW_SIZE = 4
MLP_RATIO   = 4.0
HEAD_DIM    = 16               # hard-coded in WindowAttention
QK_SCALE    = HEAD_DIM ** (-0.5)
LN_EPS      = 1e-5
N_TOK       = WINDOW_SIZE * WINDOW_SIZE            # tokens per window (16)
D_ATTN      = NUM_HEADS * HEAD_DIM                 # attention width (32)
SHIFTS      = tuple(0 if i % 2 == 0 else WINDOW_SIZE // 2 for i in range(DEPTH))


# ---------------- pure-numpy constants (built at trace/setup time, NOT traced) ----------------
def _relative_position_index(ws):
    coords = np.stack(np.meshgrid(np.arange(ws), np.arange(ws), indexing="ij"))
    cf = coords.reshape(2, -1)
    rel = (cf[:, :, None] - cf[:, None, :]).transpose(1, 2, 0).copy()
    rel[:, :, 0] += ws - 1
    rel[:, :, 1] += ws - 1
    rel[:, :, 0] *= 2 * ws - 1
    return rel.sum(-1)                                           # (N, N) int


REL_INDEX = _relative_position_index(WINDOW_SIZE)


def _calculate_mask_np(H, W, ws, ss):
    """Shifted-window attention mask, (nW, N, N) with 0 / -100 entries (pure numpy)."""
    img = np.zeros((H, W), np.float32)
    h_slices = [slice(0, -ws), slice(-ws, -ss), slice(-ss, None)]
    w_slices = [slice(0, -ws), slice(-ws, -ss), slice(-ss, None)]
    cnt = 0
    for hs in h_slices:
        for wsl in w_slices:
            img[hs, wsl] = cnt
            cnt += 1
    m = img.reshape(H // ws, ws, W // ws, ws).transpose(0, 2, 1, 3).reshape(-1, ws * ws)
    am = m[:, None, :] - m[:, :, None]
    return np.where(am == 0, 0.0, -100.0).astype(np.float32)


def _window_perm_np(B, H, W, ws, shift):
    """Permutation matrix P so that  P @ x_flat  ==  window_partition(roll(x, -shift))."""
    ids = np.arange(B * H * W).reshape(B, H, W)
    if shift > 0:
        ids = np.roll(ids, shift=(-shift, -shift), axis=(1, 2))
    ids = ids.reshape(B, H // ws, ws, W // ws, ws).transpose(0, 1, 3, 2, 4).reshape(-1)
    P = np.zeros((B * H * W, B * H * W), np.float32)
    P[np.arange(B * H * W), ids] = 1.0
    return P


@functools.lru_cache(maxsize=None)
def _perm_matrices(B, H, W):
    Ps = [_window_perm_np(B, H, W, WINDOW_SIZE, s) for s in SHIFTS]
    return (np.stack(Ps).astype(np.float32),
            np.stack([P.T for P in Ps]).astype(np.float32))


@functools.lru_cache(maxsize=None)
def _shift_masks(H, W):
    return tuple(None if s == 0 else _calculate_mask_np(H, W, WINDOW_SIZE, s)
                 for s in SHIFTS)


# ---------------- in-kernel helpers ----------------
def _erf(x):
    # Abramowitz & Stegun 7.1.26 polynomial (|err| < 1.5e-7): exact-GELU grade accuracy
    # in f32 without relying on a lax.erf lowering inside Mosaic.
    a1, a2, a3 = 0.254829592, -0.284496736, 1.421413741
    a4, a5, p = -1.453152027, 1.061405429, 0.3275911
    ax = jnp.abs(x)
    t = 1.0 / (1.0 + p * ax)
    poly = ((((a5 * t + a4) * t + a3) * t + a2) * t + a1) * t
    y = 1.0 - poly * jnp.exp(-ax * ax)
    return jnp.where(x >= 0, y, -y)


def _layernorm(x, g, b):
    mu = jnp.mean(x, axis=-1, keepdims=True)
    var = jnp.mean((x - mu) ** 2, axis=-1, keepdims=True)
    return (x - mu) * lax.rsqrt(var + LN_EPS) * g + b


# ---------------- fused BasicLayer kernel (single grid step, everything in VMEM) ----------------
def _layer_kernel(x_ref, perm_ref, permT_ref, bias_ref,
                  n1g_ref, n1b_ref, wqkv_ref, bqkv_ref, wp_ref, bp_ref,
                  n2g_ref, n2b_ref, w1_ref, b1_ref, w2_ref, b2_ref,
                  o_ref):
    f32 = jnp.float32
    R, C = x_ref.shape                       # R = B*H*W tokens, C = embed dim
    nwin = R // N_TOK                        # total windows (B * nW)
    x = x_ref[...].astype(f32)               # (R, C)

    for d in range(DEPTH):                   # static unroll over the blocks
        # ---------- norm1 ----------
        xn = _layernorm(x, n1g_ref[d], n1b_ref[d])
        # ---------- roll + window partition as one MXU permutation matmul ----------
        xw = jnp.dot(perm_ref[d], xn, preferred_element_type=f32)            # (R, C)
        # ---------- fused QKV ----------
        qkv = jnp.dot(xw, wqkv_ref[d], preferred_element_type=f32) + bqkv_ref[d]   # (R, 3D)
        qkv = qkv.reshape(nwin, N_TOK, 3 * D_ATTN)
        bias_d = bias_ref[d]                                                 # (heads, nwin, N, N)
        wp_d = wp_ref[d]                                                     # (D, C)
        # ---------- attention: all windows batched, static loop over heads ----------
        y = jnp.zeros((R, C), f32)
        for h in range(NUM_HEADS):
            lo = h * HEAD_DIM
            q = qkv[..., lo:lo + HEAD_DIM] * QK_SCALE
            k = qkv[..., D_ATTN + lo:D_ATTN + lo + HEAD_DIM]
            v = qkv[..., 2 * D_ATTN + lo:2 * D_ATTN + lo + HEAD_DIM]
            s = jnp.einsum('wqd,wkd->wqk', q, k, preferred_element_type=f32)  # (nwin, N, N)
            s = s + bias_d[h]                                                 # rel-pos bias (+mask)
            m = jnp.max(s, axis=-1, keepdims=True)
            e = jnp.exp(s - m)
            pr = e * pl.reciprocal(jnp.sum(e, axis=-1, keepdims=True), approx=True)
            oh = jnp.einsum('wqk,wkd->wqd', pr, v, preferred_element_type=f32)  # (nwin, N, hd)
            # per-head slice of proj weight -> accumulate (avoids lane concat of heads)
            y = y + jnp.dot(oh.reshape(R, HEAD_DIM), wp_d[lo:lo + HEAD_DIM, :],
                            preferred_element_type=f32)
        y = y + bp_ref[d]
        # ---------- window reverse + inverse roll + residual #1 ----------
        x = x + jnp.dot(permT_ref[d], y, preferred_element_type=f32)
        # ---------- norm2 + MLP (exact GELU) + residual #2 ----------
        xn2 = _layernorm(x, n2g_ref[d], n2b_ref[d])
        h1 = jnp.dot(xn2, w1_ref[d], preferred_element_type=f32) + b1_ref[d]
        h1 = 0.5 * h1 * (1.0 + _erf(h1 * 0.7071067811865476))
        x = x + jnp.dot(h1, w2_ref[d], preferred_element_type=f32) + b2_ref[d]

    o_ref[...] = x.astype(o_ref.dtype)


# ---------------- wrapper ----------------
def _build_bias(rel_tables, B, H, W):
    """(DEPTH, heads, B*nW, N, N) rel-pos bias (+ shift mask for shifted blocks)."""
    nW = (H // WINDOW_SIZE) * (W // WINDOW_SIZE)
    masks = _shift_masks(H, W)
    rel_idx = jnp.asarray(REL_INDEX.reshape(-1))
    out = []
    for d in range(DEPTH):
        rb = rel_tables[d][rel_idx].reshape(N_TOK, N_TOK, NUM_HEADS)
        rb = jnp.transpose(rb, (2, 0, 1))                         # (heads, N, N)
        b = rb[:, None, :, :]                                     # (heads, 1, N, N)
        if masks[d] is not None:
            b = b + jnp.asarray(masks[d])[None, :, :, :]          # (heads, nW, N, N)
        b = jnp.broadcast_to(b, (NUM_HEADS, nW, N_TOK, N_TOK))
        b = jnp.tile(b, (1, B, 1, 1))                             # (heads, B*nW, N, N); b-major windows
        out.append(b)
    return jnp.stack(out)


def basic_layer(x, x_size, params):
    B, L, C = x.shape
    H, W = x_size
    perms_np, permTs_np = _perm_matrices(B, H, W)                 # numpy constants
    bias = _build_bias(params["rel_table"], B, H, W)

    in_specs = [pl.BlockSpec(memory_space=pltpu.MemorySpace.VMEM) for _ in range(16)]
    out = pl.pallas_call(
        _layer_kernel,
        out_shape=jax.ShapeDtypeStruct((B * L, C), x.dtype),
        in_specs=in_specs,
        out_specs=pl.BlockSpec(memory_space=pltpu.MemorySpace.VMEM),
    )(x.reshape(B * L, C),
      jnp.asarray(perms_np), jnp.asarray(permTs_np), bias,
      params["n1g"], params["n1b"], params["wqkv"], params["bqkv"],
      params["wp"], params["bp"], params["n2g"], params["n2b"],
      params["w1"], params["b1"], params["w2"], params["b2"])
    # downsample=None -> Identity; Dropout/DropPath are identity at p=0.0
    return out.reshape(B, L, C)


# ---------------- deterministic parameter init (stacked over DEPTH) ----------------
def init_layer_params(key):
    C, D, Hd = EMBED_DIM, D_ATTN, int(EMBED_DIM * MLP_RATIO)
    std = 0.02

    def one_block(k):
        ks = jax.random.split(k, 5)
        w = lambda kk, s: jax.random.normal(kk, s, jnp.float32) * std
        return {
            "n1g": jnp.ones((1, C), jnp.float32), "n1b": jnp.zeros((1, C), jnp.float32),
            "wqkv": w(ks[0], (C, 3 * D)), "bqkv": jnp.zeros((1, 3 * D), jnp.float32),
            "wp": w(ks[1], (D, C)), "bp": jnp.zeros((1, C), jnp.float32),
            "rel_table": w(ks[2], ((2 * WINDOW_SIZE - 1) ** 2, NUM_HEADS)),
            "n2g": jnp.ones((1, C), jnp.float32), "n2b": jnp.zeros((1, C), jnp.float32),
            "w1": w(ks[3], (C, Hd)), "b1": jnp.zeros((1, Hd), jnp.float32),
            "w2": w(ks[4], (Hd, C)), "b2": jnp.zeros((1, C), jnp.float32),
        }

    blocks = [one_block(k) for k in jax.random.split(key, DEPTH)]
    return {name: jnp.stack([blk[name] for blk in blocks]) for name in blocks[0]}


if __name__ == "__main__":
    key = jax.random.PRNGKey(0)
    kx, kp = jax.random.split(key)

    B = 2
    H, W = INPUT_RES
    L = H * W
    x = jax.random.normal(kx, (B, L, EMBED_DIM), jnp.float32)
    params = init_layer_params(kp)

    fwd = jax.jit(lambda x, params: basic_layer(x, INPUT_RES, params))
    out = fwd(x, params)
    jax.block_until_ready(out)
    assert out.shape == (B, L, EMBED_DIM)
    assert bool(jnp.all(jnp.isfinite(out)))
    print("KERNEL_OK")
</pallas_src>

<mosaic_0001>
module attributes {stable_mosaic.version = 11 : i64} {
  func.func @_layer_kernel(%arg0: memref<128x32xf32, #tpu.memory_space<vmem>>, %arg1: memref<2x128x128xf32, #tpu.memory_space<vmem>>, %arg2: memref<2x128x128xf32, #tpu.memory_space<vmem>>, %arg3: memref<2x2x8x16x16xf32, #tpu.memory_space<vmem>>, %arg4: memref<2x1x32xf32, #tpu.memory_space<vmem>>, %arg5: memref<2x1x32xf32, #tpu.memory_space<vmem>>, %arg6: memref<2x32x96xf32, #tpu.memory_space<vmem>>, %arg7: memref<2x1x96xf32, #tpu.memory_space<vmem>>, %arg8: memref<2x32x32xf32, #tpu.memory_space<vmem>>, %arg9: memref<2x1x32xf32, #tpu.memory_space<vmem>>, %arg10: memref<2x1x32xf32, #tpu.memory_space<vmem>>, %arg11: memref<2x1x32xf32, #tpu.memory_space<vmem>>, %arg12: memref<2x32x128xf32, #tpu.memory_space<vmem>>, %arg13: memref<2x1x128xf32, #tpu.memory_space<vmem>>, %arg14: memref<2x128x32xf32, #tpu.memory_space<vmem>>, %arg15: memref<2x1x32xf32, #tpu.memory_space<vmem>>, %arg16: memref<128x32xf32, #tpu.memory_space<vmem>>) attributes {dimension_semantics = [], scalar_prefetch = 0 : i64, scratch_operands = 0 : i64, tpu.core_type = #tpu.core_type<tc>} {
    %c0 = arith.constant 0 : index
    %c0_0 = arith.constant 0 : index
    %0 = vector.load %arg0[%c0, %c0_0] : memref<128x32xf32, #tpu.memory_space<vmem>>, vector<128x32xf32>
    %c0_1 = arith.constant 0 : index
    %c0_2 = arith.constant 0 : index
    %c0_3 = arith.constant 0 : index
    %1 = vector.load %arg4[%c0_1, %c0_2, %c0_3] : memref<2x1x32xf32, #tpu.memory_space<vmem>>, vector<1x1x32xf32>
    %2 = vector.shape_cast %1 : vector<1x1x32xf32> to vector<1x32xf32>
    %c0_4 = arith.constant 0 : index
    %c0_5 = arith.constant 0 : index
    %c0_6 = arith.constant 0 : index
    %3 = vector.load %arg5[%c0_4, %c0_5, %c0_6] : memref<2x1x32xf32, #tpu.memory_space<vmem>>, vector<1x1x32xf32>
    %4 = vector.shape_cast %3 : vector<1x1x32xf32> to vector<1x32xf32>
    %cst = arith.constant dense<0.000000e+00> : vector<128xf32>
    %5 = vector.multi_reduction <add>, %0, %cst [1] : vector<128x32xf32> to vector<128xf32>
    %6 = vector.shape_cast %5 : vector<128xf32> to vector<128x1xf32>
    %cst_7 = arith.constant 3.200000e+01 : f32
    %7 = vector.broadcast %cst_7 : f32 to vector<128x1xf32>
    %8 = arith.divf %6, %7 : vector<128x1xf32>
    %9 = vector.broadcast %8 : vector<128x1xf32> to vector<128x32xf32>
    %10 = arith.subf %0, %9 : vector<128x32xf32>
    %11 = arith.mulf %10, %10 : vector<128x32xf32>
    %cst_8 = arith.constant dense<0.000000e+00> : vector<128xf32>
    %12 = vector.multi_reduction <add>, %11, %cst_8 [1] : vector<128x32xf32> to vector<128xf32>
    %13 = vector.shape_cast %12 : vector<128xf32> to vector<128x1xf32>
    %cst_9 = arith.constant 3.200000e+01 : f32
    %14 = vector.broadcast %cst_9 : f32 to vector<128x1xf32>
    %15 = arith.divf %13, %14 : vector<128x1xf32>
    %16 = vector.broadcast %8 : vector<128x1xf32> to vector<128x32xf32>
    %17 = arith.subf %0, %16 : vector<128x32xf32>
    %cst_10 = arith.constant 9.99999974E-6 : f32
    %18 = vector.broadcast %cst_10 : f32 to vector<128x1xf32>
    %19 = arith.addf %15, %18 : vector<128x1xf32>
    %20 = math.rsqrt %19 : vector<128x1xf32>
    %21 = vector.broadcast %20 : vector<128x1xf32> to vector<128x32xf32>
    %22 = arith.mulf %17, %21 : vector<128x32xf32>
    %23 = vector.broadcast %2 : vector<1x32xf32> to vector<128x32xf32>
    %24 = arith.mulf %22, %23 : vector<128x32xf32>
    %25 = vector.broadcast %4 : vector<1x32xf32> to vector<128x32xf32>
    %26 = arith.addf %24, %25 : vector<128x32xf32>
    %c0_11 = arith.constant 0 : index
    %c0_12 = arith.constant 0 : index
    %c0_13 = arith.constant 0 : index
    %27 = vector.load %arg1[%c0_11, %c0_12, %c0_13] : memref<2x128x128xf32, #tpu.memory_space<vmem>>, vector<1x128x128xf32>
    %28 = vector.shape_cast %27 : vector<1x128x128xf32> to vector<128x128xf32>
    %cst_14 = arith.constant dense<0.000000e+00> : vector<128x32xf32>
    %29 = tpu.matmul %28, %26, %cst_14 {dimension_numbers = #tpu.dot_dimension_numbers<[1], [0], [0], [1], [0, 0, 1, 1], [], []>} : vector<128x128xf32>, vector<128x32xf32>, vector<128x32xf32> -> vector<128x32xf32>
    %c0_15 = arith.constant 0 : index
    %c0_16 = arith.constant 0 : index
    %c0_17 = arith.constant 0 : index
    %30 = vector.load %arg6[%c0_15, %c0_16, %c0_17] : memref<2x32x96xf32, #tpu.memory_space<vmem>>, vector<1x32x96xf32>
    %31 = vector.shape_cast %30 : vector<1x32x96xf32> to vector<32x96xf32>
    %cst_18 = arith.constant dense<0.000000e+00> : vector<128x96xf32>
    %32 = tpu.matmul %29, %31, %cst_18 {dimension_numbers = #tpu.dot_dimension_numbers<[1], [0], [0], [1], [0, 0, 1, 1], [], []>} : vector<128x32xf32>, vector<32x96xf32>, vector<128x96xf32> -> vector<128x96xf32>
    %c0_19 = arith.constant 0 : index
    %c0_20 = arith.constant 0 : index
    %c0_21 = arith.constant 0 : index
    %33 = vector.load %arg7[%c0_19, %c0_20, %c0_21] : memref<2x1x96xf32, #tpu.memory_space<vmem>>, vector<1x1x96xf32>
    %34 = vector.shape_cast %33 : vector<1x1x96xf32> to vector<1x96xf32>
    %35 = vector.broadcast %34 : vector<1x96xf32> to vector<128x96xf32>
    %36 = arith.addf %32, %35 : vector<128x96xf32>
    %37 = vector.shape_cast %36 : vector<128x96xf32> to vector<8x16x96xf32>
    %c0_22 = arith.constant 0 : index
    %c0_23 = arith.constant 0 : index
    %c0_24 = arith.constant 0 : index
    %c0_25 = arith.constant 0 : index
    %c0_26 = arith.constant 0 : index
    %38 = vector.load %arg3[%c0_22, %c0_23, %c0_24, %c0_25, %c0_26] : memref<2x2x8x16x16xf32, #tpu.memory_space<vmem>>, vector<1x2x8x16x16xf32>
    %39 = vector.shape_cast %38 : vector<1x2x8x16x16xf32> to vector<2x8x16x16xf32>
    %c0_27 = arith.constant 0 : index
    %c0_28 = arith.constant 0 : index
    %c0_29 = arith.constant 0 : index
    %40 = vector.load %arg8[%c0_27, %c0_28, %c0_29] : memref<2x32x32xf32, #tpu.memory_space<vmem>>, vector<1x32x32xf32>
    %41 = vector.shape_cast %40 : vector<1x32x32xf32> to vector<32x32xf32>
    %cst_30 = arith.constant 0.000000e+00 : f32
    %42 = vector.broadcast %cst_30 : f32 to vector<128x32xf32>
    %43 = vector.extract_strided_slice %37 {offsets = [0, 0, 0], sizes = [8, 16, 16], strides = [1, 1, 1]} : vector<8x16x96xf32> to vector<8x16x16xf32>
    %cst_31 = arith.constant 2.500000e-01 : f32
    %44 = vector.broadcast %cst_31 : f32 to vector<8x16x16xf32>
    %45 = arith.mulf %43, %44 : vector<8x16x16xf32>
    %46 = vector.extract_strided_slice %37 {offsets = [0, 0, 32], sizes = [8, 16, 16], strides = [1, 1, 1]} : vector<8x16x96xf32> to vector<8x16x16xf32>
    %47 = vector.extract_strided_slice %37 {offsets = [0, 0, 64], sizes = [8, 16, 16], strides = [1, 1, 1]} : vector<8x16x96xf32> to vector<8x16x16xf32>
    "tpu.trace_start"() <{level = 10 : i32, message = "wqd,wkd->wqk"}> : () -> ()
    %cst_32 = arith.constant dense<0.000000e+00> : vector<8x16x16xf32>
    %48 = tpu.matmul %45, %46, %cst_32 {dimension_numbers = #tpu.dot_dimension_numbers<[2], [2], [1], [1], [0, 0, 0, 1, 1, 1], [0], [0]>} : vector<8x16x16xf32>, vector<8x16x16xf32>, vector<8x16x16xf32> -> vector<8x16x16xf32>
    "tpu.trace_stop"() : () -> ()
    %49 = vector.extract_strided_slice %39 {offsets = [0, 0, 0, 0], sizes = [1, 8, 16, 16], strides = [1, 1, 1, 1]} : vector<2x8x16x16xf32> to vector<1x8x16x16xf32>
    %50 = vector.shape_cast %49 : vector<1x8x16x16xf32> to vector<8x16x16xf32>
    %51 = arith.addf %48, %50 : vector<8x16x16xf32>
    %cst_33 = arith.constant dense<0xFF800000> : vector<8x16xf32>
    %52 = vector.multi_reduction <maximumf>, %51, %cst_33 [2] : vector<8x16x16xf32> to vector<8x16xf32>
    %53 = vector.shape_cast %52 : vector<8x16xf32> to vector<8x16x1xf32>
    %54 = vector.broadcast %53 : vector<8x16x1xf32> to vector<8x16x16xf32>
    %55 = arith.subf %51, %54 : vector<8x16x16xf32>
    %56 = math.exp %55 : vector<8x16x16xf32>
    %cst_34 = arith.constant dense<0.000000e+00> : vector<8x16xf32>
    %57 = vector.multi_reduction <add>, %56, %cst_34 [2] : vector<8x16x16xf32> to vector<8x16xf32>
    %58 = vector.shape_cast %57 : vector<8x16xf32> to vector<8x16x1xf32>
    %59 = tpu.reciprocal %58 {approx = true} : vector<8x16x1xf32> -> vector<8x16x1xf32>
    %60 = vector.broadcast %59 : vector<8x16x1xf32> to vector<8x16x16xf32>
    %61 = arith.mulf %56, %60 : vector<8x16x16xf32>
    "tpu.trace_start"() <{level = 10 : i32, message = "wqk,wkd->wqd"}> : () -> ()
    %cst_35 = arith.constant dense<0.000000e+00> : vector<8x16x16xf32>
    %62 = tpu.matmul %61, %47, %cst_35 {dimension_numbers = #tpu.dot_dimension_numbers<[2], [1], [1], [2], [0, 0, 0, 1, 1, 2], [0], [0]>} : vector<8x16x16xf32>, vector<8x16x16xf32>, vector<8x16x16xf32> -> vector<8x16x16xf32>
    "tpu.trace_stop"() : () -> ()
    %63 = vector.shape_cast %62 : vector<8x16x16xf32> to vector<128x16xf32>
    %64 = vector.extract_strided_slice %41 {offsets = [0, 0], sizes = [16, 32], strides = [1, 1]} : vector<32x32xf32> to vector<16x32xf32>
    %cst_36 = arith.constant dense<0.000000e+00> : vector<128x32xf32>
    %65 = tpu.matmul %63, %64, %cst_36 {dimension_numbers = #tpu.dot_dimension_numbers<[1], [0], [0], [1], [0, 0, 1, 1], [], []>} : vector<128x16xf32>, vector<16x32xf32>, vector<128x32xf32> -> vector<128x32xf32>
    %66 = arith.addf %42, %65 : vector<128x32xf32>
    %67 = vector.extract_strided_slice %37 {offsets = [0, 0, 16], sizes = [8, 16, 16], strides = [1, 1, 1]} : vector<8x16x96xf32> to vector<8x16x16xf32>
    %cst_37 = arith.constant 2.500000e-01 : f32
    %68 = vector.broadcast %cst_37 : f32 to vector<8x16x16xf32>
    %69 = arith.mulf %67, %68 : vector<8x16x16xf32>
    %70 = vector.extract_strided_slice %37 {offsets = [0, 0, 48], sizes = [8, 16, 16], strides = [1, 1, 1]} : vector<8x16x96xf32> to vector<8x16x16xf32>
    %71 = vector.extract_strided_slice %37 {offsets = [0, 0, 80], sizes = [8, 16, 16], strides = [1, 1, 1]} : vector<8x16x96xf32> to vector<8x16x16xf32>
    "tpu.trace_start"() <{level = 10 : i32, message = "wqd,wkd->wqk"}> : () -> ()
    %cst_38 = arith.constant dense<0.000000e+00> : vector<8x16x16xf32>
    %72 = tpu.matmul %69, %70, %cst_38 {dimension_numbers = #tpu.dot_dimension_numbers<[2], [2], [1], [1], [0, 0, 0, 1, 1, 1], [0], [0]>} : vector<8x16x16xf32>, vector<8x16x16xf32>, vector<8x16x16xf32> -> vector<8x16x16xf32>
    "tpu.trace_stop"() : () -> ()
    %73 = vector.extract_strided_slice %39 {offsets = [1, 0, 0, 0], sizes = [1, 8, 16, 16], strides = [1, 1, 1, 1]} : vector<2x8x16x16xf32> to vector<1x8x16x16xf32>
    %74 = vector.shape_cast %73 : vector<1x8x16x16xf32> to vector<8x16x16xf32>
    %75 = arith.addf %72, %74 : vector<8x16x16xf32>
    %cst_39 = arith.constant dense<0xFF800000> : vector<8x16xf32>
    %76 = vector.multi_reduction <maximumf>, %75, %cst_39 [2] : vector<8x16x16xf32> to vector<8x16xf32>
    %77 = vector.shape_cast %76 : vector<8x16xf32> to vector<8x16x1xf32>
    %78 = vector.broadcast %77 : vector<8x16x1xf32> to vector<8x16x16xf32>
    %79 = arith.subf %75, %78 : vector<8x16x16xf32>
    %80 = math.exp %79 : vector<8x16x16xf32>
    %cst_40 = arith.constant dense<0.000000e+00> : vector<8x16xf32>
    %81 = vector.multi_reduction <add>, %80, %cst_40 [2] : vector<8x16x16xf32> to vector<8x16xf32>
    %82 = vector.shape_cast %81 : vector<8x16xf32> to vector<8x16x1xf32>
    %83 = tpu.reciprocal %82 {approx = true} : vector<8x16x1xf32> -> vector<8x16x1xf32>
    %84 = vector.broadcast %83 : vector<8x16x1xf32> to vector<8x16x16xf32>
    %85 = arith.mulf %80, %84 : vector<8x16x16xf32>
    "tpu.trace_start"() <{level = 10 : i32, message = "wqk,wkd->wqd"}> : () -> ()
    %cst_41 = arith.constant dense<0.000000e+00> : vector<8x16x16xf32>
    %86 = tpu.matmul %85, %71, %cst_41 {dimension_numbers = #tpu.dot_dimension_numbers<[2], [1], [1], [2], [0, 0, 0, 1, 1, 2], [0], [0]>} : vector<8x16x16xf32>, vector<8x16x16xf32>, vector<8x16x16xf32> -> vector<8x16x16xf32>
    "tpu.trace_stop"() : () -> ()
    %87 = vector.shape_cast %86 : vector<8x16x16xf32> to vector<128x16xf32>
    %88 = vector.extract_strided_slice %41 {offsets = [16, 0], sizes = [16, 32], strides = [1, 1]} : vector<32x32xf32> to vector<16x32xf32>
    %cst_42 = arith.constant dense<0.000000e+00> : vector<128x32xf32>
    %89 = tpu.matmul %87, %88, %cst_42 {dimension_numbers = #tpu.dot_dimension_numbers<[1], [0], [0], [1], [0, 0, 1, 1], [], []>} : vector<128x16xf32>, vector<16x32xf32>, vector<128x32xf32> -> vector<128x32xf32>
    %90 = arith.addf %66, %89 : vector<128x32xf32>
    %c0_43 = arith.constant 0 : index
    %c0_44 = arith.constant 0 : index
    %c0_45 = arith.constant 0 : index
    %91 = vector.load %arg9[%c0_43, %c0_44, %c0_45] : memref<2x1x32xf32, #tpu.memory_space<vmem>>, vector<1x1x32xf32>
    %92 = vector.shape_cast %91 : vector<1x1x32xf32> to vector<1x32xf32>
    %93 = vector.broadcast %92 : vector<1x32xf32> to vector<128x32xf32>
    %94 = arith.addf %90, %93 : vector<128x32xf32>
    %c0_46 = arith.constant 0 : index
    %c0_47 = arith.constant 0 : index
    %c0_48 = arith.constant 0 : index
    %95 = vector.load %arg2[%c0_46, %c0_47, %c0_48] : memref<2x128x128xf32, #tpu.memory_space<vmem>>, vector<1x128x128xf32>
    %96 = vector.shape_cast %95 : vector<1x128x128xf32> to vector<128x128xf32>
    %cst_49 = arith.constant dense<0.000000e+00> : vector<128x32xf32>
    %97 = tpu.matmul %96, %94, %cst_49 {dimension_numbers = #tpu.dot_dimension_numbers<[1], [0], [0], [1], [0, 0, 1, 1], [], []>} : vector<128x128xf32>, vector<128x32xf32>, vector<128x32xf32> -> vector<128x32xf32>
    %98 = arith.addf %0, %97 : vector<128x32xf32>
    %c0_50 = arith.constant 0 : index
    %c0_51 = arith.constant 0 : index
    %c0_52 = arith.constant 0 : index
    %99 = vector.load %arg10[%c0_50, %c0_51, %c0_52] : memref<2x1x32xf32, #tpu.memory_space<vmem>>, vector<1x1x32xf32>
    %100 = vector.shape_cast %99 : vector<1x1x32xf32> to vector<1x32xf32>
    %c0_53 = arith.constant 0 : index
    %c0_54 = arith.constant 0 : index
    %c0_55 = arith.constant 0 : index
    %101 = vector.load %arg11[%c0_53, %c0_54, %c0_55] : memref<2x1x32xf32, #tpu.memory_space<vmem>>, vector<1x1x32xf32>
    %102 = vector.shape_cast %101 : vector<1x1x32xf32> to vector<1x32xf32>
    %cst_56 = arith.constant dense<0.000000e+00> : vector<128xf32>
    %103 = vector.multi_reduction <add>, %98, %cst_56 [1] : vector<128x32xf32> to vector<128xf32>
    %104 = vector.shape_cast %103 : vector<128xf32> to vector<128x1xf32>
    %cst_57 = arith.constant 3.200000e+01 : f32
    %105 = vector.broadcast %cst_57 : f32 to vector<128x1xf32>
    %106 = arith.divf %104, %105 : vector<128x1xf32>
    %107 = vector.broadcast %106 : vector<128x1xf32> to vector<128x32xf32>
    %108 = arith.subf %98, %107 : vector<128x32xf32>
    %109 = arith.mulf %108, %108 : vector<128x32xf32>
    %cst_58 = arith.constant dense<0.000000e+00> : vector<128xf32>
    %110 = vector.multi_reduction <add>, %109, %cst_58 [1] : vector<128x32xf32> to vector<128xf32>
    %111 = vector.shape_cast %110 : vector<128xf32> to vector<128x1xf32>
    %cst_59 = arith.constant 3.200000e+01 : f32
    %112 = vector.broadcast %cst_59 : f32 to vector<128x1xf32>
    %113 = arith.divf %111, %112 : vector<128x1xf32>
    %114 = vector.broadcast %106 : vector<128x1xf32> to vector<128x32xf32>
    %115 = arith.subf %98, %114 : vector<128x32xf32>
    %cst_60 = arith.constant 9.99999974E-6 : f32
    %116 = vector.broadcast %cst_60 : f32 to vector<128x1xf32>
    %117 = arith.addf %113, %116 : vector<128x1xf32>
    %118 = math.rsqrt %117 : vector<128x1xf32>
    %119 = vector.broadcast %118 : vector<128x1xf32> to vector<128x32xf32>
    %120 = arith.mulf %115, %119 : vector<128x32xf32>
    %121 = vector.broadcast %100 : vector<1x32xf32> to vector<128x32xf32>
    %122 = arith.mulf %120, %121 : vector<128x32xf32>
    %123 = vector.broadcast %102 : vector<1x32xf32> to vector<128x32xf32>
    %124 = arith.addf %122, %123 : vector<128x32xf32>
    %c0_61 = arith.constant 0 : index
    %c0_62 = arith.constant 0 : index
    %c0_63 = arith.constant 0 : index
    %125 = vector.load %arg12[%c0_61, %c0_62, %c0_63] : memref<2x32x128xf32, #tpu.memory_space<vmem>>, vector<1x32x128xf32>
    %126 = vector.shape_cast %125 : vector<1x32x128xf32> to vector<32x128xf32>
    %cst_64 = arith.constant dense<0.000000e+00> : vector<128x128xf32>
    %127 = tpu.matmul %124, %126, %cst_64 {dimension_numbers = #tpu.dot_dimension_numbers<[1], [0], [0], [1], [0, 0, 1, 1], [], []>} : vector<128x32xf32>, vector<32x128xf32>, vector<128x128xf32> -> vector<128x128xf32>
    %c0_65 = arith.constant 0 : index
    %c0_66 = arith.constant 0 : index
    %c0_67 = arith.constant 0 : index
    %128 = vector.load %arg13[%c0_65, %c0_66, %c0_67] : memref<2x1x128xf32, #tpu.memory_space<vmem>>, vector<1x1x128xf32>
    %129 = vector.shape_cast %128 : vector<1x1x128xf32> to vector<1x128xf32>
    %130 = vector.broadcast %129 : vector<1x128xf32> to vector<128x128xf32>
    %131 = arith.addf %127, %130 : vector<128x128xf32>
    %cst_68 = arith.constant 5.000000e-01 : f32
    %132 = vector.broadcast %cst_68 : f32 to vector<128x128xf32>
    %133 = arith.mulf %132, %131 : vector<128x128xf32>
    %cst_69 = arith.constant 0.707106769 : f32
    %134 = vector.broadcast %cst_69 : f32 to vector<128x128xf32>
    %135 = arith.mulf %131, %134 : vector<128x128xf32>
    %136 = math.absf %135 : vector<128x128xf32>
    %cst_70 = arith.constant 0.327591091 : f32
    %137 = vector.broadcast %cst_70 : f32 to vector<128x128xf32>
    %138 = arith.mulf %137, %136 : vector<128x128xf32>
    %cst_71 = arith.constant 1.000000e+00 : f32
    %139 = vector.broadcast %cst_71 : f32 to vector<128x128xf32>
    %140 = arith.addf %139, %138 : vector<128x128xf32>
    %cst_72 = arith.constant 1.000000e+00 : f32
    %141 = vector.broadcast %cst_72 : f32 to vector<128x128xf32>
    %142 = arith.divf %141, %140 : vector<128x128xf32>
    %cst_73 = arith.constant 1.06140542 : f32
    %143 = vector.broadcast %cst_73 : f32 to vector<128x128xf32>
    %144 = arith.mulf %143, %142 : vector<128x128xf32>
    %cst_74 = arith.constant -1.45315206 : f32
    %145 = vector.broadcast %cst_74 : f32 to vector<128x128xf32>
    %146 = arith.addf %144, %145 : vector<128x128xf32>
    %147 = arith.mulf %146, %142 : vector<128x128xf32>
    %cst_75 = arith.constant 1.42141378 : f32
    %148 = vector.broadcast %cst_75 : f32 to vector<128x128xf32>
    %149 = arith.addf %147, %148 : vector<128x128xf32>
    %150 = arith.mulf %149, %142 : vector<128x128xf32>
    %cst_76 = arith.constant -0.284496725 : f32
    %151 = vector.broadcast %cst_76 : f32 to vector<128x128xf32>
    %152 = arith.addf %150, %151 : vector<128x128xf32>
    %153 = arith.mulf %152, %142 : vector<128x128xf32>
    %cst_77 = arith.constant 0.254829586 : f32
    %154 = vector.broadcast %cst_77 : f32 to vector<128x128xf32>
    %155 = arith.addf %153, %154 : vector<128x128xf32>
    %156 = arith.mulf %155, %142 : vector<128x128xf32>
    %cst_78 = arith.constant 0.000000e+00 : f32
    %157 = vector.broadcast %cst_78 : f32 to vector<128x128xf32>
    %158 = arith.subf %157, %136 : vector<128x128xf32>
    %159 = arith.mulf %158, %136 : vector<128x128xf32>
    %160 = math.exp %159 : vector<128x128xf32>
    %161 = arith.mulf %156, %160 : vector<128x128xf32>
    %cst_79 = arith.constant 1.000000e+00 : f32
    %162 = vector.broadcast %cst_79 : f32 to vector<128x128xf32>
    %163 = arith.subf %162, %161 : vector<128x128xf32>
    %cst_80 = arith.constant 0.000000e+00 : f32
    %164 = vector.broadcast %cst_80 : f32 to vector<128x128xf32>
    %165 = arith.cmpf oge, %135, %164 : vector<128x128xf32>
    %cst_81 = arith.constant 0.000000e+00 : f32
    %166 = vector.broadcast %cst_81 : f32 to vector<128x128xf32>
    %167 = arith.subf %166, %163 : vector<128x128xf32>
    %168 = arith.select %165, %163, %167 : vector<128x128xi1>, vector<128x128xf32>
    %cst_82 = arith.constant 1.000000e+00 : f32
    %169 = vector.broadcast %cst_82 : f32 to vector<128x128xf32>
    %170 = arith.addf %169, %168 : vector<128x128xf32>
    %171 = arith.mulf %133, %170 : vector<128x128xf32>
    %c0_83 = arith.constant 0 : index
    %c0_84 = arith.constant 0 : index
    %c0_85 = arith.constant 0 : index
    %172 = vector.load %arg14[%c0_83, %c0_84, %c0_85] : memref<2x128x32xf32, #tpu.memory_space<vmem>>, vector<1x128x32xf32>
    %173 = vector.shape_cast %172 : vector<1x128x32xf32> to vector<128x32xf32>
    %cst_86 = arith.constant dense<0.000000e+00> : vector<128x32xf32>
    %174 = tpu.matmul %171, %173, %cst_86 {dimension_numbers = #tpu.dot_dimension_numbers<[1], [0], [0], [1], [0, 0, 1, 1], [], []>} : vector<128x128xf32>, vector<128x32xf32>, vector<128x32xf32> -> vector<128x32xf32>
    %175 = arith.addf %98, %174 : vector<128x32xf32>
    %c0_87 = arith.constant 0 : index
    %c0_88 = arith.constant 0 : index
    %c0_89 = arith.constant 0 : index
    %176 = vector.load %arg15[%c0_87, %c0_88, %c0_89] : memref<2x1x32xf32, #tpu.memory_space<vmem>>, vector<1x1x32xf32>
    %177 = vector.shape_cast %176 : vector<1x1x32xf32> to vector<1x32xf32>
    %178 = vector.broadcast %177 : vector<1x32xf32> to vector<128x32xf32>
    %179 = arith.addf %175, %178 : vector<128x32xf32>
    %c1 = arith.constant 1 : index
    %c0_90 = arith.constant 0 : index
    %c0_91 = arith.constant 0 : index
    %180 = vector.load %arg4[%c1, %c0_90, %c0_91] : memref<2x1x32xf32, #tpu.memory_space<vmem>>, vector<1x1x32xf32>
    %181 = vector.shape_cast %180 : vector<1x1x32xf32> to vector<1x32xf32>
    %c1_92 = arith.constant 1 : index
    %c0_93 = arith.constant 0 : index
    %c0_94 = arith.constant 0 : index
    %182 = vector.load %arg5[%c1_92, %c0_93, %c0_94] : memref<2x1x32xf32, #tpu.memory_space<vmem>>, vector<1x1x32xf32>
    %183 = vector.shape_cast %182 : vector<1x1x32xf32> to vector<1x32xf32>
    %cst_95 = arith.constant dense<0.000000e+00> : vector<128xf32>
    %184 = vector.multi_reduction <add>, %179, %cst_95 [1] : vector<128x32xf32> to vector<128xf32>
    %185 = vector.shape_cast %184 : vector<128xf32> to vector<128x1xf32>
    %cst_96 = arith.constant 3.200000e+01 : f32
    %186 = vector.broadcast %cst_96 : f32 to vector<128x1xf32>
    %187 = arith.divf %185, %186 : vector<128x1xf32>
    %188 = vector.broadcast %187 : vector<128x1xf32> to vector<128x32xf32>
    %189 = arith.subf %179, %188 : vector<128x32xf32>
    %190 = arith.mulf %189, %189 : vector<128x32xf32>
    %cst_97 = arith.constant dense<0.000000e+00> : vector<128xf32>
    %191 = vector.multi_reduction <add>, %190, %cst_97 [1] : vector<128x32xf32> to vector<128xf32>
    %192 = vector.shape_cast %191 : vector<128xf32> to vector<128x1xf32>
    %cst_98 = arith.constant 3.200000e+01 : f32
    %193 = vector.broadcast %cst_98 : f32 to vector<128x1xf32>
    %194 = arith.divf %192, %193 : vector<128x1xf32>
    %195 = vector.broadcast %187 : vector<128x1xf32> to vector<128x32xf32>
    %196 = arith.subf %179, %195 : vector<128x32xf32>
    %cst_99 = arith.constant 9.99999974E-6 : f32
    %197 = vector.broadcast %cst_99 : f32 to vector<128x1xf32>
    %198 = arith.addf %194, %197 : vector<128x1xf32>
    %199 = math.rsqrt %198 : vector<128x1xf32>
    %200 = vector.broadcast %199 : vector<128x1xf32> to vector<128x32xf32>
    %201 = arith.mulf %196, %200 : vector<128x32xf32>
    %202 = vector.broadcast %181 : vector<1x32xf32> to vector<128x32xf32>
    %203 = arith.mulf %201, %202 : vector<128x32xf32>
    %204 = vector.broadcast %183 : vector<1x32xf32> to vector<128x32xf32>
    %205 = arith.addf %203, %204 : vector<128x32xf32>
    %c1_100 = arith.constant 1 : index
    %c0_101 = arith.constant 0 : index
    %c0_102 = arith.constant 0 : index
    %206 = vector.load %arg1[%c1_100, %c0_101, %c0_102] : memref<2x128x128xf32, #tpu.memory_space<vmem>>, vector<1x128x128xf32>
    %207 = vector.shape_cast %206 : vector<1x128x128xf32> to vector<128x128xf32>
    %cst_103 = arith.constant dense<0.000000e+00> : vector<128x32xf32>
    %208 = tpu.matmul %207, %205, %cst_103 {dimension_numbers = #tpu.dot_dimension_numbers<[1], [0], [0], [1], [0, 0, 1, 1], [], []>} : vector<128x128xf32>, vector<128x32xf32>, vector<128x32xf32> -> vector<128x32xf32>
    %c1_104 = arith.constant 1 : index
    %c0_105 = arith.constant 0 : index
    %c0_106 = arith.constant 0 : index
    %209 = vector.load %arg6[%c1_104, %c0_105, %c0_106] : memref<2x32x96xf32, #tpu.memory_space<vmem>>, vector<1x32x96xf32>
    %210 = vector.shape_cast %209 : vector<1x32x96xf32> to vector<32x96xf32>
    %cst_107 = arith.constant dense<0.000000e+00> : vector<128x96xf32>
    %211 = tpu.matmul %208, %210, %cst_107 {dimension_numbers = #tpu.dot_dimension_numbers<[1], [0], [0], [1], [0, 0, 1, 1], [], []>} : vector<128x32xf32>, vector<32x96xf32>, vector<128x96xf32> -> vector<128x96xf32>
    %c1_108 = arith.constant 1 : index
    %c0_109 = arith.constant 0 : index
    %c0_110 = arith.constant 0 : index
    %212 = vector.load %arg7[%c1_108, %c0_109, %c0_110] : memref<2x1x96xf32, #tpu.memory_space<vmem>>, vector<1x1x96xf32>
    %213 = vector.shape_cast %212 : vector<1x1x96xf32> to vector<1x96xf32>
    %214 = vector.broadcast %213 : vector<1x96xf32> to vector<128x96xf32>
    %215 = arith.addf %211, %214 : vector<128x96xf32>
    %216 = vector.shape_cast %215 : vector<128x96xf32> to vector<8x16x96xf32>
    %c1_111 = arith.constant 1 : index
    %c0_112 = arith.constant 0 : index
    %c0_113 = arith.constant 0 : index
    %c0_114 = arith.constant 0 : index
    %c0_115 = arith.constant 0 : index
    %217 = vector.load %arg3[%c1_111, %c0_112, %c0_113, %c0_114, %c0_115] : memref<2x2x8x16x16xf32, #tpu.memory_space<vmem>>, vector<1x2x8x16x16xf32>
    %218 = vector.shape_cast %217 : vector<1x2x8x16x16xf32> to vector<2x8x16x16xf32>
    %c1_116 = arith.constant 1 : index
    %c0_117 = arith.constant 0 : index
    %c0_118 = arith.constant 0 : index
    %219 = vector.load %arg8[%c1_116, %c0_117, %c0_118] : memref<2x32x32xf32, #tpu.memory_space<vmem>>, vector<1x32x32xf32>
    %220 = vector.shape_cast %219 : vector<1x32x32xf32> to vector<32x32xf32>
    %cst_119 = arith.constant 0.000000e+00 : f32
    %221 = vector.broadcast %cst_119 : f32 to vector<128x32xf32>
    %222 = vector.extract_strided_slice %216 {offsets = [0, 0, 0], sizes = [8, 16, 16], strides = [1, 1, 1]} : vector<8x16x96xf32> to vector<8x16x16xf32>
    %cst_120 = arith.constant 2.500000e-01 : f32
    %223 = vector.broadcast %cst_120 : f32 to vector<8x16x16xf32>
    %224 = arith.mulf %222, %223 : vector<8x16x16xf32>
    %225 = vector.extract_strided_slice %216 {offsets = [0, 0, 32], sizes = [8, 16, 16], strides = [1, 1, 1]} : vector<8x16x96xf32> to vector<8x16x16xf32>
    %226 = vector.extract_strided_slice %216 {offsets = [0, 0, 64], sizes = [8, 16, 16], strides = [1, 1, 1]} : vector<8x16x96xf32> to vector<8x16x16xf32>
    "tpu.trace_start"() <{level = 10 : i32, message = "wqd,wkd->wqk"}> : () -> ()
    %cst_121 = arith.constant dense<0.000000e+00> : vector<8x16x16xf32>
    %227 = tpu.matmul %224, %225, %cst_121 {dimension_numbers = #tpu.dot_dimension_numbers<[2], [2], [1], [1], [0, 0, 0, 1, 1, 1], [0], [0]>} : vector<8x16x16xf32>, vector<8x16x16xf32>, vector<8x16x16xf32> -> vector<8x16x16xf32>
    "tpu.trace_stop"() : () -> ()
    %228 = vector.extract_strided_slice %218 {offsets = [0, 0, 0, 0], sizes = [1, 8, 16, 16], strides = [1, 1, 1, 1]} : vector<2x8x16x16xf32> to vector<1x8x16x16xf32>
    %229 = vector.shape_cast %228 : vector<1x8x16x16xf32> to vector<8x16x16xf32>
    %230 = arith.addf %227, %229 : vector<8x16x16xf32>
    %cst_122 = arith.constant dense<0xFF800000> : vector<8x16xf32>
    %231 = vector.multi_reduction <maximumf>, %230, %cst_122 [2] : vector<8x16x16xf32> to vector<8x16xf32>
    %232 = vector.shape_cast %231 : vector<8x16xf32> to vector<8x16x1xf32>
    %233 = vector.broadcast %232 : vector<8x16x1xf32> to vector<8x16x16xf32>
    %234 = arith.subf %230, %233 : vector<8x16x16xf32>
    %235 = math.exp %234 : vector<8x16x16xf32>
    %cst_123 = arith.constant dense<0.000000e+00> : vector<8x16xf32>
    %236 = vector.multi_reduction <add>, %235, %cst_123 [2] : vector<8x16x16xf32> to vector<8x16xf32>
    %237 = vector.shape_cast %236 : vector<8x16xf32> to vector<8x16x1xf32>
    %238 = tpu.reciprocal %237 {approx = true} : vector<8x16x1xf32> -> vector<8x16x1xf32>
    %239 = vector.broadcast %238 : vector<8x16x1xf32> to vector<8x16x16xf32>
    %240 = arith.mulf %235, %239 : vector<8x16x16xf32>
    "tpu.trace_start"() <{level = 10 : i32, message = "wqk,wkd->wqd"}> : () -> ()
    %cst_124 = arith.constant dense<0.000000e+00> : vector<8x16x16xf32>
    %241 = tpu.matmul %240, %226, %cst_124 {dimension_numbers = #tpu.dot_dimension_numbers<[2], [1], [1], [2], [0, 0, 0, 1, 1, 2], [0], [0]>} : vector<8x16x16xf32>, vector<8x16x16xf32>, vector<8x16x16xf32> -> vector<8x16x16xf32>
    "tpu.trace_stop"() : () -> ()
    %242 = vector.shape_cast %241 : vector<8x16x16xf32> to vector<128x16xf32>
    %243 = vector.extract_strided_slice %220 {offsets = [0, 0], sizes = [16, 32], strides = [1, 1]} : vector<32x32xf32> to vector<16x32xf32>
    %cst_125 = arith.constant dense<0.000000e+00> : vector<128x32xf32>
    %244 = tpu.matmul %242, %243, %cst_125 {dimension_numbers = #tpu.dot_dimension_numbers<[1], [0], [0], [1], [0, 0, 1, 1], [], []>} : vector<128x16xf32>, vector<16x32xf32>, vector<128x32xf32> -> vector<128x32xf32>
    %245 = arith.addf %221, %244 : vector<128x32xf32>
    %246 = vector.extract_strided_slice %216 {offsets = [0, 0, 16], sizes = [8, 16, 16], strides = [1, 1, 1]} : vector<8x16x96xf32> to vector<8x16x16xf32>
    %cst_126 = arith.constant 2.500000e-01 : f32
    %247 = vector.broadcast %cst_126 : f32 to vector<8x16x16xf32>
    %248 = arith.mulf %246, %247 : vector<8x16x16xf32>
    %249 = vector.extract_strided_slice %216 {offsets = [0, 0, 48], sizes = [8, 16, 16], strides = [1, 1, 1]} : vector<8x16x96xf32> to vector<8x16x16xf32>
    %250 = vector.extract_strided_slice %216 {offsets = [0, 0, 80], sizes = [8, 16, 16], strides = [1, 1, 1]} : vector<8x16x96xf32> to vector<8x16x16xf32>
    "tpu.trace_start"() <{level = 10 : i32, message = "wqd,wkd->wqk"}> : () -> ()
    %cst_127 = arith.constant dense<0.000000e+00> : vector<8x16x16xf32>
    %251 = tpu.matmul %248, %249, %cst_127 {dimension_numbers = #tpu.dot_dimension_numbers<[2], [2], [1], [1], [0, 0, 0, 1, 1, 1], [0], [0]>} : vector<8x16x16xf32>, vector<8x16x16xf32>, vector<8x16x16xf32> -> vector<8x16x16xf32>
    "tpu.trace_stop"() : () -> ()
    %252 = vector.extract_strided_slice %218 {offsets = [1, 0, 0, 0], sizes = [1, 8, 16, 16], strides = [1, 1, 1, 1]} : vector<2x8x16x16xf32> to vector<1x8x16x16xf32>
    %253 = vector.shape_cast %252 : vector<1x8x16x16xf32> to vector<8x16x16xf32>
    %254 = arith.addf %251, %253 : vector<8x16x16xf32>
    %cst_128 = arith.constant dense<0xFF800000> : vector<8x16xf32>
    %255 = vector.multi_reduction <maximumf>, %254, %cst_128 [2] : vector<8x16x16xf32> to vector<8x16xf32>
    %256 = vector.shape_cast %255 : vector<8x16xf32> to vector<8x16x1xf32>
    %257 = vector.broadcast %256 : vector<8x16x1xf32> to vector<8x16x16xf32>
    %258 = arith.subf %254, %257 : vector<8x16x16xf32>
    %259 = math.exp %258 : vector<8x16x16xf32>
    %cst_129 = arith.constant dense<0.000000e+00> : vector<8x16xf32>
    %260 = vector.multi_reduction <add>, %259, %cst_129 [2] : vector<8x16x16xf32> to vector<8x16xf32>
    %261 = vector.shape_cast %260 : vector<8x16xf32> to vector<8x16x1xf32>
    %262 = tpu.reciprocal %261 {approx = true} : vector<8x16x1xf32> -> vector<8x16x1xf32>
    %263 = vector.broadcast %262 : vector<8x16x1xf32> to vector<8x16x16xf32>
    %264 = arith.mulf %259, %263 : vector<8x16x16xf32>
    "tpu.trace_start"() <{level = 10 : i32, message = "wqk,wkd->wqd"}> : () -> ()
    %cst_130 = arith.constant dense<0.000000e+00> : vector<8x16x16xf32>
    %265 = tpu.matmul %264, %250, %cst_130 {dimension_numbers = #tpu.dot_dimension_numbers<[2], [1], [1], [2], [0, 0, 0, 1, 1, 2], [0], [0]>} : vector<8x16x16xf32>, vector<8x16x16xf32>, vector<8x16x16xf32> -> vector<8x16x16xf32>
    "tpu.trace_stop"() : () -> ()
    %266 = vector.shape_cast %265 : vector<8x16x16xf32> to vector<128x16xf32>
    %267 = vector.extract_strided_slice %220 {offsets = [16, 0], sizes = [16, 32], strides = [1, 1]} : vector<32x32xf32> to vector<16x32xf32>
    %cst_131 = arith.constant dense<0.000000e+00> : vector<128x32xf32>
    %268 = tpu.matmul %266, %267, %cst_131 {dimension_numbers = #tpu.dot_dimension_numbers<[1], [0], [0], [1], [0, 0, 1, 1], [], []>} : vector<128x16xf32>, vector<16x32xf32>, vector<128x32xf32> -> vector<128x32xf32>
    %269 = arith.addf %245, %268 : vector<128x32xf32>
    %c1_132 = arith.constant 1 : index
    %c0_133 = arith.constant 0 : index
    %c0_134 = arith.constant 0 : index
    %270 = vector.load %arg9[%c1_132, %c0_133, %c0_134] : memref<2x1x32xf32, #tpu.memory_space<vmem>>, vector<1x1x32xf32>
    %271 = vector.shape_cast %270 : vector<1x1x32xf32> to vector<1x32xf32>
    %272 = vector.broadcast %271 : vector<1x32xf32> to vector<128x32xf32>
    %273 = arith.addf %269, %272 : vector<128x32xf32>
    %c1_135 = arith.constant 1 : index
    %c0_136 = arith.constant 0 : index
    %c0_137 = arith.constant 0 : index
    %274 = vector.load %arg2[%c1_135, %c0_136, %c0_137] : memref<2x128x128xf32, #tpu.memory_space<vmem>>, vector<1x128x128xf32>
    %275 = vector.shape_cast %274 : vector<1x128x128xf32> to vector<128x128xf32>
    %cst_138 = arith.constant dense<0.000000e+00> : vector<128x32xf32>
    %276 = tpu.matmul %275, %273, %cst_138 {dimension_numbers = #tpu.dot_dimension_numbers<[1], [0], [0], [1], [0, 0, 1, 1], [], []>} : vector<128x128xf32>, vector<128x32xf32>, vector<128x32xf32> -> vector<128x32xf32>
    %277 = arith.addf %179, %276 : vector<128x32xf32>
    %c1_139 = arith.constant 1 : index
    %c0_140 = arith.constant 0 : index
    %c0_141 = arith.constant 0 : index
    %278 = vector.load %arg10[%c1_139, %c0_140, %c0_141] : memref<2x1x32xf32, #tpu.memory_space<vmem>>, vector<1x1x32xf32>
    %279 = vector.shape_cast %278 : vector<1x1x32xf32> to vector<1x32xf32>
    %c1_142 = arith.constant 1 : index
    %c0_143 = arith.constant 0 : index
    %c0_144 = arith.constant 0 : index
    %280 = vector.load %arg11[%c1_142, %c0_143, %c0_144] : memref<2x1x32xf32, #tpu.memory_space<vmem>>, vector<1x1x32xf32>
    %281 = vector.shape_cast %280 : vector<1x1x32xf32> to vector<1x32xf32>
    %cst_145 = arith.constant dense<0.000000e+00> : vector<128xf32>
    %282 = vector.multi_reduction <add>, %277, %cst_145 [1] : vector<128x32xf32> to vector<128xf32>
    %283 = vector.shape_cast %282 : vector<128xf32> to vector<128x1xf32>
    %cst_146 = arith.constant 3.200000e+01 : f32
    %284 = vector.broadcast %cst_146 : f32 to vector<128x1xf32>
    %285 = arith.divf %283, %284 : vector<128x1xf32>
    %286 = vector.broadcast %285 : vector<128x1xf32> to vector<128x32xf32>
    %287 = arith.subf %277, %286 : vector<128x32xf32>
    %288 = arith.mulf %287, %287 : vector<128x32xf32>
    %cst_147 = arith.constant dense<0.000000e+00> : vector<128xf32>
    %289 = vector.multi_reduction <add>, %288, %cst_147 [1] : vector<128x32xf32> to vector<128xf32>
    %290 = vector.shape_cast %289 : vector<128xf32> to vector<128x1xf32>
    %cst_148 = arith.constant 3.200000e+01 : f32
    %291 = vector.broadcast %cst_148 : f32 to vector<128x1xf32>
    %292 = arith.divf %290, %291 : vector<128x1xf32>
    %293 = vector.broadcast %285 : vector<128x1xf32> to vector<128x32xf32>
    %294 = arith.subf %277, %293 : vector<128x32xf32>
    %cst_149 = arith.constant 9.99999974E-6 : f32
    %295 = vector.broadcast %cst_149 : f32 to vector<128x1xf32>
    %296 = arith.addf %292, %295 : vector<128x1xf32>
    %297 = math.rsqrt %296 : vector<128x1xf32>
    %298 = vector.broadcast %297 : vector<128x1xf32> to vector<128x32xf32>
    %299 = arith.mulf %294, %298 : vector<128x32xf32>
    %300 = vector.broadcast %279 : vector<1x32xf32> to vector<128x32xf32>
    %301 = arith.mulf %299, %300 : vector<128x32xf32>
    %302 = vector.broadcast %281 : vector<1x32xf32> to vector<128x32xf32>
    %303 = arith.addf %301, %302 : vector<128x32xf32>
    %c1_150 = arith.constant 1 : index
    %c0_151 = arith.constant 0 : index
    %c0_152 = arith.constant 0 : index
    %304 = vector.load %arg12[%c1_150, %c0_151, %c0_152] : memref<2x32x128xf32, #tpu.memory_space<vmem>>, vector<1x32x128xf32>
    %305 = vector.shape_cast %304 : vector<1x32x128xf32> to vector<32x128xf32>
    %cst_153 = arith.constant dense<0.000000e+00> : vector<128x128xf32>
    %306 = tpu.matmul %303, %305, %cst_153 {dimension_numbers = #tpu.dot_dimension_numbers<[1], [0], [0], [1], [0, 0, 1, 1], [], []>} : vector<128x32xf32>, vector<32x128xf32>, vector<128x128xf32> -> vector<128x128xf32>
    %c1_154 = arith.constant 1 : index
    %c0_155 = arith.constant 0 : index
    %c0_156 = arith.constant 0 : index
    %307 = vector.load %arg13[%c1_154, %c0_155, %c0_156] : memref<2x1x128xf32, #tpu.memory_space<vmem>>, vector<1x1x128xf32>
    %308 = vector.shape_cast %307 : vector<1x1x128xf32> to vector<1x128xf32>
    %309 = vector.broadcast %308 : vector<1x128xf32> to vector<128x128xf32>
    %310 = arith.addf %306, %309 : vector<128x128xf32>
    %cst_157 = arith.constant 5.000000e-01 : f32
    %311 = vector.broadcast %cst_157 : f32 to vector<128x128xf32>
    %312 = arith.mulf %311, %310 : vector<128x128xf32>
    %cst_158 = arith.constant 0.707106769 : f32
    %313 = vector.broadcast %cst_158 : f32 to vector<128x128xf32>
    %314 = arith.mulf %310, %313 : vector<128x128xf32>
    %315 = math.absf %314 : vector<128x128xf32>
    %cst_159 = arith.constant 0.327591091 : f32
    %316 = vector.broadcast %cst_159 : f32 to vector<128x128xf32>
    %317 = arith.mulf %316, %315 : vector<128x128xf32>
    %cst_160 = arith.constant 1.000000e+00 : f32
    %318 = vector.broadcast %cst_160 : f32 to vector<128x128xf32>
    %319 = arith.addf %318, %317 : vector<128x128xf32>
    %cst_161 = arith.constant 1.000000e+00 : f32
    %320 = vector.broadcast %cst_161 : f32 to vector<128x128xf32>
    %321 = arith.divf %320, %319 : vector<128x128xf32>
    %cst_162 = arith.constant 1.06140542 : f32
    %322 = vector.broadcast %cst_162 : f32 to vector<128x128xf32>
    %323 = arith.mulf %322, %321 : vector<128x128xf32>
    %cst_163 = arith.constant -1.45315206 : f32
    %324 = vector.broadcast %cst_163 : f32 to vector<128x128xf32>
    %325 = arith.addf %323, %324 : vector<128x128xf32>
    %326 = arith.mulf %325, %321 : vector<128x128xf32>
    %cst_164 = arith.constant 1.42141378 : f32
    %327 = vector.broadcast %cst_164 : f32 to vector<128x128xf32>
    %328 = arith.addf %326, %327 : vector<128x128xf32>
    %329 = arith.mulf %328, %321 : vector<128x128xf32>
    %cst_165 = arith.constant -0.284496725 : f32
    %330 = vector.broadcast %cst_165 : f32 to vector<128x128xf32>
    %331 = arith.addf %329, %330 : vector<128x128xf32>
    %332 = arith.mulf %331, %321 : vector<128x128xf32>
    %cst_166 = arith.constant 0.254829586 : f32
    %333 = vector.broadcast %cst_166 : f32 to vector<128x128xf32>
    %334 = arith.addf %332, %333 : vector<128x128xf32>
    %335 = arith.mulf %334, %321 : vector<128x128xf32>
    %cst_167 = arith.constant 0.000000e+00 : f32
    %336 = vector.broadcast %cst_167 : f32 to vector<128x128xf32>
    %337 = arith.subf %336, %315 : vector<128x128xf32>
    %338 = arith.mulf %337, %315 : vector<128x128xf32>
    %339 = math.exp %338 : vector<128x128xf32>
    %340 = arith.mulf %335, %339 : vector<128x128xf32>
    %cst_168 = arith.constant 1.000000e+00 : f32
    %341 = vector.broadcast %cst_168 : f32 to vector<128x128xf32>
    %342 = arith.subf %341, %340 : vector<128x128xf32>
    %cst_169 = arith.constant 0.000000e+00 : f32
    %343 = vector.broadcast %cst_169 : f32 to vector<128x128xf32>
    %344 = arith.cmpf oge, %314, %343 : vector<128x128xf32>
    %cst_170 = arith.constant 0.000000e+00 : f32
    %345 = vector.broadcast %cst_170 : f32 to vector<128x128xf32>
    %346 = arith.subf %345, %342 : vector<128x128xf32>
    %347 = arith.select %344, %342, %346 : vector<128x128xi1>, vector<128x128xf32>
    %cst_171 = arith.constant 1.000000e+00 : f32
    %348 = vector.broadcast %cst_171 : f32 to vector<128x128xf32>
    %349 = arith.addf %348, %347 : vector<128x128xf32>
    %350 = arith.mulf %312, %349 : vector<128x128xf32>
    %c1_172 = arith.constant 1 : index
    %c0_173 = arith.constant 0 : index
    %c0_174 = arith.constant 0 : index
    %351 = vector.load %arg14[%c1_172, %c0_173, %c0_174] : memref<2x128x32xf32, #tpu.memory_space<vmem>>, vector<1x128x32xf32>
    %352 = vector.shape_cast %351 : vector<1x128x32xf32> to vector<128x32xf32>
    %cst_175 = arith.constant dense<0.000000e+00> : vector<128x32xf32>
    %353 = tpu.matmul %350, %352, %cst_175 {dimension_numbers = #tpu.dot_dimension_numbers<[1], [0], [0], [1], [0, 0, 1, 1], [], []>} : vector<128x128xf32>, vector<128x32xf32>, vector<128x32xf32> -> vector<128x32xf32>
    %354 = arith.addf %277, %353 : vector<128x32xf32>
    %c1_176 = arith.constant 1 : index
    %c0_177 = arith.constant 0 : index
    %c0_178 = arith.constant 0 : index
    %355 = vector.load %arg15[%c1_176, %c0_177, %c0_178] : memref<2x1x32xf32, #tpu.memory_space<vmem>>, vector<1x1x32xf32>
    %356 = vector.shape_cast %355 : vector<1x1x32xf32> to vector<1x32xf32>
    %357 = vector.broadcast %356 : vector<1x32xf32> to vector<128x32xf32>
    %358 = arith.addf %354, %357 : vector<128x32xf32>
    %c0_179 = arith.constant 0 : index
    %c0_180 = arith.constant 0 : index
    %359 = vector.load %arg16[%c0_179, %c0_180] : memref<128x32xf32, #tpu.memory_space<vmem>>, vector<128x32xf32>
    tpu.vector_store %arg16[%c0_179, %c0_180], %358 {strides = array<i32>} : memref<128x32xf32, #tpu.memory_space<vmem>>, vector<128x32xf32>,
    return
  }
}

</mosaic_0001>

<llo_original>
// kernel: _lambda_.1
$region0: #{_lambda_.1}
  #allocation0 [shape = 'u32[]', space=smem, size = 0x4, offset = 0x4, fixed_abs, tag = 'smem constant byte address 0x4 - core index']
  #allocation1 [shape = 'u32[144,128]{1,0:T(1,128)}', space=vmem, size = 0x12000, scoped, tag = 'internal scratch']
  %s0 = inlined_call_operand.vmem [shape: f32[128,32], index: 0, kind: input, shape index: {}]
  %s1 = inlined_call_operand.vmem [shape: f32[2,128,128], index: 1, kind: input, shape index: {}]
  %s2 = inlined_call_operand.vmem [shape: f32[2,128,128], index: 2, kind: input, shape index: {}]
  %s3 = inlined_call_operand.vmem [shape: f32[2,2,8,16,16], index: 3, kind: input, shape index: {}]
  %s4 = inlined_call_operand.vmem [shape: f32[2,1,32], index: 4, kind: input, shape index: {}]
  %s5 = inlined_call_operand.vmem [shape: f32[2,1,32], index: 5, kind: input, shape index: {}]
  %s6 = inlined_call_operand.vmem [shape: f32[2,32,96], index: 6, kind: input, shape index: {}]
  %s7 = inlined_call_operand.vmem [shape: f32[2,1,96], index: 7, kind: input, shape index: {}]
  %s8 = inlined_call_operand.vmem [shape: f32[2,32,32], index: 8, kind: input, shape index: {}]
  %s9 = inlined_call_operand.vmem [shape: f32[2,1,32], index: 9, kind: input, shape index: {}]
  %s10 = inlined_call_operand.vmem [shape: f32[2,1,32], index: 10, kind: input, shape index: {}]
  %s11 = inlined_call_operand.vmem [shape: f32[2,1,32], index: 11, kind: input, shape index: {}]
  %s12 = inlined_call_operand.vmem [shape: f32[2,32,128], index: 12, kind: input, shape index: {}]
  %s13 = inlined_call_operand.vmem [shape: f32[2,1,128], index: 13, kind: input, shape index: {}]
  %s14 = inlined_call_operand.vmem [shape: f32[2,128,32], index: 14, kind: input, shape index: {}]
  %s15 = inlined_call_operand.vmem [shape: f32[2,1,32], index: 15, kind: input, shape index: {}]
  %s16 = inlined_call_operand.vmem [shape: f32[128,32], index: 16, kind: output, shape index: {}]
  %s17 = sld [smem:[#allocation0]]
  $region74: #{_lambda_.1} parent=0
    _
  %s19 = ssub.s32 1, %s17
  %s20 = scalar_select 0, %s19, %s17
  // Predicated region
  $region2: #{_lambda_.1} parent=0 // pred_check
    _
  $region3: #{_lambda_.1} parent=0 // pred_check_branch
    %22 = sbr.rel (0) target = $region5
  $region4: #{_lambda_.1} parent=0 // pred_region
    _
  $region5: #{_lambda_.1} parent=0 // pred_fallthru
    _
  // Predicated region
  $region6: #{_lambda_.1} parent=0 // pred_check
    _
  $region7: #{_lambda_.1} parent=0 // pred_check_branch
    %24 = sbr.rel (0) target = $region9
  $region8: #{_lambda_.1} parent=0 // pred_region
    _
  $region9: #{_lambda_.1} parent=0 // pred_fallthru
    _
  // Predicated region
  $region10: #{_lambda_.1} parent=0 // pred_check
    _
  $region11: #{_lambda_.1} parent=0 // pred_check_branch
    %26 = sbr.rel (0) target = $region13
  $region12: #{_lambda_.1} parent=0 // pred_region
    _
  $region13: #{_lambda_.1} parent=0 // pred_fallthru
    _
  // Predicated region
  $region14: #{_lambda_.1} parent=0 // pred_check
    _
  $region15: #{_lambda_.1} parent=0 // pred_check_branch
    %28 = sbr.rel (0) target = $region17
  $region16: #{_lambda_.1} parent=0 // pred_region
    _
  $region17: #{_lambda_.1} parent=0 // pred_fallthru
    _
  // Predicated region
  $region18: #{_lambda_.1} parent=0 // pred_check
    _
  $region19: #{_lambda_.1} parent=0 // pred_check_branch
    %30 = sbr.rel (0) target = $region21
  $region20: #{_lambda_.1} parent=0 // pred_region
    _
  $region21: #{_lambda_.1} parent=0 // pred_fallthru
    _
  // Predicated region
  $region22: #{_lambda_.1} parent=0 // pred_check
    _
  $region23: #{_lambda_.1} parent=0 // pred_check_branch
    %32 = sbr.rel (0) target = $region25
  $region24: #{_lambda_.1} parent=0 // pred_region
    _
  $region25: #{_lambda_.1} parent=0 // pred_fallthru
    _
  // Predicated region
  $region26: #{_lambda_.1} parent=0 // pred_check
    _
  $region27: #{_lambda_.1} parent=0 // pred_check_branch
    %34 = sbr.rel (0) target = $region29
  $region28: #{_lambda_.1} parent=0 // pred_region
    _
  $region29: #{_lambda_.1} parent=0 // pred_fallthru
    _
  // Predicated region
  $region30: #{_lambda_.1} parent=0 // pred_check
    _
  $region31: #{_lambda_.1} parent=0 // pred_check_branch
    %36 = sbr.rel (0) target = $region33
  $region32: #{_lambda_.1} parent=0 // pred_region
    _
  $region33: #{_lambda_.1} parent=0 // pred_fallthru
    _
  // Predicated region
  $region34: #{_lambda_.1} parent=0 // pred_check
    _
  $region35: #{_lambda_.1} parent=0 // pred_check_branch
    %38 = sbr.rel (0) target = $region37
  $region36: #{_lambda_.1} parent=0 // pred_region
    _
  $region37: #{_lambda_.1} parent=0 // pred_fallthru
    _
  // Predicated region
  $region38: #{_lambda_.1} parent=0 // pred_check
    _
  $region39: #{_lambda_.1} parent=0 // pred_check_branch
    %40 = sbr.rel (0) target = $region41
  $region40: #{_lambda_.1} parent=0 // pred_region
    _
  $region41: #{_lambda_.1} parent=0 // pred_fallthru
    _
  // Predicated region
  $region42: #{_lambda_.1} parent=0 // pred_check
    _
  $region43: #{_lambda_.1} parent=0 // pred_check_branch
    %42 = sbr.rel (0) target = $region45
  $region44: #{_lambda_.1} parent=0 // pred_region
    _
  $region45: #{_lambda_.1} parent=0 // pred_fallthru
    _
  // Predicated region
  $region46: #{_lambda_.1} parent=0 // pred_check
    _
  $region47: #{_lambda_.1} parent=0 // pred_check_branch
    %44 = sbr.rel (0) target = $region49
  $region48: #{_lambda_.1} parent=0 // pred_region
    _
  $region49: #{_lambda_.1} parent=0 // pred_fallthru
    _
  // Predicated region
  $region50: #{_lambda_.1} parent=0 // pred_check
    _
  $region51: #{_lambda_.1} parent=0 // pred_check_branch
    %46 = sbr.rel (0) target = $region53
  $region52: #{_lambda_.1} parent=0 // pred_region
    _
  $region53: #{_lambda_.1} parent=0 // pred_fallthru
    _
  // Predicated region
  $region54: #{_lambda_.1} parent=0 // pred_check
    _
  $region55: #{_lambda_.1} parent=0 // pred_check_branch
    %48 = sbr.rel (0) target = $region57
  $region56: #{_lambda_.1} parent=0 // pred_region
    _
  $region57: #{_lambda_.1} parent=0 // pred_fallthru
    _
  // Predicated region
  $region58: #{_lambda_.1} parent=0 // pred_check
    _
  $region59: #{_lambda_.1} parent=0 // pred_check_branch
    %50 = sbr.rel (0) target = $region61
  $region60: #{_lambda_.1} parent=0 // pred_region
    _
  $region61: #{_lambda_.1} parent=0 // pred_fallthru
    _
  // Predicated region
  $region62: #{_lambda_.1} parent=0 // pred_check
    _
  $region63: #{_lambda_.1} parent=0 // pred_check_branch
    %52 = sbr.rel (0) target = $region65
  $region64: #{_lambda_.1} parent=0 // pred_region
    _
  $region65: #{_lambda_.1} parent=0 // pred_fallthru
    _
  %v53 = vld [vmem:[%s0] sm:$0xff]
  %v54 = vld [vmem:[%s0 + $0x8] sm:$0xff]
  %v55 = vld [vmem:[%s0 + $0x10] sm:$0xff]
  %v56 = vld [vmem:[%s0 + $0x18] sm:$0xff]
  %v57 = vld [vmem:[%s0 + $0x20] sm:$0xff]
  %v58 = vld [vmem:[%s0 + $0x28] sm:$0xff]
  %v59 = vld [vmem:[%s0 + $0x30] sm:$0xff]
  %v60 = vld [vmem:[%s0 + $0x38] sm:$0xff]
  %v61 = vld [vmem:[%s0 + $0x40] sm:$0xff]
  %v62 = vld [vmem:[%s0 + $0x48] sm:$0xff]
  %v63 = vld [vmem:[%s0 + $0x50] sm:$0xff]
  %v64 = vld [vmem:[%s0 + $0x58] sm:$0xff]
  %v65 = vld [vmem:[%s0 + $0x60] sm:$0xff]
  %v66 = vld [vmem:[%s0 + $0x68] sm:$0xff]
  %v67 = vld [vmem:[%s0 + $0x70] sm:$0xff]
  %v68 = vld [vmem:[%s0 + $0x78] sm:$0xff]
  %v69 = vld [vmem:[%s4] sm:$0x1]
  %v70 = vld [vmem:[%s5] sm:$0x1]
  %vm71 = vcmask 261120
  %v72 = vsel %vm71, %v53, 0.0
  %73 = vadd.xlane.f32.xlu0 %v72
  %v74 = vpop.xlane.xlu0 %73
  %v75 = vsel %vm71, %v54, 0.0
  %76 = vadd.xlane.f32.xlu0 %v75
  %v77 = vpop.xlane.xlu0 %76
  %v78 = vsel %vm71, %v55, 0.0
  %79 = vadd.xlane.f32.xlu0 %v78
  %v80 = vpop.xlane.xlu0 %79
  %v81 = vsel %vm71, %v56, 0.0
  %82 = vadd.xlane.f32.xlu0 %v81
  %v83 = vpop.xlane.xlu0 %82
  %v84 = vsel %vm71, %v57, 0.0
  %85 = vadd.xlane.f32.xlu0 %v84
  %v86 = vpop.xlane.xlu0 %85
  %v87 = vsel %vm71, %v58, 0.0
  %88 = vadd.xlane.f32.xlu0 %v87
  %v89 = vpop.xlane.xlu0 %88
  %v90 = vsel %vm71, %v59, 0.0
  %91 = vadd.xlane.f32.xlu0 %v90
  %v92 = vpop.xlane.xlu0 %91
  %v93 = vsel %vm71, %v60, 0.0
  %94 = vadd.xlane.f32.xlu0 %v93
  %v95 = vpop.xlane.xlu0 %94
  %v96 = vsel %vm71, %v61, 0.0
  %97 = vadd.xlane.f32.xlu0 %v96
  %v98 = vpop.xlane.xlu0 %97
  %v99 = vsel %vm71, %v62, 0.0
  %100 = vadd.xlane.f32.xlu0 %v99
  %v101 = vpop.xlane.xlu0 %100
  %v102 = vsel %vm71, %v63, 0.0
  %103 = vadd.xlane.f32.xlu0 %v102
  %v104 = vpop.xlane.xlu0 %103
  %v105 = vsel %vm71, %v64, 0.0
  %106 = vadd.xlane.f32.xlu0 %v105
  %v107 = vpop.xlane.xlu0 %106
  %v108 = vsel %vm71, %v65, 0.0
  %109 = vadd.xlane.f32.xlu0 %v108
  %v110 = vpop.xlane.xlu0 %109
  %v111 = vsel %vm71, %v66, 0.0
  %112 = vadd.xlane.f32.xlu0 %v111
  %v113 = vpop.xlane.xlu0 %112
  %v114 = vsel %vm71, %v67, 0.0
  %115 = vadd.xlane.f32.xlu0 %v114
  %v116 = vpop.xlane.xlu0 %115
  %v117 = vsel %vm71, %v68, 0.0
  %118 = vadd.xlane.f32.xlu0 %v117
  %v119 = vpop.xlane.xlu0 %118
  %v120 = vrcp.pop 32.0
  %v121 = vmul.f32 %v74, %v120
  %v122 = vmul.f32 %v77, %v120
  %v123 = vmul.f32 %v80, %v120
  %v124 = vmul.f32 %v83, %v120
  %v125 = vmul.f32 %v86, %v120
  %v126 = vmul.f32 %v89, %v120
  %v127 = vmul.f32 %v92, %v120
  %v128 = vmul.f32 %v95, %v120
  %v129 = vmul.f32 %v98, %v120
  %v130 = vmul.f32 %v101, %v120
  %v131 = vmul.f32 %v104, %v120
  %v132 = vmul.f32 %v107, %v120
  %v133 = vmul.f32 %v110, %v120
  %v134 = vmul.f32 %v113, %v120
  %v135 = vmul.f32 %v116, %v120
  %v136 = vmul.f32 %v119, %v120
  %v137 = vsub.f32 %v53, %v121
  %v138 = vsub.f32 %v54, %v122
  %v139 = vsub.f32 %v55, %v123
  %v140 = vsub.f32 %v56, %v124
  %v141 = vsub.f32 %v57, %v125
  %v142 = vsub.f32 %v58, %v126
  %v143 = vsub.f32 %v59, %v127
  %v144 = vsub.f32 %v60, %v128
  %v145 = vsub.f32 %v61, %v129
  %v146 = vsub.f32 %v62, %v130
  %v147 = vsub.f32 %v63, %v131
  %v148 = vsub.f32 %v64, %v132
  %v149 = vsub.f32 %v65, %v133
  %v150 = vsub.f32 %v66, %v134
  %v151 = vsub.f32 %v67, %v135
  %v152 = vsub.f32 %v68, %v136
  %v153 = vmul.f32 %v137, %v137
  %v154 = vmul.f32 %v138, %v138
  %v155 = vmul.f32 %v139, %v139
  %v156 = vmul.f32 %v140, %v140
  %v157 = vmul.f32 %v141, %v141
  %v158 = vmul.f32 %v142, %v142
  %v159 = vmul.f32 %v143, %v143
  %v160 = vmul.f32 %v144, %v144
  %v161 = vmul.f32 %v145, %v145
  %v162 = vmul.f32 %v146, %v146
  %v163 = vmul.f32 %v147, %v147
  %v164 = vmul.f32 %v148, %v148
  %v165 = vmul.f32 %v149, %v149
  %v166 = vmul.f32 %v150, %v150
  %v167 = vmul.f32 %v151, %v151
  %v168 = vmul.f32 %v152, %v152
  %v169 = vsel %vm71, %v153, 0.0
  %170 = vadd.xlane.f32.xlu0 %v169
  %v171 = vpop.xlane.xlu0 %170
  %v172 = vsel %vm71, %v154, 0.0
  %173 = vadd.xlane.f32.xlu0 %v172
  %v174 = vpop.xlane.xlu0 %173
  %v175 = vsel %vm71, %v155, 0.0
  %176 = vadd.xlane.f32.xlu0 %v175
  %v177 = vpop.xlane.xlu0 %176
  %v178 = vsel %vm71, %v156, 0.0
  %179 = vadd.xlane.f32.xlu0 %v178
  %v180 = vpop.xlane.xlu0 %179
  %v181 = vsel %vm71, %v157, 0.0
  %182 = vadd.xlane.f32.xlu0 %v181
  %v183 = vpop.xlane.xlu0 %182
  %v184 = vsel %vm71, %v158, 0.0
  %185 = vadd.xlane.f32.xlu0 %v184
  %v186 = vpop.xlane.xlu0 %185
  %v187 = vsel %vm71, %v159, 0.0
  %188 = vadd.xlane.f32.xlu0 %v187
  %v189 = vpop.xlane.xlu0 %188
  %v190 = vsel %vm71, %v160, 0.0
  %191 = vadd.xlane.f32.xlu0 %v190
  %v192 = vpop.xlane.xlu0 %191
  %v193 = vsel %vm71, %v161, 0.0
  %194 = vadd.xlane.f32.xlu0 %v193
  %v195 = vpop.xlane.xlu0 %194
  %v196 = vsel %vm71, %v162, 0.0
  %197 = vadd.xlane.f32.xlu0 %v196
  %v198 = vpop.xlane.xlu0 %197
  %v199 = vsel %vm71, %v163, 0.0
  %200 = vadd.xlane.f32.xlu0 %v199
  %v201 = vpop.xlane.xlu0 %200
  %v202 = vsel %vm71, %v164, 0.0
  %203 = vadd.xlane.f32.xlu0 %v202
  %v204 = vpop.xlane.xlu0 %203
  %v205 = vsel %vm71, %v165, 0.0
  %206 = vadd.xlane.f32.xlu0 %v205
  %v207 = vpop.xlane.xlu0 %206
  %v208 = vsel %vm71, %v166, 0.0
  %209 = vadd.xlane.f32.xlu0 %v208
  %v210 = vpop.xlane.xlu0 %209
  %v211 = vsel %vm71, %v167, 0.0
  %212 = vadd.xlane.f32.xlu0 %v211
  %v213 = vpop.xlane.xlu0 %212
  %v214 = vsel %vm71, %v168, 0.0
  %215 = vadd.xlane.f32.xlu0 %v214
  %v216 = vpop.xlane.xlu0 %215
  %v217 = vmul.f32 %v171, %v120
  %v218 = vmul.f32 %v174, %v120
  %v219 = vmul.f32 %v177, %v120
  %v220 = vmul.f32 %v180, %v120
  %v221 = vmul.f32 %v183, %v120
  %v222 = vmul.f32 %v186, %v120
  %v223 = vmul.f32 %v189, %v120
  %v224 = vmul.f32 %v192, %v120
  %v225 = vmul.f32 %v195, %v120
  %v226 = vmul.f32 %v198, %v120
  %v227 = vmul.f32 %v201, %v120
  %v228 = vmul.f32 %v204, %v120
  %v229 = vmul.f32 %v207, %v120
  %v230 = vmul.f32 %v210, %v120
  %v231 = vmul.f32 %v213, %v120
  %v232 = vmul.f32 %v216, %v120
  %v233 = vadd.f32 %v217, 1e-05
  %v234 = vadd.f32 %v218, 1e-05
  %v235 = vadd.f32 %v219, 1e-05
  %v236 = vadd.f32 %v220, 1e-05
  %v237 = vadd.f32 %v221, 1e-05
  %v238 = vadd.f32 %v222, 1e-05
  %v239 = vadd.f32 %v223, 1e-05
  %v240 = vadd.f32 %v224, 1e-05
  %v241 = vadd.f32 %v225, 1e-05
  %v242 = vadd.f32 %v226, 1e-05
  %v243 = vadd.f32 %v227, 1e-05
  %v244 = vadd.f32 %v228, 1e-05
  %v245 = vadd.f32 %v229, 1e-05
  %v246 = vadd.f32 %v230, 1e-05
  %v247 = vadd.f32 %v231, 1e-05
  %v248 = vadd.f32 %v232, 1e-05
  %v249 = vrsqrt.pop %v233
  %v250 = vrsqrt.pop %v234
  %v251 = vrsqrt.pop %v235
  %v252 = vrsqrt.pop %v236
  %v253 = vrsqrt.pop %v237
  %v254 = vrsqrt.pop %v238
  %v255 = vrsqrt.pop %v239
  %v256 = vrsqrt.pop %v240
  %v257 = vrsqrt.pop %v241
  %v258 = vrsqrt.pop %v242
  %v259 = vrsqrt.pop %v243
  %v260 = vrsqrt.pop %v244
  %v261 = vrsqrt.pop %v245
  %v262 = vrsqrt.pop %v246
  %v263 = vrsqrt.pop %v247
  %v264 = vrsqrt.pop %v248
  %v265 = vmul.f32 %v137, %v249
  %v266 = vmul.f32 %v138, %v250
  %v267 = vmul.f32 %v139, %v251
  %v268 = vmul.f32 %v140, %v252
  %v269 = vmul.f32 %v141, %v253
  %v270 = vmul.f32 %v142, %v254
  %v271 = vmul.f32 %v143, %v255
  %v272 = vmul.f32 %v144, %v256
  %v273 = vmul.f32 %v145, %v257
  %v274 = vmul.f32 %v146, %v258
  %v275 = vmul.f32 %v147, %v259
  %v276 = vmul.f32 %v148, %v260
  %v277 = vmul.f32 %v149, %v261
  %v278 = vmul.f32 %v150, %v262
  %v279 = vmul.f32 %v151, %v263
  %v280 = vmul.f32 %v152, %v264
  %v282 = vlaneseq
  %v283 = vshrl.u32 %v282, 7
  %v284 = vsub.s32 0, %v283
  %v285 = vrot.slane %v69, %v284
  %v287 = vmul.f32 %v265, %v285
  %v288 = vmul.f32 %v266, %v285
  %v289 = vmul.f32 %v267, %v285
  %v290 = vmul.f32 %v268, %v285
  %v291 = vmul.f32 %v269, %v285
  %v292 = vmul.f32 %v270, %v285
  %v293 = vmul.f32 %v271, %v285
  %v294 = vmul.f32 %v272, %v285
  %v295 = vmul.f32 %v273, %v285
  %v296 = vmul.f32 %v274, %v285
  %v297 = vmul.f32 %v275, %v285
  %v298 = vmul.f32 %v276, %v285
  %v299 = vmul.f32 %v277, %v285
  %v300 = vmul.f32 %v278, %v285
  %v301 = vmul.f32 %v279, %v285
  %v302 = vmul.f32 %v280, %v285
  %v304 = vlaneseq
  %v305 = vshrl.u32 %v304, 7
  %v306 = vsub.s32 0, %v305
  %v307 = vrot.slane %v70, %v306
  %v309 = vadd.f32 %v287, %v307
  %v310 = vadd.f32 %v288, %v307
  %v311 = vadd.f32 %v289, %v307
  %v312 = vadd.f32 %v290, %v307
  %v313 = vadd.f32 %v291, %v307
  %v314 = vadd.f32 %v292, %v307
  %v315 = vadd.f32 %v293, %v307
  %v316 = vadd.f32 %v294, %v307
  %v317 = vadd.f32 %v295, %v307
  %v318 = vadd.f32 %v296, %v307
  %v319 = vadd.f32 %v297, %v307
  %v320 = vadd.f32 %v298, %v307
  %v321 = vadd.f32 %v299, %v307
  %v322 = vadd.f32 %v300, %v307
  %v323 = vadd.f32 %v301, %v307
  %v324 = vadd.f32 %v302, %v307
  %v325 = vld [vmem:[%s1] sm:$0xff]
  %v326 = vld [vmem:[%s1 + $0x8] sm:$0xff]
  %v327 = vld [vmem:[%s1 + $0x10] sm:$0xff]
  %v328 = vld [vmem:[%s1 + $0x18] sm:$0xff]
  %v329 = vld [vmem:[%s1 + $0x20] sm:$0xff]
  %v330 = vld [vmem:[%s1 + $0x28] sm:$0xff]
  %v331 = vld [vmem:[%s1 + $0x30] sm:$0xff]
  %v332 = vld [vmem:[%s1 + $0x38] sm:$0xff]
  %v333 = vld [vmem:[%s1 + $0x40] sm:$0xff]
  %v334 = vld [vmem:[%s1 + $0x48] sm:$0xff]
  %v335 = vld [vmem:[%s1 + $0x50] sm:$0xff]
  %v336 = vld [vmem:[%s1 + $0x58] sm:$0xff]
  %v337 = vld [vmem:[%s1 + $0x60] sm:$0xff]
  %v338 = vld [vmem:[%s1 + $0x68] sm:$0xff]
  %v339 = vld [vmem:[%s1 + $0x70] sm:$0xff]
  %v340 = vld [vmem:[%s1 + $0x78] sm:$0xff]
  %341 = vmatprep.subr.mxu0 0.0
  %342 = vmatpush1.msra.mxu0 %v324
  %343 = vmatprep.subr.mxu0 0.0
  %344 = vmatpush1.msra.mxu0 %v323
  %345 = vmatprep.subr.mxu0 0.0
  %346 = vmatpush1.msra.mxu0 %v322
  %347 = vmatprep.subr.mxu0 0.0
  %348 = vmatpush1.msra.mxu0 %v321
  %349 = vmatprep.subr.mxu0 0.0
  %350 = vmatpush1.msra.mxu0 %v320
  %351 = vmatprep.subr.mxu0 0.0
  %352 = vmatpush1.msra.mxu0 %v319
  %353 = vmatprep.subr.mxu0 0.0
  %354 = vmatpush1.msra.mxu0 %v318
  %355 = vmatprep.subr.mxu0 0.0
  %356 = vmatpush1.msra.mxu0 %v317
  %357 = vmatprep.subr.mxu0 0.0
  %358 = vmatpush1.msra.mxu0 %v316
  %359 = vmatprep.subr.mxu0 0.0
  %360 = vmatpush1.msra.mxu0 %v315
  %361 = vmatprep.subr.mxu0 0.0
  %362 = vmatpush1.msra.mxu0 %v314
  %363 = vmatprep.subr.mxu0 0.0
  %364 = vmatpush1.msra.mxu0 %v313
  %365 = vmatprep.subr.mxu0 0.0
  %366 = vmatpush1.msra.mxu0 %v312
  %367 = vmatprep.subr.mxu0 0.0
  %368 = vmatpush1.msra.mxu0 %v311
  %369 = vmatprep.subr.mxu0 0.0
  %370 = vmatpush1.msra.mxu0 %v310
  %371 = vmatprep.subr.mxu0 0.0
  %372 = vmatpush1.msra.mxu0 %v309
  %373 = vmatprep.subr.mxu0 0.0
  %374 = vmatpush2.msra.mxu0 0.0
  %375 = vmatprep.subr.mxu0 0.0
  %376 = vmatpush2.msra.mxu0 0.0
  %377 = vmatprep.subr.mxu0 0.0
  %378 = vmatpush2.msra.mxu0 0.0
  %379 = vmatprep.subr.mxu0 0.0
  %380 = vmatpush2.msra.mxu0 0.0
  %381 = vmatprep.subr.mxu0 0.0
  %382 = vmatpush2.msra.mxu0 0.0
  %383 = vmatprep.subr.mxu0 0.0
  %384 = vmatpush2.msra.mxu0 0.0
  %385 = vmatprep.subr.mxu0 0.0
  %386 = vmatpush2.msra.mxu0 0.0
  %387 = vmatprep.subr.mxu0 0.0
  %388 = vmatpush2.msra.mxu0 0.0
  %389 = vmatprep.subr.mxu0 0.0
  %390 = vmatpush2.msra.mxu0 0.0
  %391 = vmatprep.subr.mxu0 0.0
  %392 = vmatpush2.msra.mxu0 0.0
  %393 = vmatprep.subr.mxu0 0.0
  %394 = vmatpush2.msra.mxu0 0.0
  %395 = vmatprep.subr.mxu0 0.0
  %396 = vmatpush2.msra.mxu0 0.0
  %397 = vmatprep.subr.mxu0 0.0
  %398 = vmatpush2.msra.mxu0 0.0
  %399 = vmatprep.subr.mxu0 0.0
  %400 = vmatpush2.msra.mxu0 0.0
  %401 = vmatprep.subr.mxu0 0.0
  %402 = vmatpush2.msra.mxu0 0.0
  %403 = vmatprep.subr.mxu0 0.0
  %404 = vmatpush2.msra.mxu0 0.0
  %405 = vmatprep.mubr.f32.mxu0 0.0
  %406 = vmatmul.mubr.f32.gmra.mxu0 %v325
  %v407 = vpop.f32.mrf.mxu0
  %v408 = vadd.f32 0.0, %v407
  %v409 = vpop.f32.mrf.mxu0
  %410 = vmatprep.mubr.f32.mxu0 0.0
  %411 = vmatmul.mubr.f32.gmra.mxu0 %v326
  %v412 = vpop.f32.mrf.mxu0
  %v413 = vadd.f32 0.0, %v412
  %v414 = vpop.f32.mrf.mxu0
  %415 = vmatprep.mubr.f32.mxu0 0.0
  %416 = vmatmul.mubr.f32.gmra.mxu0 %v327
  %v417 = vpop.f32.mrf.mxu0
  %v418 = vadd.f32 0.0, %v417
  %v419 = vpop.f32.mrf.mxu0
  %420 = vmatprep.mubr.f32.mxu0 0.0
  %421 = vmatmul.mubr.f32.gmra.mxu0 %v328
  %v422 = vpop.f32.mrf.mxu0
  %v423 = vadd.f32 0.0, %v422
  %v424 = vpop.f32.mrf.mxu0
  %425 = vmatprep.mubr.f32.mxu0 0.0
  %426 = vmatmul.mubr.f32.gmra.mxu0 %v329
  %v427 = vpop.f32.mrf.mxu0
  %v428 = vadd.f32 0.0, %v427
  %v429 = vpop.f32.mrf.mxu0
  %430 = vmatprep.mubr.f32.mxu0 0.0
  %431 = vmatmul.mubr.f32.gmra.mxu0 %v330
  %v432 = vpop.f32.mrf.mxu0
  %v433 = vadd.f32 0.0, %v432
  %v434 = vpop.f32.mrf.mxu0
  %435 = vmatprep.mubr.f32.mxu0 0.0
  %436 = vmatmul.mubr.f32.gmra.mxu0 %v331
  %v437 = vpop.f32.mrf.mxu0
  %v438 = vadd.f32 0.0, %v437
  %v439 = vpop.f32.mrf.mxu0
  %440 = vmatprep.mubr.f32.mxu0 0.0
  %441 = vmatmul.mubr.f32.gmra.mxu0 %v332
  %v442 = vpop.f32.mrf.mxu0
  %v443 = vadd.f32 0.0, %v442
  %v444 = vpop.f32.mrf.mxu0
  %445 = vmatprep.mubr.f32.mxu0 0.0
  %446 = vmatmul.mubr.f32.gmra.mxu0 %v333
  %v447 = vpop.f32.mrf.mxu0
  %v448 = vadd.f32 0.0, %v447
  %v449 = vpop.f32.mrf.mxu0
  %450 = vmatprep.mubr.f32.mxu0 0.0
  %451 = vmatmul.mubr.f32.gmra.mxu0 %v334
  %v452 = vpop.f32.mrf.mxu0
  %v453 = vadd.f32 0.0, %v452
  %v454 = vpop.f32.mrf.mxu0
  %455 = vmatprep.mubr.f32.mxu0 0.0
  %456 = vmatmul.mubr.f32.gmra.mxu0 %v335
  %v457 = vpop.f32.mrf.mxu0
  %v458 = vadd.f32 0.0, %v457
  %v459 = vpop.f32.mrf.mxu0
  %460 = vmatprep.mubr.f32.mxu0 0.0
  %461 = vmatmul.mubr.f32.gmra.mxu0 %v336
  %v462 = vpop.f32.mrf.mxu0
  %v463 = vadd.f32 0.0, %v462
  %v464 = vpop.f32.mrf.mxu0
  %465 = vmatprep.mubr.f32.mxu0 0.0
  %466 = vmatmul.mubr.f32.gmra.mxu0 %v337
  %v467 = vpop.f32.mrf.mxu0
  %v468 = vadd.f32 0.0, %v467
  %v469 = vpop.f32.mrf.mxu0
  %470 = vmatprep.mubr.f32.mxu0 0.0
  %471 = vmatmul.mubr.f32.gmra.mxu0 %v338
  %v472 = vpop.f32.mrf.mxu0
  %v473 = vadd.f32 0.0, %v472
  %v474 = vpop.f32.mrf.mxu0
  %475 = vmatprep.mubr.f32.mxu0 0.0
  %476 = vmatmul.mubr.f32.gmra.mxu0 %v339
  %v477 = vpop.f32.mrf.mxu0
  %v478 = vadd.f32 0.0, %v477
  %v479 = vpop.f32.mrf.mxu0
  %480 = vmatprep.mubr.f32.mxu0 0.0
  %481 = vmatmul.mubr.f32.gmra.mxu0 %v340
  %v482 = vpop.f32.mrf.mxu0
  %v483 = vadd.f32 0.0, %v482
  %v484 = vpop.f32.mrf.mxu0
  %485 = vdwg.mxu0
  %v486 = vld [vmem:[%s6] sm:$0xff]
  %v487 = vld [vmem:[%s6 + $0x8] sm:$0xff]
  %v488 = vld [vmem:[%s6 + $0x10] sm:$0xff]
  %v489 = vld [vmem:[%s6 + $0x18] sm:$0xff]
  %v490 = vld [vmem:[%s7] sm:$0x1]
  %v492 = vlaneseq
  %v493 = vshrl.u32 %v492, 7
  %v494 = vsub.s32 0, %v493
  %v495 = vrot.slane %v490, %v494
  %v498 = vsel %vm71, %v408, 0
  %v501 = vsel %vm71, %v413, 0
  %v504 = vsel %vm71, %v418, 0
  %v507 = vsel %vm71, %v423, 0
  %v510 = vsel %vm71, %v428, 0
  %v513 = vsel %vm71, %v433, 0
  %v516 = vsel %vm71, %v438, 0
  %v519 = vsel %vm71, %v443, 0
  %v522 = vsel %vm71, %v448, 0
  %v525 = vsel %vm71, %v453, 0
  %v528 = vsel %vm71, %v458, 0
  %v531 = vsel %vm71, %v463, 0
  %v534 = vsel %vm71, %v468, 0
  %v537 = vsel %vm71, %v473, 0
  %v540 = vsel %vm71, %v478, 0
  %v543 = vsel %vm71, %v483, 0
  %545 = vmatprep.subr.mxu0 0.0
  %546 = vmatpush1.msra.mxu0 0.0
  %547 = vmatprep.subr.mxu0 0.0
  %548 = vmatpush1.msra.mxu0 0.0
  %549 = vmatprep.subr.mxu0 0.0
  %550 = vmatpush1.msra.mxu0 0.0
  %551 = vmatprep.subr.mxu0 0.0
  %552 = vmatpush1.msra.mxu0 0.0
  %553 = vmatprep.subr.mxu0 0.0
  %554 = vmatpush1.msra.mxu0 0.0
  %555 = vmatprep.subr.mxu0 0.0
  %556 = vmatpush1.msra.mxu0 0.0
  %557 = vmatprep.subr.mxu0 0.0
  %558 = vmatpush1.msra.mxu0 0.0
  %559 = vmatprep.subr.mxu0 0.0
  %560 = vmatpush1.msra.mxu0 0.0
  %561 = vmatprep.subr.mxu0 0.0
  %562 = vmatpush1.msra.mxu0 0.0
  %563 = vmatprep.subr.mxu0 0.0
  %564 = vmatpush1.msra.mxu0 0.0
  %565 = vmatprep.subr.mxu0 0.0
  %566 = vmatpush1.msra.mxu0 0.0
  %567 = vmatprep.subr.mxu0 0.0
  %568 = vmatpush1.msra.mxu0 0.0
  %569 = vmatprep.subr.mxu0 0.0
  %570 = vmatpush1.msra.mxu0 %v489
  %571 = vmatprep.subr.mxu0 0.0
  %572 = vmatpush1.msra.mxu0 %v488
  %573 = vmatprep.subr.mxu0 0.0
  %574 = vmatpush1.msra.mxu0 %v487
  %575 = vmatprep.subr.mxu0 0.0
  %576 = vmatpush1.msra.mxu0 %v486
  %577 = vmatprep.subr.mxu0 0.0
  %578 = vmatpush2.msra.mxu0 0.0
  %579 = vmatprep.subr.mxu0 0.0
  %580 = vmatpush2.msra.mxu0 0.0
  %581 = vmatprep.subr.mxu0 0.0
  %582 = vmatpush2.msra.mxu0 0.0
  %583 = vmatprep.subr.mxu0 0.0
  %584 = vmatpush2.msra.mxu0 0.0
  %585 = vmatprep.subr.mxu0 0.0
  %586 = vmatpush2.msra.mxu0 0.0
  %587 = vmatprep.subr.mxu0 0.0
  %588 = vmatpush2.msra.mxu0 0.0
  %589 = vmatprep.subr.mxu0 0.0
  %590 = vmatpush2.msra.mxu0 0.0
  %591 = vmatprep.subr.mxu0 0.0
  %592 = vmatpush2.msra.mxu0 0.0
  %593 = vmatprep.subr.mxu0 0.0
  %594 = vmatpush2.msra.mxu0 0.0
  %595 = vmatprep.subr.mxu0 0.0
  %596 = vmatpush2.msra.mxu0 0.0
  %597 = vmatprep.subr.mxu0 0.0
  %598 = vmatpush2.msra.mxu0 0.0
  %599 = vmatprep.subr.mxu0 0.0
  %600 = vmatpush2.msra.mxu0 0.0
  %601 = vmatprep.subr.mxu0 0.0
  %602 = vmatpush2.msra.mxu0 0.0
  %603 = vmatprep.subr.mxu0 0.0
  %604 = vmatpush2.msra.mxu0 0.0
  %605 = vmatprep.subr.mxu0 0.0
  %606 = vmatpush2.msra.mxu0 0.0
  %607 = vmatprep.subr.mxu0 0.0
  %608 = vmatpush2.msra.mxu0 0.0
  %609 = vmatprep.mubr.f32.mxu0 0.0
  %610 = vmatmul.mubr.f32.gmra.mxu0 %v498
  %v611 = vpop.f32.mrf.mxu0
  %v612 = vadd.f32 %v495, %v611
  %v613 = vpop.f32.mrf.mxu0
  %614 = vmatprep.mubr.f32.mxu0 0.0
  %615 = vmatmul.mubr.f32.gmra.mxu0 %v501
  %v616 = vpop.f32.mrf.mxu0
  %v617 = vadd.f32 %v495, %v616
  %v618 = vpop.f32.mrf.mxu0
  %619 = vmatprep.mubr.f32.mxu0 0.0
  %620 = vmatmul.mubr.f32.gmra.mxu0 %v504
  %v621 = vpop.f32.mrf.mxu0
  %v622 = vadd.f32 %v495, %v621
  %v623 = vpop.f32.mrf.mxu0
  %624 = vmatprep.mubr.f32.mxu0 0.0
  %625 = vmatmul.mubr.f32.gmra.mxu0 %v507
  %v626 = vpop.f32.mrf.mxu0
  %v627 = vadd.f32 %v495, %v626
  %v628 = vpop.f32.mrf.mxu0
  %629 = vmatprep.mubr.f32.mxu0 0.0
  %630 = vmatmul.mubr.f32.gmra.mxu0 %v510
  %v631 = vpop.f32.mrf.mxu0
  %v632 = vadd.f32 %v495, %v631
  %v633 = vpop.f32.mrf.mxu0
  %634 = vmatprep.mubr.f32.mxu0 0.0
  %635 = vmatmul.mubr.f32.gmra.mxu0 %v513
  %v636 = vpop.f32.mrf.mxu0
  %v637 = vadd.f32 %v495, %v636
  %v638 = vpop.f32.mrf.mxu0
  %639 = vmatprep.mubr.f32.mxu0 0.0
  %640 = vmatmul.mubr.f32.gmra.mxu0 %v516
  %v641 = vpop.f32.mrf.mxu0
  %v642 = vadd.f32 %v495, %v641
  %v643 = vpop.f32.mrf.mxu0
  %644 = vmatprep.mubr.f32.mxu0 0.0
  %645 = vmatmul.mubr.f32.gmra.mxu0 %v519
  %v646 = vpop.f32.mrf.mxu0
  %v647 = vadd.f32 %v495, %v646
  %v648 = vpop.f32.mrf.mxu0
  %649 = vmatprep.mubr.f32.mxu0 0.0
  %650 = vmatmul.mubr.f32.gmra.mxu0 %v522
  %v651 = vpop.f32.mrf.mxu0
  %v652 = vadd.f32 %v495, %v651
  %v653 = vpop.f32.mrf.mxu0
  %654 = vmatprep.mubr.f32.mxu0 0.0
  %655 = vmatmul.mubr.f32.gmra.mxu0 %v525
  %v656 = vpop.f32.mrf.mxu0
  %v657 = vadd.f32 %v495, %v656
  %v658 = vpop.f32.mrf.mxu0
  %659 = vmatprep.mubr.f32.mxu0 0.0
  %660 = vmatmul.mubr.f32.gmra.mxu0 %v528
  %v661 = vpop.f32.mrf.mxu0
  %v662 = vadd.f32 %v495, %v661
  %v663 = vpop.f32.mrf.mxu0
  %664 = vmatprep.mubr.f32.mxu0 0.0
  %665 = vmatmul.mubr.f32.gmra.mxu0 %v531
  %v666 = vpop.f32.mrf.mxu0
  %v667 = vadd.f32 %v495, %v666
  %v668 = vpop.f32.mrf.mxu0
  %669 = vmatprep.mubr.f32.mxu0 0.0
  %670 = vmatmul.mubr.f32.gmra.mxu0 %v534
  %v671 = vpop.f32.mrf.mxu0
  %v672 = vadd.f32 %v495, %v671
  %v673 = vpop.f32.mrf.mxu0
  %674 = vmatprep.mubr.f32.mxu0 0.0
  %675 = vmatmul.mubr.f32.gmra.mxu0 %v537
  %v676 = vpop.f32.mrf.mxu0
  %v677 = vadd.f32 %v495, %v676
  %v678 = vpop.f32.mrf.mxu0
  %679 = vmatprep.mubr.f32.mxu0 0.0
  %680 = vmatmul.mubr.f32.gmra.mxu0 %v540
  %v681 = vpop.f32.mrf.mxu0
  %v682 = vadd.f32 %v495, %v681
  %v683 = vpop.f32.mrf.mxu0
  %684 = vmatprep.mubr.f32.mxu0 0.0
  %685 = vmatmul.mubr.f32.gmra.mxu0 %v543
  %v686 = vpop.f32.mrf.mxu0
  %v687 = vadd.f32 %v495, %v686
  %v688 = vpop.f32.mrf.mxu0
  %689 = vdwg.mxu0
  %v690 = vld [vmem:[%s3] sm:$0xff]
  %v691 = vld [vmem:[%s3 + $0x8] sm:$0xff]
  %v692 = vld [vmem:[%s3 + $0x10] sm:$0xff]
  %v693 = vld [vmem:[%s3 + $0x18] sm:$0xff]
  %v694 = vld [vmem:[%s3 + $0x20] sm:$0xff]
  %v695 = vld [vmem:[%s3 + $0x28] sm:$0xff]
  %v696 = vld [vmem:[%s3 + $0x30] sm:$0xff]
  %v697 = vld [vmem:[%s3 + $0x38] sm:$0xff]
  %v698 = vld [vmem:[%s3 + $0x40] sm:$0xff]
  %v699 = vld [vmem:[%s3 + $0x48] sm:$0xff]
  %v700 = vld [vmem:[%s3 + $0x50] sm:$0xff]
  %v701 = vld [vmem:[%s3 + $0x58] sm:$0xff]
  %v702 = vld [vmem:[%s3 + $0x60] sm:$0xff]
  %v703 = vld [vmem:[%s3 + $0x68] sm:$0xff]
  %v704 = vld [vmem:[%s3 + $0x70] sm:$0xff]
  %v705 = vld [vmem:[%s3 + $0x78] sm:$0xff]
  %v706 = vld [vmem:[%s3 + $0x80] sm:$0xff]
  %v707 = vld [vmem:[%s3 + $0x88] sm:$0xff]
  %v708 = vld [vmem:[%s3 + $0x90] sm:$0xff]
  %v709 = vld [vmem:[%s3 + $0x98] sm:$0xff]
  %v710 = vld [vmem:[%s3 + $0xa0] sm:$0xff]
  %v711 = vld [vmem:[%s3 + $0xa8] sm:$0xff]
  %v712 = vld [vmem:[%s3 + $0xb0] sm:$0xff]
  %v713 = vld [vmem:[%s3 + $0xb8] sm:$0xff]
  %v714 = vld [vmem:[%s3 + $0xc0] sm:$0xff]
  %v715 = vld [vmem:[%s3 + $0xc8] sm:$0xff]
  %v716 = vld [vmem:[%s3 + $0xd0] sm:$0xff]
  %v717 = vld [vmem:[%s3 + $0xd8] sm:$0xff]
  %v718 = vld [vmem:[%s3 + $0xe0] sm:$0xff]
  %v719 = vld [vmem:[%s3 + $0xe8] sm:$0xff]
  %v720 = vld [vmem:[%s3 + $0xf0] sm:$0xff]
  %v721 = vld [vmem:[%s3 + $0xf8] sm:$0xff]
  %v722 = vld [vmem:[%s8] sm:$0xff]
  %v723 = vld [vmem:[%s8 + $0x8] sm:$0xff]
  %v724 = vld [vmem:[%s8 + $0x10] sm:$0xff]
  %v725 = vld [vmem:[%s8 + $0x18] sm:$0xff]
  %v726 = vmul.f32 %v612, 0.25
  %v727 = vmul.f32 %v617, 0.25
  %v728 = vmul.f32 %v622, 0.25
  %v729 = vmul.f32 %v627, 0.25
  %v730 = vmul.f32 %v632, 0.25
  %v731 = vmul.f32 %v637, 0.25
  %v732 = vmul.f32 %v642, 0.25
  %v733 = vmul.f32 %v647, 0.25
  %v734 = vmul.f32 %v652, 0.25
  %v735 = vmul.f32 %v657, 0.25
  %v736 = vmul.f32 %v662, 0.25
  %v737 = vmul.f32 %v667, 0.25
  %v738 = vmul.f32 %v672, 0.25
  %v739 = vmul.f32 %v677, 0.25
  %v740 = vmul.f32 %v682, 0.25
  %v741 = vmul.f32 %v687, 0.25
  %744 = vrot.lane.b32.xlu0 %v612, 96
  %v745 = vpop.permute.xlu0 %744
  %746 = vrot.lane.b32.xlu0 %v617, 96
  %v747 = vpop.permute.xlu0 %746
  %vm748 = vcmask 130048
  %v750 = vsel %vm748, %v726, 0
  %v753 = vsel %vm748, %v727, 0
  %v755 = vsel %vm748, %v745, 0
  %v757 = vsel %vm748, %v747, 0
  %759 = vmatprep.subr.mxu0 0.0
  %760 = vmatpush1.xpose.msra.mxu0 0.0
  %761 = vmatprep.subr.mxu0 0.0
  %762 = vmatpush1.xpose.msra.mxu0 0.0
  %763 = vmatprep.subr.mxu0 0.0
  %764 = vmatpush1.xpose.msra.mxu0 0.0
  %765 = vmatprep.subr.mxu0 0.0
  %766 = vmatpush1.xpose.msra.mxu0 0.0
  %767 = vmatprep.subr.mxu0 0.0
  %768 = vmatpush1.xpose.msra.mxu0 0.0
  %769 = vmatprep.subr.mxu0 0.0
  %770 = vmatpush1.xpose.msra.mxu0 0.0
  %771 = vmatprep.subr.mxu0 0.0
  %772 = vmatpush1.xpose.msra.mxu0 0.0
  %773 = vmatprep.subr.mxu0 0.0
  %774 = vmatpush1.xpose.msra.mxu0 0.0
  %775 = vmatprep.subr.mxu0 0.0
  %776 = vmatpush1.xpose.msra.mxu0 0.0
  %777 = vmatprep.subr.mxu0 0.0
  %778 = vmatpush1.xpose.msra.mxu0 0.0
  %779 = vmatprep.subr.mxu0 0.0
  %780 = vmatpush1.xpose.msra.mxu0 0.0
  %781 = vmatprep.subr.mxu0 0.0
  %782 = vmatpush1.xpose.msra.mxu0 0.0
  %783 = vmatprep.subr.mxu0 0.0
  %784 = vmatpush1.xpose.msra.mxu0 0.0
  %785 = vmatprep.subr.mxu0 0.0
  %786 = vmatpush1.xpose.msra.mxu0 0.0
  %787 = vmatprep.subr.mxu0 0.0
  %788 = vmatpush1.xpose.msra.mxu0 %v757
  %789 = vmatprep.subr.mxu0 0.0
  %790 = vmatpush1.xpose.msra.mxu0 %v755
  %791 = vmatprep.subr.mxu0 0.0
  %792 = vmatpush2.xpose.msra.mxu0 0.0
  %793 = vmatprep.subr.mxu0 0.0
  %794 = vmatpush2.xpose.msra.mxu0 0.0
  %795 = vmatprep.subr.mxu0 0.0
  %796 = vmatpush2.xpose.msra.mxu0 0.0
  %797 = vmatprep.subr.mxu0 0.0
  %798 = vmatpush2.xpose.msra.mxu0 0.0
  %799 = vmatprep.subr.mxu0 0.0
  %800 = vmatpush2.xpose.msra.mxu0 0.0
  %801 = vmatprep.subr.mxu0 0.0
  %802 = vmatpush2.xpose.msra.mxu0 0.0
  %803 = vmatprep.subr.mxu0 0.0
  %804 = vmatpush2.xpose.msra.mxu0 0.0
  %805 = vmatprep.subr.mxu0 0.0
  %806 = vmatpush2.xpose.msra.mxu0 0.0
  %807 = vmatprep.subr.mxu0 0.0
  %808 = vmatpush2.xpose.msra.mxu0 0.0
  %809 = vmatprep.subr.mxu0 0.0
  %810 = vmatpush2.xpose.msra.mxu0 0.0
  %811 = vmatprep.subr.mxu0 0.0
  %812 = vmatpush2.xpose.msra.mxu0 0.0
  %813 = vmatprep.subr.mxu0 0.0
  %814 = vmatpush2.xpose.msra.mxu0 0.0
  %815 = vmatprep.subr.mxu0 0.0
  %816 = vmatpush2.xpose.msra.mxu0 0.0
  %817 = vmatprep.subr.mxu0 0.0
  %818 = vmatpush2.xpose.msra.mxu0 0.0
  %819 = vmatprep.subr.mxu0 0.0
  %820 = vmatpush2.xpose.msra.mxu0 0.0
  %821 = vmatprep.subr.mxu0 0.0
  %822 = vmatpush2.xpose.msra.mxu0 0.0
  %823 = vmatprep.mubr.f32.mxu0 0.0
  %824 = vmatmul.mubr.f32.gmra.mxu0 %v750
  %v825 = vpop.f32.mrf.mxu0
  %v826 = vadd.f32 %v690, %v825
  %v827 = vpop.f32.mrf.mxu0
  %828 = vmatprep.mubr.f32.mxu0 0.0
  %829 = vmatmul.mubr.f32.gmra.mxu0 %v753
  %v830 = vpop.f32.mrf.mxu0
  %v831 = vadd.f32 %v691, %v830
  %v832 = vpop.f32.mrf.mxu0
  %833 = vdwg.mxu0
  %836 = vrot.lane.b32.xlu0 %v622, 96
  %v837 = vpop.permute.xlu0 %836
  %838 = vrot.lane.b32.xlu0 %v627, 96
  %v839 = vpop.permute.xlu0 %838
  %v841 = vsel %vm748, %v728, 0
  %v844 = vsel %vm748, %v729, 0
  %v846 = vsel %vm748, %v837, 0
  %v848 = vsel %vm748, %v839, 0
  %850 = vmatprep.subr.mxu0 0.0
  %851 = vmatpush1.xpose.msra.mxu0 0.0
  %852 = vmatprep.subr.mxu0 0.0
  %853 = vmatpush1.xpose.msra.mxu0 0.0
  %854 = vmatprep.subr.mxu0 0.0
  %855 = vmatpush1.xpose.msra.mxu0 0.0
  %856 = vmatprep.subr.mxu0 0.0
  %857 = vmatpush1.xpose.msra.mxu0 0.0
  %858 = vmatprep.subr.mxu0 0.0
  %859 = vmatpush1.xpose.msra.mxu0 0.0
  %860 = vmatprep.subr.mxu0 0.0
  %861 = vmatpush1.xpose.msra.mxu0 0.0
  %862 = vmatprep.subr.mxu0 0.0
  %863 = vmatpush1.xpose.msra.mxu0 0.0
  %864 = vmatprep.subr.mxu0 0.0
  %865 = vmatpush1.xpose.msra.mxu0 0.0
  %866 = vmatprep.subr.mxu0 0.0
  %867 = vmatpush1.xpose.msra.mxu0 0.0
  %868 = vmatprep.subr.mxu0 0.0
  %869 = vmatpush1.xpose.msra.mxu0 0.0
  %870 = vmatprep.subr.mxu0 0.0
  %871 = vmatpush1.xpose.msra.mxu0 0.0
  %872 = vmatprep.subr.mxu0 0.0
  %873 = vmatpush1.xpose.msra.mxu0 0.0
  %874 = vmatprep.subr.mxu0 0.0
  %875 = vmatpush1.xpose.msra.mxu0 0.0
  %876 = vmatprep.subr.mxu0 0.0
  %877 = vmatpush1.xpose.msra.mxu0 0.0
  %878 = vmatprep.subr.mxu0 0.0
  %879 = vmatpush1.xpose.msra.mxu0 %v848
  %880 = vmatprep.subr.mxu0 0.0
  %881 = vmatpush1.xpose.msra.mxu0 %v846
  %882 = vmatprep.subr.mxu0 0.0
  %883 = vmatpush2.xpose.msra.mxu0 0.0
  %884 = vmatprep.subr.mxu0 0.0
  %885 = vmatpush2.xpose.msra.mxu0 0.0
  %886 = vmatprep.subr.mxu0 0.0
  %887 = vmatpush2.xpose.msra.mxu0 0.0
  %888 = vmatprep.subr.mxu0 0.0
  %889 = vmatpush2.xpose.msra.mxu0 0.0
  %890 = vmatprep.subr.mxu0 0.0
  %891 = vmatpush2.xpose.msra.mxu0 0.0
  %892 = vmatprep.subr.mxu0 0.0
  %893 = vmatpush2.xpose.msra.mxu0 0.0
  %894 = vmatprep.subr.mxu0 0.0
  %895 = vmatpush2.xpose.msra.mxu0 0.0
  %896 = vmatprep.subr.mxu0 0.0
  %897 = vmatpush2.xpose.msra.mxu0 0.0
  %898 = vmatprep.subr.mxu0 0.0
  %899 = vmatpush2.xpose.msra.mxu0 0.0
  %900 = vmatprep.subr.mxu0 0.0
  %901 = vmatpush2.xpose.msra.mxu0 0.0
  %902 = vmatprep.subr.mxu0 0.0
  %903 = vmatpush2.xpose.msra.mxu0 0.0
  %904 = vmatprep.subr.mxu0 0.0
  %905 = vmatpush2.xpose.msra.mxu0 0.0
  %906 = vmatprep.subr.mxu0 0.0
  %907 = vmatpush2.xpose.msra.mxu0 0.0
  %908 = vmatprep.subr.mxu0 0.0
  %909 = vmatpush2.xpose.msra.mxu0 0.0
  %910 = vmatprep.subr.mxu0 0.0
  %911 = vmatpush2.xpose.msra.mxu0 0.0
  %912 = vmatprep.subr.mxu0 0.0
  %913 = vmatpush2.xpose.msra.mxu0 0.0
  %914 = vmatprep.mubr.f32.mxu0 0.0
  %915 = vmatmul.mubr.f32.gmra.mxu0 %v841
  %v916 = vpop.f32.mrf.mxu0
  %v917 = vadd.f32 %v692, %v916
  %v918 = vpop.f32.mrf.mxu0
  %919 = vmatprep.mubr.f32.mxu0 0.0
  %920 = vmatmul.mubr.f32.gmra.mxu0 %v844
  %v921 = vpop.f32.mrf.mxu0
  %v922 = vadd.f32 %v693, %v921
  %v923 = vpop.f32.mrf.mxu0
  %924 = vdwg.mxu0
  %927 = vrot.lane.b32.xlu0 %v632, 96
  %v928 = vpop.permute.xlu0 %927
  %929 = vrot.lane.b32.xlu0 %v637, 96
  %v930 = vpop.permute.xlu0 %929
  %v932 = vsel %vm748, %v730, 0
  %v935 = vsel %vm748, %v731, 0
  %v937 = vsel %vm748, %v928, 0
  %v939 = vsel %vm748, %v930, 0
  %941 = vmatprep.subr.mxu0 0.0
  %942 = vmatpush1.xpose.msra.mxu0 0.0
  %943 = vmatprep.subr.mxu0 0.0
  %944 = vmatpush1.xpose.msra.mxu0 0.0
  %945 = vmatprep.subr.mxu0 0.0
  %946 = vmatpush1.xpose.msra.mxu0 0.0
  %947 = vmatprep.subr.mxu0 0.0
  %948 = vmatpush1.xpose.msra.mxu0 0.0
  %949 = vmatprep.subr.mxu0 0.0
  %950 = vmatpush1.xpose.msra.mxu0 0.0
  %951 = vmatprep.subr.mxu0 0.0
  %952 = vmatpush1.xpose.msra.mxu0 0.0
  %953 = vmatprep.subr.mxu0 0.0
  %954 = vmatpush1.xpose.msra.mxu0 0.0
  %955 = vmatprep.subr.mxu0 0.0
  %956 = vmatpush1.xpose.msra.mxu0 0.0
  %957 = vmatprep.subr.mxu0 0.0
  %958 = vmatpush1.xpose.msra.mxu0 0.0
  %959 = vmatprep.subr.mxu0 0.0
  %960 = vmatpush1.xpose.msra.mxu0 0.0
  %961 = vmatprep.subr.mxu0 0.0
  %962 = vmatpush1.xpose.msra.mxu0 0.0
  %963 = vmatprep.subr.mxu0 0.0
  %964 = vmatpush1.xpose.msra.mxu0 0.0
  %965 = vmatprep.subr.mxu0 0.0
  %966 = vmatpush1.xpose.msra.mxu0 0.0
  %967 = vmatprep.subr.mxu0 0.0
  %968 = vmatpush1.xpose.msra.mxu0 0.0
  %969 = vmatprep.subr.mxu0 0.0
  %970 = vmatpush1.xpose.msra.mxu0 %v939
  %971 = vmatprep.subr.mxu0 0.0
  %972 = vmatpush1.xpose.msra.mxu0 %v937
  %973 = vmatprep.subr.mxu0 0.0
  %974 = vmatpush2.xpose.msra.mxu0 0.0
  %975 = vmatprep.subr.mxu0 0.0
  %976 = vmatpush2.xpose.msra.mxu0 0.0
  %977 = vmatprep.subr.mxu0 0.0
  %978 = vmatpush2.xpose.msra.mxu0 0.0
  %979 = vmatprep.subr.mxu0 0.0
  %980 = vmatpush2.xpose.msra.mxu0 0.0
  %981 = vmatprep.subr.mxu0 0.0
  %982 = vmatpush2.xpose.msra.mxu0 0.0
  %983 = vmatprep.subr.mxu0 0.0
  %984 = vmatpush2.xpose.msra.mxu0 0.0
  %985 = vmatprep.subr.mxu0 0.0
  %986 = vmatpush2.xpose.msra.mxu0 0.0
  %987 = vmatprep.subr.mxu0 0.0
  %988 = vmatpush2.xpose.msra.mxu0 0.0
  %989 = vmatprep.subr.mxu0 0.0
  %990 = vmatpush2.xpose.msra.mxu0 0.0
  %991 = vmatprep.subr.mxu0 0.0
  %992 = vmatpush2.xpose.msra.mxu0 0.0
  %993 = vmatprep.subr.mxu0 0.0
  %994 = vmatpush2.xpose.msra.mxu0 0.0
  %995 = vmatprep.subr.mxu0 0.0
  %996 = vmatpush2.xpose.msra.mxu0 0.0
  %997 = vmatprep.subr.mxu0 0.0
  %998 = vmatpush2.xpose.msra.mxu0 0.0
  %999 = vmatprep.subr.mxu0 0.0
  %1000 = vmatpush2.xpose.msra.mxu0 0.0
  %1001 = vmatprep.subr.mxu0 0.0
  %1002 = vmatpush2.xpose.msra.mxu0 0.0
  %1003 = vmatprep.subr.mxu0 0.0
  %1004 = vmatpush2.xpose.msra.mxu0 0.0
  %1005 = vmatprep.mubr.f32.mxu0 0.0
  %1006 = vmatmul.mubr.f32.gmra.mxu0 %v932
  %v1007 = vpop.f32.mrf.mxu0
  %v1008 = vadd.f32 %v694, %v1007
  %v1009 = vpop.f32.mrf.mxu0
  %1010 = vmatprep.mubr.f32.mxu0 0.0
  %1011 = vmatmul.mubr.f32.gmra.mxu0 %v935
  %v1012 = vpop.f32.mrf.mxu0
  %v1013 = vadd.f32 %v695, %v1012
  %v1014 = vpop.f32.mrf.mxu0
  %1015 = vdwg.mxu0
  %1018 = vrot.lane.b32.xlu0 %v642, 96
  %v1019 = vpop.permute.xlu0 %1018
  %1020 = vrot.lane.b32.xlu0 %v647, 96
  %v1021 = vpop.permute.xlu0 %1020
  %v1023 = vsel %vm748, %v732, 0
  %v1026 = vsel %vm748, %v733, 0
  %v1028 = vsel %vm748, %v1019, 0
  %v1030 = vsel %vm748, %v1021, 0
  %1032 = vmatprep.subr.mxu0 0.0
  %1033 = vmatpush1.xpose.msra.mxu0 0.0
  %1034 = vmatprep.subr.mxu0 0.0
  %1035 = vmatpush1.xpose.msra.mxu0 0.0
  %1036 = vmatprep.subr.mxu0 0.0
  %1037 = vmatpush1.xpose.msra.mxu0 0.0
  %1038 = vmatprep.subr.mxu0 0.0
  %1039 = vmatpush1.xpose.msra.mxu0 0.0
  %1040 = vmatprep.subr.mxu0 0.0
  %1041 = vmatpush1.xpose.msra.mxu0 0.0
  %1042 = vmatprep.subr.mxu0 0.0
  %1043 = vmatpush1.xpose.msra.mxu0 0.0
  %1044 = vmatprep.subr.mxu0 0.0
  %1045 = vmatpush1.xpose.msra.mxu0 0.0
  %1046 = vmatprep.subr.mxu0 0.0
  %1047 = vmatpush1.xpose.msra.mxu0 0.0
  %1048 = vmatprep.subr.mxu0 0.0
  %1049 = vmatpush1.xpose.msra.mxu0 0.0
  %1050 = vmatprep.subr.mxu0 0.0
  %1051 = vmatpush1.xpose.msra.mxu0 0.0
  %1052 = vmatprep.subr.mxu0 0.0
  %1053 = vmatpush1.xpose.msra.mxu0 0.0
  %1054 = vmatprep.subr.mxu0 0.0
  %1055 = vmatpush1.xpose.msra.mxu0 0.0
  %1056 = vmatprep.subr.mxu0 0.0
  %1057 = vmatpush1.xpose.msra.mxu0 0.0
  %1058 = vmatprep.subr.mxu0 0.0
  %1059 = vmatpush1.xpose.msra.mxu0 0.0
  %1060 = vmatprep.subr.mxu0 0.0
  %1061 = vmatpush1.xpose.msra.mxu0 %v1030
  %1062 = vmatprep.subr.mxu0 0.0
  %1063 = vmatpush1.xpose.msra.mxu0 %v1028
  %1064 = vmatprep.subr.mxu0 0.0
  %1065 = vmatpush2.xpose.msra.mxu0 0.0
  %1066 = vmatprep.subr.mxu0 0.0
  %1067 = vmatpush2.xpose.msra.mxu0 0.0
  %1068 = vmatprep.subr.mxu0 0.0
  %1069 = vmatpush2.xpose.msra.mxu0 0.0
  %1070 = vmatprep.subr.mxu0 0.0
  %1071 = vmatpush2.xpose.msra.mxu0 0.0
  %1072 = vmatprep.subr.mxu0 0.0
  %1073 = vmatpush2.xpose.msra.mxu0 0.0
  %1074 = vmatprep.subr.mxu0 0.0
  %1075 = vmatpush2.xpose.msra.mxu0 0.0
  %1076 = vmatprep.subr.mxu0 0.0
  %1077 = vmatpush2.xpose.msra.mxu0 0.0
  %1078 = vmatprep.subr.mxu0 0.0
  %1079 = vmatpush2.xpose.msra.mxu0 0.0
  %1080 = vmatprep.subr.mxu0 0.0
  %1081 = vmatpush2.xpose.msra.mxu0 0.0
  %1082 = vmatprep.subr.mxu0 0.0
  %1083 = vmatpush2.xpose.msra.mxu0 0.0
  %1084 = vmatprep.subr.mxu0 0.0
  %1085 = vmatpush2.xpose.msra.mxu0 0.0
  %1086 = vmatprep.subr.mxu0 0.0
  %1087 = vmatpush2.xpose.msra.mxu0 0.0
  %1088 = vmatprep.subr.mxu0 0.0
  %1089 = vmatpush2.xpose.msra.mxu0 0.0
  %1090 = vmatprep.subr.mxu0 0.0
  %1091 = vmatpush2.xpose.msra.mxu0 0.0
  %1092 = vmatprep.subr.mxu0 0.0
  %1093 = vmatpush2.xpose.msra.mxu0 0.0
  %1094 = vmatprep.subr.mxu0 0.0
  %1095 = vmatpush2.xpose.msra.mxu0 0.0
  %1096 = vmatprep.mubr.f32.mxu0 0.0
  %1097 = vmatmul.mubr.f32.gmra.mxu0 %v1023
  %v1098 = vpop.f32.mrf.mxu0
  %v1099 = vadd.f32 %v696, %v1098
  %v1100 = vpop.f32.mrf.mxu0
  %1101 = vmatprep.mubr.f32.mxu0 0.0
  %1102 = vmatmul.mubr.f32.gmra.mxu0 %v1026
  %v1103 = vpop.f32.mrf.mxu0
  %v1104 = vadd.f32 %v697, %v1103
  %v1105 = vpop.f32.mrf.mxu0
  %1106 = vdwg.mxu0
  %1109 = vrot.lane.b32.xlu0 %v652, 96
  %v1110 = vpop.permute.xlu0 %1109
  %1111 = vrot.lane.b32.xlu0 %v657, 96
  %v1112 = vpop.permute.xlu0 %1111
  %v1114 = vsel %vm748, %v734, 0
  %v1117 = vsel %vm748, %v735, 0
  %v1119 = vsel %vm748, %v1110, 0
  %v1121 = vsel %vm748, %v1112, 0
  %1123 = vmatprep.subr.mxu0 0.0
  %1124 = vmatpush1.xpose.msra.mxu0 0.0
  %1125 = vmatprep.subr.mxu0 0.0
  %1126 = vmatpush1.xpose.msra.mxu0 0.0
  %1127 = vmatprep.subr.mxu0 0.0
  %1128 = vmatpush1.xpose.msra.mxu0 0.0
  %1129 = vmatprep.subr.mxu0 0.0
  %1130 = vmatpush1.xpose.msra.mxu0 0.0
  %1131 = vmatprep.subr.mxu0 0.0
  %1132 = vmatpush1.xpose.msra.mxu0 0.0
  %1133 = vmatprep.subr.mxu0 0.0
  %1134 = vmatpush1.xpose.msra.mxu0 0.0
  %1135 = vmatprep.subr.mxu0 0.0
  %1136 = vmatpush1.xpose.msra.mxu0 0.0
  %1137 = vmatprep.subr.mxu0 0.0
  %1138 = vmatpush1.xpose.msra.mxu0 0.0
  %1139 = vmatprep.subr.mxu0 0.0
  %1140 = vmatpush1.xpose.msra.mxu0 0.0
  %1141 = vmatprep.subr.mxu0 0.0
  %1142 = vmatpush1.xpose.msra.mxu0 0.0
  %1143 = vmatprep.subr.mxu0 0.0
  %1144 = vmatpush1.xpose.msra.mxu0 0.0
  %1145 = vmatprep.subr.mxu0 0.0
  %1146 = vmatpush1.xpose.msra.mxu0 0.0
  %1147 = vmatprep.subr.mxu0 0.0
  %1148 = vmatpush1.xpose.msra.mxu0 0.0
  %1149 = vmatprep.subr.mxu0 0.0
  %1150 = vmatpush1.xpose.msra.mxu0 0.0
  %1151 = vmatprep.subr.mxu0 0.0
  %1152 = vmatpush1.xpose.msra.mxu0 %v1121
  %1153 = vmatprep.subr.mxu0 0.0
  %1154 = vmatpush1.xpose.msra.mxu0 %v1119
  %1155 = vmatprep.subr.mxu0 0.0
  %1156 = vmatpush2.xpose.msra.mxu0 0.0
  %1157 = vmatprep.subr.mxu0 0.0
  %1158 = vmatpush2.xpose.msra.mxu0 0.0
  %1159 = vmatprep.subr.mxu0 0.0
  %1160 = vmatpush2.xpose.msra.mxu0 0.0
  %1161 = vmatprep.subr.mxu0 0.0
  %1162 = vmatpush2.xpose.msra.mxu0 0.0
  %1163 = vmatprep.subr.mxu0 0.0
  %1164 = vmatpush2.xpose.msra.mxu0 0.0
  %1165 = vmatprep.subr.mxu0 0.0
  %1166 = vmatpush2.xpose.msra.mxu0 0.0
  %1167 = vmatprep.subr.mxu0 0.0
  %1168 = vmatpush2.xpose.msra.mxu0 0.0
  %1169 = vmatprep.subr.mxu0 0.0
  %1170 = vmatpush2.xpose.msra.mxu0 0.0
  %1171 = vmatprep.subr.mxu0 0.0
  %1172 = vmatpush2.xpose.msra.mxu0 0.0
  %1173 = vmatprep.subr.mxu0 0.0
  %1174 = vmatpush2.xpose.msra.mxu0 0.0
  %1175 = vmatprep.subr.mxu0 0.0
  %1176 = vmatpush2.xpose.msra.mxu0 0.0
  %1177 = vmatprep.subr.mxu0 0.0
  %1178 = vmatpush2.xpose.msra.mxu0 0.0
  %1179 = vmatprep.subr.mxu0 0.0
  %1180 = vmatpush2.xpose.msra.mxu0 0.0
  %1181 = vmatprep.subr.mxu0 0.0
  %1182 = vmatpush2.xpose.msra.mxu0 0.0
  %1183 = vmatprep.subr.mxu0 0.0
  %1184 = vmatpush2.xpose.msra.mxu0 0.0
  %1185 = vmatprep.subr.mxu0 0.0
  %1186 = vmatpush2.xpose.msra.mxu0 0.0
  %1187 = vmatprep.mubr.f32.mxu0 0.0
  %1188 = vmatmul.mubr.f32.gmra.mxu0 %v1114
  %v1189 = vpop.f32.mrf.mxu0
  %v1190 = vadd.f32 %v698, %v1189
  %v1191 = vpop.f32.mrf.mxu0
  %1192 = vmatprep.mubr.f32.mxu0 0.0
  %1193 = vmatmul.mubr.f32.gmra.mxu0 %v1117
  %v1194 = vpop.f32.mrf.mxu0
  %v1195 = vadd.f32 %v699, %v1194
  %v1196 = vpop.f32.mrf.mxu0
  %1197 = vdwg.mxu0
  %1200 = vrot.lane.b32.xlu0 %v662, 96
  %v1201 = vpop.permute.xlu0 %1200
  %1202 = vrot.lane.b32.xlu0 %v667, 96
  %v1203 = vpop.permute.xlu0 %1202
  %v1205 = vsel %vm748, %v736, 0
  %v1208 = vsel %vm748, %v737, 0
  %v1210 = vsel %vm748, %v1201, 0
  %v1212 = vsel %vm748, %v1203, 0
  %1214 = vmatprep.subr.mxu0 0.0
  %1215 = vmatpush1.xpose.msra.mxu0 0.0
  %1216 = vmatprep.subr.mxu0 0.0
  %1217 = vmatpush1.xpose.msra.mxu0 0.0
  %1218 = vmatprep.subr.mxu0 0.0
  %1219 = vmatpush1.xpose.msra.mxu0 0.0
  %1220 = vmatprep.subr.mxu0 0.0
  %1221 = vmatpush1.xpose.msra.mxu0 0.0
  %1222 = vmatprep.subr.mxu0 0.0
  %1223 = vmatpush1.xpose.msra.mxu0 0.0
  %1224 = vmatprep.subr.mxu0 0.0
  %1225 = vmatpush1.xpose.msra.mxu0 0.0
  %1226 = vmatprep.subr.mxu0 0.0
  %1227 = vmatpush1.xpose.msra.mxu0 0.0
  %1228 = vmatprep.subr.mxu0 0.0
  %1229 = vmatpush1.xpose.msra.mxu0 0.0
  %1230 = vmatprep.subr.mxu0 0.0
  %1231 = vmatpush1.xpose.msra.mxu0 0.0
  %1232 = vmatprep.subr.mxu0 0.0
  %1233 = vmatpush1.xpose.msra.mxu0 0.0
  %1234 = vmatprep.subr.mxu0 0.0
  %1235 = vmatpush1.xpose.msra.mxu0 0.0
  %1236 = vmatprep.subr.mxu0 0.0
  %1237 = vmatpush1.xpose.msra.mxu0 0.0
  %1238 = vmatprep.subr.mxu0 0.0
  %1239 = vmatpush1.xpose.msra.mxu0 0.0
  %1240 = vmatprep.subr.mxu0 0.0
  %1241 = vmatpush1.xpose.msra.mxu0 0.0
  %1242 = vmatprep.subr.mxu0 0.0
  %1243 = vmatpush1.xpose.msra.mxu0 %v1212
  %1244 = vmatprep.subr.mxu0 0.0
  %1245 = vmatpush1.xpose.msra.mxu0 %v1210
  %1246 = vmatprep.subr.mxu0 0.0
  %1247 = vmatpush2.xpose.msra.mxu0 0.0
  %1248 = vmatprep.subr.mxu0 0.0
  %1249 = vmatpush2.xpose.msra.mxu0 0.0
  %1250 = vmatprep.subr.mxu0 0.0
  %1251 = vmatpush2.xpose.msra.mxu0 0.0
  %1252 = vmatprep.subr.mxu0 0.0
  %1253 = vmatpush2.xpose.msra.mxu0 0.0
  %1254 = vmatprep.subr.mxu0 0.0
  %1255 = vmatpush2.xpose.msra.mxu0 0.0
  %1256 = vmatprep.subr.mxu0 0.0
  %1257 = vmatpush2.xpose.msra.mxu0 0.0
  %1258 = vmatprep.subr.mxu0 0.0
  %1259 = vmatpush2.xpose.msra.mxu0 0.0
  %1260 = vmatprep.subr.mxu0 0.0
  %1261 = vmatpush2.xpose.msra.mxu0 0.0
  %1262 = vmatprep.subr.mxu0 0.0
  %1263 = vmatpush2.xpose.msra.mxu0 0.0
  %1264 = vmatprep.subr.mxu0 0.0
  %1265 = vmatpush2.xpose.msra.mxu0 0.0
  %1266 = vmatprep.subr.mxu0 0.0
  %1267 = vmatpush2.xpose.msra.mxu0 0.0
  %1268 = vmatprep.subr.mxu0 0.0
  %1269 = vmatpush2.xpose.msra.mxu0 0.0
  %1270 = vmatprep.subr.mxu0 0.0
  %1271 = vmatpush2.xpose.msra.mxu0 0.0
  %1272 = vmatprep.subr.mxu0 0.0
  %1273 = vmatpush2.xpose.msra.mxu0 0.0
  %1274 = vmatprep.subr.mxu0 0.0
  %1275 = vmatpush2.xpose.msra.mxu0 0.0
  %1276 = vmatprep.subr.mxu0 0.0
  %1277 = vmatpush2.xpose.msra.mxu0 0.0
  %1278 = vmatprep.mubr.f32.mxu0 0.0
  %1279 = vmatmul.mubr.f32.gmra.mxu0 %v1205
  %v1280 = vpop.f32.mrf.mxu0
  %v1281 = vadd.f32 %v700, %v1280
  %v1282 = vpop.f32.mrf.mxu0
  %1283 = vmatprep.mubr.f32.mxu0 0.0
  %1284 = vmatmul.mubr.f32.gmra.mxu0 %v1208
  %v1285 = vpop.f32.mrf.mxu0
  %v1286 = vadd.f32 %v701, %v1285
  %v1287 = vpop.f32.mrf.mxu0
  %1288 = vdwg.mxu0
  %1291 = vrot.lane.b32.xlu0 %v672, 96
  %v1292 = vpop.permute.xlu0 %1291
  %1293 = vrot.lane.b32.xlu0 %v677, 96
  %v1294 = vpop.permute.xlu0 %1293
  %v1296 = vsel %vm748, %v738, 0
  %v1299 = vsel %vm748, %v739, 0
  %v1301 = vsel %vm748, %v1292, 0
  %v1303 = vsel %vm748, %v1294, 0
  %1305 = vmatprep.subr.mxu0 0.0
  %1306 = vmatpush1.xpose.msra.mxu0 0.0
  %1307 = vmatprep.subr.mxu0 0.0
  %1308 = vmatpush1.xpose.msra.mxu0 0.0
  %1309 = vmatprep.subr.mxu0 0.0
  %1310 = vmatpush1.xpose.msra.mxu0 0.0
  %1311 = vmatprep.subr.mxu0 0.0
  %1312 = vmatpush1.xpose.msra.mxu0 0.0
  %1313 = vmatprep.subr.mxu0 0.0
  %1314 = vmatpush1.xpose.msra.mxu0 0.0
  %1315 = vmatprep.subr.mxu0 0.0
  %1316 = vmatpush1.xpose.msra.mxu0 0.0
  %1317 = vmatprep.subr.mxu0 0.0
  %1318 = vmatpush1.xpose.msra.mxu0 0.0
  %1319 = vmatprep.subr.mxu0 0.0
  %1320 = vmatpush1.xpose.msra.mxu0 0.0
  %1321 = vmatprep.subr.mxu0 0.0
  %1322 = vmatpush1.xpose.msra.mxu0 0.0
  %1323 = vmatprep.subr.mxu0 0.0
  %1324 = vmatpush1.xpose.msra.mxu0 0.0
  %1325 = vmatprep.subr.mxu0 0.0
  %1326 = vmatpush1.xpose.msra.mxu0 0.0
  %1327 = vmatprep.subr.mxu0 0.0
  %1328 = vmatpush1.xpose.msra.mxu0 0.0
  %1329 = vmatprep.subr.mxu0 0.0
  %1330 = vmatpush1.xpose.msra.mxu0 0.0
  %1331 = vmatprep.subr.mxu0 0.0
  %1332 = vmatpush1.xpose.msra.mxu0 0.0
  %1333 = vmatprep.subr.mxu0 0.0
  %1334 = vmatpush1.xpose.msra.mxu0 %v1303
  %1335 = vmatprep.subr.mxu0 0.0
  %1336 = vmatpush1.xpose.msra.mxu0 %v1301
  %1337 = vmatprep.subr.mxu0 0.0
  %1338 = vmatpush2.xpose.msra.mxu0 0.0
  %1339 = vmatprep.subr.mxu0 0.0
  %1340 = vmatpush2.xpose.msra.mxu0 0.0
  %1341 = vmatprep.subr.mxu0 0.0
  %1342 = vmatpush2.xpose.msra.mxu0 0.0
  %1343 = vmatprep.subr.mxu0 0.0
  %1344 = vmatpush2.xpose.msra.mxu0 0.0
  %1345 = vmatprep.subr.mxu0 0.0
  %1346 = vmatpush2.xpose.msra.mxu0 0.0
  %1347 = vmatprep.subr.mxu0 0.0
  %1348 = vmatpush2.xpose.msra.mxu0 0.0
  %1349 = vmatprep.subr.mxu0 0.0
  %1350 = vmatpush2.xpose.msra.mxu0 0.0
  %1351 = vmatprep.subr.mxu0 0.0
  %1352 = vmatpush2.xpose.msra.mxu0 0.0
  %1353 = vmatprep.subr.mxu0 0.0
  %1354 = vmatpush2.xpose.msra.mxu0 0.0
  %1355 = vmatprep.subr.mxu0 0.0
  %1356 = vmatpush2.xpose.msra.mxu0 0.0
  %1357 = vmatprep.subr.mxu0 0.0
  %1358 = vmatpush2.xpose.msra.mxu0 0.0
  %1359 = vmatprep.subr.mxu0 0.0
  %1360 = vmatpush2.xpose.msra.mxu0 0.0
  %1361 = vmatprep.subr.mxu0 0.0
  %1362 = vmatpush2.xpose.msra.mxu0 0.0
  %1363 = vmatprep.subr.mxu0 0.0
  %1364 = vmatpush2.xpose.msra.mxu0 0.0
  %1365 = vmatprep.subr.mxu0 0.0
  %1366 = vmatpush2.xpose.msra.mxu0 0.0
  %1367 = vmatprep.subr.mxu0 0.0
  %1368 = vmatpush2.xpose.msra.mxu0 0.0
  %1369 = vmatprep.mubr.f32.mxu0 0.0
  %1370 = vmatmul.mubr.f32.gmra.mxu0 %v1296
  %v1371 = vpop.f32.mrf.mxu0
  %v1372 = vadd.f32 %v702, %v1371
  %v1373 = vpop.f32.mrf.mxu0
  %1374 = vmatprep.mubr.f32.mxu0 0.0
  %1375 = vmatmul.mubr.f32.gmra.mxu0 %v1299
  %v1376 = vpop.f32.mrf.mxu0
  %v1377 = vadd.f32 %v703, %v1376
  %v1378 = vpop.f32.mrf.mxu0
  %1379 = vdwg.mxu0
  %1382 = vrot.lane.b32.xlu0 %v682, 96
  %v1383 = vpop.permute.xlu0 %1382
  %1384 = vrot.lane.b32.xlu0 %v687, 96
  %v1385 = vpop.permute.xlu0 %1384
  %v1387 = vsel %vm748, %v740, 0
  %v1390 = vsel %vm748, %v741, 0
  %v1392 = vsel %vm748, %v1383, 0
  %v1394 = vsel %vm748, %v1385, 0
  %1396 = vmatprep.subr.mxu0 0.0
  %1397 = vmatpush1.xpose.msra.mxu0 0.0
  %1398 = vmatprep.subr.mxu0 0.0
  %1399 = vmatpush1.xpose.msra.mxu0 0.0
  %1400 = vmatprep.subr.mxu0 0.0
  %1401 = vmatpush1.xpose.msra.mxu0 0.0
  %1402 = vmatprep.subr.mxu0 0.0
  %1403 = vmatpush1.xpose.msra.mxu0 0.0
  %1404 = vmatprep.subr.mxu0 0.0
  %1405 = vmatpush1.xpose.msra.mxu0 0.0
  %1406 = vmatprep.subr.mxu0 0.0
  %1407 = vmatpush1.xpose.msra.mxu0 0.0
  %1408 = vmatprep.subr.mxu0 0.0
  %1409 = vmatpush1.xpose.msra.mxu0 0.0
  %1410 = vmatprep.subr.mxu0 0.0
  %1411 = vmatpush1.xpose.msra.mxu0 0.0
  %1412 = vmatprep.subr.mxu0 0.0
  %1413 = vmatpush1.xpose.msra.mxu0 0.0
  %1414 = vmatprep.subr.mxu0 0.0
  %1415 = vmatpush1.xpose.msra.mxu0 0.0
  %1416 = vmatprep.subr.mxu0 0.0
  %1417 = vmatpush1.xpose.msra.mxu0 0.0
  %1418 = vmatprep.subr.mxu0 0.0
  %1419 = vmatpush1.xpose.msra.mxu0 0.0
  %1420 = vmatprep.subr.mxu0 0.0
  %1421 = vmatpush1.xpose.msra.mxu0 0.0
  %1422 = vmatprep.subr.mxu0 0.0
  %1423 = vmatpush1.xpose.msra.mxu0 0.0
  %1424 = vmatprep.subr.mxu0 0.0
  %1425 = vmatpush1.xpose.msra.mxu0 %v1394
  %1426 = vmatprep.subr.mxu0 0.0
  %1427 = vmatpush1.xpose.msra.mxu0 %v1392
  %1428 = vmatprep.subr.mxu0 0.0
  %1429 = vmatpush2.xpose.msra.mxu0 0.0
  %1430 = vmatprep.subr.mxu0 0.0
  %1431 = vmatpush2.xpose.msra.mxu0 0.0
  %1432 = vmatprep.subr.mxu0 0.0
  %1433 = vmatpush2.xpose.msra.mxu0 0.0
  %1434 = vmatprep.subr.mxu0 0.0
  %1435 = vmatpush2.xpose.msra.mxu0 0.0
  %1436 = vmatprep.subr.mxu0 0.0
  %1437 = vmatpush2.xpose.msra.mxu0 0.0
  %1438 = vmatprep.subr.mxu0 0.0
  %1439 = vmatpush2.xpose.msra.mxu0 0.0
  %1440 = vmatprep.subr.mxu0 0.0
  %1441 = vmatpush2.xpose.msra.mxu0 0.0
  %1442 = vmatprep.subr.mxu0 0.0
  %1443 = vmatpush2.xpose.msra.mxu0 0.0
  %1444 = vmatprep.subr.mxu0 0.0
  %1445 = vmatpush2.xpose.msra.mxu0 0.0
  %1446 = vmatprep.subr.mxu0 0.0
  %1447 = vmatpush2.xpose.msra.mxu0 0.0
  %1448 = vmatprep.subr.mxu0 0.0
  %1449 = vmatpush2.xpose.msra.mxu0 0.0
  %1450 = vmatprep.subr.mxu0 0.0
  %1451 = vmatpush2.xpose.msra.mxu0 0.0
  %1452 = vmatprep.subr.mxu0 0.0
  %1453 = vmatpush2.xpose.msra.mxu0 0.0
  %1454 = vmatprep.subr.mxu0 0.0
  %1455 = vmatpush2.xpose.msra.mxu0 0.0
  %1456 = vmatprep.subr.mxu0 0.0
  %1457 = vmatpush2.xpose.msra.mxu0 0.0
  %1458 = vmatprep.subr.mxu0 0.0
  %1459 = vmatpush2.xpose.msra.mxu0 0.0
  %1460 = vmatprep.mubr.f32.mxu0 0.0
  %1461 = vmatmul.mubr.f32.gmra.mxu0 %v1387
  %v1462 = vpop.f32.mrf.mxu0
  %v1463 = vadd.f32 %v704, %v1462
  %v1464 = vpop.f32.mrf.mxu0
  %1465 = vmatprep.mubr.f32.mxu0 0.0
  %1466 = vmatmul.mubr.f32.gmra.mxu0 %v1390
  %v1467 = vpop.f32.mrf.mxu0
  %v1468 = vadd.f32 %v705, %v1467
  %v1469 = vpop.f32.mrf.mxu0
  %1470 = vdwg.mxu0
  %v1471 = vsel %vm748, %v826, -inf
  %1472 = vmax.xlane.f32.xlu0 %v1471
  %v1473 = vpop.xlane.xlu0 %1472
  %v1474 = vsel %vm748, %v831, -inf
  %1475 = vmax.xlane.f32.xlu0 %v1474
  %v1476 = vpop.xlane.xlu0 %1475
  %v1477 = vsel %vm748, %v917, -inf
  %1478 = vmax.xlane.f32.xlu0 %v1477
  %v1479 = vpop.xlane.xlu0 %1478
  %v1480 = vsel %vm748, %v922, -inf
  %1481 = vmax.xlane.f32.xlu0 %v1480
  %v1482 = vpop.xlane.xlu0 %1481
  %v1483 = vsel %vm748, %v1008, -inf
  %1484 = vmax.xlane.f32.xlu0 %v1483
  %v1485 = vpop.xlane.xlu0 %1484
  %v1486 = vsel %vm748, %v1013, -inf
  %1487 = vmax.xlane.f32.xlu0 %v1486
  %v1488 = vpop.xlane.xlu0 %1487
  %v1489 = vsel %vm748, %v1099, -inf
  %1490 = vmax.xlane.f32.xlu0 %v1489
  %v1491 = vpop.xlane.xlu0 %1490
  %v1492 = vsel %vm748, %v1104, -inf
  %1493 = vmax.xlane.f32.xlu0 %v1492
  %v1494 = vpop.xlane.xlu0 %1493
  %v1495 = vsel %vm748, %v1190, -inf
  %1496 = vmax.xlane.f32.xlu0 %v1495
  %v1497 = vpop.xlane.xlu0 %1496
  %v1498 = vsel %vm748, %v1195, -inf
  %1499 = vmax.xlane.f32.xlu0 %v1498
  %v1500 = vpop.xlane.xlu0 %1499
  %v1501 = vsel %vm748, %v1281, -inf
  %1502 = vmax.xlane.f32.xlu0 %v1501
  %v1503 = vpop.xlane.xlu0 %1502
  %v1504 = vsel %vm748, %v1286, -inf
  %1505 = vmax.xlane.f32.xlu0 %v1504
  %v1506 = vpop.xlane.xlu0 %1505
  %v1507 = vsel %vm748, %v1372, -inf
  %1508 = vmax.xlane.f32.xlu0 %v1507
  %v1509 = vpop.xlane.xlu0 %1508
  %v1510 = vsel %vm748, %v1377, -inf
  %1511 = vmax.xlane.f32.xlu0 %v1510
  %v1512 = vpop.xlane.xlu0 %1511
  %v1513 = vsel %vm748, %v1463, -inf
  %1514 = vmax.xlane.f32.xlu0 %v1513
  %v1515 = vpop.xlane.xlu0 %1514
  %v1516 = vsel %vm748, %v1468, -inf
  %1517 = vmax.xlane.f32.xlu0 %v1516
  %v1518 = vpop.xlane.xlu0 %1517
  %v1519 = vsub.f32 %v826, %v1473
  %v1520 = vsub.f32 %v831, %v1476
  %v1521 = vsub.f32 %v917, %v1479
  %v1522 = vsub.f32 %v922, %v1482
  %v1523 = vsub.f32 %v1008, %v1485
  %v1524 = vsub.f32 %v1013, %v1488
  %v1525 = vsub.f32 %v1099, %v1491
  %v1526 = vsub.f32 %v1104, %v1494
  %v1527 = vsub.f32 %v1190, %v1497
  %v1528 = vsub.f32 %v1195, %v1500
  %v1529 = vsub.f32 %v1281, %v1503
  %v1530 = vsub.f32 %v1286, %v1506
  %v1531 = vsub.f32 %v1372, %v1509
  %v1532 = vsub.f32 %v1377, %v1512
  %v1533 = vsub.f32 %v1463, %v1515
  %v1534 = vsub.f32 %v1468, %v1518
  %v1535 = vmul.f32 %v1519, 1.442695
  %v1536 = vpow.pop %v1535
  %v1537 = vmul.f32 %v1520, 1.442695
  %v1538 = vpow.pop %v1537
  %v1539 = vmul.f32 %v1521, 1.442695
  %v1540 = vpow.pop %v1539
  %v1541 = vmul.f32 %v1522, 1.442695
  %v1542 = vpow.pop %v1541
  %v1543 = vmul.f32 %v1523, 1.442695
  %v1544 = vpow.pop %v1543
  %v1545 = vmul.f32 %v1524, 1.442695
  %v1546 = vpow.pop %v1545
  %v1547 = vmul.f32 %v1525, 1.442695
  %v1548 = vpow.pop %v1547
  %v1549 = vmul.f32 %v1526, 1.442695
  %v1550 = vpow.pop %v1549
  %v1551 = vmul.f32 %v1527, 1.442695
  %v1552 = vpow.pop %v1551
  %v1553 = vmul.f32 %v1528, 1.442695
  %v1554 = vpow.pop %v1553
  %v1555 = vmul.f32 %v1529, 1.442695
  %v1556 = vpow.pop %v1555
  %v1557 = vmul.f32 %v1530, 1.442695
  %v1558 = vpow.pop %v1557
  %v1559 = vmul.f32 %v1531, 1.442695
  %v1560 = vpow.pop %v1559
  %v1561 = vmul.f32 %v1532, 1.442695
  %v1562 = vpow.pop %v1561
  %v1563 = vmul.f32 %v1533, 1.442695
  %v1564 = vpow.pop %v1563
  %v1565 = vmul.f32 %v1534, 1.442695
  %v1566 = vpow.pop %v1565
  %v1567 = vsel %vm748, %v1536, 0.0
  %1568 = vadd.xlane.f32.xlu0 %v1567
  %v1569 = vpop.xlane.xlu0 %1568
  %v1570 = vsel %vm748, %v1538, 0.0
  %1571 = vadd.xlane.f32.xlu0 %v1570
  %v1572 = vpop.xlane.xlu0 %1571
  %v1573 = vsel %vm748, %v1540, 0.0
  %1574 = vadd.xlane.f32.xlu0 %v1573
  %v1575 = vpop.xlane.xlu0 %1574
  %v1576 = vsel %vm748, %v1542, 0.0
  %1577 = vadd.xlane.f32.xlu0 %v1576
  %v1578 = vpop.xlane.xlu0 %1577
  %v1579 = vsel %vm748, %v1544, 0.0
  %1580 = vadd.xlane.f32.xlu0 %v1579
  %v1581 = vpop.xlane.xlu0 %1580
  %v1582 = vsel %vm748, %v1546, 0.0
  %1583 = vadd.xlane.f32.xlu0 %v1582
  %v1584 = vpop.xlane.xlu0 %1583
  %v1585 = vsel %vm748, %v1548, 0.0
  %1586 = vadd.xlane.f32.xlu0 %v1585
  %v1587 = vpop.xlane.xlu0 %1586
  %v1588 = vsel %vm748, %v1550, 0.0
  %1589 = vadd.xlane.f32.xlu0 %v1588
  %v1590 = vpop.xlane.xlu0 %1589
  %v1591 = vsel %vm748, %v1552, 0.0
  %1592 = vadd.xlane.f32.xlu0 %v1591
  %v1593 = vpop.xlane.xlu0 %1592
  %v1594 = vsel %vm748, %v1554, 0.0
  %1595 = vadd.xlane.f32.xlu0 %v1594
  %v1596 = vpop.xlane.xlu0 %1595
  %v1597 = vsel %vm748, %v1556, 0.0
  %1598 = vadd.xlane.f32.xlu0 %v1597
  %v1599 = vpop.xlane.xlu0 %1598
  %v1600 = vsel %vm748, %v1558, 0.0
  %1601 = vadd.xlane.f32.xlu0 %v1600
  %v1602 = vpop.xlane.xlu0 %1601
  %v1603 = vsel %vm748, %v1560, 0.0
  %1604 = vadd.xlane.f32.xlu0 %v1603
  %v1605 = vpop.xlane.xlu0 %1604
  %v1606 = vsel %vm748, %v1562, 0.0
  %1607 = vadd.xlane.f32.xlu0 %v1606
  %v1608 = vpop.xlane.xlu0 %1607
  %v1609 = vsel %vm748, %v1564, 0.0
  %1610 = vadd.xlane.f32.xlu0 %v1609
  %v1611 = vpop.xlane.xlu0 %1610
  %v1612 = vsel %vm748, %v1566, 0.0
  %1613 = vadd.xlane.f32.xlu0 %v1612
  %v1614 = vpop.xlane.xlu0 %1613
  %v1615 = vrcp.pop %v1569
  %v1616 = vrcp.pop %v1572
  %v1617 = vrcp.pop %v1575
  %v1618 = vrcp.pop %v1578
  %v1619 = vrcp.pop %v1581
  %v1620 = vrcp.pop %v1584
  %v1621 = vrcp.pop %v1587
  %v1622 = vrcp.pop %v1590
  %v1623 = vrcp.pop %v1593
  %v1624 = vrcp.pop %v1596
  %v1625 = vrcp.pop %v1599
  %v1626 = vrcp.pop %v1602
  %v1627 = vrcp.pop %v1605
  %v1628 = vrcp.pop %v1608
  %v1629 = vrcp.pop %v1611
  %v1630 = vrcp.pop %v1614
  %v1631 = vmul.f32 %v1536, %v1615
  %v1632 = vmul.f32 %v1538, %v1616
  %v1633 = vmul.f32 %v1540, %v1617
  %v1634 = vmul.f32 %v1542, %v1618
  %v1635 = vmul.f32 %v1544, %v1619
  %v1636 = vmul.f32 %v1546, %v1620
  %v1637 = vmul.f32 %v1548, %v1621
  %v1638 = vmul.f32 %v1550, %v1622
  %v1639 = vmul.f32 %v1552, %v1623
  %v1640 = vmul.f32 %v1554, %v1624
  %v1641 = vmul.f32 %v1556, %v1625
  %v1642 = vmul.f32 %v1558, %v1626
  %v1643 = vmul.f32 %v1560, %v1627
  %v1644 = vmul.f32 %v1562, %v1628
  %v1645 = vmul.f32 %v1564, %v1629
  %v1646 = vmul.f32 %v1566, %v1630
  %1647 = vrot.lane.b32.xlu0 %v612, 64
  %v1648 = vpop.permute.xlu0 %1647
  %1649 = vrot.lane.b32.xlu0 %v617, 64
  %v1650 = vpop.permute.xlu0 %1649
  %v1654 = vsel %vm748, %v1631, 0
  %v1657 = vsel %vm748, %v1632, 0
  %1659 = vmatprep.subr.mxu0 0.0
  %1660 = vmatpush1.msra.mxu0 0.0
  %1661 = vmatprep.subr.mxu0 0.0
  %1662 = vmatpush1.msra.mxu0 0.0
  %1663 = vmatprep.subr.mxu0 0.0
  %1664 = vmatpush1.msra.mxu0 0.0
  %1665 = vmatprep.subr.mxu0 0.0
  %1666 = vmatpush1.msra.mxu0 0.0
  %1667 = vmatprep.subr.mxu0 0.0
  %1668 = vmatpush1.msra.mxu0 0.0
  %1669 = vmatprep.subr.mxu0 0.0
  %1670 = vmatpush1.msra.mxu0 0.0
  %1671 = vmatprep.subr.mxu0 0.0
  %1672 = vmatpush1.msra.mxu0 0.0
  %1673 = vmatprep.subr.mxu0 0.0
  %1674 = vmatpush1.msra.mxu0 0.0
  %1675 = vmatprep.subr.mxu0 0.0
  %1676 = vmatpush1.msra.mxu0 0.0
  %1677 = vmatprep.subr.mxu0 0.0
  %1678 = vmatpush1.msra.mxu0 0.0
  %1679 = vmatprep.subr.mxu0 0.0
  %1680 = vmatpush1.msra.mxu0 0.0
  %1681 = vmatprep.subr.mxu0 0.0
  %1682 = vmatpush1.msra.mxu0 0.0
  %1683 = vmatprep.subr.mxu0 0.0
  %1684 = vmatpush1.msra.mxu0 0.0
  %1685 = vmatprep.subr.mxu0 0.0
  %1686 = vmatpush1.msra.mxu0 0.0
  %1687 = vmatprep.subr.mxu0 0.0
  %1688 = vmatpush1.msra.mxu0 %v1650
  %1689 = vmatprep.subr.mxu0 0.0
  %1690 = vmatpush1.msra.mxu0 %v1648
  %1691 = vmatprep.subr.mxu0 0.0
  %1692 = vmatpush2.msra.mxu0 0.0
  %1693 = vmatprep.subr.mxu0 0.0
  %1694 = vmatpush2.msra.mxu0 0.0
  %1695 = vmatprep.subr.mxu0 0.0
  %1696 = vmatpush2.msra.mxu0 0.0
  %1697 = vmatprep.subr.mxu0 0.0
  %1698 = vmatpush2.msra.mxu0 0.0
  %1699 = vmatprep.subr.mxu0 0.0
  %1700 = vmatpush2.msra.mxu0 0.0
  %1701 = vmatprep.subr.mxu0 0.0
  %1702 = vmatpush2.msra.mxu0 0.0
  %1703 = vmatprep.subr.mxu0 0.0
  %1704 = vmatpush2.msra.mxu0 0.0
  %1705 = vmatprep.subr.mxu0 0.0
  %1706 = vmatpush2.msra.mxu0 0.0
  %1707 = vmatprep.subr.mxu0 0.0
  %1708 = vmatpush2.msra.mxu0 0.0
  %1709 = vmatprep.subr.mxu0 0.0
  %1710 = vmatpush2.msra.mxu0 0.0
  %1711 = vmatprep.subr.mxu0 0.0
  %1712 = vmatpush2.msra.mxu0 0.0
  %1713 = vmatprep.subr.mxu0 0.0
  %1714 = vmatpush2.msra.mxu0 0.0
  %1715 = vmatprep.subr.mxu0 0.0
  %1716 = vmatpush2.msra.mxu0 0.0
  %1717 = vmatprep.subr.mxu0 0.0
  %1718 = vmatpush2.msra.mxu0 0.0
  %1719 = vmatprep.subr.mxu0 0.0
  %1720 = vmatpush2.msra.mxu0 0.0
  %1721 = vmatprep.subr.mxu0 0.0
  %1722 = vmatpush2.msra.mxu0 0.0
  %1723 = vmatprep.mubr.f32.mxu0 0.0
  %1724 = vmatmul.mubr.f32.gmra.mxu0 %v1654
  %v1725 = vpop.f32.mrf.mxu0
  %v1726 = vadd.f32 0.0, %v1725
  %v1727 = vpop.f32.mrf.mxu0
  %1728 = vmatprep.mubr.f32.mxu0 0.0
  %1729 = vmatmul.mubr.f32.gmra.mxu0 %v1657
  %v1730 = vpop.f32.mrf.mxu0
  %v1731 = vadd.f32 0.0, %v1730
  %v1732 = vpop.f32.mrf.mxu0
  %1733 = vdwg.mxu0
  %1734 = vrot.lane.b32.xlu0 %v622, 64
  %v1735 = vpop.permute.xlu0 %1734
  %1736 = vrot.lane.b32.xlu0 %v627, 64
  %v1737 = vpop.permute.xlu0 %1736
  %v1741 = vsel %vm748, %v1633, 0
  %v1744 = vsel %vm748, %v1634, 0
  %1746 = vmatprep.subr.mxu0 0.0
  %1747 = vmatpush1.msra.mxu0 0.0
  %1748 = vmatprep.subr.mxu0 0.0
  %1749 = vmatpush1.msra.mxu0 0.0
  %1750 = vmatprep.subr.mxu0 0.0
  %1751 = vmatpush1.msra.mxu0 0.0
  %1752 = vmatprep.subr.mxu0 0.0
  %1753 = vmatpush1.msra.mxu0 0.0
  %1754 = vmatprep.subr.mxu0 0.0
  %1755 = vmatpush1.msra.mxu0 0.0
  %1756 = vmatprep.subr.mxu0 0.0
  %1757 = vmatpush1.msra.mxu0 0.0
  %1758 = vmatprep.subr.mxu0 0.0
  %1759 = vmatpush1.msra.mxu0 0.0
  %1760 = vmatprep.subr.mxu0 0.0
  %1761 = vmatpush1.msra.mxu0 0.0
  %1762 = vmatprep.subr.mxu0 0.0
  %1763 = vmatpush1.msra.mxu0 0.0
  %1764 = vmatprep.subr.mxu0 0.0
  %1765 = vmatpush1.msra.mxu0 0.0
  %1766 = vmatprep.subr.mxu0 0.0
  %1767 = vmatpush1.msra.mxu0 0.0
  %1768 = vmatprep.subr.mxu0 0.0
  %1769 = vmatpush1.msra.mxu0 0.0
  %1770 = vmatprep.subr.mxu0 0.0
  %1771 = vmatpush1.msra.mxu0 0.0
  %1772 = vmatprep.subr.mxu0 0.0
  %1773 = vmatpush1.msra.mxu0 0.0
  %1774 = vmatprep.subr.mxu0 0.0
  %1775 = vmatpush1.msra.mxu0 %v1737
  %1776 = vmatprep.subr.mxu0 0.0
  %1777 = vmatpush1.msra.mxu0 %v1735
  %1778 = vmatprep.subr.mxu0 0.0
  %1779 = vmatpush2.msra.mxu0 0.0
  %1780 = vmatprep.subr.mxu0 0.0
  %1781 = vmatpush2.msra.mxu0 0.0
  %1782 = vmatprep.subr.mxu0 0.0
  %1783 = vmatpush2.msra.mxu0 0.0
  %1784 = vmatprep.subr.mxu0 0.0
  %1785 = vmatpush2.msra.mxu0 0.0
  %1786 = vmatprep.subr.mxu0 0.0
  %1787 = vmatpush2.msra.mxu0 0.0
  %1788 = vmatprep.subr.mxu0 0.0
  %1789 = vmatpush2.msra.mxu0 0.0
  %1790 = vmatprep.subr.mxu0 0.0
  %1791 = vmatpush2.msra.mxu0 0.0
  %1792 = vmatprep.subr.mxu0 0.0
  %1793 = vmatpush2.msra.mxu0 0.0
  %1794 = vmatprep.subr.mxu0 0.0
  %1795 = vmatpush2.msra.mxu0 0.0
  %1796 = vmatprep.subr.mxu0 0.0
  %1797 = vmatpush2.msra.mxu0 0.0
  %1798 = vmatprep.subr.mxu0 0.0
  %1799 = vmatpush2.msra.mxu0 0.0
  %1800 = vmatprep.subr.mxu0 0.0
  %1801 = vmatpush2.msra.mxu0 0.0
  %1802 = vmatprep.subr.mxu0 0.0
  %1803 = vmatpush2.msra.mxu0 0.0
  %1804 = vmatprep.subr.mxu0 0.0
  %1805 = vmatpush2.msra.mxu0 0.0
  %1806 = vmatprep.subr.mxu0 0.0
  %1807 = vmatpush2.msra.mxu0 0.0
  %1808 = vmatprep.subr.mxu0 0.0
  %1809 = vmatpush2.msra.mxu0 0.0
  %1810 = vmatprep.mubr.f32.mxu0 0.0
  %1811 = vmatmul.mubr.f32.gmra.mxu0 %v1741
  %v1812 = vpop.f32.mrf.mxu0
  %v1813 = vadd.f32 0.0, %v1812
  %v1814 = vpop.f32.mrf.mxu0
  %1815 = vmatprep.mubr.f32.mxu0 0.0
  %1816 = vmatmul.mubr.f32.gmra.mxu0 %v1744
  %v1817 = vpop.f32.mrf.mxu0
  %v1818 = vadd.f32 0.0, %v1817
  %v1819 = vpop.f32.mrf.mxu0
  %1820 = vdwg.mxu0
  %1821 = vrot.lane.b32.xlu0 %v632, 64
  %v1822 = vpop.permute.xlu0 %1821
  %1823 = vrot.lane.b32.xlu0 %v637, 64
  %v1824 = vpop.permute.xlu0 %1823
  %v1828 = vsel %vm748, %v1635, 0
  %v1831 = vsel %vm748, %v1636, 0
  %1833 = vmatprep.subr.mxu0 0.0
  %1834 = vmatpush1.msra.mxu0 0.0
  %1835 = vmatprep.subr.mxu0 0.0
  %1836 = vmatpush1.msra.mxu0 0.0
  %1837 = vmatprep.subr.mxu0 0.0
  %1838 = vmatpush1.msra.mxu0 0.0
  %1839 = vmatprep.subr.mxu0 0.0
  %1840 = vmatpush1.msra.mxu0 0.0
  %1841 = vmatprep.subr.mxu0 0.0
  %1842 = vmatpush1.msra.mxu0 0.0
  %1843 = vmatprep.subr.mxu0 0.0
  %1844 = vmatpush1.msra.mxu0 0.0
  %1845 = vmatprep.subr.mxu0 0.0
  %1846 = vmatpush1.msra.mxu0 0.0
  %1847 = vmatprep.subr.mxu0 0.0
  %1848 = vmatpush1.msra.mxu0 0.0
  %1849 = vmatprep.subr.mxu0 0.0
  %1850 = vmatpush1.msra.mxu0 0.0
  %1851 = vmatprep.subr.mxu0 0.0
  %1852 = vmatpush1.msra.mxu0 0.0
  %1853 = vmatprep.subr.mxu0 0.0
  %1854 = vmatpush1.msra.mxu0 0.0
  %1855 = vmatprep.subr.mxu0 0.0
  %1856 = vmatpush1.msra.mxu0 0.0
  %1857 = vmatprep.subr.mxu0 0.0
  %1858 = vmatpush1.msra.mxu0 0.0
  %1859 = vmatprep.subr.mxu0 0.0
  %1860 = vmatpush1.msra.mxu0 0.0
  %1861 = vmatprep.subr.mxu0 0.0
  %1862 = vmatpush1.msra.mxu0 %v1824
  %1863 = vmatprep.subr.mxu0 0.0
  %1864 = vmatpush1.msra.mxu0 %v1822
  %1865 = vmatprep.subr.mxu0 0.0
  %1866 = vmatpush2.msra.mxu0 0.0
  %1867 = vmatprep.subr.mxu0 0.0
  %1868 = vmatpush2.msra.mxu0 0.0
  %1869 = vmatprep.subr.mxu0 0.0
  %1870 = vmatpush2.msra.mxu0 0.0
  %1871 = vmatprep.subr.mxu0 0.0
  %1872 = vmatpush2.msra.mxu0 0.0
  %1873 = vmatprep.subr.mxu0 0.0
  %1874 = vmatpush2.msra.mxu0 0.0
  %1875 = vmatprep.subr.mxu0 0.0
  %1876 = vmatpush2.msra.mxu0 0.0
  %1877 = vmatprep.subr.mxu0 0.0
  %1878 = vmatpush2.msra.mxu0 0.0
  %1879 = vmatprep.subr.mxu0 0.0
  %1880 = vmatpush2.msra.mxu0 0.0
  %1881 = vmatprep.subr.mxu0 0.0
  %1882 = vmatpush2.msra.mxu0 0.0
  %1883 = vmatprep.subr.mxu0 0.0
  %1884 = vmatpush2.msra.mxu0 0.0
  %1885 = vmatprep.subr.mxu0 0.0
  %1886 = vmatpush2.msra.mxu0 0.0
  %1887 = vmatprep.subr.mxu0 0.0
  %1888 = vmatpush2.msra.mxu0 0.0
  %1889 = vmatprep.subr.mxu0 0.0
  %1890 = vmatpush2.msra.mxu0 0.0
  %1891 = vmatprep.subr.mxu0 0.0
  %1892 = vmatpush2.msra.mxu0 0.0
  %1893 = vmatprep.subr.mxu0 0.0
  %1894 = vmatpush2.msra.mxu0 0.0
  %1895 = vmatprep.subr.mxu0 0.0
  %1896 = vmatpush2.msra.mxu0 0.0
  %1897 = vmatprep.mubr.f32.mxu0 0.0
  %1898 = vmatmul.mubr.f32.gmra.mxu0 %v1828
  %v1899 = vpop.f32.mrf.mxu0
  %v1900 = vadd.f32 0.0, %v1899
  %v1901 = vpop.f32.mrf.mxu0
  %1902 = vmatprep.mubr.f32.mxu0 0.0
  %1903 = vmatmul.mubr.f32.gmra.mxu0 %v1831
  %v1904 = vpop.f32.mrf.mxu0
  %v1905 = vadd.f32 0.0, %v1904
  %v1906 = vpop.f32.mrf.mxu0
  %1907 = vdwg.mxu0
  %1908 = vrot.lane.b32.xlu0 %v642, 64
  %v1909 = vpop.permute.xlu0 %1908
  %1910 = vrot.lane.b32.xlu0 %v647, 64
  %v1911 = vpop.permute.xlu0 %1910
  %v1915 = vsel %vm748, %v1637, 0
  %v1918 = vsel %vm748, %v1638, 0
  %1920 = vmatprep.subr.mxu0 0.0
  %1921 = vmatpush1.msra.mxu0 0.0
  %1922 = vmatprep.subr.mxu0 0.0
  %1923 = vmatpush1.msra.mxu0 0.0
  %1924 = vmatprep.subr.mxu0 0.0
  %1925 = vmatpush1.msra.mxu0 0.0
  %1926 = vmatprep.subr.mxu0 0.0
  %1927 = vmatpush1.msra.mxu0 0.0
  %1928 = vmatprep.subr.mxu0 0.0
  %1929 = vmatpush1.msra.mxu0 0.0
  %1930 = vmatprep.subr.mxu0 0.0
  %1931 = vmatpush1.msra.mxu0 0.0
  %1932 = vmatprep.subr.mxu0 0.0
  %1933 = vmatpush1.msra.mxu0 0.0
  %1934 = vmatprep.subr.mxu0 0.0
  %1935 = vmatpush1.msra.mxu0 0.0
  %1936 = vmatprep.subr.mxu0 0.0
  %1937 = vmatpush1.msra.mxu0 0.0
  %1938 = vmatprep.subr.mxu0 0.0
  %1939 = vmatpush1.msra.mxu0 0.0
  %1940 = vmatprep.subr.mxu0 0.0
  %1941 = vmatpush1.msra.mxu0 0.0
  %1942 = vmatprep.subr.mxu0 0.0
  %1943 = vmatpush1.msra.mxu0 0.0
  %1944 = vmatprep.subr.mxu0 0.0
  %1945 = vmatpush1.msra.mxu0 0.0
  %1946 = vmatprep.subr.mxu0 0.0
  %1947 = vmatpush1.msra.mxu0 0.0
  %1948 = vmatprep.subr.mxu0 0.0
  %1949 = vmatpush1.msra.mxu0 %v1911
  %1950 = vmatprep.subr.mxu0 0.0
  %1951 = vmatpush1.msra.mxu0 %v1909
  %1952 = vmatprep.subr.mxu0 0.0
  %1953 = vmatpush2.msra.mxu0 0.0
  %1954 = vmatprep.subr.mxu0 0.0
  %1955 = vmatpush2.msra.mxu0 0.0
  %1956 = vmatprep.subr.mxu0 0.0
  %1957 = vmatpush2.msra.mxu0 0.0
  %1958 = vmatprep.subr.mxu0 0.0
  %1959 = vmatpush2.msra.mxu0 0.0
  %1960 = vmatprep.subr.mxu0 0.0
  %1961 = vmatpush2.msra.mxu0 0.0
  %1962 = vmatprep.subr.mxu0 0.0
  %1963 = vmatpush2.msra.mxu0 0.0
  %1964 = vmatprep.subr.mxu0 0.0
  %1965 = vmatpush2.msra.mxu0 0.0
  %1966 = vmatprep.subr.mxu0 0.0
  %1967 = vmatpush2.msra.mxu0 0.0
  %1968 = vmatprep.subr.mxu0 0.0
  %1969 = vmatpush2.msra.mxu0 0.0
  %1970 = vmatprep.subr.mxu0 0.0
  %1971 = vmatpush2.msra.mxu0 0.0
  %1972 = vmatprep.subr.mxu0 0.0
  %1973 = vmatpush2.msra.mxu0 0.0
  %1974 = vmatprep.subr.mxu0 0.0
  %1975 = vmatpush2.msra.mxu0 0.0
  %1976 = vmatprep.subr.mxu0 0.0
  %1977 = vmatpush2.msra.mxu0 0.0
  %1978 = vmatprep.subr.mxu0 0.0
  %1979 = vmatpush2.msra.mxu0 0.0
  %1980 = vmatprep.subr.mxu0 0.0
  %1981 = vmatpush2.msra.mxu0 0.0
  %1982 = vmatprep.subr.mxu0 0.0
  %1983 = vmatpush2.msra.mxu0 0.0
  %1984 = vmatprep.mubr.f32.mxu0 0.0
  %1985 = vmatmul.mubr.f32.gmra.mxu0 %v1915
  %v1986 = vpop.f32.mrf.mxu0
  %v1987 = vadd.f32 0.0, %v1986
  %v1988 = vpop.f32.mrf.mxu0
  %1989 = vmatprep.mubr.f32.mxu0 0.0
  %1990 = vmatmul.mubr.f32.gmra.mxu0 %v1918
  %v1991 = vpop.f32.mrf.mxu0
  %v1992 = vadd.f32 0.0, %v1991
  %v1993 = vpop.f32.mrf.mxu0
  %1994 = vdwg.mxu0
  %1995 = vrot.lane.b32.xlu0 %v652, 64
  %v1996 = vpop.permute.xlu0 %1995
  %1997 = vrot.lane.b32.xlu0 %v657, 64
  %v1998 = vpop.permute.xlu0 %1997
  %v2002 = vsel %vm748, %v1639, 0
  %v2005 = vsel %vm748, %v1640, 0
  %2007 = vmatprep.subr.mxu0 0.0
  %2008 = vmatpush1.msra.mxu0 0.0
  %2009 = vmatprep.subr.mxu0 0.0
  %2010 = vmatpush1.msra.mxu0 0.0
  %2011 = vmatprep.subr.mxu0 0.0
  %2012 = vmatpush1.msra.mxu0 0.0
  %2013 = vmatprep.subr.mxu0 0.0
  %2014 = vmatpush1.msra.mxu0 0.0
  %2015 = vmatprep.subr.mxu0 0.0
  %2016 = vmatpush1.msra.mxu0 0.0
  %2017 = vmatprep.subr.mxu0 0.0
  %2018 = vmatpush1.msra.mxu0 0.0
  %2019 = vmatprep.subr.mxu0 0.0
  %2020 = vmatpush1.msra.mxu0 0.0
  %2021 = vmatprep.subr.mxu0 0.0
  %2022 = vmatpush1.msra.mxu0 0.0
  %2023 = vmatprep.subr.mxu0 0.0
  %2024 = vmatpush1.msra.mxu0 0.0
  %2025 = vmatprep.subr.mxu0 0.0
  %2026 = vmatpush1.msra.mxu0 0.0
  %2027 = vmatprep.subr.mxu0 0.0
  %2028 = vmatpush1.msra.mxu0 0.0
  %2029 = vmatprep.subr.mxu0 0.0
  %2030 = vmatpush1.msra.mxu0 0.0
  %2031 = vmatprep.subr.mxu0 0.0
  %2032 = vmatpush1.msra.mxu0 0.0
  %2033 = vmatprep.subr.mxu0 0.0
  %2034 = vmatpush1.msra.mxu0 0.0
  %2035 = vmatprep.subr.mxu0 0.0
  %2036 = vmatpush1.msra.mxu0 %v1998
  %2037 = vmatprep.subr.mxu0 0.0
  %2038 = vmatpush1.msra.mxu0 %v1996
  %2039 = vmatprep.subr.mxu0 0.0
  %2040 = vmatpush2.msra.mxu0 0.0
  %2041 = vmatprep.subr.mxu0 0.0
  %2042 = vmatpush2.msra.mxu0 0.0
  %2043 = vmatprep.subr.mxu0 0.0
  %2044 = vmatpush2.msra.mxu0 0.0
  %2045 = vmatprep.subr.mxu0 0.0
  %2046 = vmatpush2.msra.mxu0 0.0
  %2047 = vmatprep.subr.mxu0 0.0
  %2048 = vmatpush2.msra.mxu0 0.0
  %2049 = vmatprep.subr.mxu0 0.0
  %2050 = vmatpush2.msra.mxu0 0.0
  %2051 = vmatprep.subr.mxu0 0.0
  %2052 = vmatpush2.msra.mxu0 0.0
  %2053 = vmatprep.subr.mxu0 0.0
  %2054 = vmatpush2.msra.mxu0 0.0
  %2055 = vmatprep.subr.mxu0 0.0
  %2056 = vmatpush2.msra.mxu0 0.0
  %2057 = vmatprep.subr.mxu0 0.0
  %2058 = vmatpush2.msra.mxu0 0.0
  %2059 = vmatprep.subr.mxu0 0.0
  %2060 = vmatpush2.msra.mxu0 0.0
  %2061 = vmatprep.subr.mxu0 0.0
  %2062 = vmatpush2.msra.mxu0 0.0
  %2063 = vmatprep.subr.mxu0 0.0
  %2064 = vmatpush2.msra.mxu0 0.0
  %2065 = vmatprep.subr.mxu0 0.0
  %2066 = vmatpush2.msra.mxu0 0.0
  %2067 = vmatprep.subr.mxu0 0.0
  %2068 = vmatpush2.msra.mxu0 0.0
  %2069 = vmatprep.subr.mxu0 0.0
  %2070 = vmatpush2.msra.mxu0 0.0
  %2071 = vmatprep.mubr.f32.mxu0 0.0
  %2072 = vmatmul.mubr.f32.gmra.mxu0 %v2002
  %v2073 = vpop.f32.mrf.mxu0
  %v2074 = vadd.f32 0.0, %v2073
  %v2075 = vpop.f32.mrf.mxu0
  %2076 = vmatprep.mubr.f32.mxu0 0.0
  %2077 = vmatmul.mubr.f32.gmra.mxu0 %v2005
  %v2078 = vpop.f32.mrf.mxu0
  %v2079 = vadd.f32 0.0, %v2078
  %v2080 = vpop.f32.mrf.mxu0
  %2081 = vdwg.mxu0
  %2082 = vrot.lane.b32.xlu0 %v662, 64
  %v2083 = vpop.permute.xlu0 %2082
  %2084 = vrot.lane.b32.xlu0 %v667, 64
  %v2085 = vpop.permute.xlu0 %2084
  %v2089 = vsel %vm748, %v1641, 0
  %v2092 = vsel %vm748, %v1642, 0
  %2094 = vmatprep.subr.mxu0 0.0
  %2095 = vmatpush1.msra.mxu0 0.0
  %2096 = vmatprep.subr.mxu0 0.0
  %2097 = vmatpush1.msra.mxu0 0.0
  %2098 = vmatprep.subr.mxu0 0.0
  %2099 = vmatpush1.msra.mxu0 0.0
  %2100 = vmatprep.subr.mxu0 0.0
  %2101 = vmatpush1.msra.mxu0 0.0
  %2102 = vmatprep.subr.mxu0 0.0
  %2103 = vmatpush1.msra.mxu0 0.0
  %2104 = vmatprep.subr.mxu0 0.0
  %2105 = vmatpush1.msra.mxu0 0.0
  %2106 = vmatprep.subr.mxu0 0.0
  %2107 = vmatpush1.msra.mxu0 0.0
  %2108 = vmatprep.subr.mxu0 0.0
  %2109 = vmatpush1.msra.mxu0 0.0
  %2110 = vmatprep.subr.mxu0 0.0
  %2111 = vmatpush1.msra.mxu0 0.0
  %2112 = vmatprep.subr.mxu0 0.0
  %2113 = vmatpush1.msra.mxu0 0.0
  %2114 = vmatprep.subr.mxu0 0.0
  %2115 = vmatpush1.msra.mxu0 0.0
  %2116 = vmatprep.subr.mxu0 0.0
  %2117 = vmatpush1.msra.mxu0 0.0
  %2118 = vmatprep.subr.mxu0 0.0
  %2119 = vmatpush1.msra.mxu0 0.0
  %2120 = vmatprep.subr.mxu0 0.0
  %2121 = vmatpush1.msra.mxu0 0.0
  %2122 = vmatprep.subr.mxu0 0.0
  %2123 = vmatpush1.msra.mxu0 %v2085
  %2124 = vmatprep.subr.mxu0 0.0
  %2125 = vmatpush1.msra.mxu0 %v2083
  %2126 = vmatprep.subr.mxu0 0.0
  %2127 = vmatpush2.msra.mxu0 0.0
  %2128 = vmatprep.subr.mxu0 0.0
  %2129 = vmatpush2.msra.mxu0 0.0
  %2130 = vmatprep.subr.mxu0 0.0
  %2131 = vmatpush2.msra.mxu0 0.0
  %2132 = vmatprep.subr.mxu0 0.0
  %2133 = vmatpush2.msra.mxu0 0.0
  %2134 = vmatprep.subr.mxu0 0.0
  %2135 = vmatpush2.msra.mxu0 0.0
  %2136 = vmatprep.subr.mxu0 0.0
  %2137 = vmatpush2.msra.mxu0 0.0
  %2138 = vmatprep.subr.mxu0 0.0
  %2139 = vmatpush2.msra.mxu0 0.0
  %2140 = vmatprep.subr.mxu0 0.0
  %2141 = vmatpush2.msra.mxu0 0.0
  %2142 = vmatprep.subr.mxu0 0.0
  %2143 = vmatpush2.msra.mxu0 0.0
  %2144 = vmatprep.subr.mxu0 0.0
  %2145 = vmatpush2.msra.mxu0 0.0
  %2146 = vmatprep.subr.mxu0 0.0
  %2147 = vmatpush2.msra.mxu0 0.0
  %2148 = vmatprep.subr.mxu0 0.0
  %2149 = vmatpush2.msra.mxu0 0.0
  %2150 = vmatprep.subr.mxu0 0.0
  %2151 = vmatpush2.msra.mxu0 0.0
  %2152 = vmatprep.subr.mxu0 0.0
  %2153 = vmatpush2.msra.mxu0 0.0
  %2154 = vmatprep.subr.mxu0 0.0
  %2155 = vmatpush2.msra.mxu0 0.0
  %2156 = vmatprep.subr.mxu0 0.0
  %2157 = vmatpush2.msra.mxu0 0.0
  %2158 = vmatprep.mubr.f32.mxu0 0.0
  %2159 = vmatmul.mubr.f32.gmra.mxu0 %v2089
  %v2160 = vpop.f32.mrf.mxu0
  %v2161 = vadd.f32 0.0, %v2160
  %v2162 = vpop.f32.mrf.mxu0
  %2163 = vmatprep.mubr.f32.mxu0 0.0
  %2164 = vmatmul.mubr.f32.gmra.mxu0 %v2092
  %v2165 = vpop.f32.mrf.mxu0
  %v2166 = vadd.f32 0.0, %v2165
  %v2167 = vpop.f32.mrf.mxu0
  %2168 = vdwg.mxu0
  %2169 = vrot.lane.b32.xlu0 %v672, 64
  %v2170 = vpop.permute.xlu0 %2169
  %2171 = vrot.lane.b32.xlu0 %v677, 64
  %v2172 = vpop.permute.xlu0 %2171
  %v2176 = vsel %vm748, %v1643, 0
  %v2179 = vsel %vm748, %v1644, 0
  %2181 = vmatprep.subr.mxu0 0.0
  %2182 = vmatpush1.msra.mxu0 0.0
  %2183 = vmatprep.subr.mxu0 0.0
  %2184 = vmatpush1.msra.mxu0 0.0
  %2185 = vmatprep.subr.mxu0 0.0
  %2186 = vmatpush1.msra.mxu0 0.0
  %2187 = vmatprep.subr.mxu0 0.0
  %2188 = vmatpush1.msra.mxu0 0.0
  %2189 = vmatprep.subr.mxu0 0.0
  %2190 = vmatpush1.msra.mxu0 0.0
  %2191 = vmatprep.subr.mxu0 0.0
  %2192 = vmatpush1.msra.mxu0 0.0
  %2193 = vmatprep.subr.mxu0 0.0
  %2194 = vmatpush1.msra.mxu0 0.0
  %2195 = vmatprep.subr.mxu0 0.0
  %2196 = vmatpush1.msra.mxu0 0.0
  %2197 = vmatprep.subr.mxu0 0.0
  %2198 = vmatpush1.msra.mxu0 0.0
  %2199 = vmatprep.subr.mxu0 0.0
  %2200 = vmatpush1.msra.mxu0 0.0
  %2201 = vmatprep.subr.mxu0 0.0
  %2202 = vmatpush1.msra.mxu0 0.0
  %2203 = vmatprep.subr.mxu0 0.0
  %2204 = vmatpush1.msra.mxu0 0.0
  %2205 = vmatprep.subr.mxu0 0.0
  %2206 = vmatpush1.msra.mxu0 0.0
  %2207 = vmatprep.subr.mxu0 0.0
  %2208 = vmatpush1.msra.mxu0 0.0
  %2209 = vmatprep.subr.mxu0 0.0
  %2210 = vmatpush1.msra.mxu0 %v2172
  %2211 = vmatprep.subr.mxu0 0.0
  %2212 = vmatpush1.msra.mxu0 %v2170
  %2213 = vmatprep.subr.mxu0 0.0
  %2214 = vmatpush2.msra.mxu0 0.0
  %2215 = vmatprep.subr.mxu0 0.0
  %2216 = vmatpush2.msra.mxu0 0.0
  %2217 = vmatprep.subr.mxu0 0.0
  %2218 = vmatpush2.msra.mxu0 0.0
  %2219 = vmatprep.subr.mxu0 0.0
  %2220 = vmatpush2.msra.mxu0 0.0
  %2221 = vmatprep.subr.mxu0 0.0
  %2222 = vmatpush2.msra.mxu0 0.0
  %2223 = vmatprep.subr.mxu0 0.0
  %2224 = vmatpush2.msra.mxu0 0.0
  %2225 = vmatprep.subr.mxu0 0.0
  %2226 = vmatpush2.msra.mxu0 0.0
  %2227 = vmatprep.subr.mxu0 0.0
  %2228 = vmatpush2.msra.mxu0 0.0
  %2229 = vmatprep.subr.mxu0 0.0
  %2230 = vmatpush2.msra.mxu0 0.0
  %2231 = vmatprep.subr.mxu0 0.0
  %2232 = vmatpush2.msra.mxu0 0.0
  %2233 = vmatprep.subr.mxu0 0.0
  %2234 = vmatpush2.msra.mxu0 0.0
  %2235 = vmatprep.subr.mxu0 0.0
  %2236 = vmatpush2.msra.mxu0 0.0
  %2237 = vmatprep.subr.mxu0 0.0
  %2238 = vmatpush2.msra.mxu0 0.0
  %2239 = vmatprep.subr.mxu0 0.0
  %2240 = vmatpush2.msra.mxu0 0.0
  %2241 = vmatprep.subr.mxu0 0.0
  %2242 = vmatpush2.msra.mxu0 0.0
  %2243 = vmatprep.subr.mxu0 0.0
  %2244 = vmatpush2.msra.mxu0 0.0
  %2245 = vmatprep.mubr.f32.mxu0 0.0
  %2246 = vmatmul.mubr.f32.gmra.mxu0 %v2176
  %v2247 = vpop.f32.mrf.mxu0
  %v2248 = vadd.f32 0.0, %v2247
  %v2249 = vpop.f32.mrf.mxu0
  %2250 = vmatprep.mubr.f32.mxu0 0.0
  %2251 = vmatmul.mubr.f32.gmra.mxu0 %v2179
  %v2252 = vpop.f32.mrf.mxu0
  %v2253 = vadd.f32 0.0, %v2252
  %v2254 = vpop.f32.mrf.mxu0
  %2255 = vdwg.mxu0
  %2256 = vrot.lane.b32.xlu0 %v682, 64
  %v2257 = vpop.permute.xlu0 %2256
  %2258 = vrot.lane.b32.xlu0 %v687, 64
  %v2259 = vpop.permute.xlu0 %2258
  %v2263 = vsel %vm748, %v1645, 0
  %v2266 = vsel %vm748, %v1646, 0
  %2268 = vmatprep.subr.mxu0 0.0
  %2269 = vmatpush1.msra.mxu0 0.0
  %2270 = vmatprep.subr.mxu0 0.0
  %2271 = vmatpush1.msra.mxu0 0.0
  %2272 = vmatprep.subr.mxu0 0.0
  %2273 = vmatpush1.msra.mxu0 0.0
  %2274 = vmatprep.subr.mxu0 0.0
  %2275 = vmatpush1.msra.mxu0 0.0
  %2276 = vmatprep.subr.mxu0 0.0
  %2277 = vmatpush1.msra.mxu0 0.0
  %2278 = vmatprep.subr.mxu0 0.0
  %2279 = vmatpush1.msra.mxu0 0.0
  %2280 = vmatprep.subr.mxu0 0.0
  %2281 = vmatpush1.msra.mxu0 0.0
  %2282 = vmatprep.subr.mxu0 0.0
  %2283 = vmatpush1.msra.mxu0 0.0
  %2284 = vmatprep.subr.mxu0 0.0
  %2285 = vmatpush1.msra.mxu0 0.0
  %2286 = vmatprep.subr.mxu0 0.0
  %2287 = vmatpush1.msra.mxu0 0.0
  %2288 = vmatprep.subr.mxu0 0.0
  %2289 = vmatpush1.msra.mxu0 0.0
  %2290 = vmatprep.subr.mxu0 0.0
  %2291 = vmatpush1.msra.mxu0 0.0
  %2292 = vmatprep.subr.mxu0 0.0
  %2293 = vmatpush1.msra.mxu0 0.0
  %2294 = vmatprep.subr.mxu0 0.0
  %2295 = vmatpush1.msra.mxu0 0.0
  %2296 = vmatprep.subr.mxu0 0.0
  %2297 = vmatpush1.msra.mxu0 %v2259
  %2298 = vmatprep.subr.mxu0 0.0
  %2299 = vmatpush1.msra.mxu0 %v2257
  %2300 = vmatprep.subr.mxu0 0.0
  %2301 = vmatpush2.msra.mxu0 0.0
  %2302 = vmatprep.subr.mxu0 0.0
  %2303 = vmatpush2.msra.mxu0 0.0
  %2304 = vmatprep.subr.mxu0 0.0
  %2305 = vmatpush2.msra.mxu0 0.0
  %2306 = vmatprep.subr.mxu0 0.0
  %2307 = vmatpush2.msra.mxu0 0.0
  %2308 = vmatprep.subr.mxu0 0.0
  %2309 = vmatpush2.msra.mxu0 0.0
  %2310 = vmatprep.subr.mxu0 0.0
  %2311 = vmatpush2.msra.mxu0 0.0
  %2312 = vmatprep.subr.mxu0 0.0
  %2313 = vmatpush2.msra.mxu0 0.0
  %2314 = vmatprep.subr.mxu0 0.0
  %2315 = vmatpush2.msra.mxu0 0.0
  %2316 = vmatprep.subr.mxu0 0.0
  %2317 = vmatpush2.msra.mxu0 0.0
  %2318 = vmatprep.subr.mxu0 0.0
  %2319 = vmatpush2.msra.mxu0 0.0
  %2320 = vmatprep.subr.mxu0 0.0
  %2321 = vmatpush2.msra.mxu0 0.0
  %2322 = vmatprep.subr.mxu0 0.0
  %2323 = vmatpush2.msra.mxu0 0.0
  %2324 = vmatprep.subr.mxu0 0.0
  %2325 = vmatpush2.msra.mxu0 0.0
  %2326 = vmatprep.subr.mxu0 0.0
  %2327 = vmatpush2.msra.mxu0 0.0
  %2328 = vmatprep.subr.mxu0 0.0
  %2329 = vmatpush2.msra.mxu0 0.0
  %2330 = vmatprep.subr.mxu0 0.0
  %2331 = vmatpush2.msra.mxu0 0.0
  %2332 = vmatprep.mubr.f32.mxu0 0.0
  %2333 = vmatmul.mubr.f32.gmra.mxu0 %v2263
  %v2334 = vpop.f32.mrf.mxu0
  %v2335 = vadd.f32 0.0, %v2334
  %v2336 = vpop.f32.mrf.mxu0
  %2337 = vmatprep.mubr.f32.mxu0 0.0
  %2338 = vmatmul.mubr.f32.gmra.mxu0 %v2266
  %v2339 = vpop.f32.mrf.mxu0
  %v2340 = vadd.f32 0.0, %v2339
  %v2341 = vpop.f32.mrf.mxu0
  %2342 = vdwg.mxu0
  %2343 = vrot.lane.b32.xlu0 %v726, 112
  %v2344 = vpop.permute.xlu0 %2343
  %2345 = vrot.lane.b32.xlu0 %v727, 112
  %v2346 = vpop.permute.xlu0 %2345
  %2347 = vrot.lane.b32.xlu0 %v612, 80
  %v2348 = vpop.permute.xlu0 %2347
  %2349 = vrot.lane.b32.xlu0 %v617, 80
  %v2350 = vpop.permute.xlu0 %2349
  %v2351 = vsel %vm748, %v2344, 0
  %v2353 = vsel %vm748, %v2346, 0
  %v2355 = vsel %vm748, %v2348, 0
  %v2357 = vsel %vm748, %v2350, 0
  %2359 = vmatprep.subr.mxu0 0.0
  %2360 = vmatpush1.xpose.msra.mxu0 0.0
  %2361 = vmatprep.subr.mxu0 0.0
  %2362 = vmatpush1.xpose.msra.mxu0 0.0
  %2363 = vmatprep.subr.mxu0 0.0
  %2364 = vmatpush1.xpose.msra.mxu0 0.0
  %2365 = vmatprep.subr.mxu0 0.0
  %2366 = vmatpush1.xpose.msra.mxu0 0.0
  %2367 = vmatprep.subr.mxu0 0.0
  %2368 = vmatpush1.xpose.msra.mxu0 0.0
  %2369 = vmatprep.subr.mxu0 0.0
  %2370 = vmatpush1.xpose.msra.mxu0 0.0
  %2371 = vmatprep.subr.mxu0 0.0
  %2372 = vmatpush1.xpose.msra.mxu0 0.0
  %2373 = vmatprep.subr.mxu0 0.0
  %2374 = vmatpush1.xpose.msra.mxu0 0.0
  %2375 = vmatprep.subr.mxu0 0.0
  %2376 = vmatpush1.xpose.msra.mxu0 0.0
  %2377 = vmatprep.subr.mxu0 0.0
  %2378 = vmatpush1.xpose.msra.mxu0 0.0
  %2379 = vmatprep.subr.mxu0 0.0
  %2380 = vmatpush1.xpose.msra.mxu0 0.0
  %2381 = vmatprep.subr.mxu0 0.0
  %2382 = vmatpush1.xpose.msra.mxu0 0.0
  %2383 = vmatprep.subr.mxu0 0.0
  %2384 = vmatpush1.xpose.msra.mxu0 0.0
  %2385 = vmatprep.subr.mxu0 0.0
  %2386 = vmatpush1.xpose.msra.mxu0 0.0
  %2387 = vmatprep.subr.mxu0 0.0
  %2388 = vmatpush1.xpose.msra.mxu0 %v2357
  %2389 = vmatprep.subr.mxu0 0.0
  %2390 = vmatpush1.xpose.msra.mxu0 %v2355
  %2391 = vmatprep.subr.mxu0 0.0
  %2392 = vmatpush2.xpose.msra.mxu0 0.0
  %2393 = vmatprep.subr.mxu0 0.0
  %2394 = vmatpush2.xpose.msra.mxu0 0.0
  %2395 = vmatprep.subr.mxu0 0.0
  %2396 = vmatpush2.xpose.msra.mxu0 0.0
  %2397 = vmatprep.subr.mxu0 0.0
  %2398 = vmatpush2.xpose.msra.mxu0 0.0
  %2399 = vmatprep.subr.mxu0 0.0
  %2400 = vmatpush2.xpose.msra.mxu0 0.0
  %2401 = vmatprep.subr.mxu0 0.0
  %2402 = vmatpush2.xpose.msra.mxu0 0.0
  %2403 = vmatprep.subr.mxu0 0.0
  %2404 = vmatpush2.xpose.msra.mxu0 0.0
  %2405 = vmatprep.subr.mxu0 0.0
  %2406 = vmatpush2.xpose.msra.mxu0 0.0
  %2407 = vmatprep.subr.mxu0 0.0
  %2408 = vmatpush2.xpose.msra.mxu0 0.0
  %2409 = vmatprep.subr.mxu0 0.0
  %2410 = vmatpush2.xpose.msra.mxu0 0.0
  %2411 = vmatprep.subr.mxu0 0.0
  %2412 = vmatpush2.xpose.msra.mxu0 0.0
  %2413 = vmatprep.subr.mxu0 0.0
  %2414 = vmatpush2.xpose.msra.mxu0 0.0
  %2415 = vmatprep.subr.mxu0 0.0
  %2416 = vmatpush2.xpose.msra.mxu0 0.0
  %2417 = vmatprep.subr.mxu0 0.0
  %2418 = vmatpush2.xpose.msra.mxu0 0.0
  %2419 = vmatprep.subr.mxu0 0.0
  %2420 = vmatpush2.xpose.msra.mxu0 0.0
  %2421 = vmatprep.subr.mxu0 0.0
  %2422 = vmatpush2.xpose.msra.mxu0 0.0
  %2423 = vmatprep.mubr.f32.mxu0 0.0
  %2424 = vmatmul.mubr.f32.gmra.mxu0 %v2351
  %v2425 = vpop.f32.mrf.mxu0
  %v2426 = vadd.f32 %v706, %v2425
  %v2427 = vpop.f32.mrf.mxu0
  %2428 = vmatprep.mubr.f32.mxu0 0.0
  %2429 = vmatmul.mubr.f32.gmra.mxu0 %v2353
  %v2430 = vpop.f32.mrf.mxu0
  %v2431 = vadd.f32 %v707, %v2430
  %v2432 = vpop.f32.mrf.mxu0
  %2433 = vdwg.mxu0
  %2434 = vrot.lane.b32.xlu0 %v728, 112
  %v2435 = vpop.permute.xlu0 %2434
  %2436 = vrot.lane.b32.xlu0 %v729, 112
  %v2437 = vpop.permute.xlu0 %2436
  %2438 = vrot.lane.b32.xlu0 %v622, 80
  %v2439 = vpop.permute.xlu0 %2438
  %2440 = vrot.lane.b32.xlu0 %v627, 80
  %v2441 = vpop.permute.xlu0 %2440
  %v2442 = vsel %vm748, %v2435, 0
  %v2444 = vsel %vm748, %v2437, 0
  %v2446 = vsel %vm748, %v2439, 0
  %v2448 = vsel %vm748, %v2441, 0
  %2450 = vmatprep.subr.mxu0 0.0
  %2451 = vmatpush1.xpose.msra.mxu0 0.0
  %2452 = vmatprep.subr.mxu0 0.0
  %2453 = vmatpush1.xpose.msra.mxu0 0.0
  %2454 = vmatprep.subr.mxu0 0.0
  %2455 = vmatpush1.xpose.msra.mxu0 0.0
  %2456 = vmatprep.subr.mxu0 0.0
  %2457 = vmatpush1.xpose.msra.mxu0 0.0
  %2458 = vmatprep.subr.mxu0 0.0
  %2459 = vmatpush1.xpose.msra.mxu0 0.0
  %2460 = vmatprep.subr.mxu0 0.0
  %2461 = vmatpush1.xpose.msra.mxu0 0.0
  %2462 = vmatprep.subr.mxu0 0.0
  %2463 = vmatpush1.xpose.msra.mxu0 0.0
  %2464 = vmatprep.subr.mxu0 0.0
  %2465 = vmatpush1.xpose.msra.mxu0 0.0
  %2466 = vmatprep.subr.mxu0 0.0
  %2467 = vmatpush1.xpose.msra.mxu0 0.0
  %2468 = vmatprep.subr.mxu0 0.0
  %2469 = vmatpush1.xpose.msra.mxu0 0.0
  %2470 = vmatprep.subr.mxu0 0.0
  %2471 = vmatpush1.xpose.msra.mxu0 0.0
  %2472 = vmatprep.subr.mxu0 0.0
  %2473 = vmatpush1.xpose.msra.mxu0 0.0
  %2474 = vmatprep.subr.mxu0 0.0
  %2475 = vmatpush1.xpose.msra.mxu0 0.0
  %2476 = vmatprep.subr.mxu0 0.0
  %2477 = vmatpush1.xpose.msra.mxu0 0.0
  %2478 = vmatprep.subr.mxu0 0.0
  %2479 = vmatpush1.xpose.msra.mxu0 %v2448
  %2480 = vmatprep.subr.mxu0 0.0
  %2481 = vmatpush1.xpose.msra.mxu0 %v2446
  %2482 = vmatprep.subr.mxu0 0.0
  %2483 = vmatpush2.xpose.msra.mxu0 0.0
  %2484 = vmatprep.subr.mxu0 0.0
  %2485 = vmatpush2.xpose.msra.mxu0 0.0
  %2486 = vmatprep.subr.mxu0 0.0
  %2487 = vmatpush2.xpose.msra.mxu0 0.0
  %2488 = vmatprep.subr.mxu0 0.0
  %2489 = vmatpush2.xpose.msra.mxu0 0.0
  %2490 = vmatprep.subr.mxu0 0.0
  %2491 = vmatpush2.xpose.msra.mxu0 0.0
  %2492 = vmatprep.subr.mxu0 0.0
  %2493 = vmatpush2.xpose.msra.mxu0 0.0
  %2494 = vmatprep.subr.mxu0 0.0
  %2495 = vmatpush2.xpose.msra.mxu0 0.0
  %2496 = vmatprep.subr.mxu0 0.0
  %2497 = vmatpush2.xpose.msra.mxu0 0.0
  %2498 = vmatprep.subr.mxu0 0.0
  %2499 = vmatpush2.xpose.msra.mxu0 0.0
  %2500 = vmatprep.subr.mxu0 0.0
  %2501 = vmatpush2.xpose.msra.mxu0 0.0
  %2502 = vmatprep.subr.mxu0 0.0
  %2503 = vmatpush2.xpose.msra.mxu0 0.0
  %2504 = vmatprep.subr.mxu0 0.0
  %2505 = vmatpush2.xpose.msra.mxu0 0.0
  %2506 = vmatprep.subr.mxu0 0.0
  %2507 = vmatpush2.xpose.msra.mxu0 0.0
  %2508 = vmatprep.subr.mxu0 0.0
  %2509 = vmatpush2.xpose.msra.mxu0 0.0
  %2510 = vmatprep.subr.mxu0 0.0
  %2511 = vmatpush2.xpose.msra.mxu0 0.0
  %2512 = vmatprep.subr.mxu0 0.0
  %2513 = vmatpush2.xpose.msra.mxu0 0.0
  %2514 = vmatprep.mubr.f32.mxu0 0.0
  %2515 = vmatmul.mubr.f32.gmra.mxu0 %v2442
  %v2516 = vpop.f32.mrf.mxu0
  %v2517 = vadd.f32 %v708, %v2516
  %v2518 = vpop.f32.mrf.mxu0
  %2519 = vmatprep.mubr.f32.mxu0 0.0
  %2520 = vmatmul.mubr.f32.gmra.mxu0 %v2444
  %v2521 = vpop.f32.mrf.mxu0
  %v2522 = vadd.f32 %v709, %v2521
  %v2523 = vpop.f32.mrf.mxu0
  %2524 = vdwg.mxu0
  %2525 = vrot.lane.b32.xlu0 %v730, 112
  %v2526 = vpop.permute.xlu0 %2525
  %2527 = vrot.lane.b32.xlu0 %v731, 112
  %v2528 = vpop.permute.xlu0 %2527
  %2529 = vrot.lane.b32.xlu0 %v632, 80
  %v2530 = vpop.permute.xlu0 %2529
  %2531 = vrot.lane.b32.xlu0 %v637, 80
  %v2532 = vpop.permute.xlu0 %2531
  %v2533 = vsel %vm748, %v2526, 0
  %v2535 = vsel %vm748, %v2528, 0
  %v2537 = vsel %vm748, %v2530, 0
  %v2539 = vsel %vm748, %v2532, 0
  %2541 = vmatprep.subr.mxu0 0.0
  %2542 = vmatpush1.xpose.msra.mxu0 0.0
  %2543 = vmatprep.subr.mxu0 0.0
  %2544 = vmatpush1.xpose.msra.mxu0 0.0
  %2545 = vmatprep.subr.mxu0 0.0
  %2546 = vmatpush1.xpose.msra.mxu0 0.0
  %2547 = vmatprep.subr.mxu0 0.0
  %2548 = vmatpush1.xpose.msra.mxu0 0.0
  %2549 = vmatprep.subr.mxu0 0.0
  %2550 = vmatpush1.xpose.msra.mxu0 0.0
  %2551 = vmatprep.subr.mxu0 0.0
  %2552 = vmatpush1.xpose.msra.mxu0 0.0
  %2553 = vmatprep.subr.mxu0 0.0
  %2554 = vmatpush1.xpose.msra.mxu0 0.0
  %2555 = vmatprep.subr.mxu0 0.0
  %2556 = vmatpush1.xpose.msra.mxu0 0.0
  %2557 = vmatprep.subr.mxu0 0.0
  %2558 = vmatpush1.xpose.msra.mxu0 0.0
  %2559 = vmatprep.subr.mxu0 0.0
  %2560 = vmatpush1.xpose.msra.mxu0 0.0
  %2561 = vmatprep.subr.mxu0 0.0
  %2562 = vmatpush1.xpose.msra.mxu0 0.0
  %2563 = vmatprep.subr.mxu0 0.0
  %2564 = vmatpush1.xpose.msra.mxu0 0.0
  %2565 = vmatprep.subr.mxu0 0.0
  %2566 = vmatpush1.xpose.msra.mxu0 0.0
  %2567 = vmatprep.subr.mxu0 0.0
  %2568 = vmatpush1.xpose.msra.mxu0 0.0
  %2569 = vmatprep.subr.mxu0 0.0
  %2570 = vmatpush1.xpose.msra.mxu0 %v2539
  %2571 = vmatprep.subr.mxu0 0.0
  %2572 = vmatpush1.xpose.msra.mxu0 %v2537
  %2573 = vmatprep.subr.mxu0 0.0
  %2574 = vmatpush2.xpose.msra.mxu0 0.0
  %2575 = vmatprep.subr.mxu0 0.0
  %2576 = vmatpush2.xpose.msra.mxu0 0.0
  %2577 = vmatprep.subr.mxu0 0.0
  %2578 = vmatpush2.xpose.msra.mxu0 0.0
  %2579 = vmatprep.subr.mxu0 0.0
  %2580 = vmatpush2.xpose.msra.mxu0 0.0
  %2581 = vmatprep.subr.mxu0 0.0
  %2582 = vmatpush2.xpose.msra.mxu0 0.0
  %2583 = vmatprep.subr.mxu0 0.0
  %2584 = vmatpush2.xpose.msra.mxu0 0.0
  %2585 = vmatprep.subr.mxu0 0.0
  %2586 = vmatpush2.xpose.msra.mxu0 0.0
  %2587 = vmatprep.subr.mxu0 0.0
  %2588 = vmatpush2.xpose.msra.mxu0 0.0
  %2589 = vmatprep.subr.mxu0 0.0
  %2590 = vmatpush2.xpose.msra.mxu0 0.0
  %2591 = vmatprep.subr.mxu0 0.0
  %2592 = vmatpush2.xpose.msra.mxu0 0.0
  %2593 = vmatprep.subr.mxu0 0.0
  %2594 = vmatpush2.xpose.msra.mxu0 0.0
  %2595 = vmatprep.subr.mxu0 0.0
  %2596 = vmatpush2.xpose.msra.mxu0 0.0
  %2597 = vmatprep.subr.mxu0 0.0
  %2598 = vmatpush2.xpose.msra.mxu0 0.0
  %2599 = vmatprep.subr.mxu0 0.0
  %2600 = vmatpush2.xpose.msra.mxu0 0.0
  %2601 = vmatprep.subr.mxu0 0.0
  %2602 = vmatpush2.xpose.msra.mxu0 0.0
  %2603 = vmatprep.subr.mxu0 0.0
  %2604 = vmatpush2.xpose.msra.mxu0 0.0
  %2605 = vmatprep.mubr.f32.mxu0 0.0
  %2606 = vmatmul.mubr.f32.gmra.mxu0 %v2533
  %v2607 = vpop.f32.mrf.mxu0
  %v2608 = vadd.f32 %v710, %v2607
  %v2609 = vpop.f32.mrf.mxu0
  %2610 = vmatprep.mubr.f32.mxu0 0.0
  %2611 = vmatmul.mubr.f32.gmra.mxu0 %v2535
  %v2612 = vpop.f32.mrf.mxu0
  %v2613 = vadd.f32 %v711, %v2612
  %v2614 = vpop.f32.mrf.mxu0
  %2615 = vdwg.mxu0
  %2616 = vrot.lane.b32.xlu0 %v732, 112
  %v2617 = vpop.permute.xlu0 %2616
  %2618 = vrot.lane.b32.xlu0 %v733, 112
  %v2619 = vpop.permute.xlu0 %2618
  %2620 = vrot.lane.b32.xlu0 %v642, 80
  %v2621 = vpop.permute.xlu0 %2620
  %2622 = vrot.lane.b32.xlu0 %v647, 80
  %v2623 = vpop.permute.xlu0 %2622
  %v2624 = vsel %vm748, %v2617, 0
  %v2626 = vsel %vm748, %v2619, 0
  %v2628 = vsel %vm748, %v2621, 0
  %v2630 = vsel %vm748, %v2623, 0
  %2632 = vmatprep.subr.mxu0 0.0
  %2633 = vmatpush1.xpose.msra.mxu0 0.0
  %2634 = vmatprep.subr.mxu0 0.0
  %2635 = vmatpush1.xpose.msra.mxu0 0.0
  %2636 = vmatprep.subr.mxu0 0.0
  %2637 = vmatpush1.xpose.msra.mxu0 0.0
  %2638 = vmatprep.subr.mxu0 0.0
  %2639 = vmatpush1.xpose.msra.mxu0 0.0
  %2640 = vmatprep.subr.mxu0 0.0
  %2641 = vmatpush1.xpose.msra.mxu0 0.0
  %2642 = vmatprep.subr.mxu0 0.0
  %2643 = vmatpush1.xpose.msra.mxu0 0.0
  %2644 = vmatprep.subr.mxu0 0.0
  %2645 = vmatpush1.xpose.msra.mxu0 0.0
  %2646 = vmatprep.subr.mxu0 0.0
  %2647 = vmatpush1.xpose.msra.mxu0 0.0
  %2648 = vmatprep.subr.mxu0 0.0
  %2649 = vmatpush1.xpose.msra.mxu0 0.0
  %2650 = vmatprep.subr.mxu0 0.0
  %2651 = vmatpush1.xpose.msra.mxu0 0.0
  %2652 = vmatprep.subr.mxu0 0.0
  %2653 = vmatpush1.xpose.msra.mxu0 0.0
  %2654 = vmatprep.subr.mxu0 0.0
  %2655 = vmatpush1.xpose.msra.mxu0 0.0
  %2656 = vmatprep.subr.mxu0 0.0
  %2657 = vmatpush1.xpose.msra.mxu0 0.0
  %2658 = vmatprep.subr.mxu0 0.0
  %2659 = vmatpush1.xpose.msra.mxu0 0.0
  %2660 = vmatprep.subr.mxu0 0.0
  %2661 = vmatpush1.xpose.msra.mxu0 %v2630
  %2662 = vmatprep.subr.mxu0 0.0
  %2663 = vmatpush1.xpose.msra.mxu0 %v2628
  %2664 = vmatprep.subr.mxu0 0.0
  %2665 = vmatpush2.xpose.msra.mxu0 0.0
  %2666 = vmatprep.subr.mxu0 0.0
  %2667 = vmatpush2.xpose.msra.mxu0 0.0
  %2668 = vmatprep.subr.mxu0 0.0
  %2669 = vmatpush2.xpose.msra.mxu0 0.0
  %2670 = vmatprep.subr.mxu0 0.0
  %2671 = vmatpush2.xpose.msra.mxu0 0.0
  %2672 = vmatprep.subr.mxu0 0.0
  %2673 = vmatpush2.xpose.msra.mxu0 0.0
  %2674 = vmatprep.subr.mxu0 0.0
  %2675 = vmatpush2.xpose.msra.mxu0 0.0
  %2676 = vmatprep.subr.mxu0 0.0
  %2677 = vmatpush2.xpose.msra.mxu0 0.0
  %2678 = vmatprep.subr.mxu0 0.0
  %2679 = vmatpush2.xpose.msra.mxu0 0.0
  %2680 = vmatprep.subr.mxu0 0.0
  %2681 = vmatpush2.xpose.msra.mxu0 0.0
  %2682 = vmatprep.subr.mxu0 0.0
  %2683 = vmatpush2.xpose.msra.mxu0 0.0
  %2684 = vmatprep.subr.mxu0 0.0
  %2685 = vmatpush2.xpose.msra.mxu0 0.0
  %2686 = vmatprep.subr.mxu0 0.0
  %2687 = vmatpush2.xpose.msra.mxu0 0.0
  %2688 = vmatprep.subr.mxu0 0.0
  %2689 = vmatpush2.xpose.msra.mxu0 0.0
  %2690 = vmatprep.subr.mxu0 0.0
  %2691 = vmatpush2.xpose.msra.mxu0 0.0
  %2692 = vmatprep.subr.mxu0 0.0
  %2693 = vmatpush2.xpose.msra.mxu0 0.0
  %2694 = vmatprep.subr.mxu0 0.0
  %2695 = vmatpush2.xpose.msra.mxu0 0.0
  %2696 = vmatprep.mubr.f32.mxu0 0.0
  %2697 = vmatmul.mubr.f32.gmra.mxu0 %v2624
  %v2698 = vpop.f32.mrf.mxu0
  %v2699 = vadd.f32 %v712, %v2698
  %v2700 = vpop.f32.mrf.mxu0
  %2701 = vmatprep.mubr.f32.mxu0 0.0
  %2702 = vmatmul.mubr.f32.gmra.mxu0 %v2626
  %v2703 = vpop.f32.mrf.mxu0
  %v2704 = vadd.f32 %v713, %v2703
  %v2705 = vpop.f32.mrf.mxu0
  %2706 = vdwg.mxu0
  %2707 = vrot.lane.b32.xlu0 %v734, 112
  %v2708 = vpop.permute.xlu0 %2707
  %2709 = vrot.lane.b32.xlu0 %v735, 112
  %v2710 = vpop.permute.xlu0 %2709
  %2711 = vrot.lane.b32.xlu0 %v652, 80
  %v2712 = vpop.permute.xlu0 %2711
  %2713 = vrot.lane.b32.xlu0 %v657, 80
  %v2714 = vpop.permute.xlu0 %2713
  %v2715 = vsel %vm748, %v2708, 0
  %v2717 = vsel %vm748, %v2710, 0
  %v2719 = vsel %vm748, %v2712, 0
  %v2721 = vsel %vm748, %v2714, 0
  %2723 = vmatprep.subr.mxu0 0.0
  %2724 = vmatpush1.xpose.msra.mxu0 0.0
  %2725 = vmatprep.subr.mxu0 0.0
  %2726 = vmatpush1.xpose.msra.mxu0 0.0
  %2727 = vmatprep.subr.mxu0 0.0
  %2728 = vmatpush1.xpose.msra.mxu0 0.0
  %2729 = vmatprep.subr.mxu0 0.0
  %2730 = vmatpush1.xpose.msra.mxu0 0.0
  %2731 = vmatprep.subr.mxu0 0.0
  %2732 = vmatpush1.xpose.msra.mxu0 0.0
  %2733 = vmatprep.subr.mxu0 0.0
  %2734 = vmatpush1.xpose.msra.mxu0 0.0
  %2735 = vmatprep.subr.mxu0 0.0
  %2736 = vmatpush1.xpose.msra.mxu0 0.0
  %2737 = vmatprep.subr.mxu0 0.0
  %2738 = vmatpush1.xpose.msra.mxu0 0.0
  %2739 = vmatprep.subr.mxu0 0.0
  %2740 = vmatpush1.xpose.msra.mxu0 0.0
  %2741 = vmatprep.subr.mxu0 0.0
  %2742 = vmatpush1.xpose.msra.mxu0 0.0
  %2743 = vmatprep.subr.mxu0 0.0
  %2744 = vmatpush1.xpose.msra.mxu0 0.0
  %2745 = vmatprep.subr.mxu0 0.0
  %2746 = vmatpush1.xpose.msra.mxu0 0.0
  %2747 = vmatprep.subr.mxu0 0.0
  %2748 = vmatpush1.xpose.msra.mxu0 0.0
  %2749 = vmatprep.subr.mxu0 0.0
  %2750 = vmatpush1.xpose.msra.mxu0 0.0
  %2751 = vmatprep.subr.mxu0 0.0
  %2752 = vmatpush1.xpose.msra.mxu0 %v2721
  %2753 = vmatprep.subr.mxu0 0.0
  %2754 = vmatpush1.xpose.msra.mxu0 %v2719
  %2755 = vmatprep.subr.mxu0 0.0
  %2756 = vmatpush2.xpose.msra.mxu0 0.0
  %2757 = vmatprep.subr.mxu0 0.0
  %2758 = vmatpush2.xpose.msra.mxu0 0.0
  %2759 = vmatprep.subr.mxu0 0.0
  %2760 = vmatpush2.xpose.msra.mxu0 0.0
  %2761 = vmatprep.subr.mxu0 0.0
  %2762 = vmatpush2.xpose.msra.mxu0 0.0
  %2763 = vmatprep.subr.mxu0 0.0
  %2764 = vmatpush2.xpose.msra.mxu0 0.0
  %2765 = vmatprep.subr.mxu0 0.0
  %2766 = vmatpush2.xpose.msra.mxu0 0.0
  %2767 = vmatprep.subr.mxu0 0.0
  %2768 = vmatpush2.xpose.msra.mxu0 0.0
  %2769 = vmatprep.subr.mxu0 0.0
  %2770 = vmatpush2.xpose.msra.mxu0 0.0
  %2771 = vmatprep.subr.mxu0 0.0
  %2772 = vmatpush2.xpose.msra.mxu0 0.0
  %2773 = vmatprep.subr.mxu0 0.0
  %2774 = vmatpush2.xpose.msra.mxu0 0.0
  %2775 = vmatprep.subr.mxu0 0.0
  %2776 = vmatpush2.xpose.msra.mxu0 0.0
  %2777 = vmatprep.subr.mxu0 0.0
  %2778 = vmatpush2.xpose.msra.mxu0 0.0
  %2779 = vmatprep.subr.mxu0 0.0
  %2780 = vmatpush2.xpose.msra.mxu0 0.0
  %2781 = vmatprep.subr.mxu0 0.0
  %2782 = vmatpush2.xpose.msra.mxu0 0.0
  %2783 = vmatprep.subr.mxu0 0.0
  %2784 = vmatpush2.xpose.msra.mxu0 0.0
  %2785 = vmatprep.subr.mxu0 0.0
  %2786 = vmatpush2.xpose.msra.mxu0 0.0
  %2787 = vmatprep.mubr.f32.mxu0 0.0
  %2788 = vmatmul.mubr.f32.gmra.mxu0 %v2715
  %v2789 = vpop.f32.mrf.mxu0
  %v2790 = vadd.f32 %v714, %v2789
  %v2791 = vpop.f32.mrf.mxu0
  %2792 = vmatprep.mubr.f32.mxu0 0.0
  %2793 = vmatmul.mubr.f32.gmra.mxu0 %v2717
  %v2794 = vpop.f32.mrf.mxu0
  %v2795 = vadd.f32 %v715, %v2794
  %v2796 = vpop.f32.mrf.mxu0
  %2797 = vdwg.mxu0
  %2798 = vrot.lane.b32.xlu0 %v736, 112
  %v2799 = vpop.permute.xlu0 %2798
  %2800 = vrot.lane.b32.xlu0 %v737, 112
  %v2801 = vpop.permute.xlu0 %2800
  %2802 = vrot.lane.b32.xlu0 %v662, 80
  %v2803 = vpop.permute.xlu0 %2802
  %2804 = vrot.lane.b32.xlu0 %v667, 80
  %v2805 = vpop.permute.xlu0 %2804
  %v2806 = vsel %vm748, %v2799, 0
  %v2808 = vsel %vm748, %v2801, 0
  %v2810 = vsel %vm748, %v2803, 0
  %v2812 = vsel %vm748, %v2805, 0
  %2814 = vmatprep.subr.mxu0 0.0
  %2815 = vmatpush1.xpose.msra.mxu0 0.0
  %2816 = vmatprep.subr.mxu0 0.0
  %2817 = vmatpush1.xpose.msra.mxu0 0.0
  %2818 = vmatprep.subr.mxu0 0.0
  %2819 = vmatpush1.xpose.msra.mxu0 0.0
  %2820 = vmatprep.subr.mxu0 0.0
  %2821 = vmatpush1.xpose.msra.mxu0 0.0
  %2822 = vmatprep.subr.mxu0 0.0
  %2823 = vmatpush1.xpose.msra.mxu0 0.0
  %2824 = vmatprep.subr.mxu0 0.0
  %2825 = vmatpush1.xpose.msra.mxu0 0.0
  %2826 = vmatprep.subr.mxu0 0.0
  %2827 = vmatpush1.xpose.msra.mxu0 0.0
  %2828 = vmatprep.subr.mxu0 0.0
  %2829 = vmatpush1.xpose.msra.mxu0 0.0
  %2830 = vmatprep.subr.mxu0 0.0
  %2831 = vmatpush1.xpose.msra.mxu0 0.0
  %2832 = vmatprep.subr.mxu0 0.0
  %2833 = vmatpush1.xpose.msra.mxu0 0.0
  %2834 = vmatprep.subr.mxu0 0.0
  %2835 = vmatpush1.xpose.msra.mxu0 0.0
  %2836 = vmatprep.subr.mxu0 0.0
  %2837 = vmatpush1.xpose.msra.mxu0 0.0
  %2838 = vmatprep.subr.mxu0 0.0
  %2839 = vmatpush1.xpose.msra.mxu0 0.0
  %2840 = vmatprep.subr.mxu0 0.0
  %2841 = vmatpush1.xpose.msra.mxu0 0.0
  %2842 = vmatprep.subr.mxu0 0.0
  %2843 = vmatpush1.xpose.msra.mxu0 %v2812
  %2844 = vmatprep.subr.mxu0 0.0
  %2845 = vmatpush1.xpose.msra.mxu0 %v2810
  %2846 = vmatprep.subr.mxu0 0.0
  %2847 = vmatpush2.xpose.msra.mxu0 0.0
  %2848 = vmatprep.subr.mxu0 0.0
  %2849 = vmatpush2.xpose.msra.mxu0 0.0
  %2850 = vmatprep.subr.mxu0 0.0
  %2851 = vmatpush2.xpose.msra.mxu0 0.0
  %2852 = vmatprep.subr.mxu0 0.0
  %2853 = vmatpush2.xpose.msra.mxu0 0.0
  %2854 = vmatprep.subr.mxu0 0.0
  %2855 = vmatpush2.xpose.msra.mxu0 0.0
  %2856 = vmatprep.subr.mxu0 0.0
  %2857 = vmatpush2.xpose.msra.mxu0 0.0
  %2858 = vmatprep.subr.mxu0 0.0
  %2859 = vmatpush2.xpose.msra.mxu0 0.0
  %2860 = vmatprep.subr.mxu0 0.0
  %2861 = vmatpush2.xpose.msra.mxu0 0.0
  %2862 = vmatprep.subr.mxu0 0.0
  %2863 = vmatpush2.xpose.msra.mxu0 0.0
  %2864 = vmatprep.subr.mxu0 0.0
  %2865 = vmatpush2.xpose.msra.mxu0 0.0
  %2866 = vmatprep.subr.mxu0 0.0
  %2867 = vmatpush2.xpose.msra.mxu0 0.0
  %2868 = vmatprep.subr.mxu0 0.0
  %2869 = vmatpush2.xpose.msra.mxu0 0.0
  %2870 = vmatprep.subr.mxu0 0.0
  %2871 = vmatpush2.xpose.msra.mxu0 0.0
  %2872 = vmatprep.subr.mxu0 0.0
  %2873 = vmatpush2.xpose.msra.mxu0 0.0
  %2874 = vmatprep.subr.mxu0 0.0
  %2875 = vmatpush2.xpose.msra.mxu0 0.0
  %2876 = vmatprep.subr.mxu0 0.0
  %2877 = vmatpush2.xpose.msra.mxu0 0.0
  %2878 = vmatprep.mubr.f32.mxu0 0.0
  %2879 = vmatmul.mubr.f32.gmra.mxu0 %v2806
  %v2880 = vpop.f32.mrf.mxu0
  %v2881 = vadd.f32 %v716, %v2880
  %v2882 = vpop.f32.mrf.mxu0
  %2883 = vmatprep.mubr.f32.mxu0 0.0
  %2884 = vmatmul.mubr.f32.gmra.mxu0 %v2808
  %v2885 = vpop.f32.mrf.mxu0
  %v2886 = vadd.f32 %v717, %v2885
  %v2887 = vpop.f32.mrf.mxu0
  %2888 = vdwg.mxu0
  %2889 = vrot.lane.b32.xlu0 %v738, 112
  %v2890 = vpop.permute.xlu0 %2889
  %2891 = vrot.lane.b32.xlu0 %v739, 112
  %v2892 = vpop.permute.xlu0 %2891
  %2893 = vrot.lane.b32.xlu0 %v672, 80
  %v2894 = vpop.permute.xlu0 %2893
  %2895 = vrot.lane.b32.xlu0 %v677, 80
  %v2896 = vpop.permute.xlu0 %2895
  %v2897 = vsel %vm748, %v2890, 0
  %v2899 = vsel %vm748, %v2892, 0
  %v2901 = vsel %vm748, %v2894, 0
  %v2903 = vsel %vm748, %v2896, 0
  %2905 = vmatprep.subr.mxu0 0.0
  %2906 = vmatpush1.xpose.msra.mxu0 0.0
  %2907 = vmatprep.subr.mxu0 0.0
  %2908 = vmatpush1.xpose.msra.mxu0 0.0
  %2909 = vmatprep.subr.mxu0 0.0
  %2910 = vmatpush1.xpose.msra.mxu0 0.0
  %2911 = vmatprep.subr.mxu0 0.0
  %2912 = vmatpush1.xpose.msra.mxu0 0.0
  %2913 = vmatprep.subr.mxu0 0.0
  %2914 = vmatpush1.xpose.msra.mxu0 0.0
  %2915 = vmatprep.subr.mxu0 0.0
  %2916 = vmatpush1.xpose.msra.mxu0 0.0
  %2917 = vmatprep.subr.mxu0 0.0
  %2918 = vmatpush1.xpose.msra.mxu0 0.0
  %2919 = vmatprep.subr.mxu0 0.0
  %2920 = vmatpush1.xpose.msra.mxu0 0.0
  %2921 = vmatprep.subr.mxu0 0.0
  %2922 = vmatpush1.xpose.msra.mxu0 0.0
  %2923 = vmatprep.subr.mxu0 0.0
  %2924 = vmatpush1.xpose.msra.mxu0 0.0
  %2925 = vmatprep.subr.mxu0 0.0
  %2926 = vmatpush1.xpose.msra.mxu0 0.0
  %2927 = vmatprep.subr.mxu0 0.0
  %2928 = vmatpush1.xpose.msra.mxu0 0.0
  %2929 = vmatprep.subr.mxu0 0.0
  %2930 = vmatpush1.xpose.msra.mxu0 0.0
  %2931 = vmatprep.subr.mxu0 0.0
  %2932 = vmatpush1.xpose.msra.mxu0 0.0
  %2933 = vmatprep.subr.mxu0 0.0
  %2934 = vmatpush1.xpose.msra.mxu0 %v2903
  %2935 = vmatprep.subr.mxu0 0.0
  %2936 = vmatpush1.xpose.msra.mxu0 %v2901
  %2937 = vmatprep.subr.mxu0 0.0
  %2938 = vmatpush2.xpose.msra.mxu0 0.0
  %2939 = vmatprep.subr.mxu0 0.0
  %2940 = vmatpush2.xpose.msra.mxu0 0.0
  %2941 = vmatprep.subr.mxu0 0.0
  %2942 = vmatpush2.xpose.msra.mxu0 0.0
  %2943 = vmatprep.subr.mxu0 0.0
  %2944 = vmatpush2.xpose.msra.mxu0 0.0
  %2945 = vmatprep.subr.mxu0 0.0
  %2946 = vmatpush2.xpose.msra.mxu0 0.0
  %2947 = vmatprep.subr.mxu0 0.0
  %2948 = vmatpush2.xpose.msra.mxu0 0.0
  %2949 = vmatprep.subr.mxu0 0.0
  %2950 = vmatpush2.xpose.msra.mxu0 0.0
  %2951 = vmatprep.subr.mxu0 0.0
  %2952 = vmatpush2.xpose.msra.mxu0 0.0
  %2953 = vmatprep.subr.mxu0 0.0
  %2954 = vmatpush2.xpose.msra.mxu0 0.0
  %2955 = vmatprep.subr.mxu0 0.0
  %2956 = vmatpush2.xpose.msra.mxu0 0.0
  %2957 = vmatprep.subr.mxu0 0.0
  %2958 = vmatpush2.xpose.msra.mxu0 0.0
  %2959 = vmatprep.subr.mxu0 0.0
  %2960 = vmatpush2.xpose.msra.mxu0 0.0
  %2961 = vmatprep.subr.mxu0 0.0
  %2962 = vmatpush2.xpose.msra.mxu0 0.0
  %2963 = vmatprep.subr.mxu0 0.0
  %2964 = vmatpush2.xpose.msra.mxu0 0.0
  %2965 = vmatprep.subr.mxu0 0.0
  %2966 = vmatpush2.xpose.msra.mxu0 0.0
  %2967 = vmatprep.subr.mxu0 0.0
  %2968 = vmatpush2.xpose.msra.mxu0 0.0
  %2969 = vmatprep.mubr.f32.mxu0 0.0
  %2970 = vmatmul.mubr.f32.gmra.mxu0 %v2897
  %v2971 = vpop.f32.mrf.mxu0
  %v2972 = vadd.f32 %v718, %v2971
  %v2973 = vpop.f32.mrf.mxu0
  %2974 = vmatprep.mubr.f32.mxu0 0.0
  %2975 = vmatmul.mubr.f32.gmra.mxu0 %v2899
  %v2976 = vpop.f32.mrf.mxu0
  %v2977 = vadd.f32 %v719, %v2976
  %v2978 = vpop.f32.mrf.mxu0
  %2979 = vdwg.mxu0
  %2980 = vrot.lane.b32.xlu0 %v740, 112
  %v2981 = vpop.permute.xlu0 %2980
  %2982 = vrot.lane.b32.xlu0 %v741, 112
  %v2983 = vpop.permute.xlu0 %2982
  %2984 = vrot.lane.b32.xlu0 %v682, 80
  %v2985 = vpop.permute.xlu0 %2984
  %2986 = vrot.lane.b32.xlu0 %v687, 80
  %v2987 = vpop.permute.xlu0 %2986
  %v2988 = vsel %vm748, %v2981, 0
  %v2990 = vsel %vm748, %v2983, 0
  %v2992 = vsel %vm748, %v2985, 0
  %v2994 = vsel %vm748, %v2987, 0
  %2996 = vmatprep.subr.mxu0 0.0
  %2997 = vmatpush1.xpose.msra.mxu0 0.0
  %2998 = vmatprep.subr.mxu0 0.0
  %2999 = vmatpush1.xpose.msra.mxu0 0.0
  %3000 = vmatprep.subr.mxu0 0.0
  %3001 = vmatpush1.xpose.msra.mxu0 0.0
  %3002 = vmatprep.subr.mxu0 0.0
  %3003 = vmatpush1.xpose.msra.mxu0 0.0
  %3004 = vmatprep.subr.mxu0 0.0
  %3005 = vmatpush1.xpose.msra.mxu0 0.0
  %3006 = vmatprep.subr.mxu0 0.0
  %3007 = vmatpush1.xpose.msra.mxu0 0.0
  %3008 = vmatprep.subr.mxu0 0.0
  %3009 = vmatpush1.xpose.msra.mxu0 0.0
  %3010 = vmatprep.subr.mxu0 0.0
  %3011 = vmatpush1.xpose.msra.mxu0 0.0
  %3012 = vmatprep.subr.mxu0 0.0
  %3013 = vmatpush1.xpose.msra.mxu0 0.0
  %3014 = vmatprep.subr.mxu0 0.0
  %3015 = vmatpush1.xpose.msra.mxu0 0.0
  %3016 = vmatprep.subr.mxu0 0.0
  %3017 = vmatpush1.xpose.msra.mxu0 0.0
  %3018 = vmatprep.subr.mxu0 0.0
  %3019 = vmatpush1.xpose.msra.mxu0 0.0
  %3020 = vmatprep.subr.mxu0 0.0
  %3021 = vmatpush1.xpose.msra.mxu0 0.0
  %3022 = vmatprep.subr.mxu0 0.0
  %3023 = vmatpush1.xpose.msra.mxu0 0.0
  %3024 = vmatprep.subr.mxu0 0.0
  %3025 = vmatpush1.xpose.msra.mxu0 %v2994
  %3026 = vmatprep.subr.mxu0 0.0
  %3027 = vmatpush1.xpose.msra.mxu0 %v2992
  %3028 = vmatprep.subr.mxu0 0.0
  %3029 = vmatpush2.xpose.msra.mxu0 0.0
  %3030 = vmatprep.subr.mxu0 0.0
  %3031 = vmatpush2.xpose.msra.mxu0 0.0
  %3032 = vmatprep.subr.mxu0 0.0
  %3033 = vmatpush2.xpose.msra.mxu0 0.0
  %3034 = vmatprep.subr.mxu0 0.0
  %3035 = vmatpush2.xpose.msra.mxu0 0.0
  %3036 = vmatprep.subr.mxu0 0.0
  %3037 = vmatpush2.xpose.msra.mxu0 0.0
  %3038 = vmatprep.subr.mxu0 0.0
  %3039 = vmatpush2.xpose.msra.mxu0 0.0
  %3040 = vmatprep.subr.mxu0 0.0
  %3041 = vmatpush2.xpose.msra.mxu0 0.0
  %3042 = vmatprep.subr.mxu0 0.0
  %3043 = vmatpush2.xpose.msra.mxu0 0.0
  %3044 = vmatprep.subr.mxu0 0.0
  %3045 = vmatpush2.xpose.msra.mxu0 0.0
  %3046 = vmatprep.subr.mxu0 0.0
  %3047 = vmatpush2.xpose.msra.mxu0 0.0
  %3048 = vmatprep.subr.mxu0 0.0
  %3049 = vmatpush2.xpose.msra.mxu0 0.0
  %3050 = vmatprep.subr.mxu0 0.0
  %3051 = vmatpush2.xpose.msra.mxu0 0.0
  %3052 = vmatprep.subr.mxu0 0.0
  %3053 = vmatpush2.xpose.msra.mxu0 0.0
  %3054 = vmatprep.subr.mxu0 0.0
  %3055 = vmatpush2.xpose.msra.mxu0 0.0
  %3056 = vmatprep.subr.mxu0 0.0
  %3057 = vmatpush2.xpose.msra.mxu0 0.0
  %3058 = vmatprep.subr.mxu0 0.0
  %3059 = vmatpush2.xpose.msra.mxu0 0.0
  %3060 = vmatprep.mubr.f32.mxu0 0.0
  %3061 = vmatmul.mubr.f32.gmra.mxu0 %v2988
  %v3062 = vpop.f32.mrf.mxu0
  %v3063 = vadd.f32 %v720, %v3062
  %v3064 = vpop.f32.mrf.mxu0
  %3065 = vmatprep.mubr.f32.mxu0 0.0
  %3066 = vmatmul.mubr.f32.gmra.mxu0 %v2990
  %v3067 = vpop.f32.mrf.mxu0
  %v3068 = vadd.f32 %v721, %v3067
  %v3069 = vpop.f32.mrf.mxu0
  %3070 = vdwg.mxu0
  %v3071 = vsel %vm748, %v2426, -inf
  %3072 = vmax.xlane.f32.xlu0 %v3071
  %v3073 = vpop.xlane.xlu0 %3072
  %v3074 = vsel %vm748, %v2431, -inf
  %3075 = vmax.xlane.f32.xlu0 %v3074
  %v3076 = vpop.xlane.xlu0 %3075
  %v3077 = vsel %vm748, %v2517, -inf
  %3078 = vmax.xlane.f32.xlu0 %v3077
  %v3079 = vpop.xlane.xlu0 %3078
  %v3080 = vsel %vm748, %v2522, -inf
  %3081 = vmax.xlane.f32.xlu0 %v3080
  %v3082 = vpop.xlane.xlu0 %3081
  %v3083 = vsel %vm748, %v2608, -inf
  %3084 = vmax.xlane.f32.xlu0 %v3083
  %v3085 = vpop.xlane.xlu0 %3084
  %v3086 = vsel %vm748, %v2613, -inf
  %3087 = vmax.xlane.f32.xlu0 %v3086
  %v3088 = vpop.xlane.xlu0 %3087
  %v3089 = vsel %vm748, %v2699, -inf
  %3090 = vmax.xlane.f32.xlu0 %v3089
  %v3091 = vpop.xlane.xlu0 %3090
  %v3092 = vsel %vm748, %v2704, -inf
  %3093 = vmax.xlane.f32.xlu0 %v3092
  %v3094 = vpop.xlane.xlu0 %3093
  %v3095 = vsel %vm748, %v2790, -inf
  %3096 = vmax.xlane.f32.xlu0 %v3095
  %v3097 = vpop.xlane.xlu0 %3096
  %v3098 = vsel %vm748, %v2795, -inf
  %3099 = vmax.xlane.f32.xlu0 %v3098
  %v3100 = vpop.xlane.xlu0 %3099
  %v3101 = vsel %vm748, %v2881, -inf
  %3102 = vmax.xlane.f32.xlu0 %v3101
  %v3103 = vpop.xlane.xlu0 %3102
  %v3104 = vsel %vm748, %v2886, -inf
  %3105 = vmax.xlane.f32.xlu0 %v3104
  %v3106 = vpop.xlane.xlu0 %3105
  %v3107 = vsel %vm748, %v2972, -inf
  %3108 = vmax.xlane.f32.xlu0 %v3107
  %v3109 = vpop.xlane.xlu0 %3108
  %v3110 = vsel %vm748, %v2977, -inf
  %3111 = vmax.xlane.f32.xlu0 %v3110
  %v3112 = vpop.xlane.xlu0 %3111
  %v3113 = vsel %vm748, %v3063, -inf
  %3114 = vmax.xlane.f32.xlu0 %v3113
  %v3115 = vpop.xlane.xlu0 %3114
  %v3116 = vsel %vm748, %v3068, -inf
  %3117 = vmax.xlane.f32.xlu0 %v3116
  %v3118 = vpop.xlane.xlu0 %3117
  %v3119 = vsub.f32 %v2426, %v3073
  %v3120 = vsub.f32 %v2431, %v3076
  %v3121 = vsub.f32 %v2517, %v3079
  %v3122 = vsub.f32 %v2522, %v3082
  %v3123 = vsub.f32 %v2608, %v3085
  %v3124 = vsub.f32 %v2613, %v3088
  %v3125 = vsub.f32 %v2699, %v3091
  %v3126 = vsub.f32 %v2704, %v3094
  %v3127 = vsub.f32 %v2790, %v3097
  %v3128 = vsub.f32 %v2795, %v3100
  %v3129 = vsub.f32 %v2881, %v3103
  %v3130 = vsub.f32 %v2886, %v3106
  %v3131 = vsub.f32 %v2972, %v3109
  %v3132 = vsub.f32 %v2977, %v3112
  %v3133 = vsub.f32 %v3063, %v3115
  %v3134 = vsub.f32 %v3068, %v3118
  %v3135 = vmul.f32 %v3119, 1.442695
  %v3136 = vpow.pop %v3135
  %v3137 = vmul.f32 %v3120, 1.442695
  %v3138 = vpow.pop %v3137
  %v3139 = vmul.f32 %v3121, 1.442695
  %v3140 = vpow.pop %v3139
  %v3141 = vmul.f32 %v3122, 1.442695
  %v3142 = vpow.pop %v3141
  %v3143 = vmul.f32 %v3123, 1.442695
  %v3144 = vpow.pop %v3143
  %v3145 = vmul.f32 %v3124, 1.442695
  %v3146 = vpow.pop %v3145
  %v3147 = vmul.f32 %v3125, 1.442695
  %v3148 = vpow.pop %v3147
  %v3149 = vmul.f32 %v3126, 1.442695
  %v3150 = vpow.pop %v3149
  %v3151 = vmul.f32 %v3127, 1.442695
  %v3152 = vpow.pop %v3151
  %v3153 = vmul.f32 %v3128, 1.442695
  %v3154 = vpow.pop %v3153
  %v3155 = vmul.f32 %v3129, 1.442695
  %v3156 = vpow.pop %v3155
  %v3157 = vmul.f32 %v3130, 1.442695
  %v3158 = vpow.pop %v3157
  %v3159 = vmul.f32 %v3131, 1.442695
  %v3160 = vpow.pop %v3159
  %v3161 = vmul.f32 %v3132, 1.442695
  %v3162 = vpow.pop %v3161
  %v3163 = vmul.f32 %v3133, 1.442695
  %v3164 = vpow.pop %v3163
  %v3165 = vmul.f32 %v3134, 1.442695
  %v3166 = vpow.pop %v3165
  %v3167 = vsel %vm748, %v3136, 0.0
  %3168 = vadd.xlane.f32.xlu0 %v3167
  %v3169 = vpop.xlane.xlu0 %3168
  %v3170 = vsel %vm748, %v3138, 0.0
  %3171 = vadd.xlane.f32.xlu0 %v3170
  %v3172 = vpop.xlane.xlu0 %3171
  %v3173 = vsel %vm748, %v3140, 0.0
  %3174 = vadd.xlane.f32.xlu0 %v3173
  %v3175 = vpop.xlane.xlu0 %3174
  %v3176 = vsel %vm748, %v3142, 0.0
  %3177 = vadd.xlane.f32.xlu0 %v3176
  %v3178 = vpop.xlane.xlu0 %3177
  %v3179 = vsel %vm748, %v3144, 0.0
  %3180 = vadd.xlane.f32.xlu0 %v3179
  %v3181 = vpop.xlane.xlu0 %3180
  %v3182 = vsel %vm748, %v3146, 0.0
  %3183 = vadd.xlane.f32.xlu0 %v3182
  %v3184 = vpop.xlane.xlu0 %3183
  %v3185 = vsel %vm748, %v3148, 0.0
  %3186 = vadd.xlane.f32.xlu0 %v3185
  %v3187 = vpop.xlane.xlu0 %3186
  %v3188 = vsel %vm748, %v3150, 0.0
  %3189 = vadd.xlane.f32.xlu0 %v3188
  %v3190 = vpop.xlane.xlu0 %3189
  %v3191 = vsel %vm748, %v3152, 0.0
  %3192 = vadd.xlane.f32.xlu0 %v3191
  %v3193 = vpop.xlane.xlu0 %3192
  %v3194 = vsel %vm748, %v3154, 0.0
  %3195 = vadd.xlane.f32.xlu0 %v3194
  %v3196 = vpop.xlane.xlu0 %3195
  %v3197 = vsel %vm748, %v3156, 0.0
  %3198 = vadd.xlane.f32.xlu0 %v3197
  %v3199 = vpop.xlane.xlu0 %3198
  %v3200 = vsel %vm748, %v3158, 0.0
  %3201 = vadd.xlane.f32.xlu0 %v3200
  %v3202 = vpop.xlane.xlu0 %3201
  %v3203 = vsel %vm748, %v3160, 0.0
  %3204 = vadd.xlane.f32.xlu0 %v3203
  %v3205 = vpop.xlane.xlu0 %3204
  %v3206 = vsel %vm748, %v3162, 0.0
  %3207 = vadd.xlane.f32.xlu0 %v3206
  %v3208 = vpop.xlane.xlu0 %3207
  %v3209 = vsel %vm748, %v3164, 0.0
  %3210 = vadd.xlane.f32.xlu0 %v3209
  %v3211 = vpop.xlane.xlu0 %3210
  %v3212 = vsel %vm748, %v3166, 0.0
  %3213 = vadd.xlane.f32.xlu0 %v3212
  %v3214 = vpop.xlane.xlu0 %3213
  %v3215 = vrcp.pop %v3169
  %v3216 = vrcp.pop %v3172
  %v3217 = vrcp.pop %v3175
  %v3218 = vrcp.pop %v3178
  %v3219 = vrcp.pop %v3181
  %v3220 = vrcp.pop %v3184
  %v3221 = vrcp.pop %v3187
  %v3222 = vrcp.pop %v3190
  %v3223 = vrcp.pop %v3193
  %v3224 = vrcp.pop %v3196
  %v3225 = vrcp.pop %v3199
  %v3226 = vrcp.pop %v3202
  %v3227 = vrcp.pop %v3205
  %v3228 = vrcp.pop %v3208
  %v3229 = vrcp.pop %v3211
  %v3230 = vrcp.pop %v3214
  %v3231 = vmul.f32 %v3136, %v3215
  %v3232 = vmul.f32 %v3138, %v3216
  %v3233 = vmul.f32 %v3140, %v3217
  %v3234 = vmul.f32 %v3142, %v3218
  %v3235 = vmul.f32 %v3144, %v3219
  %v3236 = vmul.f32 %v3146, %v3220
  %v3237 = vmul.f32 %v3148, %v3221
  %v3238 = vmul.f32 %v3150, %v3222
  %v3239 = vmul.f32 %v3152, %v3223
  %v3240 = vmul.f32 %v3154, %v3224
  %v3241 = vmul.f32 %v3156, %v3225
  %v3242 = vmul.f32 %v3158, %v3226
  %v3243 = vmul.f32 %v3160, %v3227
  %v3244 = vmul.f32 %v3162, %v3228
  %v3245 = vmul.f32 %v3164, %v3229
  %v3246 = vmul.f32 %v3166, %v3230
  %3247 = vrot.lane.b32.xlu0 %v612, 48
  %v3248 = vpop.permute.xlu0 %3247
  %3249 = vrot.lane.b32.xlu0 %v617, 48
  %v3250 = vpop.permute.xlu0 %3249
  %v3254 = vsel %vm748, %v3231, 0
  %v3257 = vsel %vm748, %v3232, 0
  %3259 = vmatprep.subr.mxu0 0.0
  %3260 = vmatpush1.msra.mxu0 0.0
  %3261 = vmatprep.subr.mxu0 0.0
  %3262 = vmatpush1.msra.mxu0 0.0
  %3263 = vmatprep.subr.mxu0 0.0
  %3264 = vmatpush1.msra.mxu0 0.0
  %3265 = vmatprep.subr.mxu0 0.0
  %3266 = vmatpush1.msra.mxu0 0.0
  %3267 = vmatprep.subr.mxu0 0.0
  %3268 = vmatpush1.msra.mxu0 0.0
  %3269 = vmatprep.subr.mxu0 0.0
  %3270 = vmatpush1.msra.mxu0 0.0
  %3271 = vmatprep.subr.mxu0 0.0
  %3272 = vmatpush1.msra.mxu0 0.0
  %3273 = vmatprep.subr.mxu0 0.0
  %3274 = vmatpush1.msra.mxu0 0.0
  %3275 = vmatprep.subr.mxu0 0.0
  %3276 = vmatpush1.msra.mxu0 0.0
  %3277 = vmatprep.subr.mxu0 0.0
  %3278 = vmatpush1.msra.mxu0 0.0
  %3279 = vmatprep.subr.mxu0 0.0
  %3280 = vmatpush1.msra.mxu0 0.0
  %3281 = vmatprep.subr.mxu0 0.0
  %3282 = vmatpush1.msra.mxu0 0.0
  %3283 = vmatprep.subr.mxu0 0.0
  %3284 = vmatpush1.msra.mxu0 0.0
  %3285 = vmatprep.subr.mxu0 0.0
  %3286 = vmatpush1.msra.mxu0 0.0
  %3287 = vmatprep.subr.mxu0 0.0
  %3288 = vmatpush1.msra.mxu0 %v3250
  %3289 = vmatprep.subr.mxu0 0.0
  %3290 = vmatpush1.msra.mxu0 %v3248
  %3291 = vmatprep.subr.mxu0 0.0
  %3292 = vmatpush2.msra.mxu0 0.0
  %3293 = vmatprep.subr.mxu0 0.0
  %3294 = vmatpush2.msra.mxu0 0.0
  %3295 = vmatprep.subr.mxu0 0.0
  %3296 = vmatpush2.msra.mxu0 0.0
  %3297 = vmatprep.subr.mxu0 0.0
  %3298 = vmatpush2.msra.mxu0 0.0
  %3299 = vmatprep.subr.mxu0 0.0
  %3300 = vmatpush2.msra.mxu0 0.0
  %3301 = vmatprep.subr.mxu0 0.0
  %3302 = vmatpush2.msra.mxu0 0.0
  %3303 = vmatprep.subr.mxu0 0.0
  %3304 = vmatpush2.msra.mxu0 0.0
  %3305 = vmatprep.subr.mxu0 0.0
  %3306 = vmatpush2.msra.mxu0 0.0
  %3307 = vmatprep.subr.mxu0 0.0
  %3308 = vmatpush2.msra.mxu0 0.0
  %3309 = vmatprep.subr.mxu0 0.0
  %3310 = vmatpush2.msra.mxu0 0.0
  %3311 = vmatprep.subr.mxu0 0.0
  %3312 = vmatpush2.msra.mxu0 0.0
  %3313 = vmatprep.subr.mxu0 0.0
  %3314 = vmatpush2.msra.mxu0 0.0
  %3315 = vmatprep.subr.mxu0 0.0
  %3316 = vmatpush2.msra.mxu0 0.0
  %3317 = vmatprep.subr.mxu0 0.0
  %3318 = vmatpush2.msra.mxu0 0.0
  %3319 = vmatprep.subr.mxu0 0.0
  %3320 = vmatpush2.msra.mxu0 0.0
  %3321 = vmatprep.subr.mxu0 0.0
  %3322 = vmatpush2.msra.mxu0 0.0
  %3323 = vmatprep.mubr.f32.mxu0 0.0
  %3324 = vmatmul.mubr.f32.gmra.mxu0 %v3254
  %v3325 = vpop.f32.mrf.mxu0
  %v3326 = vadd.f32 0.0, %v3325
  %v3327 = vpop.f32.mrf.mxu0
  %3328 = vmatprep.mubr.f32.mxu0 0.0
  %3329 = vmatmul.mubr.f32.gmra.mxu0 %v3257
  %v3330 = vpop.f32.mrf.mxu0
  %v3331 = vadd.f32 0.0, %v3330
  %v3332 = vpop.f32.mrf.mxu0
  %3333 = vdwg.mxu0
  %3334 = vrot.lane.b32.xlu0 %v622, 48
  %v3335 = vpop.permute.xlu0 %3334
  %3336 = vrot.lane.b32.xlu0 %v627, 48
  %v3337 = vpop.permute.xlu0 %3336
  %v3341 = vsel %vm748, %v3233, 0
  %v3344 = vsel %vm748, %v3234, 0
  %3346 = vmatprep.subr.mxu0 0.0
  %3347 = vmatpush1.msra.mxu0 0.0
  %3348 = vmatprep.subr.mxu0 0.0
  %3349 = vmatpush1.msra.mxu0 0.0
  %3350 = vmatprep.subr.mxu0 0.0
  %3351 = vmatpush1.msra.mxu0 0.0
  %3352 = vmatprep.subr.mxu0 0.0
  %3353 = vmatpush1.msra.mxu0 0.0
  %3354 = vmatprep.subr.mxu0 0.0
  %3355 = vmatpush1.msra.mxu0 0.0
  %3356 = vmatprep.subr.mxu0 0.0
  %3357 = vmatpush1.msra.mxu0 0.0
  %3358 = vmatprep.subr.mxu0 0.0
  %3359 = vmatpush1.msra.mxu0 0.0
  %3360 = vmatprep.subr.mxu0 0.0
  %3361 = vmatpush1.msra.mxu0 0.0
  %3362 = vmatprep.subr.mxu0 0.0
  %3363 = vmatpush1.msra.mxu0 0.0
  %3364 = vmatprep.subr.mxu0 0.0
  %3365 = vmatpush1.msra.mxu0 0.0
  %3366 = vmatprep.subr.mxu0 0.0
  %3367 = vmatpush1.msra.mxu0 0.0
  %3368 = vmatprep.subr.mxu0 0.0
  %3369 = vmatpush1.msra.mxu0 0.0
  %3370 = vmatprep.subr.mxu0 0.0
  %3371 = vmatpush1.msra.mxu0 0.0
  %3372 = vmatprep.subr.mxu0 0.0
  %3373 = vmatpush1.msra.mxu0 0.0
  %3374 = vmatprep.subr.mxu0 0.0
  %3375 = vmatpush1.msra.mxu0 %v3337
  %3376 = vmatprep.subr.mxu0 0.0
  %3377 = vmatpush1.msra.mxu0 %v3335
  %3378 = vmatprep.subr.mxu0 0.0
  %3379 = vmatpush2.msra.mxu0 0.0
  %3380 = vmatprep.subr.mxu0 0.0
  %3381 = vmatpush2.msra.mxu0 0.0
  %3382 = vmatprep.subr.mxu0 0.0
  %3383 = vmatpush2.msra.mxu0 0.0
  %3384 = vmatprep.subr.mxu0 0.0
  %3385 = vmatpush2.msra.mxu0 0.0
  %3386 = vmatprep.subr.mxu0 0.0
  %3387 = vmatpush2.msra.mxu0 0.0
  %3388 = vmatprep.subr.mxu0 0.0
  %3389 = vmatpush2.msra.mxu0 0.0
  %3390 = vmatprep.subr.mxu0 0.0
  %3391 = vmatpush2.msra.mxu0 0.0
  %3392 = vmatprep.subr.mxu0 0.0
  %3393 = vmatpush2.msra.mxu0 0.0
  %3394 = vmatprep.subr.mxu0 0.0
  %3395 = vmatpush2.msra.mxu0 0.0
  %3396 = vmatprep.subr.mxu0 0.0
  %3397 = vmatpush2.msra.mxu0 0.0
  %3398 = vmatprep.subr.mxu0 0.0
  %3399 = vmatpush2.msra.mxu0 0.0
  %3400 = vmatprep.subr.mxu0 0.0
  %3401 = vmatpush2.msra.mxu0 0.0
  %3402 = vmatprep.subr.mxu0 0.0
  %3403 = vmatpush2.msra.mxu0 0.0
  %3404 = vmatprep.subr.mxu0 0.0
  %3405 = vmatpush2.msra.mxu0 0.0
  %3406 = vmatprep.subr.mxu0 0.0
  %3407 = vmatpush2.msra.mxu0 0.0
  %3408 = vmatprep.subr.mxu0 0.0
  %3409 = vmatpush2.msra.mxu0 0.0
  %3410 = vmatprep.mubr.f32.mxu0 0.0
  %3411 = vmatmul.mubr.f32.gmra.mxu0 %v3341
  %v3412 = vpop.f32.mrf.mxu0
  %v3413 = vadd.f32 0.0, %v3412
  %v3414 = vpop.f32.mrf.mxu0
  %3415 = vmatprep.mubr.f32.mxu0 0.0
  %3416 = vmatmul.mubr.f32.gmra.mxu0 %v3344
  %v3417 = vpop.f32.mrf.mxu0
  %v3418 = vadd.f32 0.0, %v3417
  %v3419 = vpop.f32.mrf.mxu0
  %3420 = vdwg.mxu0
  %3421 = vrot.lane.b32.xlu0 %v632, 48
  %v3422 = vpop.permute.xlu0 %3421
  %3423 = vrot.lane.b32.xlu0 %v637, 48
  %v3424 = vpop.permute.xlu0 %3423
  %v3428 = vsel %vm748, %v3235, 0
  %v3431 = vsel %vm748, %v3236, 0
  %3433 = vmatprep.subr.mxu0 0.0
  %3434 = vmatpush1.msra.mxu0 0.0
  %3435 = vmatprep.subr.mxu0 0.0
  %3436 = vmatpush1.msra.mxu0 0.0
  %3437 = vmatprep.subr.mxu0 0.0
  %3438 = vmatpush1.msra.mxu0 0.0
  %3439 = vmatprep.subr.mxu0 0.0
  %3440 = vmatpush1.msra.mxu0 0.0
  %3441 = vmatprep.subr.mxu0 0.0
  %3442 = vmatpush1.msra.mxu0 0.0
  %3443 = vmatprep.subr.mxu0 0.0
  %3444 = vmatpush1.msra.mxu0 0.0
  %3445 = vmatprep.subr.mxu0 0.0
  %3446 = vmatpush1.msra.mxu0 0.0
  %3447 = vmatprep.subr.mxu0 0.0
  %3448 = vmatpush1.msra.mxu0 0.0
  %3449 = vmatprep.subr.mxu0 0.0
  %3450 = vmatpush1.msra.mxu0 0.0
  %3451 = vmatprep.subr.mxu0 0.0
  %3452 = vmatpush1.msra.mxu0 0.0
  %3453 = vmatprep.subr.mxu0 0.0
  %3454 = vmatpush1.msra.mxu0 0.0
  %3455 = vmatprep.subr.mxu0 0.0
  %3456 = vmatpush1.msra.mxu0 0.0
  %3457 = vmatprep.subr.mxu0 0.0
  %3458 = vmatpush1.msra.mxu0 0.0
  %3459 = vmatprep.subr.mxu0 0.0
  %3460 = vmatpush1.msra.mxu0 0.0
  %3461 = vmatprep.subr.mxu0 0.0
  %3462 = vmatpush1.msra.mxu0 %v3424
  %3463 = vmatprep.subr.mxu0 0.0
  %3464 = vmatpush1.msra.mxu0 %v3422
  %3465 = vmatprep.subr.mxu0 0.0
  %3466 = vmatpush2.msra.mxu0 0.0
  %3467 = vmatprep.subr.mxu0 0.0
  %3468 = vmatpush2.msra.mxu0 0.0
  %3469 = vmatprep.subr.mxu0 0.0
  %3470 = vmatpush2.msra.mxu0 0.0
  %3471 = vmatprep.subr.mxu0 0.0
  %3472 = vmatpush2.msra.mxu0 0.0
  %3473 = vmatprep.subr.mxu0 0.0
  %3474 = vmatpush2.msra.mxu0 0.0
  %3475 = vmatprep.subr.mxu0 0.0
  %3476 = vmatpush2.msra.mxu0 0.0
  %3477 = vmatprep.subr.mxu0 0.0
  %3478 = vmatpush2.msra.mxu0 0.0
  %3479 = vmatprep.subr.mxu0 0.0
  %3480 = vmatpush2.msra.mxu0 0.0
  %3481 = vmatprep.subr.mxu0 0.0
  %3482 = vmatpush2.msra.mxu0 0.0
  %3483 = vmatprep.subr.mxu0 0.0
  %3484 = vmatpush2.msra.mxu0 0.0
  %3485 = vmatprep.subr.mxu0 0.0
  %3486 = vmatpush2.msra.mxu0 0.0
  %3487 = vmatprep.subr.mxu0 0.0
  %3488 = vmatpush2.msra.mxu0 0.0
  %3489 = vmatprep.subr.mxu0 0.0
  %3490 = vmatpush2.msra.mxu0 0.0
  %3491 = vmatprep.subr.mxu0 0.0
  %3492 = vmatpush2.msra.mxu0 0.0
  %3493 = vmatprep.subr.mxu0 0.0
  %3494 = vmatpush2.msra.mxu0 0.0
  %3495 = vmatprep.subr.mxu0 0.0
  %3496 = vmatpush2.msra.mxu0 0.0
  %3497 = vmatprep.mubr.f32.mxu0 0.0
  %3498 = vmatmul.mubr.f32.gmra.mxu0 %v3428
  %v3499 = vpop.f32.mrf.mxu0
  %v3500 = vadd.f32 0.0, %v3499
  %v3501 = vpop.f32.mrf.mxu0
  %3502 = vmatprep.mubr.f32.mxu0 0.0
  %3503 = vmatmul.mubr.f32.gmra.mxu0 %v3431
  %v3504 = vpop.f32.mrf.mxu0
  %v3505 = vadd.f32 0.0, %v3504
  %v3506 = vpop.f32.mrf.mxu0
  %3507 = vdwg.mxu0
  %3508 = vrot.lane.b32.xlu0 %v642, 48
  %v3509 = vpop.permute.xlu0 %3508
  %3510 = vrot.lane.b32.xlu0 %v647, 48
  %v3511 = vpop.permute.xlu0 %3510
  %v3515 = vsel %vm748, %v3237, 0
  %v3518 = vsel %vm748, %v3238, 0
  %3520 = vmatprep.subr.mxu0 0.0
  %3521 = vmatpush1.msra.mxu0 0.0
  %3522 = vmatprep.subr.mxu0 0.0
  %3523 = vmatpush1.msra.mxu0 0.0
  %3524 = vmatprep.subr.mxu0 0.0
  %3525 = vmatpush1.msra.mxu0 0.0
  %3526 = vmatprep.subr.mxu0 0.0
  %3527 = vmatpush1.msra.mxu0 0.0
  %3528 = vmatprep.subr.mxu0 0.0
  %3529 = vmatpush1.msra.mxu0 0.0
  %3530 = vmatprep.subr.mxu0 0.0
  %3531 = vmatpush1.msra.mxu0 0.0
  %3532 = vmatprep.subr.mxu0 0.0
  %3533 = vmatpush1.msra.mxu0 0.0
  %3534 = vmatprep.subr.mxu0 0.0
  %3535 = vmatpush1.msra.mxu0 0.0
  %3536 = vmatprep.subr.mxu0 0.0
  %3537 = vmatpush1.msra.mxu0 0.0
  %3538 = vmatprep.subr.mxu0 0.0
  %3539 = vmatpush1.msra.mxu0 0.0
  %3540 = vmatprep.subr.mxu0 0.0
  %3541 = vmatpush1.msra.mxu0 0.0
  %3542 = vmatprep.subr.mxu0 0.0
  %3543 = vmatpush1.msra.mxu0 0.0
  %3544 = vmatprep.subr.mxu0 0.0
  %3545 = vmatpush1.msra.mxu0 0.0
  %3546 = vmatprep.subr.mxu0 0.0
  %3547 = vmatpush1.msra.mxu0 0.0
  %3548 = vmatprep.subr.mxu0 0.0
  %3549 = vmatpush1.msra.mxu0 %v3511
  %3550 = vmatprep.subr.mxu0 0.0
  %3551 = vmatpush1.msra.mxu0 %v3509
  %3552 = vmatprep.subr.mxu0 0.0
  %3553 = vmatpush2.msra.mxu0 0.0
  %3554 = vmatprep.subr.mxu0 0.0
  %3555 = vmatpush2.msra.mxu0 0.0
  %3556 = vmatprep.subr.mxu0 0.0
  %3557 = vmatpush2.msra.mxu0 0.0
  %3558 = vmatprep.subr.mxu0 0.0
  %3559 = vmatpush2.msra.mxu0 0.0
  %3560 = vmatprep.subr.mxu0 0.0
  %3561 = vmatpush2.msra.mxu0 0.0
  %3562 = vmatprep.subr.mxu0 0.0
  %3563 = vmatpush2.msra.mxu0 0.0
  %3564 = vmatprep.subr.mxu0 0.0
  %3565 = vmatpush2.msra.mxu0 0.0
  %3566 = vmatprep.subr.mxu0 0.0
  %3567 = vmatpush2.msra.mxu0 0.0
  %3568 = vmatprep.subr.mxu0 0.0
  %3569 = vmatpush2.msra.mxu0 0.0
  %3570 = vmatprep.subr.mxu0 0.0
  %3571 = vmatpush2.msra.mxu0 0.0
  %3572 = vmatprep.subr.mxu0 0.0
  %3573 = vmatpush2.msra.mxu0 0.0
  %3574 = vmatprep.subr.mxu0 0.0
  %3575 = vmatpush2.msra.mxu0 0.0
  %3576 = vmatprep.subr.mxu0 0.0
  %3577 = vmatpush2.msra.mxu0 0.0
  %3578 = vmatprep.subr.mxu0 0.0
  %3579 = vmatpush2.msra.mxu0 0.0
  %3580 = vmatprep.subr.mxu0 0.0
  %3581 = vmatpush2.msra.mxu0 0.0
  %3582 = vmatprep.subr.mxu0 0.0
  %3583 = vmatpush2.msra.mxu0 0.0
  %3584 = vmatprep.mubr.f32.mxu0 0.0
  %3585 = vmatmul.mubr.f32.gmra.mxu0 %v3515
  %v3586 = vpop.f32.mrf.mxu0
  %v3587 = vadd.f32 0.0, %v3586
  %v3588 = vpop.f32.mrf.mxu0
  %3589 = vmatprep.mubr.f32.mxu0 0.0
  %3590 = vmatmul.mubr.f32.gmra.mxu0 %v3518
  %v3591 = vpop.f32.mrf.mxu0
  %v3592 = vadd.f32 0.0, %v3591
  %v3593 = vpop.f32.mrf.mxu0
  %3594 = vdwg.mxu0
  %3595 = vrot.lane.b32.xlu0 %v652, 48
  %v3596 = vpop.permute.xlu0 %3595
  %3597 = vrot.lane.b32.xlu0 %v657, 48
  %v3598 = vpop.permute.xlu0 %3597
  %v3602 = vsel %vm748, %v3239, 0
  %v3605 = vsel %vm748, %v3240, 0
  %3607 = vmatprep.subr.mxu0 0.0
  %3608 = vmatpush1.msra.mxu0 0.0
  %3609 = vmatprep.subr.mxu0 0.0
  %3610 = vmatpush1.msra.mxu0 0.0
  %3611 = vmatprep.subr.mxu0 0.0
  %3612 = vmatpush1.msra.mxu0 0.0
  %3613 = vmatprep.subr.mxu0 0.0
  %3614 = vmatpush1.msra.mxu0 0.0
  %3615 = vmatprep.subr.mxu0 0.0
  %3616 = vmatpush1.msra.mxu0 0.0
  %3617 = vmatprep.subr.mxu0 0.0
  %3618 = vmatpush1.msra.mxu0 0.0
  %3619 = vmatprep.subr.mxu0 0.0
  %3620 = vmatpush1.msra.mxu0 0.0
  %3621 = vmatprep.subr.mxu0 0.0
  %3622 = vmatpush1.msra.mxu0 0.0
  %3623 = vmatprep.subr.mxu0 0.0
  %3624 = vmatpush1.msra.mxu0 0.0
  %3625 = vmatprep.subr.mxu0 0.0
  %3626 = vmatpush1.msra.mxu0 0.0
  %3627 = vmatprep.subr.mxu0 0.0
  %3628 = vmatpush1.msra.mxu0 0.0
  %3629 = vmatprep.subr.mxu0 0.0
  %3630 = vmatpush1.msra.mxu0 0.0
  %3631 = vmatprep.subr.mxu0 0.0
  %3632 = vmatpush1.msra.mxu0 0.0
  %3633 = vmatprep.subr.mxu0 0.0
  %3634 = vmatpush1.msra.mxu0 0.0
  %3635 = vmatprep.subr.mxu0 0.0
  %3636 = vmatpush1.msra.mxu0 %v3598
  %3637 = vmatprep.subr.mxu0 0.0
  %3638 = vmatpush1.msra.mxu0 %v3596
  %3639 = vmatprep.subr.mxu0 0.0
  %3640 = vmatpush2.msra.mxu0 0.0
  %3641 = vmatprep.subr.mxu0 0.0
  %3642 = vmatpush2.msra.mxu0 0.0
  %3643 = vmatprep.subr.mxu0 0.0
  %3644 = vmatpush2.msra.mxu0 0.0
  %3645 = vmatprep.subr.mxu0 0.0
  %3646 = vmatpush2.msra.mxu0 0.0
  %3647 = vmatprep.subr.mxu0 0.0
  %3648 = vmatpush2.msra.mxu0 0.0
  %3649 = vmatprep.subr.mxu0 0.0
  %3650 = vmatpush2.msra.mxu0 0.0
  %3651 = vmatprep.subr.mxu0 0.0
  %3652 = vmatpush2.msra.mxu0 0.0
  %3653 = vmatprep.subr.mxu0 0.0
  %3654 = vmatpush2.msra.mxu0 0.0
  %3655 = vmatprep.subr.mxu0 0.0
  %3656 = vmatpush2.msra.mxu0 0.0
  %3657 = vmatprep.subr.mxu0 0.0
  %3658 = vmatpush2.msra.mxu0 0.0
  %3659 = vmatprep.subr.mxu0 0.0
  %3660 = vmatpush2.msra.mxu0 0.0
  %3661 = vmatprep.subr.mxu0 0.0
  %3662 = vmatpush2.msra.mxu0 0.0
  %3663 = vmatprep.subr.mxu0 0.0
  %3664 = vmatpush2.msra.mxu0 0.0
  %3665 = vmatprep.subr.mxu0 0.0
  %3666 = vmatpush2.msra.mxu0 0.0
  %3667 = vmatprep.subr.mxu0 0.0
  %3668 = vmatpush2.msra.mxu0 0.0
  %3669 = vmatprep.subr.mxu0 0.0
  %3670 = vmatpush2.msra.mxu0 0.0
  %3671 = vmatprep.mubr.f32.mxu0 0.0
  %3672 = vmatmul.mubr.f32.gmra.mxu0 %v3602
  %v3673 = vpop.f32.mrf.mxu0
  %v3674 = vadd.f32 0.0, %v3673
  %v3675 = vpop.f32.mrf.mxu0
  %3676 = vmatprep.mubr.f32.mxu0 0.0
  %3677 = vmatmul.mubr.f32.gmra.mxu0 %v3605
  %v3678 = vpop.f32.mrf.mxu0
  %v3679 = vadd.f32 0.0, %v3678
  %v3680 = vpop.f32.mrf.mxu0
  %3681 = vdwg.mxu0
  %3682 = vrot.lane.b32.xlu0 %v662, 48
  %v3683 = vpop.permute.xlu0 %3682
  %3684 = vrot.lane.b32.xlu0 %v667, 48
  %v3685 = vpop.permute.xlu0 %3684
  %v3689 = vsel %vm748, %v3241, 0
  %v3692 = vsel %vm748, %v3242, 0
  %3694 = vmatprep.subr.mxu0 0.0
  %3695 = vmatpush1.msra.mxu0 0.0
  %3696 = vmatprep.subr.mxu0 0.0
  %3697 = vmatpush1.msra.mxu0 0.0
  %3698 = vmatprep.subr.mxu0 0.0
  %3699 = vmatpush1.msra.mxu0 0.0
  %3700 = vmatprep.subr.mxu0 0.0
  %3701 = vmatpush1.msra.mxu0 0.0
  %3702 = vmatprep.subr.mxu0 0.0
  %3703 = vmatpush1.msra.mxu0 0.0
  %3704 = vmatprep.subr.mxu0 0.0
  %3705 = vmatpush1.msra.mxu0 0.0
  %3706 = vmatprep.subr.mxu0 0.0
  %3707 = vmatpush1.msra.mxu0 0.0
  %3708 = vmatprep.subr.mxu0 0.0
  %3709 = vmatpush1.msra.mxu0 0.0
  %3710 = vmatprep.subr.mxu0 0.0
  %3711 = vmatpush1.msra.mxu0 0.0
  %3712 = vmatprep.subr.mxu0 0.0
  %3713 = vmatpush1.msra.mxu0 0.0
  %3714 = vmatprep.subr.mxu0 0.0
  %3715 = vmatpush1.msra.mxu0 0.0
  %3716 = vmatprep.subr.mxu0 0.0
  %3717 = vmatpush1.msra.mxu0 0.0
  %3718 = vmatprep.subr.mxu0 0.0
  %3719 = vmatpush1.msra.mxu0 0.0
  %3720 = vmatprep.subr.mxu0 0.0
  %3721 = vmatpush1.msra.mxu0 0.0
  %3722 = vmatprep.subr.mxu0 0.0
  %3723 = vmatpush1.msra.mxu0 %v3685
  %3724 = vmatprep.subr.mxu0 0.0
  %3725 = vmatpush1.msra.mxu0 %v3683
  %3726 = vmatprep.subr.mxu0 0.0
  %3727 = vmatpush2.msra.mxu0 0.0
  %3728 = vmatprep.subr.mxu0 0.0
  %3729 = vmatpush2.msra.mxu0 0.0
  %3730 = vmatprep.subr.mxu0 0.0
  %3731 = vmatpush2.msra.mxu0 0.0
  %3732 = vmatprep.subr.mxu0 0.0
  %3733 = vmatpush2.msra.mxu0 0.0
  %3734 = vmatprep.subr.mxu0 0.0
  %3735 = vmatpush2.msra.mxu0 0.0
  %3736 = vmatprep.subr.mxu0 0.0
  %3737 = vmatpush2.msra.mxu0 0.0
  %3738 = vmatprep.subr.mxu0 0.0
  %3739 = vmatpush2.msra.mxu0 0.0
  %3740 = vmatprep.subr.mxu0 0.0
  %3741 = vmatpush2.msra.mxu0 0.0
  %3742 = vmatprep.subr.mxu0 0.0
  %3743 = vmatpush2.msra.mxu0 0.0
  %3744 = vmatprep.subr.mxu0 0.0
  %3745 = vmatpush2.msra.mxu0 0.0
  %3746 = vmatprep.subr.mxu0 0.0
  %3747 = vmatpush2.msra.mxu0 0.0
  %3748 = vmatprep.subr.mxu0 0.0
  %3749 = vmatpush2.msra.mxu0 0.0
  %3750 = vmatprep.subr.mxu0 0.0
  %3751 = vmatpush2.msra.mxu0 0.0
  %3752 = vmatprep.subr.mxu0 0.0
  %3753 = vmatpush2.msra.mxu0 0.0
  %3754 = vmatprep.subr.mxu0 0.0
  %3755 = vmatpush2.msra.mxu0 0.0
  %3756 = vmatprep.subr.mxu0 0.0
  %3757 = vmatpush2.msra.mxu0 0.0
  %3758 = vmatprep.mubr.f32.mxu0 0.0
  %3759 = vmatmul.mubr.f32.gmra.mxu0 %v3689
  %v3760 = vpop.f32.mrf.mxu0
  %v3761 = vadd.f32 0.0, %v3760
  %v3762 = vpop.f32.mrf.mxu0
  %3763 = vmatprep.mubr.f32.mxu0 0.0
  %3764 = vmatmul.mubr.f32.gmra.mxu0 %v3692
  %v3765 = vpop.f32.mrf.mxu0
  %v3766 = vadd.f32 0.0, %v3765
  %v3767 = vpop.f32.mrf.mxu0
  %3768 = vdwg.mxu0
  %3769 = vrot.lane.b32.xlu0 %v672, 48
  %v3770 = vpop.permute.xlu0 %3769
  %3771 = vrot.lane.b32.xlu0 %v677, 48
  %v3772 = vpop.permute.xlu0 %3771
  %v3776 = vsel %vm748, %v3243, 0
  %v3779 = vsel %vm748, %v3244, 0
  %3781 = vmatprep.subr.mxu0 0.0
  %3782 = vmatpush1.msra.mxu0 0.0
  %3783 = vmatprep.subr.mxu0 0.0
  %3784 = vmatpush1.msra.mxu0 0.0
  %3785 = vmatprep.subr.mxu0 0.0
  %3786 = vmatpush1.msra.mxu0 0.0
  %3787 = vmatprep.subr.mxu0 0.0
  %3788 = vmatpush1.msra.mxu0 0.0
  %3789 = vmatprep.subr.mxu0 0.0
  %3790 = vmatpush1.msra.mxu0 0.0
  %3791 = vmatprep.subr.mxu0 0.0
  %3792 = vmatpush1.msra.mxu0 0.0
  %3793 = vmatprep.subr.mxu0 0.0
  %3794 = vmatpush1.msra.mxu0 0.0
  %3795 = vmatprep.subr.mxu0 0.0
  %3796 = vmatpush1.msra.mxu0 0.0
  %3797 = vmatprep.subr.mxu0 0.0
  %3798 = vmatpush1.msra.mxu0 0.0
  %3799 = vmatprep.subr.mxu0 0.0
  %3800 = vmatpush1.msra.mxu0 0.0
  %3801 = vmatprep.subr.mxu0 0.0
  %3802 = vmatpush1.msra.mxu0 0.0
  %3803 = vmatprep.subr.mxu0 0.0
  %3804 = vmatpush1.msra.mxu0 0.0
  %3805 = vmatprep.subr.mxu0 0.0
  %3806 = vmatpush1.msra.mxu0 0.0
  %3807 = vmatprep.subr.mxu0 0.0
  %3808 = vmatpush1.msra.mxu0 0.0
  %3809 = vmatprep.subr.mxu0 0.0
  %3810 = vmatpush1.msra.mxu0 %v3772
  %3811 = vmatprep.subr.mxu0 0.0
  %3812 = vmatpush1.msra.mxu0 %v3770
  %3813 = vmatprep.subr.mxu0 0.0
  %3814 = vmatpush2.msra.mxu0 0.0
  %3815 = vmatprep.subr.mxu0 0.0
  %3816 = vmatpush2.msra.mxu0 0.0
  %3817 = vmatprep.subr.mxu0 0.0
  %3818 = vmatpush2.msra.mxu0 0.0
  %3819 = vmatprep.subr.mxu0 0.0
  %3820 = vmatpush2.msra.mxu0 0.0
  %3821 = vmatprep.subr.mxu0 0.0
  %3822 = vmatpush2.msra.mxu0 0.0
  %3823 = vmatprep.subr.mxu0 0.0
  %3824 = vmatpush2.msra.mxu0 0.0
  %3825 = vmatprep.subr.mxu0 0.0
  %3826 = vmatpush2.msra.mxu0 0.0
  %3827 = vmatprep.subr.mxu0 0.0
  %3828 = vmatpush2.msra.mxu0 0.0
  %3829 = vmatprep.subr.mxu0 0.0
  %3830 = vmatpush2.msra.mxu0 0.0
  %3831 = vmatprep.subr.mxu0 0.0
  %3832 = vmatpush2.msra.mxu0 0.0
  %3833 = vmatprep.subr.mxu0 0.0
  %3834 = vmatpush2.msra.mxu0 0.0
  %3835 = vmatprep.subr.mxu0 0.0
  %3836 = vmatpush2.msra.mxu0 0.0
  %3837 = vmatprep.subr.mxu0 0.0
  %3838 = vmatpush2.msra.mxu0 0.0
  %3839 = vmatprep.subr.mxu0 0.0
  %3840 = vmatpush2.msra.mxu0 0.0
  %3841 = vmatprep.subr.mxu0 0.0
  %3842 = vmatpush2.msra.mxu0 0.0
  %3843 = vmatprep.subr.mxu0 0.0
  %3844 = vmatpush2.msra.mxu0 0.0
  %3845 = vmatprep.mubr.f32.mxu0 0.0
  %3846 = vmatmul.mubr.f32.gmra.mxu0 %v3776
  %v3847 = vpop.f32.mrf.mxu0
  %v3848 = vadd.f32 0.0, %v3847
  %v3849 = vpop.f32.mrf.mxu0
  %3850 = vmatprep.mubr.f32.mxu0 0.0
  %3851 = vmatmul.mubr.f32.gmra.mxu0 %v3779
  %v3852 = vpop.f32.mrf.mxu0
  %v3853 = vadd.f32 0.0, %v3852
  %v3854 = vpop.f32.mrf.mxu0
  %3855 = vdwg.mxu0
  %3856 = vrot.lane.b32.xlu0 %v682, 48
  %v3857 = vpop.permute.xlu0 %3856
  %3858 = vrot.lane.b32.xlu0 %v687, 48
  %v3859 = vpop.permute.xlu0 %3858
  %v3863 = vsel %vm748, %v3245, 0
  %v3866 = vsel %vm748, %v3246, 0
  %3868 = vmatprep.subr.mxu0 0.0
  %3869 = vmatpush1.msra.mxu0 0.0
  %3870 = vmatprep.subr.mxu0 0.0
  %3871 = vmatpush1.msra.mxu0 0.0
  %3872 = vmatprep.subr.mxu0 0.0
  %3873 = vmatpush1.msra.mxu0 0.0
  %3874 = vmatprep.subr.mxu0 0.0
  %3875 = vmatpush1.msra.mxu0 0.0
  %3876 = vmatprep.subr.mxu0 0.0
  %3877 = vmatpush1.msra.mxu0 0.0
  %3878 = vmatprep.subr.mxu0 0.0
  %3879 = vmatpush1.msra.mxu0 0.0
  %3880 = vmatprep.subr.mxu0 0.0
  %3881 = vmatpush1.msra.mxu0 0.0
  %3882 = vmatprep.subr.mxu0 0.0
  %3883 = vmatpush1.msra.mxu0 0.0
  %3884 = vmatprep.subr.mxu0 0.0
  %3885 = vmatpush1.msra.mxu0 0.0
  %3886 = vmatprep.subr.mxu0 0.0
  %3887 = vmatpush1.msra.mxu0 0.0
  %3888 = vmatprep.subr.mxu0 0.0
  %3889 = vmatpush1.msra.mxu0 0.0
  %3890 = vmatprep.subr.mxu0 0.0
  %3891 = vmatpush1.msra.mxu0 0.0
  %3892 = vmatprep.subr.mxu0 0.0
  %3893 = vmatpush1.msra.mxu0 0.0
  %3894 = vmatprep.subr.mxu0 0.0
  %3895 = vmatpush1.msra.mxu0 0.0
  %3896 = vmatprep.subr.mxu0 0.0
  %3897 = vmatpush1.msra.mxu0 %v3859
  %3898 = vmatprep.subr.mxu0 0.0
  %3899 = vmatpush1.msra.mxu0 %v3857
  %3900 = vmatprep.subr.mxu0 0.0
  %3901 = vmatpush2.msra.mxu0 0.0
  %3902 = vmatprep.subr.mxu0 0.0
  %3903 = vmatpush2.msra.mxu0 0.0
  %3904 = vmatprep.subr.mxu0 0.0
  %3905 = vmatpush2.msra.mxu0 0.0
  %3906 = vmatprep.subr.mxu0 0.0
  %3907 = vmatpush2.msra.mxu0 0.0
  %3908 = vmatprep.subr.mxu0 0.0
  %3909 = vmatpush2.msra.mxu0 0.0
  %3910 = vmatprep.subr.mxu0 0.0
  %3911 = vmatpush2.msra.mxu0 0.0
  %3912 = vmatprep.subr.mxu0 0.0
  %3913 = vmatpush2.msra.mxu0 0.0
  %3914 = vmatprep.subr.mxu0 0.0
  %3915 = vmatpush2.msra.mxu0 0.0
  %3916 = vmatprep.subr.mxu0 0.0
  %3917 = vmatpush2.msra.mxu0 0.0
  %3918 = vmatprep.subr.mxu0 0.0
  %3919 = vmatpush2.msra.mxu0 0.0
  %3920 = vmatprep.subr.mxu0 0.0
  %3921 = vmatpush2.msra.mxu0 0.0
  %3922 = vmatprep.subr.mxu0 0.0
  %3923 = vmatpush2.msra.mxu0 0.0
  %3924 = vmatprep.subr.mxu0 0.0
  %3925 = vmatpush2.msra.mxu0 0.0
  %3926 = vmatprep.subr.mxu0 0.0
  %3927 = vmatpush2.msra.mxu0 0.0
  %3928 = vmatprep.subr.mxu0 0.0
  %3929 = vmatpush2.msra.mxu0 0.0
  %3930 = vmatprep.subr.mxu0 0.0
  %3931 = vmatpush2.msra.mxu0 0.0
  %3932 = vmatprep.mubr.f32.mxu0 0.0
  %3933 = vmatmul.mubr.f32.gmra.mxu0 %v3863
  %v3934 = vpop.f32.mrf.mxu0
  %v3935 = vadd.f32 0.0, %v3934
  %v3936 = vpop.f32.mrf.mxu0
  %3937 = vmatprep.mubr.f32.mxu0 0.0
  %3938 = vmatmul.mubr.f32.gmra.mxu0 %v3866
  %v3939 = vpop.f32.mrf.mxu0
  %v3940 = vadd.f32 0.0, %v3939
  %v3941 = vpop.f32.mrf.mxu0
  %3942 = vdwg.mxu0
  %v3944 = vsel %vm748, %v3326, 0
  %v3947 = vsel %vm748, %v3331, 0
  %v3950 = vsel %vm748, %v3413, 0
  %v3953 = vsel %vm748, %v3418, 0
  %v3956 = vsel %vm748, %v3500, 0
  %v3959 = vsel %vm748, %v3505, 0
  %v3962 = vsel %vm748, %v3587, 0
  %v3965 = vsel %vm748, %v3592, 0
  %v3968 = vsel %vm748, %v3674, 0
  %v3971 = vsel %vm748, %v3679, 0
  %v3974 = vsel %vm748, %v3761, 0
  %v3977 = vsel %vm748, %v3766, 0
  %v3980 = vsel %vm748, %v3848, 0
  %v3983 = vsel %vm748, %v3853, 0
  %v3986 = vsel %vm748, %v3935, 0
  %v3989 = vsel %vm748, %v3940, 0
  %3991 = vmatprep.subr.mxu0 0.0
  %3992 = vmatpush1.msra.mxu0 0.0
  %3993 = vmatprep.subr.mxu0 0.0
  %3994 = vmatpush1.msra.mxu0 0.0
  %3995 = vmatprep.subr.mxu0 0.0
  %3996 = vmatpush1.msra.mxu0 0.0
  %3997 = vmatprep.subr.mxu0 0.0
  %3998 = vmatpush1.msra.mxu0 0.0
  %3999 = vmatprep.subr.mxu0 0.0
  %4000 = vmatpush1.msra.mxu0 0.0
  %4001 = vmatprep.subr.mxu0 0.0
  %4002 = vmatpush1.msra.mxu0 0.0
  %4003 = vmatprep.subr.mxu0 0.0
  %4004 = vmatpush1.msra.mxu0 0.0
  %4005 = vmatprep.subr.mxu0 0.0
  %4006 = vmatpush1.msra.mxu0 0.0
  %4007 = vmatprep.subr.mxu0 0.0
  %4008 = vmatpush1.msra.mxu0 0.0
  %4009 = vmatprep.subr.mxu0 0.0
  %4010 = vmatpush1.msra.mxu0 0.0
  %4011 = vmatprep.subr.mxu0 0.0
  %4012 = vmatpush1.msra.mxu0 0.0
  %4013 = vmatprep.subr.mxu0 0.0
  %4014 = vmatpush1.msra.mxu0 0.0
  %4015 = vmatprep.subr.mxu0 0.0
  %4016 = vmatpush1.msra.mxu0 0.0
  %4017 = vmatprep.subr.mxu0 0.0
  %4018 = vmatpush1.msra.mxu0 0.0
  %4019 = vmatprep.subr.mxu0 0.0
  %4020 = vmatpush1.msra.mxu0 %v725
  %4021 = vmatprep.subr.mxu0 0.0
  %4022 = vmatpush1.msra.mxu0 %v724
  %4023 = vmatprep.subr.mxu0 0.0
  %4024 = vmatpush2.msra.mxu0 0.0
  %4025 = vmatprep.subr.mxu0 0.0
  %4026 = vmatpush2.msra.mxu0 0.0
  %4027 = vmatprep.subr.mxu0 0.0
  %4028 = vmatpush2.msra.mxu0 0.0
  %4029 = vmatprep.subr.mxu0 0.0
  %4030 = vmatpush2.msra.mxu0 0.0
  %4031 = vmatprep.subr.mxu0 0.0
  %4032 = vmatpush2.msra.mxu0 0.0
  %4033 = vmatprep.subr.mxu0 0.0
  %4034 = vmatpush2.msra.mxu0 0.0
  %4035 = vmatprep.subr.mxu0 0.0
  %4036 = vmatpush2.msra.mxu0 0.0
  %4037 = vmatprep.subr.mxu0 0.0
  %4038 = vmatpush2.msra.mxu0 0.0
  %4039 = vmatprep.subr.mxu0 0.0
  %4040 = vmatpush2.msra.mxu0 0.0
  %4041 = vmatprep.subr.mxu0 0.0
  %4042 = vmatpush2.msra.mxu0 0.0
  %4043 = vmatprep.subr.mxu0 0.0
  %4044 = vmatpush2.msra.mxu0 0.0
  %4045 = vmatprep.subr.mxu0 0.0
  %4046 = vmatpush2.msra.mxu0 0.0
  %4047 = vmatprep.subr.mxu0 0.0
  %4048 = vmatpush2.msra.mxu0 0.0
  %4049 = vmatprep.subr.mxu0 0.0
  %4050 = vmatpush2.msra.mxu0 0.0
  %4051 = vmatprep.subr.mxu0 0.0
  %4052 = vmatpush2.msra.mxu0 0.0
  %4053 = vmatprep.subr.mxu0 0.0
  %4054 = vmatpush2.msra.mxu0 0.0
  %4055 = vmatprep.mubr.f32.mxu0 0.0
  %4056 = vmatmul.mubr.f32.gmra.mxu0 %v3944
  %v4057 = vpop.f32.mrf.mxu0
  %v4058 = vadd.f32 0.0, %v4057
  %v4059 = vpop.f32.mrf.mxu0
  %4060 = vmatprep.mubr.f32.mxu0 0.0
  %4061 = vmatmul.mubr.f32.gmra.mxu0 %v3947
  %v4062 = vpop.f32.mrf.mxu0
  %v4063 = vadd.f32 0.0, %v4062
  %v4064 = vpop.f32.mrf.mxu0
  %4065 = vmatprep.mubr.f32.mxu0 0.0
  %4066 = vmatmul.mubr.f32.gmra.mxu0 %v3950
  %v4067 = vpop.f32.mrf.mxu0
  %v4068 = vadd.f32 0.0, %v4067
  %v4069 = vpop.f32.mrf.mxu0
  %4070 = vmatprep.mubr.f32.mxu0 0.0
  %4071 = vmatmul.mubr.f32.gmra.mxu0 %v3953
  %v4072 = vpop.f32.mrf.mxu0
  %v4073 = vadd.f32 0.0, %v4072
  %v4074 = vpop.f32.mrf.mxu0
  %4075 = vmatprep.mubr.f32.mxu0 0.0
  %4076 = vmatmul.mubr.f32.gmra.mxu0 %v3956
  %v4077 = vpop.f32.mrf.mxu0
  %v4078 = vadd.f32 0.0, %v4077
  %v4079 = vpop.f32.mrf.mxu0
  %4080 = vmatprep.mubr.f32.mxu0 0.0
  %4081 = vmatmul.mubr.f32.gmra.mxu0 %v3959
  %v4082 = vpop.f32.mrf.mxu0
  %v4083 = vadd.f32 0.0, %v4082
  %v4084 = vpop.f32.mrf.mxu0
  %4085 = vmatprep.mubr.f32.mxu0 0.0
  %4086 = vmatmul.mubr.f32.gmra.mxu0 %v3962
  %v4087 = vpop.f32.mrf.mxu0
  %v4088 = vadd.f32 0.0, %v4087
  %v4089 = vpop.f32.mrf.mxu0
  %4090 = vmatprep.mubr.f32.mxu0 0.0
  %4091 = vmatmul.mubr.f32.gmra.mxu0 %v3965
  %v4092 = vpop.f32.mrf.mxu0
  %v4093 = vadd.f32 0.0, %v4092
  %v4094 = vpop.f32.mrf.mxu0
  %4095 = vmatprep.mubr.f32.mxu0 0.0
  %4096 = vmatmul.mubr.f32.gmra.mxu0 %v3968
  %v4097 = vpop.f32.mrf.mxu0
  %v4098 = vadd.f32 0.0, %v4097
  %v4099 = vpop.f32.mrf.mxu0
  %4100 = vmatprep.mubr.f32.mxu0 0.0
  %4101 = vmatmul.mubr.f32.gmra.mxu0 %v3971
  %v4102 = vpop.f32.mrf.mxu0
  %v4103 = vadd.f32 0.0, %v4102
  %v4104 = vpop.f32.mrf.mxu0
  %4105 = vmatprep.mubr.f32.mxu0 0.0
  %4106 = vmatmul.mubr.f32.gmra.mxu0 %v3974
  %v4107 = vpop.f32.mrf.mxu0
  %v4108 = vadd.f32 0.0, %v4107
  %v4109 = vpop.f32.mrf.mxu0
  %4110 = vmatprep.mubr.f32.mxu0 0.0
  %4111 = vmatmul.mubr.f32.gmra.mxu0 %v3977
  %v4112 = vpop.f32.mrf.mxu0
  %v4113 = vadd.f32 0.0, %v4112
  %v4114 = vpop.f32.mrf.mxu0
  %4115 = vmatprep.mubr.f32.mxu0 0.0
  %4116 = vmatmul.mubr.f32.gmra.mxu0 %v3980
  %v4117 = vpop.f32.mrf.mxu0
  %v4118 = vadd.f32 0.0, %v4117
  %v4119 = vpop.f32.mrf.mxu0
  %4120 = vmatprep.mubr.f32.mxu0 0.0
  %4121 = vmatmul.mubr.f32.gmra.mxu0 %v3983
  %v4122 = vpop.f32.mrf.mxu0
  %v4123 = vadd.f32 0.0, %v4122
  %v4124 = vpop.f32.mrf.mxu0
  %4125 = vmatprep.mubr.f32.mxu0 0.0
  %4126 = vmatmul.mubr.f32.gmra.mxu0 %v3986
  %v4127 = vpop.f32.mrf.mxu0
  %v4128 = vadd.f32 0.0, %v4127
  %v4129 = vpop.f32.mrf.mxu0
  %4130 = vmatprep.mubr.f32.mxu0 0.0
  %4131 = vmatmul.mubr.f32.gmra.mxu0 %v3989
  %v4132 = vpop.f32.mrf.mxu0
  %v4133 = vadd.f32 0.0, %v4132
  %v4134 = vpop.f32.mrf.mxu0
  %4135 = vdwg.mxu0
  %v4137 = vsel %vm748, %v1726, 0
  %v4140 = vsel %vm748, %v1731, 0
  %v4143 = vsel %vm748, %v1813, 0
  %v4146 = vsel %vm748, %v1818, 0
  %v4149 = vsel %vm748, %v1900, 0
  %v4152 = vsel %vm748, %v1905, 0
  %v4155 = vsel %vm748, %v1987, 0
  %v4158 = vsel %vm748, %v1992, 0
  %v4161 = vsel %vm748, %v2074, 0
  %v4164 = vsel %vm748, %v2079, 0
  %v4167 = vsel %vm748, %v2161, 0
  %v4170 = vsel %vm748, %v2166, 0
  %v4173 = vsel %vm748, %v2248, 0
  %v4176 = vsel %vm748, %v2253, 0
  %v4179 = vsel %vm748, %v2335, 0
  %v4182 = vsel %vm748, %v2340, 0
  %4184 = vmatprep.subr.mxu0 0.0
  %4185 = vmatpush1.msra.mxu0 0.0
  %4186 = vmatprep.subr.mxu0 0.0
  %4187 = vmatpush1.msra.mxu0 0.0
  %4188 = vmatprep.subr.mxu0 0.0
  %4189 = vmatpush1.msra.mxu0 0.0
  %4190 = vmatprep.subr.mxu0 0.0
  %4191 = vmatpush1.msra.mxu0 0.0
  %4192 = vmatprep.subr.mxu0 0.0
  %4193 = vmatpush1.msra.mxu0 0.0
  %4194 = vmatprep.subr.mxu0 0.0
  %4195 = vmatpush1.msra.mxu0 0.0
  %4196 = vmatprep.subr.mxu0 0.0
  %4197 = vmatpush1.msra.mxu0 0.0
  %4198 = vmatprep.subr.mxu0 0.0
  %4199 = vmatpush1.msra.mxu0 0.0
  %4200 = vmatprep.subr.mxu0 0.0
  %4201 = vmatpush1.msra.mxu0 0.0
  %4202 = vmatprep.subr.mxu0 0.0
  %4203 = vmatpush1.msra.mxu0 0.0
  %4204 = vmatprep.subr.mxu0 0.0
  %4205 = vmatpush1.msra.mxu0 0.0
  %4206 = vmatprep.subr.mxu0 0.0
  %4207 = vmatpush1.msra.mxu0 0.0
  %4208 = vmatprep.subr.mxu0 0.0
  %4209 = vmatpush1.msra.mxu0 0.0
  %4210 = vmatprep.subr.mxu0 0.0
  %4211 = vmatpush1.msra.mxu0 0.0
  %4212 = vmatprep.subr.mxu0 0.0
  %4213 = vmatpush1.msra.mxu0 %v723
  %4214 = vmatprep.subr.mxu0 0.0
  %4215 = vmatpush1.msra.mxu0 %v722
  %4216 = vmatprep.subr.mxu0 0.0
  %4217 = vmatpush2.msra.mxu0 0.0
  %4218 = vmatprep.subr.mxu0 0.0
  %4219 = vmatpush2.msra.mxu0 0.0
  %4220 = vmatprep.subr.mxu0 0.0
  %4221 = vmatpush2.msra.mxu0 0.0
  %4222 = vmatprep.subr.mxu0 0.0
  %4223 = vmatpush2.msra.mxu0 0.0
  %4224 = vmatprep.subr.mxu0 0.0
  %4225 = vmatpush2.msra.mxu0 0.0
  %4226 = vmatprep.subr.mxu0 0.0
  %4227 = vmatpush2.msra.mxu0 0.0
  %4228 = vmatprep.subr.mxu0 0.0
  %4229 = vmatpush2.msra.mxu0 0.0
  %4230 = vmatprep.subr.mxu0 0.0
  %4231 = vmatpush2.msra.mxu0 0.0
  %4232 = vmatprep.subr.mxu0 0.0
  %4233 = vmatpush2.msra.mxu0 0.0
  %4234 = vmatprep.subr.mxu0 0.0
  %4235 = vmatpush2.msra.mxu0 0.0
  %4236 = vmatprep.subr.mxu0 0.0
  %4237 = vmatpush2.msra.mxu0 0.0
  %4238 = vmatprep.subr.mxu0 0.0
  %4239 = vmatpush2.msra.mxu0 0.0
  %4240 = vmatprep.subr.mxu0 0.0
  %4241 = vmatpush2.msra.mxu0 0.0
  %4242 = vmatprep.subr.mxu0 0.0
  %4243 = vmatpush2.msra.mxu0 0.0
  %4244 = vmatprep.subr.mxu0 0.0
  %4245 = vmatpush2.msra.mxu0 0.0
  %4246 = vmatprep.subr.mxu0 0.0
  %4247 = vmatpush2.msra.mxu0 0.0
  %4248 = vmatprep.mubr.f32.mxu0 0.0
  %4249 = vmatmul.mubr.f32.gmra.mxu0 %v4137
  %v4250 = vpop.f32.mrf.mxu0
  %v4251 = vadd.f32 %v4058, %v4250
  %v4252 = vpop.f32.mrf.mxu0
  %4253 = vmatprep.mubr.f32.mxu0 0.0
  %4254 = vmatmul.mubr.f32.gmra.mxu0 %v4140
  %v4255 = vpop.f32.mrf.mxu0
  %v4256 = vadd.f32 %v4063, %v4255
  %v4257 = vpop.f32.mrf.mxu0
  %4258 = vmatprep.mubr.f32.mxu0 0.0
  %4259 = vmatmul.mubr.f32.gmra.mxu0 %v4143
  %v4260 = vpop.f32.mrf.mxu0
  %v4261 = vadd.f32 %v4068, %v4260
  %v4262 = vpop.f32.mrf.mxu0
  %4263 = vmatprep.mubr.f32.mxu0 0.0
  %4264 = vmatmul.mubr.f32.gmra.mxu0 %v4146
  %v4265 = vpop.f32.mrf.mxu0
  %v4266 = vadd.f32 %v4073, %v4265
  %v4267 = vpop.f32.mrf.mxu0
  %4268 = vmatprep.mubr.f32.mxu0 0.0
  %4269 = vmatmul.mubr.f32.gmra.mxu0 %v4149
  %v4270 = vpop.f32.mrf.mxu0
  %v4271 = vadd.f32 %v4078, %v4270
  %v4272 = vpop.f32.mrf.mxu0
  %4273 = vmatprep.mubr.f32.mxu0 0.0
  %4274 = vmatmul.mubr.f32.gmra.mxu0 %v4152
  %v4275 = vpop.f32.mrf.mxu0
  %v4276 = vadd.f32 %v4083, %v4275
  %v4277 = vpop.f32.mrf.mxu0
  %4278 = vmatprep.mubr.f32.mxu0 0.0
  %4279 = vmatmul.mubr.f32.gmra.mxu0 %v4155
  %v4280 = vpop.f32.mrf.mxu0
  %v4281 = vadd.f32 %v4088, %v4280
  %v4282 = vpop.f32.mrf.mxu0
  %4283 = vmatprep.mubr.f32.mxu0 0.0
  %4284 = vmatmul.mubr.f32.gmra.mxu0 %v4158
  %v4285 = vpop.f32.mrf.mxu0
  %v4286 = vadd.f32 %v4093, %v4285
  %v4287 = vpop.f32.mrf.mxu0
  %4288 = vmatprep.mubr.f32.mxu0 0.0
  %4289 = vmatmul.mubr.f32.gmra.mxu0 %v4161
  %v4290 = vpop.f32.mrf.mxu0
  %v4291 = vadd.f32 %v4098, %v4290
  %v4292 = vpop.f32.mrf.mxu0
  %4293 = vmatprep.mubr.f32.mxu0 0.0
  %4294 = vmatmul.mubr.f32.gmra.mxu0 %v4164
  %v4295 = vpop.f32.mrf.mxu0
  %v4296 = vadd.f32 %v4103, %v4295
  %v4297 = vpop.f32.mrf.mxu0
  %4298 = vmatprep.mubr.f32.mxu0 0.0
  %4299 = vmatmul.mubr.f32.gmra.mxu0 %v4167
  %v4300 = vpop.f32.mrf.mxu0
  %v4301 = vadd.f32 %v4108, %v4300
  %v4302 = vpop.f32.mrf.mxu0
  %4303 = vmatprep.mubr.f32.mxu0 0.0
  %4304 = vmatmul.mubr.f32.gmra.mxu0 %v4170
  %v4305 = vpop.f32.mrf.mxu0
  %v4306 = vadd.f32 %v4113, %v4305
  %v4307 = vpop.f32.mrf.mxu0
  %4308 = vmatprep.mubr.f32.mxu0 0.0
  %4309 = vmatmul.mubr.f32.gmra.mxu0 %v4173
  %v4310 = vpop.f32.mrf.mxu0
  %v4311 = vadd.f32 %v4118, %v4310
  %v4312 = vpop.f32.mrf.mxu0
  %4313 = vmatprep.mubr.f32.mxu0 0.0
  %4314 = vmatmul.mubr.f32.gmra.mxu0 %v4176
  %v4315 = vpop.f32.mrf.mxu0
  %v4316 = vadd.f32 %v4123, %v4315
  %v4317 = vpop.f32.mrf.mxu0
  %4318 = vmatprep.mubr.f32.mxu0 0.0
  %4319 = vmatmul.mubr.f32.gmra.mxu0 %v4179
  %v4320 = vpop.f32.mrf.mxu0
  %v4321 = vadd.f32 %v4128, %v4320
  %v4322 = vpop.f32.mrf.mxu0
  %4323 = vmatprep.mubr.f32.mxu0 0.0
  %4324 = vmatmul.mubr.f32.gmra.mxu0 %v4182
  %v4325 = vpop.f32.mrf.mxu0
  %v4326 = vadd.f32 %v4133, %v4325
  %v4327 = vpop.f32.mrf.mxu0
  %4328 = vdwg.mxu0
  %v4329 = vld [vmem:[%s9] sm:$0x1]
  %v4331 = vlaneseq
  %v4332 = vshrl.u32 %v4331, 7
  %v4333 = vsub.s32 0, %v4332
  %v4334 = vrot.slane %v4329, %v4333
  %v4336 = vadd.f32 %v4251, %v4334
  %v4337 = vadd.f32 %v4256, %v4334
  %v4338 = vadd.f32 %v4261, %v4334
  %v4339 = vadd.f32 %v4266, %v4334
  %v4340 = vadd.f32 %v4271, %v4334
  %v4341 = vadd.f32 %v4276, %v4334
  %v4342 = vadd.f32 %v4281, %v4334
  %v4343 = vadd.f32 %v4286, %v4334
  %v4344 = vadd.f32 %v4291, %v4334
  %v4345 = vadd.f32 %v4296, %v4334
  %v4346 = vadd.f32 %v4301, %v4334
  %v4347 = vadd.f32 %v4306, %v4334
  %v4348 = vadd.f32 %v4311, %v4334
  %v4349 = vadd.f32 %v4316, %v4334
  %v4350 = vadd.f32 %v4321, %v4334
  %v4351 = vadd.f32 %v4326, %v4334
  %v4352 = vld [vmem:[%s2] sm:$0xff]
  %v4353 = vld [vmem:[%s2 + $0x8] sm:$0xff]
  %v4354 = vld [vmem:[%s2 + $0x10] sm:$0xff]
  %v4355 = vld [vmem:[%s2 + $0x18] sm:$0xff]
  %v4356 = vld [vmem:[%s2 + $0x20] sm:$0xff]
  %v4357 = vld [vmem:[%s2 + $0x28] sm:$0xff]
  %v4358 = vld [vmem:[%s2 + $0x30] sm:$0xff]
  %v4359 = vld [vmem:[%s2 + $0x38] sm:$0xff]
  %v4360 = vld [vmem:[%s2 + $0x40] sm:$0xff]
  %v4361 = vld [vmem:[%s2 + $0x48] sm:$0xff]
  %v4362 = vld [vmem:[%s2 + $0x50] sm:$0xff]
  %v4363 = vld [vmem:[%s2 + $0x58] sm:$0xff]
  %v4364 = vld [vmem:[%s2 + $0x60] sm:$0xff]
  %v4365 = vld [vmem:[%s2 + $0x68] sm:$0xff]
  %v4366 = vld [vmem:[%s2 + $0x70] sm:$0xff]
  %v4367 = vld [vmem:[%s2 + $0x78] sm:$0xff]
  %4368 = vmatprep.subr.mxu0 0.0
  %4369 = vmatpush1.msra.mxu0 %v4351
  %4370 = vmatprep.subr.mxu0 0.0
  %4371 = vmatpush1.msra.mxu0 %v4350
  %4372 = vmatprep.subr.mxu0 0.0
  %4373 = vmatpush1.msra.mxu0 %v4349
  %4374 = vmatprep.subr.mxu0 0.0
  %4375 = vmatpush1.msra.mxu0 %v4348
  %4376 = vmatprep.subr.mxu0 0.0
  %4377 = vmatpush1.msra.mxu0 %v4347
  %4378 = vmatprep.subr.mxu0 0.0
  %4379 = vmatpush1.msra.mxu0 %v4346
  %4380 = vmatprep.subr.mxu0 0.0
  %4381 = vmatpush1.msra.mxu0 %v4345
  %4382 = vmatprep.subr.mxu0 0.0
  %4383 = vmatpush1.msra.mxu0 %v4344
  %4384 = vmatprep.subr.mxu0 0.0
  %4385 = vmatpush1.msra.mxu0 %v4343
  %4386 = vmatprep.subr.mxu0 0.0
  %4387 = vmatpush1.msra.mxu0 %v4342
  %4388 = vmatprep.subr.mxu0 0.0
  %4389 = vmatpush1.msra.mxu0 %v4341
  %4390 = vmatprep.subr.mxu0 0.0
  %4391 = vmatpush1.msra.mxu0 %v4340
  %4392 = vmatprep.subr.mxu0 0.0
  %4393 = vmatpush1.msra.mxu0 %v4339
  %4394 = vmatprep.subr.mxu0 0.0
  %4395 = vmatpush1.msra.mxu0 %v4338
  %4396 = vmatprep.subr.mxu0 0.0
  %4397 = vmatpush1.msra.mxu0 %v4337
  %4398 = vmatprep.subr.mxu0 0.0
  %4399 = vmatpush1.msra.mxu0 %v4336
  %4400 = vmatprep.subr.mxu0 0.0
  %4401 = vmatpush2.msra.mxu0 0.0
  %4402 = vmatprep.subr.mxu0 0.0
  %4403 = vmatpush2.msra.mxu0 0.0
  %4404 = vmatprep.subr.mxu0 0.0
  %4405 = vmatpush2.msra.mxu0 0.0
  %4406 = vmatprep.subr.mxu0 0.0
  %4407 = vmatpush2.msra.mxu0 0.0
  %4408 = vmatprep.subr.mxu0 0.0
  %4409 = vmatpush2.msra.mxu0 0.0
  %4410 = vmatprep.subr.mxu0 0.0
  %4411 = vmatpush2.msra.mxu0 0.0
  %4412 = vmatprep.subr.mxu0 0.0
  %4413 = vmatpush2.msra.mxu0 0.0
  %4414 = vmatprep.subr.mxu0 0.0
  %4415 = vmatpush2.msra.mxu0 0.0
  %4416 = vmatprep.subr.mxu0 0.0
  %4417 = vmatpush2.msra.mxu0 0.0
  %4418 = vmatprep.subr.mxu0 0.0
  %4419 = vmatpush2.msra.mxu0 0.0
  %4420 = vmatprep.subr.mxu0 0.0
  %4421 = vmatpush2.msra.mxu0 0.0
  %4422 = vmatprep.subr.mxu0 0.0
  %4423 = vmatpush2.msra.mxu0 0.0
  %4424 = vmatprep.subr.mxu0 0.0
  %4425 = vmatpush2.msra.mxu0 0.0
  %4426 = vmatprep.subr.mxu0 0.0
  %4427 = vmatpush2.msra.mxu0 0.0
  %4428 = vmatprep.subr.mxu0 0.0
  %4429 = vmatpush2.msra.mxu0 0.0
  %4430 = vmatprep.subr.mxu0 0.0
  %4431 = vmatpush2.msra.mxu0 0.0
  %4432 = vmatprep.mubr.f32.mxu0 0.0
  %4433 = vmatmul.mubr.f32.gmra.mxu0 %v4352
  %v4434 = vpop.f32.mrf.mxu0
  %v4435 = vadd.f32 0.0, %v4434
  %v4436 = vpop.f32.mrf.mxu0
  %4437 = vmatprep.mubr.f32.mxu0 0.0
  %4438 = vmatmul.mubr.f32.gmra.mxu0 %v4353
  %v4439 = vpop.f32.mrf.mxu0
  %v4440 = vadd.f32 0.0, %v4439
  %v4441 = vpop.f32.mrf.mxu0
  %4442 = vmatprep.mubr.f32.mxu0 0.0
  %4443 = vmatmul.mubr.f32.gmra.mxu0 %v4354
  %v4444 = vpop.f32.mrf.mxu0
  %v4445 = vadd.f32 0.0, %v4444
  %v4446 = vpop.f32.mrf.mxu0
  %4447 = vmatprep.mubr.f32.mxu0 0.0
  %4448 = vmatmul.mubr.f32.gmra.mxu0 %v4355
  %v4449 = vpop.f32.mrf.mxu0
  %v4450 = vadd.f32 0.0, %v4449
  %v4451 = vpop.f32.mrf.mxu0
  %4452 = vmatprep.mubr.f32.mxu0 0.0
  %4453 = vmatmul.mubr.f32.gmra.mxu0 %v4356
  %v4454 = vpop.f32.mrf.mxu0
  %v4455 = vadd.f32 0.0, %v4454
  %v4456 = vpop.f32.mrf.mxu0
  %4457 = vmatprep.mubr.f32.mxu0 0.0
  %4458 = vmatmul.mubr.f32.gmra.mxu0 %v4357
  %v4459 = vpop.f32.mrf.mxu0
  %v4460 = vadd.f32 0.0, %v4459
  %v4461 = vpop.f32.mrf.mxu0
  %4462 = vmatprep.mubr.f32.mxu0 0.0
  %4463 = vmatmul.mubr.f32.gmra.mxu0 %v4358
  %v4464 = vpop.f32.mrf.mxu0
  %v4465 = vadd.f32 0.0, %v4464
  %v4466 = vpop.f32.mrf.mxu0
  %4467 = vmatprep.mubr.f32.mxu0 0.0
  %4468 = vmatmul.mubr.f32.gmra.mxu0 %v4359
  %v4469 = vpop.f32.mrf.mxu0
  %v4470 = vadd.f32 0.0, %v4469
  %v4471 = vpop.f32.mrf.mxu0
  %4472 = vmatprep.mubr.f32.mxu0 0.0
  %4473 = vmatmul.mubr.f32.gmra.mxu0 %v4360
  %v4474 = vpop.f32.mrf.mxu0
  %v4475 = vadd.f32 0.0, %v4474
  %v4476 = vpop.f32.mrf.mxu0
  %4477 = vmatprep.mubr.f32.mxu0 0.0
  %4478 = vmatmul.mubr.f32.gmra.mxu0 %v4361
  %v4479 = vpop.f32.mrf.mxu0
  %v4480 = vadd.f32 0.0, %v4479
  %v4481 = vpop.f32.mrf.mxu0
  %4482 = vmatprep.mubr.f32.mxu0 0.0
  %4483 = vmatmul.mubr.f32.gmra.mxu0 %v4362
  %v4484 = vpop.f32.mrf.mxu0
  %v4485 = vadd.f32 0.0, %v4484
  %v4486 = vpop.f32.mrf.mxu0
  %4487 = vmatprep.mubr.f32.mxu0 0.0
  %4488 = vmatmul.mubr.f32.gmra.mxu0 %v4363
  %v4489 = vpop.f32.mrf.mxu0
  %v4490 = vadd.f32 0.0, %v4489
  %v4491 = vpop.f32.mrf.mxu0
  %4492 = vmatprep.mubr.f32.mxu0 0.0
  %4493 = vmatmul.mubr.f32.gmra.mxu0 %v4364
  %v4494 = vpop.f32.mrf.mxu0
  %v4495 = vadd.f32 0.0, %v4494
  %v4496 = vpop.f32.mrf.mxu0
  %4497 = vmatprep.mubr.f32.mxu0 0.0
  %4498 = vmatmul.mubr.f32.gmra.mxu0 %v4365
  %v4499 = vpop.f32.mrf.mxu0
  %v4500 = vadd.f32 0.0, %v4499
  %v4501 = vpop.f32.mrf.mxu0
  %4502 = vmatprep.mubr.f32.mxu0 0.0
  %4503 = vmatmul.mubr.f32.gmra.mxu0 %v4366
  %v4504 = vpop.f32.mrf.mxu0
  %v4505 = vadd.f32 0.0, %v4504
  %v4506 = vpop.f32.mrf.mxu0
  %4507 = vmatprep.mubr.f32.mxu0 0.0
  %4508 = vmatmul.mubr.f32.gmra.mxu0 %v4367
  %v4509 = vpop.f32.mrf.mxu0
  %v4510 = vadd.f32 0.0, %v4509
  %v4511 = vpop.f32.mrf.mxu0
  %4512 = vdwg.mxu0
  %v4513 = vadd.f32 %v53, %v4435
  %v4514 = vadd.f32 %v54, %v4440
  %v4515 = vadd.f32 %v55, %v4445
  %v4516 = vadd.f32 %v56, %v4450
  %v4517 = vadd.f32 %v57, %v4455
  %v4518 = vadd.f32 %v58, %v4460
  %v4519 = vadd.f32 %v59, %v4465
  %v4520 = vadd.f32 %v60, %v4470
  %v4521 = vadd.f32 %v61, %v4475
  %v4522 = vadd.f32 %v62, %v4480
  %v4523 = vadd.f32 %v63, %v4485
  %v4524 = vadd.f32 %v64, %v4490
  %v4525 = vadd.f32 %v65, %v4495
  %v4526 = vadd.f32 %v66, %v4500
  %v4527 = vadd.f32 %v67, %v4505
  %v4528 = vadd.f32 %v68, %v4510
  %v4529 = vld [vmem:[%s10] sm:$0x1]
  %v4530 = vld [vmem:[%s11] sm:$0x1]
  %v4531 = vsel %vm71, %v4513, 0.0
  %4532 = vadd.xlane.f32.xlu0 %v4531
  %v4533 = vpop.xlane.xlu0 %4532
  %v4534 = vsel %vm71, %v4514, 0.0
  %4535 = vadd.xlane.f32.xlu0 %v4534
  %v4536 = vpop.xlane.xlu0 %4535
  %v4537 = vsel %vm71, %v4515, 0.0
  %4538 = vadd.xlane.f32.xlu0 %v4537
  %v4539 = vpop.xlane.xlu0 %4538
  %v4540 = vsel %vm71, %v4516, 0.0
  %4541 = vadd.xlane.f32.xlu0 %v4540
  %v4542 = vpop.xlane.xlu0 %4541
  %v4543 = vsel %vm71, %v4517, 0.0
  %4544 = vadd.xlane.f32.xlu0 %v4543
  %v4545 = vpop.xlane.xlu0 %4544
  %v4546 = vsel %vm71, %v4518, 0.0
  %4547 = vadd.xlane.f32.xlu0 %v4546
  %v4548 = vpop.xlane.xlu0 %4547
  %v4549 = vsel %vm71, %v4519, 0.0
  %4550 = vadd.xlane.f32.xlu0 %v4549
  %v4551 = vpop.xlane.xlu0 %4550
  %v4552 = vsel %vm71, %v4520, 0.0
  %4553 = vadd.xlane.f32.xlu0 %v4552
  %v4554 = vpop.xlane.xlu0 %4553
  %v4555 = vsel %vm71, %v4521, 0.0
  %4556 = vadd.xlane.f32.xlu0 %v4555
  %v4557 = vpop.xlane.xlu0 %4556
  %v4558 = vsel %vm71, %v4522, 0.0
  %4559 = vadd.xlane.f32.xlu0 %v4558
  %v4560 = vpop.xlane.xlu0 %4559
  %v4561 = vsel %vm71, %v4523, 0.0
  %4562 = vadd.xlane.f32.xlu0 %v4561
  %v4563 = vpop.xlane.xlu0 %4562
  %v4564 = vsel %vm71, %v4524, 0.0
  %4565 = vadd.xlane.f32.xlu0 %v4564
  %v4566 = vpop.xlane.xlu0 %4565
  %v4567 = vsel %vm71, %v4525, 0.0
  %4568 = vadd.xlane.f32.xlu0 %v4567
  %v4569 = vpop.xlane.xlu0 %4568
  %v4570 = vsel %vm71, %v4526, 0.0
  %4571 = vadd.xlane.f32.xlu0 %v4570
  %v4572 = vpop.xlane.xlu0 %4571
  %v4573 = vsel %vm71, %v4527, 0.0
  %4574 = vadd.xlane.f32.xlu0 %v4573
  %v4575 = vpop.xlane.xlu0 %4574
  %v4576 = vsel %vm71, %v4528, 0.0
  %4577 = vadd.xlane.f32.xlu0 %v4576
  %v4578 = vpop.xlane.xlu0 %4577
  %v4579 = vmul.f32 %v4533, %v120
  %v4580 = vmul.f32 %v4536, %v120
  %v4581 = vmul.f32 %v4539, %v120
  %v4582 = vmul.f32 %v4542, %v120
  %v4583 = vmul.f32 %v4545, %v120
  %v4584 = vmul.f32 %v4548, %v120
  %v4585 = vmul.f32 %v4551, %v120
  %v4586 = vmul.f32 %v4554, %v120
  %v4587 = vmul.f32 %v4557, %v120
  %v4588 = vmul.f32 %v4560, %v120
  %v4589 = vmul.f32 %v4563, %v120
  %v4590 = vmul.f32 %v4566, %v120
  %v4591 = vmul.f32 %v4569, %v120
  %v4592 = vmul.f32 %v4572, %v120
  %v4593 = vmul.f32 %v4575, %v120
  %v4594 = vmul.f32 %v4578, %v120
  %v4595 = vsub.f32 %v4513, %v4579
  %v4596 = vsub.f32 %v4514, %v4580
  %v4597 = vsub.f32 %v4515, %v4581
  %v4598 = vsub.f32 %v4516, %v4582
  %v4599 = vsub.f32 %v4517, %v4583
  %v4600 = vsub.f32 %v4518, %v4584
  %v4601 = vsub.f32 %v4519, %v4585
  %v4602 = vsub.f32 %v4520, %v4586
  %v4603 = vsub.f32 %v4521, %v4587
  %v4604 = vsub.f32 %v4522, %v4588
  %v4605 = vsub.f32 %v4523, %v4589
  %v4606 = vsub.f32 %v4524, %v4590
  %v4607 = vsub.f32 %v4525, %v4591
  %v4608 = vsub.f32 %v4526, %v4592
  %v4609 = vsub.f32 %v4527, %v4593
  %v4610 = vsub.f32 %v4528, %v4594
  %v4611 = vmul.f32 %v4595, %v4595
  %v4612 = vmul.f32 %v4596, %v4596
  %v4613 = vmul.f32 %v4597, %v4597
  %v4614 = vmul.f32 %v4598, %v4598
  %v4615 = vmul.f32 %v4599, %v4599
  %v4616 = vmul.f32 %v4600, %v4600
  %v4617 = vmul.f32 %v4601, %v4601
  %v4618 = vmul.f32 %v4602, %v4602
  %v4619 = vmul.f32 %v4603, %v4603
  %v4620 = vmul.f32 %v4604, %v4604
  %v4621 = vmul.f32 %v4605, %v4605
  %v4622 = vmul.f32 %v4606, %v4606
  %v4623 = vmul.f32 %v4607, %v4607
  %v4624 = vmul.f32 %v4608, %v4608
  %v4625 = vmul.f32 %v4609, %v4609
  %v4626 = vmul.f32 %v4610, %v4610
  %v4627 = vsel %vm71, %v4611, 0.0
  %4628 = vadd.xlane.f32.xlu0 %v4627
  %v4629 = vpop.xlane.xlu0 %4628
  %v4630 = vsel %vm71, %v4612, 0.0
  %4631 = vadd.xlane.f32.xlu0 %v4630
  %v4632 = vpop.xlane.xlu0 %4631
  %v4633 = vsel %vm71, %v4613, 0.0
  %4634 = vadd.xlane.f32.xlu0 %v4633
  %v4635 = vpop.xlane.xlu0 %4634
  %v4636 = vsel %vm71, %v4614, 0.0
  %4637 = vadd.xlane.f32.xlu0 %v4636
  %v4638 = vpop.xlane.xlu0 %4637
  %v4639 = vsel %vm71, %v4615, 0.0
  %4640 = vadd.xlane.f32.xlu0 %v4639
  %v4641 = vpop.xlane.xlu0 %4640
  %v4642 = vsel %vm71, %v4616, 0.0
  %4643 = vadd.xlane.f32.xlu0 %v4642
  %v4644 = vpop.xlane.xlu0 %4643
  %v4645 = vsel %vm71, %v4617, 0.0
  %4646 = vadd.xlane.f32.xlu0 %v4645
  %v4647 = vpop.xlane.xlu0 %4646
  %v4648 = vsel %vm71, %v4618, 0.0
  %4649 = vadd.xlane.f32.xlu0 %v4648
  %v4650 = vpop.xlane.xlu0 %4649
  %v4651 = vsel %vm71, %v4619, 0.0
  %4652 = vadd.xlane.f32.xlu0 %v4651
  %v4653 = vpop.xlane.xlu0 %4652
  %v4654 = vsel %vm71, %v4620, 0.0
  %4655 = vadd.xlane.f32.xlu0 %v4654
  %v4656 = vpop.xlane.xlu0 %4655
  %v4657 = vsel %vm71, %v4621, 0.0
  %4658 = vadd.xlane.f32.xlu0 %v4657
  %v4659 = vpop.xlane.xlu0 %4658
  %v4660 = vsel %vm71, %v4622, 0.0
  %4661 = vadd.xlane.f32.xlu0 %v4660
  %v4662 = vpop.xlane.xlu0 %4661
  %v4663 = vsel %vm71, %v4623, 0.0
  %4664 = vadd.xlane.f32.xlu0 %v4663
  %v4665 = vpop.xlane.xlu0 %4664
  %v4666 = vsel %vm71, %v4624, 0.0
  %4667 = vadd.xlane.f32.xlu0 %v4666
  %v4668 = vpop.xlane.xlu0 %4667
  %v4669 = vsel %vm71, %v4625, 0.0
  %4670 = vadd.xlane.f32.xlu0 %v4669
  %v4671 = vpop.xlane.xlu0 %4670
  %v4672 = vsel %vm71, %v4626, 0.0
  %4673 = vadd.xlane.f32.xlu0 %v4672
  %v4674 = vpop.xlane.xlu0 %4673
  %v4675 = vmul.f32 %v4629, %v120
  %v4676 = vmul.f32 %v4632, %v120
  %v4677 = vmul.f32 %v4635, %v120
  %v4678 = vmul.f32 %v4638, %v120
  %v4679 = vmul.f32 %v4641, %v120
  %v4680 = vmul.f32 %v4644, %v120
  %v4681 = vmul.f32 %v4647, %v120
  %v4682 = vmul.f32 %v4650, %v120
  %v4683 = vmul.f32 %v4653, %v120
  %v4684 = vmul.f32 %v4656, %v120
  %v4685 = vmul.f32 %v4659, %v120
  %v4686 = vmul.f32 %v4662, %v120
  %v4687 = vmul.f32 %v4665, %v120
  %v4688 = vmul.f32 %v4668, %v120
  %v4689 = vmul.f32 %v4671, %v120
  %v4690 = vmul.f32 %v4674, %v120
  %v4691 = vadd.f32 %v4675, 1e-05
  %v4692 = vadd.f32 %v4676, 1e-05
  %v4693 = vadd.f32 %v4677, 1e-05
  %v4694 = vadd.f32 %v4678, 1e-05
  %v4695 = vadd.f32 %v4679, 1e-05
  %v4696 = vadd.f32 %v4680, 1e-05
  %v4697 = vadd.f32 %v4681, 1e-05
  %v4698 = vadd.f32 %v4682, 1e-05
  %v4699 = vadd.f32 %v4683, 1e-05
  %v4700 = vadd.f32 %v4684, 1e-05
  %v4701 = vadd.f32 %v4685, 1e-05
  %v4702 = vadd.f32 %v4686, 1e-05
  %v4703 = vadd.f32 %v4687, 1e-05
  %v4704 = vadd.f32 %v4688, 1e-05
  %v4705 = vadd.f32 %v4689, 1e-05
  %v4706 = vadd.f32 %v4690, 1e-05
  %v4707 = vrsqrt.pop %v4691
  %v4708 = vrsqrt.pop %v4692
  %v4709 = vrsqrt.pop %v4693
  %v4710 = vrsqrt.pop %v4694
  %v4711 = vrsqrt.pop %v4695
  %v4712 = vrsqrt.pop %v4696
  %v4713 = vrsqrt.pop %v4697
  %v4714 = vrsqrt.pop %v4698
  %v4715 = vrsqrt.pop %v4699
  %v4716 = vrsqrt.pop %v4700
  %v4717 = vrsqrt.pop %v4701
  %v4718 = vrsqrt.pop %v4702
  %v4719 = vrsqrt.pop %v4703
  %v4720 = vrsqrt.pop %v4704
  %v4721 = vrsqrt.pop %v4705
  %v4722 = vrsqrt.pop %v4706
  %v4723 = vmul.f32 %v4595, %v4707
  %v4724 = vmul.f32 %v4596, %v4708
  %v4725 = vmul.f32 %v4597, %v4709
  %v4726 = vmul.f32 %v4598, %v4710
  %v4727 = vmul.f32 %v4599, %v4711
  %v4728 = vmul.f32 %v4600, %v4712
  %v4729 = vmul.f32 %v4601, %v4713
  %v4730 = vmul.f32 %v4602, %v4714
  %v4731 = vmul.f32 %v4603, %v4715
  %v4732 = vmul.f32 %v4604, %v4716
  %v4733 = vmul.f32 %v4605, %v4717
  %v4734 = vmul.f32 %v4606, %v4718
  %v4735 = vmul.f32 %v4607, %v4719
  %v4736 = vmul.f32 %v4608, %v4720
  %v4737 = vmul.f32 %v4609, %v4721
  %v4738 = vmul.f32 %v4610, %v4722
  %v4740 = vlaneseq
  %v4741 = vshrl.u32 %v4740, 7
  %v4742 = vsub.s32 0, %v4741
  %v4743 = vrot.slane %v4529, %v4742
  %v4745 = vmul.f32 %v4723, %v4743
  %v4746 = vmul.f32 %v4724, %v4743
  %v4747 = vmul.f32 %v4725, %v4743
  %v4748 = vmul.f32 %v4726, %v4743
  %v4749 = vmul.f32 %v4727, %v4743
  %v4750 = vmul.f32 %v4728, %v4743
  %v4751 = vmul.f32 %v4729, %v4743
  %v4752 = vmul.f32 %v4730, %v4743
  %v4753 = vmul.f32 %v4731, %v4743
  %v4754 = vmul.f32 %v4732, %v4743
  %v4755 = vmul.f32 %v4733, %v4743
  %v4756 = vmul.f32 %v4734, %v4743
  %v4757 = vmul.f32 %v4735, %v4743
  %v4758 = vmul.f32 %v4736, %v4743
  %v4759 = vmul.f32 %v4737, %v4743
  %v4760 = vmul.f32 %v4738, %v4743
  %v4762 = vlaneseq
  %v4763 = vshrl.u32 %v4762, 7
  %v4764 = vsub.s32 0, %v4763
  %v4765 = vrot.slane %v4530, %v4764
  %v4767 = vadd.f32 %v4745, %v4765
  %v4768 = vadd.f32 %v4746, %v4765
  %v4769 = vadd.f32 %v4747, %v4765
  %v4770 = vadd.f32 %v4748, %v4765
  %v4771 = vadd.f32 %v4749, %v4765
  %v4772 = vadd.f32 %v4750, %v4765
  %v4773 = vadd.f32 %v4751, %v4765
  %v4774 = vadd.f32 %v4752, %v4765
  %v4775 = vadd.f32 %v4753, %v4765
  %v4776 = vadd.f32 %v4754, %v4765
  %v4777 = vadd.f32 %v4755, %v4765
  %v4778 = vadd.f32 %v4756, %v4765
  %v4779 = vadd.f32 %v4757, %v4765
  %v4780 = vadd.f32 %v4758, %v4765
  %v4781 = vadd.f32 %v4759, %v4765
  %v4782 = vadd.f32 %v4760, %v4765
  %v4783 = vld [vmem:[%s12] sm:$0xff]
  %v4784 = vld [vmem:[%s12 + $0x8] sm:$0xff]
  %v4785 = vld [vmem:[%s12 + $0x10] sm:$0xff]
  %v4786 = vld [vmem:[%s12 + $0x18] sm:$0xff]
  %v4787 = vld [vmem:[%s13] sm:$0x1]
  %v4789 = vlaneseq
  %v4790 = vshrl.u32 %v4789, 7
  %v4791 = vsub.s32 0, %v4790
  %v4792 = vrot.slane %v4787, %v4791
  %v4795 = vsel %vm71, %v4767, 0
  %v4798 = vsel %vm71, %v4768, 0
  %v4801 = vsel %vm71, %v4769, 0
  %v4804 = vsel %vm71, %v4770, 0
  %v4807 = vsel %vm71, %v4771, 0
  %v4810 = vsel %vm71, %v4772, 0
  %v4813 = vsel %vm71, %v4773, 0
  %v4816 = vsel %vm71, %v4774, 0
  %v4819 = vsel %vm71, %v4775, 0
  %v4822 = vsel %vm71, %v4776, 0
  %v4825 = vsel %vm71, %v4777, 0
  %v4828 = vsel %vm71, %v4778, 0
  %v4831 = vsel %vm71, %v4779, 0
  %v4834 = vsel %vm71, %v4780, 0
  %v4837 = vsel %vm71, %v4781, 0
  %v4840 = vsel %vm71, %v4782, 0
  %4842 = vmatprep.subr.mxu0 0.0
  %4843 = vmatpush1.msra.mxu0 0.0
  %4844 = vmatprep.subr.mxu0 0.0
  %4845 = vmatpush1.msra.mxu0 0.0
  %4846 = vmatprep.subr.mxu0 0.0
  %4847 = vmatpush1.msra.mxu0 0.0
  %4848 = vmatprep.subr.mxu0 0.0
  %4849 = vmatpush1.msra.mxu0 0.0
  %4850 = vmatprep.subr.mxu0 0.0
  %4851 = vmatpush1.msra.mxu0 0.0
  %4852 = vmatprep.subr.mxu0 0.0
  %4853 = vmatpush1.msra.mxu0 0.0
  %4854 = vmatprep.subr.mxu0 0.0
  %4855 = vmatpush1.msra.mxu0 0.0
  %4856 = vmatprep.subr.mxu0 0.0
  %4857 = vmatpush1.msra.mxu0 0.0
  %4858 = vmatprep.subr.mxu0 0.0
  %4859 = vmatpush1.msra.mxu0 0.0
  %4860 = vmatprep.subr.mxu0 0.0
  %4861 = vmatpush1.msra.mxu0 0.0
  %4862 = vmatprep.subr.mxu0 0.0
  %4863 = vmatpush1.msra.mxu0 0.0
  %4864 = vmatprep.subr.mxu0 0.0
  %4865 = vmatpush1.msra.mxu0 0.0
  %4866 = vmatprep.subr.mxu0 0.0
  %4867 = vmatpush1.msra.mxu0 %v4786
  %4868 = vmatprep.subr.mxu0 0.0
  %4869 = vmatpush1.msra.mxu0 %v4785
  %4870 = vmatprep.subr.mxu0 0.0
  %4871 = vmatpush1.msra.mxu0 %v4784
  %4872 = vmatprep.subr.mxu0 0.0
  %4873 = vmatpush1.msra.mxu0 %v4783
  %4874 = vmatprep.subr.mxu0 0.0
  %4875 = vmatpush2.msra.mxu0 0.0
  %4876 = vmatprep.subr.mxu0 0.0
  %4877 = vmatpush2.msra.mxu0 0.0
  %4878 = vmatprep.subr.mxu0 0.0
  %4879 = vmatpush2.msra.mxu0 0.0
  %4880 = vmatprep.subr.mxu0 0.0
  %4881 = vmatpush2.msra.mxu0 0.0
  %4882 = vmatprep.subr.mxu0 0.0
  %4883 = vmatpush2.msra.mxu0 0.0
  %4884 = vmatprep.subr.mxu0 0.0
  %4885 = vmatpush2.msra.mxu0 0.0
  %4886 = vmatprep.subr.mxu0 0.0
  %4887 = vmatpush2.msra.mxu0 0.0
  %4888 = vmatprep.subr.mxu0 0.0
  %4889 = vmatpush2.msra.mxu0 0.0
  %4890 = vmatprep.subr.mxu0 0.0
  %4891 = vmatpush2.msra.mxu0 0.0
  %4892 = vmatprep.subr.mxu0 0.0
  %4893 = vmatpush2.msra.mxu0 0.0
  %4894 = vmatprep.subr.mxu0 0.0
  %4895 = vmatpush2.msra.mxu0 0.0
  %4896 = vmatprep.subr.mxu0 0.0
  %4897 = vmatpush2.msra.mxu0 0.0
  %4898 = vmatprep.subr.mxu0 0.0
  %4899 = vmatpush2.msra.mxu0 0.0
  %4900 = vmatprep.subr.mxu0 0.0
  %4901 = vmatpush2.msra.mxu0 0.0
  %4902 = vmatprep.subr.mxu0 0.0
  %4903 = vmatpush2.msra.mxu0 0.0
  %4904 = vmatprep.subr.mxu0 0.0
  %4905 = vmatpush2.msra.mxu0 0.0
  %4906 = vmatprep.mubr.f32.mxu0 0.0
  %4907 = vmatmul.mubr.f32.gmra.mxu0 %v4795
  %v4908 = vpop.f32.mrf.mxu0
  %v4909 = vadd.f32 %v4792, %v4908
  %v4910 = vpop.f32.mrf.mxu0
  %4911 = vmatprep.mubr.f32.mxu0 0.0
  %4912 = vmatmul.mubr.f32.gmra.mxu0 %v4798
  %v4913 = vpop.f32.mrf.mxu0
  %v4914 = vadd.f32 %v4792, %v4913
  %v4915 = vpop.f32.mrf.mxu0
  %4916 = vmatprep.mubr.f32.mxu0 0.0
  %4917 = vmatmul.mubr.f32.gmra.mxu0 %v4801
  %v4918 = vpop.f32.mrf.mxu0
  %v4919 = vadd.f32 %v4792, %v4918
  %v4920 = vpop.f32.mrf.mxu0
  %4921 = vmatprep.mubr.f32.mxu0 0.0
  %4922 = vmatmul.mubr.f32.gmra.mxu0 %v4804
  %v4923 = vpop.f32.mrf.mxu0
  %v4924 = vadd.f32 %v4792, %v4923
  %v4925 = vpop.f32.mrf.mxu0
  %4926 = vmatprep.mubr.f32.mxu0 0.0
  %4927 = vmatmul.mubr.f32.gmra.mxu0 %v4807
  %v4928 = vpop.f32.mrf.mxu0
  %v4929 = vadd.f32 %v4792, %v4928
  %v4930 = vpop.f32.mrf.mxu0
  %4931 = vmatprep.mubr.f32.mxu0 0.0
  %4932 = vmatmul.mubr.f32.gmra.mxu0 %v4810
  %v4933 = vpop.f32.mrf.mxu0
  %v4934 = vadd.f32 %v4792, %v4933
  %v4935 = vpop.f32.mrf.mxu0
  %4936 = vmatprep.mubr.f32.mxu0 0.0
  %4937 = vmatmul.mubr.f32.gmra.mxu0 %v4813
  %v4938 = vpop.f32.mrf.mxu0
  %v4939 = vadd.f32 %v4792, %v4938
  %v4940 = vpop.f32.mrf.mxu0
  %4941 = vmatprep.mubr.f32.mxu0 0.0
  %4942 = vmatmul.mubr.f32.gmra.mxu0 %v4816
  %v4943 = vpop.f32.mrf.mxu0
  %v4944 = vadd.f32 %v4792, %v4943
  %v4945 = vpop.f32.mrf.mxu0
  %4946 = vmatprep.mubr.f32.mxu0 0.0
  %4947 = vmatmul.mubr.f32.gmra.mxu0 %v4819
  %v4948 = vpop.f32.mrf.mxu0
  %v4949 = vadd.f32 %v4792, %v4948
  %v4950 = vpop.f32.mrf.mxu0
  %4951 = vmatprep.mubr.f32.mxu0 0.0
  %4952 = vmatmul.mubr.f32.gmra.mxu0 %v4822
  %v4953 = vpop.f32.mrf.mxu0
  %v4954 = vadd.f32 %v4792, %v4953
  %v4955 = vpop.f32.mrf.mxu0
  %4956 = vmatprep.mubr.f32.mxu0 0.0
  %4957 = vmatmul.mubr.f32.gmra.mxu0 %v4825
  %v4958 = vpop.f32.mrf.mxu0
  %v4959 = vadd.f32 %v4792, %v4958
  %v4960 = vpop.f32.mrf.mxu0
  %4961 = vmatprep.mubr.f32.mxu0 0.0
  %4962 = vmatmul.mubr.f32.gmra.mxu0 %v4828
  %v4963 = vpop.f32.mrf.mxu0
  %v4964 = vadd.f32 %v4792, %v4963
  %v4965 = vpop.f32.mrf.mxu0
  %4966 = vmatprep.mubr.f32.mxu0 0.0
  %4967 = vmatmul.mubr.f32.gmra.mxu0 %v4831
  %v4968 = vpop.f32.mrf.mxu0
  %v4969 = vadd.f32 %v4792, %v4968
  %v4970 = vpop.f32.mrf.mxu0
  %4971 = vmatprep.mubr.f32.mxu0 0.0
  %4972 = vmatmul.mubr.f32.gmra.mxu0 %v4834
  %v4973 = vpop.f32.mrf.mxu0
  %v4974 = vadd.f32 %v4792, %v4973
  %v4975 = vpop.f32.mrf.mxu0
  %4976 = vmatprep.mubr.f32.mxu0 0.0
  %4977 = vmatmul.mubr.f32.gmra.mxu0 %v4837
  %v4978 = vpop.f32.mrf.mxu0
  %v4979 = vadd.f32 %v4792, %v4978
  %v4980 = vpop.f32.mrf.mxu0
  %4981 = vmatprep.mubr.f32.mxu0 0.0
  %4982 = vmatmul.mubr.f32.gmra.mxu0 %v4840
  %v4983 = vpop.f32.mrf.mxu0
  %v4984 = vadd.f32 %v4792, %v4983
  %v4985 = vpop.f32.mrf.mxu0
  %4986 = vdwg.mxu0
  %v4987 = vmul.f32 %v4909, 0.5
  %v4988 = vmul.f32 %v4914, 0.5
  %v4989 = vmul.f32 %v4919, 0.5
  %v4990 = vmul.f32 %v4924, 0.5
  %v4991 = vmul.f32 %v4929, 0.5
  %v4992 = vmul.f32 %v4934, 0.5
  %v4993 = vmul.f32 %v4939, 0.5
  %v4994 = vmul.f32 %v4944, 0.5
  %v4995 = vmul.f32 %v4949, 0.5
  %v4996 = vmul.f32 %v4954, 0.5
  %v4997 = vmul.f32 %v4959, 0.5
  %v4998 = vmul.f32 %v4964, 0.5
  %v4999 = vmul.f32 %v4969, 0.5
  %v5000 = vmul.f32 %v4974, 0.5
  %v5001 = vmul.f32 %v4979, 0.5
  %v5002 = vmul.f32 %v4984, 0.5
  %v5003 = vmul.f32 %v4909, 0.70710677
  %v5004 = vmul.f32 %v4914, 0.70710677
  %v5005 = vmul.f32 %v4919, 0.70710677
  %v5006 = vmul.f32 %v4924, 0.70710677
  %v5007 = vmul.f32 %v4929, 0.70710677
  %v5008 = vmul.f32 %v4934, 0.70710677
  %v5009 = vmul.f32 %v4939, 0.70710677
  %v5010 = vmul.f32 %v4944, 0.70710677
  %v5011 = vmul.f32 %v4949, 0.70710677
  %v5012 = vmul.f32 %v4954, 0.70710677
  %v5013 = vmul.f32 %v4959, 0.70710677
  %v5014 = vmul.f32 %v4964, 0.70710677
  %v5015 = vmul.f32 %v4969, 0.70710677
  %v5016 = vmul.f32 %v4974, 0.70710677
  %v5017 = vmul.f32 %v4979, 0.70710677
  %v5018 = vmul.f32 %v4984, 0.70710677
  %v5019 = vand.u32 2147483647, %v5003
  %v5020 = vand.u32 2147483647, %v5004
  %v5021 = vand.u32 2147483647, %v5005
  %v5022 = vand.u32 2147483647, %v5006
  %v5023 = vand.u32 2147483647, %v5007
  %v5024 = vand.u32 2147483647, %v5008
  %v5025 = vand.u32 2147483647, %v5009
  %v5026 = vand.u32 2147483647, %v5010
  %v5027 = vand.u32 2147483647, %v5011
  %v5028 = vand.u32 2147483647, %v5012
  %v5029 = vand.u32 2147483647, %v5013
  %v5030 = vand.u32 2147483647, %v5014
  %v5031 = vand.u32 2147483647, %v5015
  %v5032 = vand.u32 2147483647, %v5016
  %v5033 = vand.u32 2147483647, %v5017
  %v5034 = vand.u32 2147483647, %v5018
  %v5035 = vmul.f32 %v5019, 0.3275911
  %v5036 = vmul.f32 %v5020, 0.3275911
  %v5037 = vmul.f32 %v5021, 0.3275911
  %v5038 = vmul.f32 %v5022, 0.3275911
  %v5039 = vmul.f32 %v5023, 0.3275911
  %v5040 = vmul.f32 %v5024, 0.3275911
  %v5041 = vmul.f32 %v5025, 0.3275911
  %v5042 = vmul.f32 %v5026, 0.3275911
  %v5043 = vmul.f32 %v5027, 0.3275911
  %v5044 = vmul.f32 %v5028, 0.3275911
  %v5045 = vmul.f32 %v5029, 0.3275911
  %v5046 = vmul.f32 %v5030, 0.3275911
  %v5047 = vmul.f32 %v5031, 0.3275911
  %v5048 = vmul.f32 %v5032, 0.3275911
  %v5049 = vmul.f32 %v5033, 0.3275911
  %v5050 = vmul.f32 %v5034, 0.3275911
  %v5051 = vadd.f32 %v5035, 1.0
  %v5052 = vadd.f32 %v5036, 1.0
  %v5053 = vadd.f32 %v5037, 1.0
  %v5054 = vadd.f32 %v5038, 1.0
  %v5055 = vadd.f32 %v5039, 1.0
  %v5056 = vadd.f32 %v5040, 1.0
  %v5057 = vadd.f32 %v5041, 1.0
  %v5058 = vadd.f32 %v5042, 1.0
  %v5059 = vadd.f32 %v5043, 1.0
  %v5060 = vadd.f32 %v5044, 1.0
  %v5061 = vadd.f32 %v5045, 1.0
  %v5062 = vadd.f32 %v5046, 1.0
  %v5063 = vadd.f32 %v5047, 1.0
  %v5064 = vadd.f32 %v5048, 1.0
  %v5065 = vadd.f32 %v5049, 1.0
  %v5066 = vadd.f32 %v5050, 1.0
  %v5067 = vrcp.pop %v5051
  %v5068 = vmul.f32 1.0, %v5067
  %v5069 = vrcp.pop %v5052
  %v5070 = vmul.f32 1.0, %v5069
  %v5071 = vrcp.pop %v5053
  %v5072 = vmul.f32 1.0, %v5071
  %v5073 = vrcp.pop %v5054
  %v5074 = vmul.f32 1.0, %v5073
  %v5075 = vrcp.pop %v5055
  %v5076 = vmul.f32 1.0, %v5075
  %v5077 = vrcp.pop %v5056
  %v5078 = vmul.f32 1.0, %v5077
  %v5079 = vrcp.pop %v5057
  %v5080 = vmul.f32 1.0, %v5079
  %v5081 = vrcp.pop %v5058
  %v5082 = vmul.f32 1.0, %v5081
  %v5083 = vrcp.pop %v5059
  %v5084 = vmul.f32 1.0, %v5083
  %v5085 = vrcp.pop %v5060
  %v5086 = vmul.f32 1.0, %v5085
  %v5087 = vrcp.pop %v5061
  %v5088 = vmul.f32 1.0, %v5087
  %v5089 = vrcp.pop %v5062
  %v5090 = vmul.f32 1.0, %v5089
  %v5091 = vrcp.pop %v5063
  %v5092 = vmul.f32 1.0, %v5091
  %v5093 = vrcp.pop %v5064
  %v5094 = vmul.f32 1.0, %v5093
  %v5095 = vrcp.pop %v5065
  %v5096 = vmul.f32 1.0, %v5095
  %v5097 = vrcp.pop %v5066
  %v5098 = vmul.f32 1.0, %v5097
  %v5099 = vmul.f32 %v5068, 1.0614054
  %v5100 = vmul.f32 %v5070, 1.0614054
  %v5101 = vmul.f32 %v5072, 1.0614054
  %v5102 = vmul.f32 %v5074, 1.0614054
  %v5103 = vmul.f32 %v5076, 1.0614054
  %v5104 = vmul.f32 %v5078, 1.0614054
  %v5105 = vmul.f32 %v5080, 1.0614054
  %v5106 = vmul.f32 %v5082, 1.0614054
  %v5107 = vmul.f32 %v5084, 1.0614054
  %v5108 = vmul.f32 %v5086, 1.0614054
  %v5109 = vmul.f32 %v5088, 1.0614054
  %v5110 = vmul.f32 %v5090, 1.0614054
  %v5111 = vmul.f32 %v5092, 1.0614054
  %v5112 = vmul.f32 %v5094, 1.0614054
  %v5113 = vmul.f32 %v5096, 1.0614054
  %v5114 = vmul.f32 %v5098, 1.0614054
  %v5115 = vadd.f32 %v5099, -1.4531521
  %v5116 = vadd.f32 %v5100, -1.4531521
  %v5117 = vadd.f32 %v5101, -1.4531521
  %v5118 = vadd.f32 %v5102, -1.4531521
  %v5119 = vadd.f32 %v5103, -1.4531521
  %v5120 = vadd.f32 %v5104, -1.4531521
  %v5121 = vadd.f32 %v5105, -1.4531521
  %v5122 = vadd.f32 %v5106, -1.4531521
  %v5123 = vadd.f32 %v5107, -1.4531521
  %v5124 = vadd.f32 %v5108, -1.4531521
  %v5125 = vadd.f32 %v5109, -1.4531521
  %v5126 = vadd.f32 %v5110, -1.4531521
  %v5127 = vadd.f32 %v5111, -1.4531521
  %v5128 = vadd.f32 %v5112, -1.4531521
  %v5129 = vadd.f32 %v5113, -1.4531521
  %v5130 = vadd.f32 %v5114, -1.4531521
  %v5131 = vmul.f32 %v5115, %v5068
  %v5132 = vmul.f32 %v5116, %v5070
  %v5133 = vmul.f32 %v5117, %v5072
  %v5134 = vmul.f32 %v5118, %v5074
  %v5135 = vmul.f32 %v5119, %v5076
  %v5136 = vmul.f32 %v5120, %v5078
  %v5137 = vmul.f32 %v5121, %v5080
  %v5138 = vmul.f32 %v5122, %v5082
  %v5139 = vmul.f32 %v5123, %v5084
  %v5140 = vmul.f32 %v5124, %v5086
  %v5141 = vmul.f32 %v5125, %v5088
  %v5142 = vmul.f32 %v5126, %v5090
  %v5143 = vmul.f32 %v5127, %v5092
  %v5144 = vmul.f32 %v5128, %v5094
  %v5145 = vmul.f32 %v5129, %v5096
  %v5146 = vmul.f32 %v5130, %v5098
  %v5147 = vadd.f32 %v5131, 1.4214138
  %v5148 = vadd.f32 %v5132, 1.4214138
  %v5149 = vadd.f32 %v5133, 1.4214138
  %v5150 = vadd.f32 %v5134, 1.4214138
  %v5151 = vadd.f32 %v5135, 1.4214138
  %v5152 = vadd.f32 %v5136, 1.4214138
  %v5153 = vadd.f32 %v5137, 1.4214138
  %v5154 = vadd.f32 %v5138, 1.4214138
  %v5155 = vadd.f32 %v5139, 1.4214138
  %v5156 = vadd.f32 %v5140, 1.4214138
  %v5157 = vadd.f32 %v5141, 1.4214138
  %v5158 = vadd.f32 %v5142, 1.4214138
  %v5159 = vadd.f32 %v5143, 1.4214138
  %v5160 = vadd.f32 %v5144, 1.4214138
  %v5161 = vadd.f32 %v5145, 1.4214138
  %v5162 = vadd.f32 %v5146, 1.4214138
  %v5163 = vmul.f32 %v5147, %v5068
  %v5164 = vmul.f32 %v5148, %v5070
  %v5165 = vmul.f32 %v5149, %v5072
  %v5166 = vmul.f32 %v5150, %v5074
  %v5167 = vmul.f32 %v5151, %v5076
  %v5168 = vmul.f32 %v5152, %v5078
  %v5169 = vmul.f32 %v5153, %v5080
  %v5170 = vmul.f32 %v5154, %v5082
  %v5171 = vmul.f32 %v5155, %v5084
  %v5172 = vmul.f32 %v5156, %v5086
  %v5173 = vmul.f32 %v5157, %v5088
  %v5174 = vmul.f32 %v5158, %v5090
  %v5175 = vmul.f32 %v5159, %v5092
  %v5176 = vmul.f32 %v5160, %v5094
  %v5177 = vmul.f32 %v5161, %v5096
  %v5178 = vmul.f32 %v5162, %v5098
  %v5179 = vadd.f32 %v5163, -0.28449672
  %v5180 = vadd.f32 %v5164, -0.28449672
  %v5181 = vadd.f32 %v5165, -0.28449672
  %v5182 = vadd.f32 %v5166, -0.28449672
  %v5183 = vadd.f32 %v5167, -0.28449672
  %v5184 = vadd.f32 %v5168, -0.28449672
  %v5185 = vadd.f32 %v5169, -0.28449672
  %v5186 = vadd.f32 %v5170, -0.28449672
  %v5187 = vadd.f32 %v5171, -0.28449672
  %v5188 = vadd.f32 %v5172, -0.28449672
  %v5189 = vadd.f32 %v5173, -0.28449672
  %v5190 = vadd.f32 %v5174, -0.28449672
  %v5191 = vadd.f32 %v5175, -0.28449672
  %v5192 = vadd.f32 %v5176, -0.28449672
  %v5193 = vadd.f32 %v5177, -0.28449672
  %v5194 = vadd.f32 %v5178, -0.28449672
  %v5195 = vmul.f32 %v5179, %v5068
  %v5196 = vmul.f32 %v5180, %v5070
  %v5197 = vmul.f32 %v5181, %v5072
  %v5198 = vmul.f32 %v5182, %v5074
  %v5199 = vmul.f32 %v5183, %v5076
  %v5200 = vmul.f32 %v5184, %v5078
  %v5201 = vmul.f32 %v5185, %v5080
  %v5202 = vmul.f32 %v5186, %v5082
  %v5203 = vmul.f32 %v5187, %v5084
  %v5204 = vmul.f32 %v5188, %v5086
  %v5205 = vmul.f32 %v5189, %v5088
  %v5206 = vmul.f32 %v5190, %v5090
  %v5207 = vmul.f32 %v5191, %v5092
  %v5208 = vmul.f32 %v5192, %v5094
  %v5209 = vmul.f32 %v5193, %v5096
  %v5210 = vmul.f32 %v5194, %v5098
  %v5211 = vadd.f32 %v5195, 0.2548296
  %v5212 = vadd.f32 %v5196, 0.2548296
  %v5213 = vadd.f32 %v5197, 0.2548296
  %v5214 = vadd.f32 %v5198, 0.2548296
  %v5215 = vadd.f32 %v5199, 0.2548296
  %v5216 = vadd.f32 %v5200, 0.2548296
  %v5217 = vadd.f32 %v5201, 0.2548296
  %v5218 = vadd.f32 %v5202, 0.2548296
  %v5219 = vadd.f32 %v5203, 0.2548296
  %v5220 = vadd.f32 %v5204, 0.2548296
  %v5221 = vadd.f32 %v5205, 0.2548296
  %v5222 = vadd.f32 %v5206, 0.2548296
  %v5223 = vadd.f32 %v5207, 0.2548296
  %v5224 = vadd.f32 %v5208, 0.2548296
  %v5225 = vadd.f32 %v5209, 0.2548296
  %v5226 = vadd.f32 %v5210, 0.2548296
  %v5227 = vmul.f32 %v5211, %v5068
  %v5228 = vmul.f32 %v5212, %v5070
  %v5229 = vmul.f32 %v5213, %v5072
  %v5230 = vmul.f32 %v5214, %v5074
  %v5231 = vmul.f32 %v5215, %v5076
  %v5232 = vmul.f32 %v5216, %v5078
  %v5233 = vmul.f32 %v5217, %v5080
  %v5234 = vmul.f32 %v5218, %v5082
  %v5235 = vmul.f32 %v5219, %v5084
  %v5236 = vmul.f32 %v5220, %v5086
  %v5237 = vmul.f32 %v5221, %v5088
  %v5238 = vmul.f32 %v5222, %v5090
  %v5239 = vmul.f32 %v5223, %v5092
  %v5240 = vmul.f32 %v5224, %v5094
  %v5241 = vmul.f32 %v5225, %v5096
  %v5242 = vmul.f32 %v5226, %v5098
  %v5243 = vsub.f32 0.0, %v5019
  %v5244 = vsub.f32 0.0, %v5020
  %v5245 = vsub.f32 0.0, %v5021
  %v5246 = vsub.f32 0.0, %v5022
  %v5247 = vsub.f32 0.0, %v5023
  %v5248 = vsub.f32 0.0, %v5024
  %v5249 = vsub.f32 0.0, %v5025
  %v5250 = vsub.f32 0.0, %v5026
  %v5251 = vsub.f32 0.0, %v5027
  %v5252 = vsub.f32 0.0, %v5028
  %v5253 = vsub.f32 0.0, %v5029
  %v5254 = vsub.f32 0.0, %v5030
  %v5255 = vsub.f32 0.0, %v5031
  %v5256 = vsub.f32 0.0, %v5032
  %v5257 = vsub.f32 0.0, %v5033
  %v5258 = vsub.f32 0.0, %v5034
  %v5259 = vmul.f32 %v5243, %v5019
  %v5260 = vmul.f32 %v5244, %v5020
  %v5261 = vmul.f32 %v5245, %v5021
  %v5262 = vmul.f32 %v5246, %v5022
  %v5263 = vmul.f32 %v5247, %v5023
  %v5264 = vmul.f32 %v5248, %v5024
  %v5265 = vmul.f32 %v5249, %v5025
  %v5266 = vmul.f32 %v5250, %v5026
  %v5267 = vmul.f32 %v5251, %v5027
  %v5268 = vmul.f32 %v5252, %v5028
  %v5269 = vmul.f32 %v5253, %v5029
  %v5270 = vmul.f32 %v5254, %v5030
  %v5271 = vmul.f32 %v5255, %v5031
  %v5272 = vmul.f32 %v5256, %v5032
  %v5273 = vmul.f32 %v5257, %v5033
  %v5274 = vmul.f32 %v5258, %v5034
  %v5275 = vmul.f32 %v5259, 1.442695
  %v5276 = vpow.pop %v5275
  %v5277 = vmul.f32 %v5260, 1.442695
  %v5278 = vpow.pop %v5277
  %v5279 = vmul.f32 %v5261, 1.442695
  %v5280 = vpow.pop %v5279
  %v5281 = vmul.f32 %v5262, 1.442695
  %v5282 = vpow.pop %v5281
  %v5283 = vmul.f32 %v5263, 1.442695
  %v5284 = vpow.pop %v5283
  %v5285 = vmul.f32 %v5264, 1.442695
  %v5286 = vpow.pop %v5285
  %v5287 = vmul.f32 %v5265, 1.442695
  %v5288 = vpow.pop %v5287
  %v5289 = vmul.f32 %v5266, 1.442695
  %v5290 = vpow.pop %v5289
  %v5291 = vmul.f32 %v5267, 1.442695
  %v5292 = vpow.pop %v5291
  %v5293 = vmul.f32 %v5268, 1.442695
  %v5294 = vpow.pop %v5293
  %v5295 = vmul.f32 %v5269, 1.442695
  %v5296 = vpow.pop %v5295
  %v5297 = vmul.f32 %v5270, 1.442695
  %v5298 = vpow.pop %v5297
  %v5299 = vmul.f32 %v5271, 1.442695
  %v5300 = vpow.pop %v5299
  %v5301 = vmul.f32 %v5272, 1.442695
  %v5302 = vpow.pop %v5301
  %v5303 = vmul.f32 %v5273, 1.442695
  %v5304 = vpow.pop %v5303
  %v5305 = vmul.f32 %v5274, 1.442695
  %v5306 = vpow.pop %v5305
  %v5307 = vmul.f32 %v5227, %v5276
  %v5308 = vmul.f32 %v5228, %v5278
  %v5309 = vmul.f32 %v5229, %v5280
  %v5310 = vmul.f32 %v5230, %v5282
  %v5311 = vmul.f32 %v5231, %v5284
  %v5312 = vmul.f32 %v5232, %v5286
  %v5313 = vmul.f32 %v5233, %v5288
  %v5314 = vmul.f32 %v5234, %v5290
  %v5315 = vmul.f32 %v5235, %v5292
  %v5316 = vmul.f32 %v5236, %v5294
  %v5317 = vmul.f32 %v5237, %v5296
  %v5318 = vmul.f32 %v5238, %v5298
  %v5319 = vmul.f32 %v5239, %v5300
  %v5320 = vmul.f32 %v5240, %v5302
  %v5321 = vmul.f32 %v5241, %v5304
  %v5322 = vmul.f32 %v5242, %v5306
  %v5323 = vsub.f32 1.0, %v5307
  %v5324 = vsub.f32 1.0, %v5308
  %v5325 = vsub.f32 1.0, %v5309
  %v5326 = vsub.f32 1.0, %v5310
  %v5327 = vsub.f32 1.0, %v5311
  %v5328 = vsub.f32 1.0, %v5312
  %v5329 = vsub.f32 1.0, %v5313
  %v5330 = vsub.f32 1.0, %v5314
  %v5331 = vsub.f32 1.0, %v5315
  %v5332 = vsub.f32 1.0, %v5316
  %v5333 = vsub.f32 1.0, %v5317
  %v5334 = vsub.f32 1.0, %v5318
  %v5335 = vsub.f32 1.0, %v5319
  %v5336 = vsub.f32 1.0, %v5320
  %v5337 = vsub.f32 1.0, %v5321
  %v5338 = vsub.f32 1.0, %v5322
  %vm5339 = vcmp.ge.f32.partialorder %v5003, 0.0
  %vm5340 = vcmp.ge.f32.partialorder %v5004, 0.0
  %vm5341 = vcmp.ge.f32.partialorder %v5005, 0.0
  %vm5342 = vcmp.ge.f32.partialorder %v5006, 0.0
  %vm5343 = vcmp.ge.f32.partialorder %v5007, 0.0
  %vm5344 = vcmp.ge.f32.partialorder %v5008, 0.0
  %vm5345 = vcmp.ge.f32.partialorder %v5009, 0.0
  %vm5346 = vcmp.ge.f32.partialorder %v5010, 0.0
  %vm5347 = vcmp.ge.f32.partialorder %v5011, 0.0
  %vm5348 = vcmp.ge.f32.partialorder %v5012, 0.0
  %vm5349 = vcmp.ge.f32.partialorder %v5013, 0.0
  %vm5350 = vcmp.ge.f32.partialorder %v5014, 0.0
  %vm5351 = vcmp.ge.f32.partialorder %v5015, 0.0
  %vm5352 = vcmp.ge.f32.partialorder %v5016, 0.0
  %vm5353 = vcmp.ge.f32.partialorder %v5017, 0.0
  %vm5354 = vcmp.ge.f32.partialorder %v5018, 0.0
  %v5355 = vsub.f32 0.0, %v5323
  %v5356 = vsub.f32 0.0, %v5324
  %v5357 = vsub.f32 0.0, %v5325
  %v5358 = vsub.f32 0.0, %v5326
  %v5359 = vsub.f32 0.0, %v5327
  %v5360 = vsub.f32 0.0, %v5328
  %v5361 = vsub.f32 0.0, %v5329
  %v5362 = vsub.f32 0.0, %v5330
  %v5363 = vsub.f32 0.0, %v5331
  %v5364 = vsub.f32 0.0, %v5332
  %v5365 = vsub.f32 0.0, %v5333
  %v5366 = vsub.f32 0.0, %v5334
  %v5367 = vsub.f32 0.0, %v5335
  %v5368 = vsub.f32 0.0, %v5336
  %v5369 = vsub.f32 0.0, %v5337
  %v5370 = vsub.f32 0.0, %v5338
  %v5371 = vsel %vm5339, %v5323, %v5355
  %v5372 = vsel %vm5340, %v5324, %v5356
  %v5373 = vsel %vm5341, %v5325, %v5357
  %v5374 = vsel %vm5342, %v5326, %v5358
  %v5375 = vsel %vm5343, %v5327, %v5359
  %v5376 = vsel %vm5344, %v5328, %v5360
  %v5377 = vsel %vm5345, %v5329, %v5361
  %v5378 = vsel %vm5346, %v5330, %v5362
  %v5379 = vsel %vm5347, %v5331, %v5363
  %v5380 = vsel %vm5348, %v5332, %v5364
  %v5381 = vsel %vm5349, %v5333, %v5365
  %v5382 = vsel %vm5350, %v5334, %v5366
  %v5383 = vsel %vm5351, %v5335, %v5367
  %v5384 = vsel %vm5352, %v5336, %v5368
  %v5385 = vsel %vm5353, %v5337, %v5369
  %v5386 = vsel %vm5354, %v5338, %v5370
  %v5387 = vadd.f32 %v5371, 1.0
  %v5388 = vadd.f32 %v5372, 1.0
  %v5389 = vadd.f32 %v5373, 1.0
  %v5390 = vadd.f32 %v5374, 1.0
  %v5391 = vadd.f32 %v5375, 1.0
  %v5392 = vadd.f32 %v5376, 1.0
  %v5393 = vadd.f32 %v5377, 1.0
  %v5394 = vadd.f32 %v5378, 1.0
  %v5395 = vadd.f32 %v5379, 1.0
  %v5396 = vadd.f32 %v5380, 1.0
  %v5397 = vadd.f32 %v5381, 1.0
  %v5398 = vadd.f32 %v5382, 1.0
  %v5399 = vadd.f32 %v5383, 1.0
  %v5400 = vadd.f32 %v5384, 1.0
  %v5401 = vadd.f32 %v5385, 1.0
  %v5402 = vadd.f32 %v5386, 1.0
  %v5403 = vmul.f32 %v4987, %v5387
  %v5404 = vmul.f32 %v4988, %v5388
  %v5405 = vmul.f32 %v4989, %v5389
  %v5406 = vmul.f32 %v4990, %v5390
  %v5407 = vmul.f32 %v4991, %v5391
  %v5408 = vmul.f32 %v4992, %v5392
  %v5409 = vmul.f32 %v4993, %v5393
  %v5410 = vmul.f32 %v4994, %v5394
  %v5411 = vmul.f32 %v4995, %v5395
  %v5412 = vmul.f32 %v4996, %v5396
  %v5413 = vmul.f32 %v4997, %v5397
  %v5414 = vmul.f32 %v4998, %v5398
  %v5415 = vmul.f32 %v4999, %v5399
  %v5416 = vmul.f32 %v5000, %v5400
  %v5417 = vmul.f32 %v5001, %v5401
  %v5418 = vmul.f32 %v5002, %v5402
  %v5419 = vld [vmem:[%s14] sm:$0xff]
  %v5420 = vld [vmem:[%s14 + $0x8] sm:$0xff]
  %v5421 = vld [vmem:[%s14 + $0x10] sm:$0xff]
  %v5422 = vld [vmem:[%s14 + $0x18] sm:$0xff]
  %v5423 = vld [vmem:[%s14 + $0x20] sm:$0xff]
  %v5424 = vld [vmem:[%s14 + $0x28] sm:$0xff]
  %v5425 = vld [vmem:[%s14 + $0x30] sm:$0xff]
  %v5426 = vld [vmem:[%s14 + $0x38] sm:$0xff]
  %v5427 = vld [vmem:[%s14 + $0x40] sm:$0xff]
  %v5428 = vld [vmem:[%s14 + $0x48] sm:$0xff]
  %v5429 = vld [vmem:[%s14 + $0x50] sm:$0xff]
  %v5430 = vld [vmem:[%s14 + $0x58] sm:$0xff]
  %v5431 = vld [vmem:[%s14 + $0x60] sm:$0xff]
  %v5432 = vld [vmem:[%s14 + $0x68] sm:$0xff]
  %v5433 = vld [vmem:[%s14 + $0x70] sm:$0xff]
  %v5434 = vld [vmem:[%s14 + $0x78] sm:$0xff]
  %5435 = vmatprep.subr.mxu0 0.0
  %5436 = vmatpush1.msra.mxu0 %v5434
  %5437 = vmatprep.subr.mxu0 0.0
  %5438 = vmatpush1.msra.mxu0 %v5433
  %5439 = vmatprep.subr.mxu0 0.0
  %5440 = vmatpush1.msra.mxu0 %v5432
  %5441 = vmatprep.subr.mxu0 0.0
  %5442 = vmatpush1.msra.mxu0 %v5431
  %5443 = vmatprep.subr.mxu0 0.0
  %5444 = vmatpush1.msra.mxu0 %v5430
  %5445 = vmatprep.subr.mxu0 0.0
  %5446 = vmatpush1.msra.mxu0 %v5429
  %5447 = vmatprep.subr.mxu0 0.0
  %5448 = vmatpush1.msra.mxu0 %v5428
  %5449 = vmatprep.subr.mxu0 0.0
  %5450 = vmatpush1.msra.mxu0 %v5427
  %5451 = vmatprep.subr.mxu0 0.0
  %5452 = vmatpush1.msra.mxu0 %v5426
  %5453 = vmatprep.subr.mxu0 0.0
  %5454 = vmatpush1.msra.mxu0 %v5425
  %5455 = vmatprep.subr.mxu0 0.0
  %5456 = vmatpush1.msra.mxu0 %v5424
  %5457 = vmatprep.subr.mxu0 0.0
  %5458 = vmatpush1.msra.mxu0 %v5423
  %5459 = vmatprep.subr.mxu0 0.0
  %5460 = vmatpush1.msra.mxu0 %v5422
  %5461 = vmatprep.subr.mxu0 0.0
  %5462 = vmatpush1.msra.mxu0 %v5421
  %5463 = vmatprep.subr.mxu0 0.0
  %5464 = vmatpush1.msra.mxu0 %v5420
  %5465 = vmatprep.subr.mxu0 0.0
  %5466 = vmatpush1.msra.mxu0 %v5419
  %5467 = vmatprep.subr.mxu0 0.0
  %5468 = vmatpush2.msra.mxu0 0.0
  %5469 = vmatprep.subr.mxu0 0.0
  %5470 = vmatpush2.msra.mxu0 0.0
  %5471 = vmatprep.subr.mxu0 0.0
  %5472 = vmatpush2.msra.mxu0 0.0
  %5473 = vmatprep.subr.mxu0 0.0
  %5474 = vmatpush2.msra.mxu0 0.0
  %5475 = vmatprep.subr.mxu0 0.0
  %5476 = vmatpush2.msra.mxu0 0.0
  %5477 = vmatprep.subr.mxu0 0.0
  %5478 = vmatpush2.msra.mxu0 0.0
  %5479 = vmatprep.subr.mxu0 0.0
  %5480 = vmatpush2.msra.mxu0 0.0
  %5481 = vmatprep.subr.mxu0 0.0
  %5482 = vmatpush2.msra.mxu0 0.0
  %5483 = vmatprep.subr.mxu0 0.0
  %5484 = vmatpush2.msra.mxu0 0.0
  %5485 = vmatprep.subr.mxu0 0.0
  %5486 = vmatpush2.msra.mxu0 0.0
  %5487 = vmatprep.subr.mxu0 0.0
  %5488 = vmatpush2.msra.mxu0 0.0
  %5489 = vmatprep.subr.mxu0 0.0
  %5490 = vmatpush2.msra.mxu0 0.0
  %5491 = vmatprep.subr.mxu0 0.0
  %5492 = vmatpush2.msra.mxu0 0.0
  %5493 = vmatprep.subr.mxu0 0.0
  %5494 = vmatpush2.msra.mxu0 0.0
  %5495 = vmatprep.subr.mxu0 0.0
  %5496 = vmatpush2.msra.mxu0 0.0
  %5497 = vmatprep.subr.mxu0 0.0
  %5498 = vmatpush2.msra.mxu0 0.0
  %5499 = vmatprep.mubr.f32.mxu0 0.0
  %5500 = vmatmul.mubr.f32.gmra.mxu0 %v5403
  %v5501 = vpop.f32.mrf.mxu0
  %v5502 = vadd.f32 0.0, %v5501
  %v5503 = vpop.f32.mrf.mxu0
  %5504 = vmatprep.mubr.f32.mxu0 0.0
  %5505 = vmatmul.mubr.f32.gmra.mxu0 %v5404
  %v5506 = vpop.f32.mrf.mxu0
  %v5507 = vadd.f32 0.0, %v5506
  %v5508 = vpop.f32.mrf.mxu0
  %5509 = vmatprep.mubr.f32.mxu0 0.0
  %5510 = vmatmul.mubr.f32.gmra.mxu0 %v5405
  %v5511 = vpop.f32.mrf.mxu0
  %v5512 = vadd.f32 0.0, %v5511
  %v5513 = vpop.f32.mrf.mxu0
  %5514 = vmatprep.mubr.f32.mxu0 0.0
  %5515 = vmatmul.mubr.f32.gmra.mxu0 %v5406
  %v5516 = vpop.f32.mrf.mxu0
  %v5517 = vadd.f32 0.0, %v5516
  %v5518 = vpop.f32.mrf.mxu0
  %5519 = vmatprep.mubr.f32.mxu0 0.0
  %5520 = vmatmul.mubr.f32.gmra.mxu0 %v5407
  %v5521 = vpop.f32.mrf.mxu0
  %v5522 = vadd.f32 0.0, %v5521
  %v5523 = vpop.f32.mrf.mxu0
  %5524 = vmatprep.mubr.f32.mxu0 0.0
  %5525 = vmatmul.mubr.f32.gmra.mxu0 %v5408
  %v5526 = vpop.f32.mrf.mxu0
  %v5527 = vadd.f32 0.0, %v5526
  %v5528 = vpop.f32.mrf.mxu0
  %5529 = vmatprep.mubr.f32.mxu0 0.0
  %5530 = vmatmul.mubr.f32.gmra.mxu0 %v5409
  %v5531 = vpop.f32.mrf.mxu0
  %v5532 = vadd.f32 0.0, %v5531
  %v5533 = vpop.f32.mrf.mxu0
  %5534 = vmatprep.mubr.f32.mxu0 0.0
  %5535 = vmatmul.mubr.f32.gmra.mxu0 %v5410
  %v5536 = vpop.f32.mrf.mxu0
  %v5537 = vadd.f32 0.0, %v5536
  %v5538 = vpop.f32.mrf.mxu0
  %5539 = vmatprep.mubr.f32.mxu0 0.0
  %5540 = vmatmul.mubr.f32.gmra.mxu0 %v5411
  %v5541 = vpop.f32.mrf.mxu0
  %v5542 = vadd.f32 0.0, %v5541
  %v5543 = vpop.f32.mrf.mxu0
  %5544 = vmatprep.mubr.f32.mxu0 0.0
  %5545 = vmatmul.mubr.f32.gmra.mxu0 %v5412
  %v5546 = vpop.f32.mrf.mxu0
  %v5547 = vadd.f32 0.0, %v5546
  %v5548 = vpop.f32.mrf.mxu0
  %5549 = vmatprep.mubr.f32.mxu0 0.0
  %5550 = vmatmul.mubr.f32.gmra.mxu0 %v5413
  %v5551 = vpop.f32.mrf.mxu0
  %v5552 = vadd.f32 0.0, %v5551
  %v5553 = vpop.f32.mrf.mxu0
  %5554 = vmatprep.mubr.f32.mxu0 0.0
  %5555 = vmatmul.mubr.f32.gmra.mxu0 %v5414
  %v5556 = vpop.f32.mrf.mxu0
  %v5557 = vadd.f32 0.0, %v5556
  %v5558 = vpop.f32.mrf.mxu0
  %5559 = vmatprep.mubr.f32.mxu0 0.0
  %5560 = vmatmul.mubr.f32.gmra.mxu0 %v5415
  %v5561 = vpop.f32.mrf.mxu0
  %v5562 = vadd.f32 0.0, %v5561
  %v5563 = vpop.f32.mrf.mxu0
  %5564 = vmatprep.mubr.f32.mxu0 0.0
  %5565 = vmatmul.mubr.f32.gmra.mxu0 %v5416
  %v5566 = vpop.f32.mrf.mxu0
  %v5567 = vadd.f32 0.0, %v5566
  %v5568 = vpop.f32.mrf.mxu0
  %5569 = vmatprep.mubr.f32.mxu0 0.0
  %5570 = vmatmul.mubr.f32.gmra.mxu0 %v5417
  %v5571 = vpop.f32.mrf.mxu0
  %v5572 = vadd.f32 0.0, %v5571
  %v5573 = vpop.f32.mrf.mxu0
  %5574 = vmatprep.mubr.f32.mxu0 0.0
  %5575 = vmatmul.mubr.f32.gmra.mxu0 %v5418
  %v5576 = vpop.f32.mrf.mxu0
  %v5577 = vadd.f32 0.0, %v5576
  %v5578 = vpop.f32.mrf.mxu0
  %5579 = vdwg.mxu0
  %v5580 = vadd.f32 %v4513, %v5502
  %v5581 = vadd.f32 %v4514, %v5507
  %v5582 = vadd.f32 %v4515, %v5512
  %v5583 = vadd.f32 %v4516, %v5517
  %v5584 = vadd.f32 %v4517, %v5522
  %v5585 = vadd.f32 %v4518, %v5527
  %v5586 = vadd.f32 %v4519, %v5532
  %v5587 = vadd.f32 %v4520, %v5537
  %v5588 = vadd.f32 %v4521, %v5542
  %v5589 = vadd.f32 %v4522, %v5547
  %v5590 = vadd.f32 %v4523, %v5552
  %v5591 = vadd.f32 %v4524, %v5557
  %v5592 = vadd.f32 %v4525, %v5562
  %v5593 = vadd.f32 %v4526, %v5567
  %v5594 = vadd.f32 %v4527, %v5572
  %v5595 = vadd.f32 %v4528, %v5577
  %v5596 = vld [vmem:[%s15] sm:$0x1]
  %v5598 = vlaneseq
  %v5599 = vshrl.u32 %v5598, 7
  %v5600 = vsub.s32 0, %v5599
  %v5601 = vrot.slane %v5596, %v5600
  %v5603 = vadd.f32 %v5580, %v5601
  %v5604 = vadd.f32 %v5581, %v5601
  %v5605 = vadd.f32 %v5582, %v5601
  %v5606 = vadd.f32 %v5583, %v5601
  %v5607 = vadd.f32 %v5584, %v5601
  %v5608 = vadd.f32 %v5585, %v5601
  %v5609 = vadd.f32 %v5586, %v5601
  %v5610 = vadd.f32 %v5587, %v5601
  %v5611 = vadd.f32 %v5588, %v5601
  %v5612 = vadd.f32 %v5589, %v5601
  %v5613 = vadd.f32 %v5590, %v5601
  %v5614 = vadd.f32 %v5591, %v5601
  %v5615 = vadd.f32 %v5592, %v5601
  %v5616 = vadd.f32 %v5593, %v5601
  %v5617 = vadd.f32 %v5594, %v5601
  %v5618 = vadd.f32 %v5595, %v5601
  %s5619 = scalar_lea.vmem %s4, 1
  %v5620 = vld [vmem:[%s5619] sm:$0x1]
  %s5621 = scalar_lea.vmem %s5, 1
  %v5622 = vld [vmem:[%s5621] sm:$0x1]
  %v5623 = vsel %vm71, %v5603, 0.0
  %5624 = vadd.xlane.f32.xlu0 %v5623
  %v5625 = vpop.xlane.xlu0 %5624
  %v5626 = vsel %vm71, %v5604, 0.0
  %5627 = vadd.xlane.f32.xlu0 %v5626
  %v5628 = vpop.xlane.xlu0 %5627
  %v5629 = vsel %vm71, %v5605, 0.0
  %5630 = vadd.xlane.f32.xlu0 %v5629
  %v5631 = vpop.xlane.xlu0 %5630
  %v5632 = vsel %vm71, %v5606, 0.0
  %5633 = vadd.xlane.f32.xlu0 %v5632
  %v5634 = vpop.xlane.xlu0 %5633
  %v5635 = vsel %vm71, %v5607, 0.0
  %5636 = vadd.xlane.f32.xlu0 %v5635
  %v5637 = vpop.xlane.xlu0 %5636
  %v5638 = vsel %vm71, %v5608, 0.0
  %5639 = vadd.xlane.f32.xlu0 %v5638
  %v5640 = vpop.xlane.xlu0 %5639
  %v5641 = vsel %vm71, %v5609, 0.0
  %5642 = vadd.xlane.f32.xlu0 %v5641
  %v5643 = vpop.xlane.xlu0 %5642
  %v5644 = vsel %vm71, %v5610, 0.0
  %5645 = vadd.xlane.f32.xlu0 %v5644
  %v5646 = vpop.xlane.xlu0 %5645
  %v5647 = vsel %vm71, %v5611, 0.0
  %5648 = vadd.xlane.f32.xlu0 %v5647
  %v5649 = vpop.xlane.xlu0 %5648
  %v5650 = vsel %vm71, %v5612, 0.0
  %5651 = vadd.xlane.f32.xlu0 %v5650
  %v5652 = vpop.xlane.xlu0 %5651
  %v5653 = vsel %vm71, %v5613, 0.0
  %5654 = vadd.xlane.f32.xlu0 %v5653
  %v5655 = vpop.xlane.xlu0 %5654
  %v5656 = vsel %vm71, %v5614, 0.0
  %5657 = vadd.xlane.f32.xlu0 %v5656
  %v5658 = vpop.xlane.xlu0 %5657
  %v5659 = vsel %vm71, %v5615, 0.0
  %5660 = vadd.xlane.f32.xlu0 %v5659
  %v5661 = vpop.xlane.xlu0 %5660
  %v5662 = vsel %vm71, %v5616, 0.0
  %5663 = vadd.xlane.f32.xlu0 %v5662
  %v5664 = vpop.xlane.xlu0 %5663
  %v5665 = vsel %vm71, %v5617, 0.0
  %5666 = vadd.xlane.f32.xlu0 %v5665
  %v5667 = vpop.xlane.xlu0 %5666
  %v5668 = vsel %vm71, %v5618, 0.0
  %5669 = vadd.xlane.f32.xlu0 %v5668
  %v5670 = vpop.xlane.xlu0 %5669
  %v5671 = vmul.f32 %v5625, %v120
  %v5672 = vmul.f32 %v5628, %v120
  %v5673 = vmul.f32 %v5631, %v120
  %v5674 = vmul.f32 %v5634, %v120
  %v5675 = vmul.f32 %v5637, %v120
  %v5676 = vmul.f32 %v5640, %v120
  %v5677 = vmul.f32 %v5643, %v120
  %v5678 = vmul.f32 %v5646, %v120
  %v5679 = vmul.f32 %v5649, %v120
  %v5680 = vmul.f32 %v5652, %v120
  %v5681 = vmul.f32 %v5655, %v120
  %v5682 = vmul.f32 %v5658, %v120
  %v5683 = vmul.f32 %v5661, %v120
  %v5684 = vmul.f32 %v5664, %v120
  %v5685 = vmul.f32 %v5667, %v120
  %v5686 = vmul.f32 %v5670, %v120
  %v5687 = vsub.f32 %v5603, %v5671
  %v5688 = vsub.f32 %v5604, %v5672
  %v5689 = vsub.f32 %v5605, %v5673
  %v5690 = vsub.f32 %v5606, %v5674
  %v5691 = vsub.f32 %v5607, %v5675
  %v5692 = vsub.f32 %v5608, %v5676
  %v5693 = vsub.f32 %v5609, %v5677
  %v5694 = vsub.f32 %v5610, %v5678
  %v5695 = vsub.f32 %v5611, %v5679
  %v5696 = vsub.f32 %v5612, %v5680
  %v5697 = vsub.f32 %v5613, %v5681
  %v5698 = vsub.f32 %v5614, %v5682
  %v5699 = vsub.f32 %v5615, %v5683
  %v5700 = vsub.f32 %v5616, %v5684
  %v5701 = vsub.f32 %v5617, %v5685
  %v5702 = vsub.f32 %v5618, %v5686
  %v5703 = vmul.f32 %v5687, %v5687
  %v5704 = vmul.f32 %v5688, %v5688
  %v5705 = vmul.f32 %v5689, %v5689
  %v5706 = vmul.f32 %v5690, %v5690
  %v5707 = vmul.f32 %v5691, %v5691
  %v5708 = vmul.f32 %v5692, %v5692
  %v5709 = vmul.f32 %v5693, %v5693
  %v5710 = vmul.f32 %v5694, %v5694
  %v5711 = vmul.f32 %v5695, %v5695
  %v5712 = vmul.f32 %v5696, %v5696
  %v5713 = vmul.f32 %v5697, %v5697
  %v5714 = vmul.f32 %v5698, %v5698
  %v5715 = vmul.f32 %v5699, %v5699
  %v5716 = vmul.f32 %v5700, %v5700
  %v5717 = vmul.f32 %v5701, %v5701
  %v5718 = vmul.f32 %v5702, %v5702
  %v5719 = vsel %vm71, %v5703, 0.0
  %5720 = vadd.xlane.f32.xlu0 %v5719
  %v5721 = vpop.xlane.xlu0 %5720
  %v5722 = vsel %vm71, %v5704, 0.0
  %5723 = vadd.xlane.f32.xlu0 %v5722
  %v5724 = vpop.xlane.xlu0 %5723
  %v5725 = vsel %vm71, %v5705, 0.0
  %5726 = vadd.xlane.f32.xlu0 %v5725
  %v5727 = vpop.xlane.xlu0 %5726
  %v5728 = vsel %vm71, %v5706, 0.0
  %5729 = vadd.xlane.f32.xlu0 %v5728
  %v5730 = vpop.xlane.xlu0 %5729
  %v5731 = vsel %vm71, %v5707, 0.0
  %5732 = vadd.xlane.f32.xlu0 %v5731
  %v5733 = vpop.xlane.xlu0 %5732
  %v5734 = vsel %vm71, %v5708, 0.0
  %5735 = vadd.xlane.f32.xlu0 %v5734
  %v5736 = vpop.xlane.xlu0 %5735
  %v5737 = vsel %vm71, %v5709, 0.0
  %5738 = vadd.xlane.f32.xlu0 %v5737
  %v5739 = vpop.xlane.xlu0 %5738
  %v5740 = vsel %vm71, %v5710, 0.0
  %5741 = vadd.xlane.f32.xlu0 %v5740
  %v5742 = vpop.xlane.xlu0 %5741
  %v5743 = vsel %vm71, %v5711, 0.0
  %5744 = vadd.xlane.f32.xlu0 %v5743
  %v5745 = vpop.xlane.xlu0 %5744
  %v5746 = vsel %vm71, %v5712, 0.0
  %5747 = vadd.xlane.f32.xlu0 %v5746
  %v5748 = vpop.xlane.xlu0 %5747
  %v5749 = vsel %vm71, %v5713, 0.0
  %5750 = vadd.xlane.f32.xlu0 %v5749
  %v5751 = vpop.xlane.xlu0 %5750
  %v5752 = vsel %vm71, %v5714, 0.0
  %5753 = vadd.xlane.f32.xlu0 %v5752
  %v5754 = vpop.xlane.xlu0 %5753
  %v5755 = vsel %vm71, %v5715, 0.0
  %5756 = vadd.xlane.f32.xlu0 %v5755
  %v5757 = vpop.xlane.xlu0 %5756
  %v5758 = vsel %vm71, %v5716, 0.0
  %5759 = vadd.xlane.f32.xlu0 %v5758
  %v5760 = vpop.xlane.xlu0 %5759
  %v5761 = vsel %vm71, %v5717, 0.0
  %5762 = vadd.xlane.f32.xlu0 %v5761
  %v5763 = vpop.xlane.xlu0 %5762
  %v5764 = vsel %vm71, %v5718, 0.0
  %5765 = vadd.xlane.f32.xlu0 %v5764
  %v5766 = vpop.xlane.xlu0 %5765
  %v5767 = vmul.f32 %v5721, %v120
  %v5768 = vmul.f32 %v5724, %v120
  %v5769 = vmul.f32 %v5727, %v120
  %v5770 = vmul.f32 %v5730, %v120
  %v5771 = vmul.f32 %v5733, %v120
  %v5772 = vmul.f32 %v5736, %v120
  %v5773 = vmul.f32 %v5739, %v120
  %v5774 = vmul.f32 %v5742, %v120
  %v5775 = vmul.f32 %v5745, %v120
  %v5776 = vmul.f32 %v5748, %v120
  %v5777 = vmul.f32 %v5751, %v120
  %v5778 = vmul.f32 %v5754, %v120
  %v5779 = vmul.f32 %v5757, %v120
  %v5780 = vmul.f32 %v5760, %v120
  %v5781 = vmul.f32 %v5763, %v120
  %v5782 = vmul.f32 %v5766, %v120
  %v5783 = vadd.f32 %v5767, 1e-05
  %v5784 = vadd.f32 %v5768, 1e-05
  %v5785 = vadd.f32 %v5769, 1e-05
  %v5786 = vadd.f32 %v5770, 1e-05
  %v5787 = vadd.f32 %v5771, 1e-05
  %v5788 = vadd.f32 %v5772, 1e-05
  %v5789 = vadd.f32 %v5773, 1e-05
  %v5790 = vadd.f32 %v5774, 1e-05
  %v5791 = vadd.f32 %v5775, 1e-05
  %v5792 = vadd.f32 %v5776, 1e-05
  %v5793 = vadd.f32 %v5777, 1e-05
  %v5794 = vadd.f32 %v5778, 1e-05
  %v5795 = vadd.f32 %v5779, 1e-05
  %v5796 = vadd.f32 %v5780, 1e-05
  %v5797 = vadd.f32 %v5781, 1e-05
  %v5798 = vadd.f32 %v5782, 1e-05
  %v5799 = vrsqrt.pop %v5783
  %v5800 = vrsqrt.pop %v5784
  %v5801 = vrsqrt.pop %v5785
  %v5802 = vrsqrt.pop %v5786
  %v5803 = vrsqrt.pop %v5787
  %v5804 = vrsqrt.pop %v5788
  %v5805 = vrsqrt.pop %v5789
  %v5806 = vrsqrt.pop %v5790
  %v5807 = vrsqrt.pop %v5791
  %v5808 = vrsqrt.pop %v5792
  %v5809 = vrsqrt.pop %v5793
  %v5810 = vrsqrt.pop %v5794
  %v5811 = vrsqrt.pop %v5795
  %v5812 = vrsqrt.pop %v5796
  %v5813 = vrsqrt.pop %v5797
  %v5814 = vrsqrt.pop %v5798
  %v5815 = vmul.f32 %v5687, %v5799
  %v5816 = vmul.f32 %v5688, %v5800
  %v5817 = vmul.f32 %v5689, %v5801
  %v5818 = vmul.f32 %v5690, %v5802
  %v5819 = vmul.f32 %v5691, %v5803
  %v5820 = vmul.f32 %v5692, %v5804
  %v5821 = vmul.f32 %v5693, %v5805
  %v5822 = vmul.f32 %v5694, %v5806
  %v5823 = vmul.f32 %v5695, %v5807
  %v5824 = vmul.f32 %v5696, %v5808
  %v5825 = vmul.f32 %v5697, %v5809
  %v5826 = vmul.f32 %v5698, %v5810
  %v5827 = vmul.f32 %v5699, %v5811
  %v5828 = vmul.f32 %v5700, %v5812
  %v5829 = vmul.f32 %v5701, %v5813
  %v5830 = vmul.f32 %v5702, %v5814
  %v5832 = vlaneseq
  %v5833 = vshrl.u32 %v5832, 7
  %v5834 = vsub.s32 0, %v5833
  %v5835 = vrot.slane %v5620, %v5834
  %v5837 = vmul.f32 %v5815, %v5835
  %v5838 = vmul.f32 %v5816, %v5835
  %v5839 = vmul.f32 %v5817, %v5835
  %v5840 = vmul.f32 %v5818, %v5835
  %v5841 = vmul.f32 %v5819, %v5835
  %v5842 = vmul.f32 %v5820, %v5835
  %v5843 = vmul.f32 %v5821, %v5835
  %v5844 = vmul.f32 %v5822, %v5835
  %v5845 = vmul.f32 %v5823, %v5835
  %v5846 = vmul.f32 %v5824, %v5835
  %v5847 = vmul.f32 %v5825, %v5835
  %v5848 = vmul.f32 %v5826, %v5835
  %v5849 = vmul.f32 %v5827, %v5835
  %v5850 = vmul.f32 %v5828, %v5835
  %v5851 = vmul.f32 %v5829, %v5835
  %v5852 = vmul.f32 %v5830, %v5835
  %v5854 = vlaneseq
  %v5855 = vshrl.u32 %v5854, 7
  %v5856 = vsub.s32 0, %v5855
  %v5857 = vrot.slane %v5622, %v5856
  %v5859 = vadd.f32 %v5837, %v5857
  %v5860 = vadd.f32 %v5838, %v5857
  %v5861 = vadd.f32 %v5839, %v5857
  %v5862 = vadd.f32 %v5840, %v5857
  %v5863 = vadd.f32 %v5841, %v5857
  %v5864 = vadd.f32 %v5842, %v5857
  %v5865 = vadd.f32 %v5843, %v5857
  %v5866 = vadd.f32 %v5844, %v5857
  %v5867 = vadd.f32 %v5845, %v5857
  %v5868 = vadd.f32 %v5846, %v5857
  %v5869 = vadd.f32 %v5847, %v5857
  %v5870 = vadd.f32 %v5848, %v5857
  %v5871 = vadd.f32 %v5849, %v5857
  %v5872 = vadd.f32 %v5850, %v5857
  %v5873 = vadd.f32 %v5851, %v5857
  %v5874 = vadd.f32 %v5852, %v5857
  %s5875 = scalar_lea.vmem %s1, 128
  %v5876 = vld [vmem:[%s5875] sm:$0xff]
  %v5877 = vld [vmem:[%s5875 + $0x8] sm:$0xff]
  %v5878 = vld [vmem:[%s5875 + $0x10] sm:$0xff]
  %v5879 = vld [vmem:[%s5875 + $0x18] sm:$0xff]
  %v5880 = vld [vmem:[%s5875 + $0x20] sm:$0xff]
  %v5881 = vld [vmem:[%s5875 + $0x28] sm:$0xff]
  %v5882 = vld [vmem:[%s5875 + $0x30] sm:$0xff]
  %v5883 = vld [vmem:[%s5875 + $0x38] sm:$0xff]
  %v5884 = vld [vmem:[%s5875 + $0x40] sm:$0xff]
  %v5885 = vld [vmem:[%s5875 + $0x48] sm:$0xff]
  %v5886 = vld [vmem:[%s5875 + $0x50] sm:$0xff]
  %v5887 = vld [vmem:[%s5875 + $0x58] sm:$0xff]
  %v5888 = vld [vmem:[%s5875 + $0x60] sm:$0xff]
  %v5889 = vld [vmem:[%s5875 + $0x68] sm:$0xff]
  %v5890 = vld [vmem:[%s5875 + $0x70] sm:$0xff]
  %v5891 = vld [vmem:[%s5875 + $0x78] sm:$0xff]
  %5892 = vmatprep.subr.mxu0 0.0
  %5893 = vmatpush1.msra.mxu0 %v5874
  %5894 = vmatprep.subr.mxu0 0.0
  %5895 = vmatpush1.msra.mxu0 %v5873
  %5896 = vmatprep.subr.mxu0 0.0
  %5897 = vmatpush1.msra.mxu0 %v5872
  %5898 = vmatprep.subr.mxu0 0.0
  %5899 = vmatpush1.msra.mxu0 %v5871
  %5900 = vmatprep.subr.mxu0 0.0
  %5901 = vmatpush1.msra.mxu0 %v5870
  %5902 = vmatprep.subr.mxu0 0.0
  %5903 = vmatpush1.msra.mxu0 %v5869
  %5904 = vmatprep.subr.mxu0 0.0
  %5905 = vmatpush1.msra.mxu0 %v5868
  %5906 = vmatprep.subr.mxu0 0.0
  %5907 = vmatpush1.msra.mxu0 %v5867
  %5908 = vmatprep.subr.mxu0 0.0
  %5909 = vmatpush1.msra.mxu0 %v5866
  %5910 = vmatprep.subr.mxu0 0.0
  %5911 = vmatpush1.msra.mxu0 %v5865
  %5912 = vmatprep.subr.mxu0 0.0
  %5913 = vmatpush1.msra.mxu0 %v5864
  %5914 = vmatprep.subr.mxu0 0.0
  %5915 = vmatpush1.msra.mxu0 %v5863
  %5916 = vmatprep.subr.mxu0 0.0
  %5917 = vmatpush1.msra.mxu0 %v5862
  %5918 = vmatprep.subr.mxu0 0.0
  %5919 = vmatpush1.msra.mxu0 %v5861
  %5920 = vmatprep.subr.mxu0 0.0
  %5921 = vmatpush1.msra.mxu0 %v5860
  %5922 = vmatprep.subr.mxu0 0.0
  %5923 = vmatpush1.msra.mxu0 %v5859
  %5924 = vmatprep.subr.mxu0 0.0
  %5925 = vmatpush2.msra.mxu0 0.0
  %5926 = vmatprep.subr.mxu0 0.0
  %5927 = vmatpush2.msra.mxu0 0.0
  %5928 = vmatprep.subr.mxu0 0.0
  %5929 = vmatpush2.msra.mxu0 0.0
  %5930 = vmatprep.subr.mxu0 0.0
  %5931 = vmatpush2.msra.mxu0 0.0
  %5932 = vmatprep.subr.mxu0 0.0
  %5933 = vmatpush2.msra.mxu0 0.0
  %5934 = vmatprep.subr.mxu0 0.0
  %5935 = vmatpush2.msra.mxu0 0.0
  %5936 = vmatprep.subr.mxu0 0.0
  %5937 = vmatpush2.msra.mxu0 0.0
  %5938 = vmatprep.subr.mxu0 0.0
  %5939 = vmatpush2.msra.mxu0 0.0
  %5940 = vmatprep.subr.mxu0 0.0
  %5941 = vmatpush2.msra.mxu0 0.0
  %5942 = vmatprep.subr.mxu0 0.0
  %5943 = vmatpush2.msra.mxu0 0.0
  %5944 = vmatprep.subr.mxu0 0.0
  %5945 = vmatpush2.msra.mxu0 0.0
  %5946 = vmatprep.subr.mxu0 0.0
  %5947 = vmatpush2.msra.mxu0 0.0
  %5948 = vmatprep.subr.mxu0 0.0
  %5949 = vmatpush2.msra.mxu0 0.0
  %5950 = vmatprep.subr.mxu0 0.0
  %5951 = vmatpush2.msra.mxu0 0.0
  %5952 = vmatprep.subr.mxu0 0.0
  %5953 = vmatpush2.msra.mxu0 0.0
  %5954 = vmatprep.subr.mxu0 0.0
  %5955 = vmatpush2.msra.mxu0 0.0
  %5956 = vmatprep.mubr.f32.mxu0 0.0
  %5957 = vmatmul.mubr.f32.gmra.mxu0 %v5876
  %v5958 = vpop.f32.mrf.mxu0
  %v5959 = vadd.f32 0.0, %v5958
  %v5960 = vpop.f32.mrf.mxu0
  %5961 = vmatprep.mubr.f32.mxu0 0.0
  %5962 = vmatmul.mubr.f32.gmra.mxu0 %v5877
  %v5963 = vpop.f32.mrf.mxu0
  %v5964 = vadd.f32 0.0, %v5963
  %v5965 = vpop.f32.mrf.mxu0
  %5966 = vmatprep.mubr.f32.mxu0 0.0
  %5967 = vmatmul.mubr.f32.gmra.mxu0 %v5878
  %v5968 = vpop.f32.mrf.mxu0
  %v5969 = vadd.f32 0.0, %v5968
  %v5970 = vpop.f32.mrf.mxu0
  %5971 = vmatprep.mubr.f32.mxu0 0.0
  %5972 = vmatmul.mubr.f32.gmra.mxu0 %v5879
  %v5973 = vpop.f32.mrf.mxu0
  %v5974 = vadd.f32 0.0, %v5973
  %v5975 = vpop.f32.mrf.mxu0
  %5976 = vmatprep.mubr.f32.mxu0 0.0
  %5977 = vmatmul.mubr.f32.gmra.mxu0 %v5880
  %v5978 = vpop.f32.mrf.mxu0
  %v5979 = vadd.f32 0.0, %v5978
  %v5980 = vpop.f32.mrf.mxu0
  %5981 = vmatprep.mubr.f32.mxu0 0.0
  %5982 = vmatmul.mubr.f32.gmra.mxu0 %v5881
  %v5983 = vpop.f32.mrf.mxu0
  %v5984 = vadd.f32 0.0, %v5983
  %v5985 = vpop.f32.mrf.mxu0
  %5986 = vmatprep.mubr.f32.mxu0 0.0
  %5987 = vmatmul.mubr.f32.gmra.mxu0 %v5882
  %v5988 = vpop.f32.mrf.mxu0
  %v5989 = vadd.f32 0.0, %v5988
  %v5990 = vpop.f32.mrf.mxu0
  %5991 = vmatprep.mubr.f32.mxu0 0.0
  %5992 = vmatmul.mubr.f32.gmra.mxu0 %v5883
  %v5993 = vpop.f32.mrf.mxu0
  %v5994 = vadd.f32 0.0, %v5993
  %v5995 = vpop.f32.mrf.mxu0
  %5996 = vmatprep.mubr.f32.mxu0 0.0
  %5997 = vmatmul.mubr.f32.gmra.mxu0 %v5884
  %v5998 = vpop.f32.mrf.mxu0
  %v5999 = vadd.f32 0.0, %v5998
  %v6000 = vpop.f32.mrf.mxu0
  %6001 = vmatprep.mubr.f32.mxu0 0.0
  %6002 = vmatmul.mubr.f32.gmra.mxu0 %v5885
  %v6003 = vpop.f32.mrf.mxu0
  %v6004 = vadd.f32 0.0, %v6003
  %v6005 = vpop.f32.mrf.mxu0
  %6006 = vmatprep.mubr.f32.mxu0 0.0
  %6007 = vmatmul.mubr.f32.gmra.mxu0 %v5886
  %v6008 = vpop.f32.mrf.mxu0
  %v6009 = vadd.f32 0.0, %v6008
  %v6010 = vpop.f32.mrf.mxu0
  %6011 = vmatprep.mubr.f32.mxu0 0.0
  %6012 = vmatmul.mubr.f32.gmra.mxu0 %v5887
  %v6013 = vpop.f32.mrf.mxu0
  %v6014 = vadd.f32 0.0, %v6013
  %v6015 = vpop.f32.mrf.mxu0
  %6016 = vmatprep.mubr.f32.mxu0 0.0
  %6017 = vmatmul.mubr.f32.gmra.mxu0 %v5888
  %v6018 = vpop.f32.mrf.mxu0
  %v6019 = vadd.f32 0.0, %v6018
  %v6020 = vpop.f32.mrf.mxu0
  %6021 = vmatprep.mubr.f32.mxu0 0.0
  %6022 = vmatmul.mubr.f32.gmra.mxu0 %v5889
  %v6023 = vpop.f32.mrf.mxu0
  %v6024 = vadd.f32 0.0, %v6023
  %v6025 = vpop.f32.mrf.mxu0
  %6026 = vmatprep.mubr.f32.mxu0 0.0
  %6027 = vmatmul.mubr.f32.gmra.mxu0 %v5890
  %v6028 = vpop.f32.mrf.mxu0
  %v6029 = vadd.f32 0.0, %v6028
  %v6030 = vpop.f32.mrf.mxu0
  %6031 = vmatprep.mubr.f32.mxu0 0.0
  %6032 = vmatmul.mubr.f32.gmra.mxu0 %v5891
  %v6033 = vpop.f32.mrf.mxu0
  %v6034 = vadd.f32 0.0, %v6033
  %v6035 = vpop.f32.mrf.mxu0
  %6036 = vdwg.mxu0
  %s6037 = scalar_lea.vmem %s6, 32
  %v6038 = vld [vmem:[%s6037] sm:$0xff]
  %v6039 = vld [vmem:[%s6037 + $0x8] sm:$0xff]
  %v6040 = vld [vmem:[%s6037 + $0x10] sm:$0xff]
  %v6041 = vld [vmem:[%s6037 + $0x18] sm:$0xff]
  %s6042 = scalar_lea.vmem %s7, 1
  %v6043 = vld [vmem:[%s6042] sm:$0x1]
  %v6045 = vlaneseq
  %v6046 = vshrl.u32 %v6045, 7
  %v6047 = vsub.s32 0, %v6046
  %v6048 = vrot.slane %v6043, %v6047
  %v6051 = vsel %vm71, %v5959, 0
  %v6054 = vsel %vm71, %v5964, 0
  %v6057 = vsel %vm71, %v5969, 0
  %v6060 = vsel %vm71, %v5974, 0
  %v6063 = vsel %vm71, %v5979, 0
  %v6066 = vsel %vm71, %v5984, 0
  %v6069 = vsel %vm71, %v5989, 0
  %v6072 = vsel %vm71, %v5994, 0
  %v6075 = vsel %vm71, %v5999, 0
  %v6078 = vsel %vm71, %v6004, 0
  %v6081 = vsel %vm71, %v6009, 0
  %v6084 = vsel %vm71, %v6014, 0
  %v6087 = vsel %vm71, %v6019, 0
  %v6090 = vsel %vm71, %v6024, 0
  %v6093 = vsel %vm71, %v6029, 0
  %v6096 = vsel %vm71, %v6034, 0
  %6098 = vmatprep.subr.mxu0 0.0
  %6099 = vmatpush1.msra.mxu0 0.0
  %6100 = vmatprep.subr.mxu0 0.0
  %6101 = vmatpush1.msra.mxu0 0.0
  %6102 = vmatprep.subr.mxu0 0.0
  %6103 = vmatpush1.msra.mxu0 0.0
  %6104 = vmatprep.subr.mxu0 0.0
  %6105 = vmatpush1.msra.mxu0 0.0
  %6106 = vmatprep.subr.mxu0 0.0
  %6107 = vmatpush1.msra.mxu0 0.0
  %6108 = vmatprep.subr.mxu0 0.0
  %6109 = vmatpush1.msra.mxu0 0.0
  %6110 = vmatprep.subr.mxu0 0.0
  %6111 = vmatpush1.msra.mxu0 0.0
  %6112 = vmatprep.subr.mxu0 0.0
  %6113 = vmatpush1.msra.mxu0 0.0
  %6114 = vmatprep.subr.mxu0 0.0
  %6115 = vmatpush1.msra.mxu0 0.0
  %6116 = vmatprep.subr.mxu0 0.0
  %6117 = vmatpush1.msra.mxu0 0.0
  %6118 = vmatprep.subr.mxu0 0.0
  %6119 = vmatpush1.msra.mxu0 0.0
  %6120 = vmatprep.subr.mxu0 0.0
  %6121 = vmatpush1.msra.mxu0 0.0
  %6122 = vmatprep.subr.mxu0 0.0
  %6123 = vmatpush1.msra.mxu0 %v6041
  %6124 = vmatprep.subr.mxu0 0.0
  %6125 = vmatpush1.msra.mxu0 %v6040
  %6126 = vmatprep.subr.mxu0 0.0
  %6127 = vmatpush1.msra.mxu0 %v6039
  %6128 = vmatprep.subr.mxu0 0.0
  %6129 = vmatpush1.msra.mxu0 %v6038
  %6130 = vmatprep.subr.mxu0 0.0
  %6131 = vmatpush2.msra.mxu0 0.0
  %6132 = vmatprep.subr.mxu0 0.0
  %6133 = vmatpush2.msra.mxu0 0.0
  %6134 = vmatprep.subr.mxu0 0.0
  %6135 = vmatpush2.msra.mxu0 0.0
  %6136 = vmatprep.subr.mxu0 0.0
  %6137 = vmatpush2.msra.mxu0 0.0
  %6138 = vmatprep.subr.mxu0 0.0
  %6139 = vmatpush2.msra.mxu0 0.0
  %6140 = vmatprep.subr.mxu0 0.0
  %6141 = vmatpush2.msra.mxu0 0.0
  %6142 = vmatprep.subr.mxu0 0.0
  %6143 = vmatpush2.msra.mxu0 0.0
  %6144 = vmatprep.subr.mxu0 0.0
  %6145 = vmatpush2.msra.mxu0 0.0
  %6146 = vmatprep.subr.mxu0 0.0
  %6147 = vmatpush2.msra.mxu0 0.0
  %6148 = vmatprep.subr.mxu0 0.0
  %6149 = vmatpush2.msra.mxu0 0.0
  %6150 = vmatprep.subr.mxu0 0.0
  %6151 = vmatpush2.msra.mxu0 0.0
  %6152 = vmatprep.subr.mxu0 0.0
  %6153 = vmatpush2.msra.mxu0 0.0
  %6154 = vmatprep.subr.mxu0 0.0
  %6155 = vmatpush2.msra.mxu0 0.0
  %6156 = vmatprep.subr.mxu0 0.0
  %6157 = vmatpush2.msra.mxu0 0.0
  %6158 = vmatprep.subr.mxu0 0.0
  %6159 = vmatpush2.msra.mxu0 0.0
  %6160 = vmatprep.subr.mxu0 0.0
  %6161 = vmatpush2.msra.mxu0 0.0
  %6162 = vmatprep.mubr.f32.mxu0 0.0
  %6163 = vmatmul.mubr.f32.gmra.mxu0 %v6051
  %v6164 = vpop.f32.mrf.mxu0
  %v6165 = vadd.f32 %v6048, %v6164
  %v6166 = vpop.f32.mrf.mxu0
  %6167 = vmatprep.mubr.f32.mxu0 0.0
  %6168 = vmatmul.mubr.f32.gmra.mxu0 %v6054
  %v6169 = vpop.f32.mrf.mxu0
  %v6170 = vadd.f32 %v6048, %v6169
  %v6171 = vpop.f32.mrf.mxu0
  %6172 = vmatprep.mubr.f32.mxu0 0.0
  %6173 = vmatmul.mubr.f32.gmra.mxu0 %v6057
  %v6174 = vpop.f32.mrf.mxu0
  %v6175 = vadd.f32 %v6048, %v6174
  %v6176 = vpop.f32.mrf.mxu0
  %6177 = vmatprep.mubr.f32.mxu0 0.0
  %6178 = vmatmul.mubr.f32.gmra.mxu0 %v6060
  %v6179 = vpop.f32.mrf.mxu0
  %v6180 = vadd.f32 %v6048, %v6179
  %v6181 = vpop.f32.mrf.mxu0
  %6182 = vmatprep.mubr.f32.mxu0 0.0
  %6183 = vmatmul.mubr.f32.gmra.mxu0 %v6063
  %v6184 = vpop.f32.mrf.mxu0
  %v6185 = vadd.f32 %v6048, %v6184
  %v6186 = vpop.f32.mrf.mxu0
  %6187 = vmatprep.mubr.f32.mxu0 0.0
  %6188 = vmatmul.mubr.f32.gmra.mxu0 %v6066
  %v6189 = vpop.f32.mrf.mxu0
  %v6190 = vadd.f32 %v6048, %v6189
  %v6191 = vpop.f32.mrf.mxu0
  %6192 = vmatprep.mubr.f32.mxu0 0.0
  %6193 = vmatmul.mubr.f32.gmra.mxu0 %v6069
  %v6194 = vpop.f32.mrf.mxu0
  %v6195 = vadd.f32 %v6048, %v6194
  %v6196 = vpop.f32.mrf.mxu0
  %6197 = vmatprep.mubr.f32.mxu0 0.0
  %6198 = vmatmul.mubr.f32.gmra.mxu0 %v6072
  %v6199 = vpop.f32.mrf.mxu0
  %v6200 = vadd.f32 %v6048, %v6199
  %v6201 = vpop.f32.mrf.mxu0
  %6202 = vmatprep.mubr.f32.mxu0 0.0
  %6203 = vmatmul.mubr.f32.gmra.mxu0 %v6075
  %v6204 = vpop.f32.mrf.mxu0
  %v6205 = vadd.f32 %v6048, %v6204
  %v6206 = vpop.f32.mrf.mxu0
  %6207 = vmatprep.mubr.f32.mxu0 0.0
  %6208 = vmatmul.mubr.f32.gmra.mxu0 %v6078
  %v6209 = vpop.f32.mrf.mxu0
  %v6210 = vadd.f32 %v6048, %v6209
  %v6211 = vpop.f32.mrf.mxu0
  %6212 = vmatprep.mubr.f32.mxu0 0.0
  %6213 = vmatmul.mubr.f32.gmra.mxu0 %v6081
  %v6214 = vpop.f32.mrf.mxu0
  %v6215 = vadd.f32 %v6048, %v6214
  %v6216 = vpop.f32.mrf.mxu0
  %6217 = vmatprep.mubr.f32.mxu0 0.0
  %6218 = vmatmul.mubr.f32.gmra.mxu0 %v6084
  %v6219 = vpop.f32.mrf.mxu0
  %v6220 = vadd.f32 %v6048, %v6219
  %v6221 = vpop.f32.mrf.mxu0
  %6222 = vmatprep.mubr.f32.mxu0 0.0
  %6223 = vmatmul.mubr.f32.gmra.mxu0 %v6087
  %v6224 = vpop.f32.mrf.mxu0
  %v6225 = vadd.f32 %v6048, %v6224
  %v6226 = vpop.f32.mrf.mxu0
  %6227 = vmatprep.mubr.f32.mxu0 0.0
  %6228 = vmatmul.mubr.f32.gmra.mxu0 %v6090
  %v6229 = vpop.f32.mrf.mxu0
  %v6230 = vadd.f32 %v6048, %v6229
  %v6231 = vpop.f32.mrf.mxu0
  %6232 = vmatprep.mubr.f32.mxu0 0.0
  %6233 = vmatmul.mubr.f32.gmra.mxu0 %v6093
  %v6234 = vpop.f32.mrf.mxu0
  %v6235 = vadd.f32 %v6048, %v6234
  %v6236 = vpop.f32.mrf.mxu0
  %6237 = vmatprep.mubr.f32.mxu0 0.0
  %6238 = vmatmul.mubr.f32.gmra.mxu0 %v6096
  %v6239 = vpop.f32.mrf.mxu0
  %v6240 = vadd.f32 %v6048, %v6239
  %v6241 = vpop.f32.mrf.mxu0
  %6242 = vdwg.mxu0
  %s6243 = scalar_lea.vmem %s3, 256
  %v6244 = vld [vmem:[%s6243] sm:$0xff]
  %v6245 = vld [vmem:[%s6243 + $0x8] sm:$0xff]
  %v6246 = vld [vmem:[%s6243 + $0x10] sm:$0xff]
  %v6247 = vld [vmem:[%s6243 + $0x18] sm:$0xff]
  %v6248 = vld [vmem:[%s6243 + $0x20] sm:$0xff]
  %v6249 = vld [vmem:[%s6243 + $0x28] sm:$0xff]
  %v6250 = vld [vmem:[%s6243 + $0x30] sm:$0xff]
  %v6251 = vld [vmem:[%s6243 + $0x38] sm:$0xff]
  %v6252 = vld [vmem:[%s6243 + $0x40] sm:$0xff]
  %v6253 = vld [vmem:[%s6243 + $0x48] sm:$0xff]
  %v6254 = vld [vmem:[%s6243 + $0x50] sm:$0xff]
  %v6255 = vld [vmem:[%s6243 + $0x58] sm:$0xff]
  %v6256 = vld [vmem:[%s6243 + $0x60] sm:$0xff]
  %v6257 = vld [vmem:[%s6243 + $0x68] sm:$0xff]
  %v6258 = vld [vmem:[%s6243 + $0x70] sm:$0xff]
  %v6259 = vld [vmem:[%s6243 + $0x78] sm:$0xff]
  %v6260 = vld [vmem:[%s6243 + $0x80] sm:$0xff]
  %v6261 = vld [vmem:[%s6243 + $0x88] sm:$0xff]
  %v6262 = vld [vmem:[%s6243 + $0x90] sm:$0xff]
  %v6263 = vld [vmem:[%s6243 + $0x98] sm:$0xff]
  %v6264 = vld [vmem:[%s6243 + $0xa0] sm:$0xff]
  %v6265 = vld [vmem:[%s6243 + $0xa8] sm:$0xff]
  %v6266 = vld [vmem:[%s6243 + $0xb0] sm:$0xff]
  %v6267 = vld [vmem:[%s6243 + $0xb8] sm:$0xff]
  %v6268 = vld [vmem:[%s6243 + $0xc0] sm:$0xff]
  %v6269 = vld [vmem:[%s6243 + $0xc8] sm:$0xff]
  %v6270 = vld [vmem:[%s6243 + $0xd0] sm:$0xff]
  %v6271 = vld [vmem:[%s6243 + $0xd8] sm:$0xff]
  %v6272 = vld [vmem:[%s6243 + $0xe0] sm:$0xff]
  %v6273 = vld [vmem:[%s6243 + $0xe8] sm:$0xff]
  %v6274 = vld [vmem:[%s6243 + $0xf0] sm:$0xff]
  %v6275 = vld [vmem:[%s6243 + $0xf8] sm:$0xff]
  %s6276 = scalar_lea.vmem %s8, 32
  %v6277 = vld [vmem:[%s6276] sm:$0xff]
  %v6278 = vld [vmem:[%s6276 + $0x8] sm:$0xff]
  %v6279 = vld [vmem:[%s6276 + $0x10] sm:$0xff]
  %v6280 = vld [vmem:[%s6276 + $0x18] sm:$0xff]
  %v6281 = vmul.f32 %v6165, 0.25
  %v6282 = vmul.f32 %v6170, 0.25
  %v6283 = vmul.f32 %v6175, 0.25
  %v6284 = vmul.f32 %v6180, 0.25
  %v6285 = vmul.f32 %v6185, 0.25
  %v6286 = vmul.f32 %v6190, 0.25
  %v6287 = vmul.f32 %v6195, 0.25
  %v6288 = vmul.f32 %v6200, 0.25
  %v6289 = vmul.f32 %v6205, 0.25
  %v6290 = vmul.f32 %v6210, 0.25
  %v6291 = vmul.f32 %v6215, 0.25
  %v6292 = vmul.f32 %v6220, 0.25
  %v6293 = vmul.f32 %v6225, 0.25
  %v6294 = vmul.f32 %v6230, 0.25
  %v6295 = vmul.f32 %v6235, 0.25
  %v6296 = vmul.f32 %v6240, 0.25
  %6299 = vrot.lane.b32.xlu0 %v6165, 96
  %v6300 = vpop.permute.xlu0 %6299
  %6301 = vrot.lane.b32.xlu0 %v6170, 96
  %v6302 = vpop.permute.xlu0 %6301
  %v6304 = vsel %vm748, %v6281, 0
  %v6307 = vsel %vm748, %v6282, 0
  %v6309 = vsel %vm748, %v6300, 0
  %v6311 = vsel %vm748, %v6302, 0
  %6313 = vmatprep.subr.mxu0 0.0
  %6314 = vmatpush1.xpose.msra.mxu0 0.0
  %6315 = vmatprep.subr.mxu0 0.0
  %6316 = vmatpush1.xpose.msra.mxu0 0.0
  %6317 = vmatprep.subr.mxu0 0.0
  %6318 = vmatpush1.xpose.msra.mxu0 0.0
  %6319 = vmatprep.subr.mxu0 0.0
  %6320 = vmatpush1.xpose.msra.mxu0 0.0
  %6321 = vmatprep.subr.mxu0 0.0
  %6322 = vmatpush1.xpose.msra.mxu0 0.0
  %6323 = vmatprep.subr.mxu0 0.0
  %6324 = vmatpush1.xpose.msra.mxu0 0.0
  %6325 = vmatprep.subr.mxu0 0.0
  %6326 = vmatpush1.xpose.msra.mxu0 0.0
  %6327 = vmatprep.subr.mxu0 0.0
  %6328 = vmatpush1.xpose.msra.mxu0 0.0
  %6329 = vmatprep.subr.mxu0 0.0
  %6330 = vmatpush1.xpose.msra.mxu0 0.0
  %6331 = vmatprep.subr.mxu0 0.0
  %6332 = vmatpush1.xpose.msra.mxu0 0.0
  %6333 = vmatprep.subr.mxu0 0.0
  %6334 = vmatpush1.xpose.msra.mxu0 0.0
  %6335 = vmatprep.subr.mxu0 0.0
  %6336 = vmatpush1.xpose.msra.mxu0 0.0
  %6337 = vmatprep.subr.mxu0 0.0
  %6338 = vmatpush1.xpose.msra.mxu0 0.0
  %6339 = vmatprep.subr.mxu0 0.0
  %6340 = vmatpush1.xpose.msra.mxu0 0.0
  %6341 = vmatprep.subr.mxu0 0.0
  %6342 = vmatpush1.xpose.msra.mxu0 %v6311
  %6343 = vmatprep.subr.mxu0 0.0
  %6344 = vmatpush1.xpose.msra.mxu0 %v6309
  %6345 = vmatprep.subr.mxu0 0.0
  %6346 = vmatpush2.xpose.msra.mxu0 0.0
  %6347 = vmatprep.subr.mxu0 0.0
  %6348 = vmatpush2.xpose.msra.mxu0 0.0
  %6349 = vmatprep.subr.mxu0 0.0
  %6350 = vmatpush2.xpose.msra.mxu0 0.0
  %6351 = vmatprep.subr.mxu0 0.0
  %6352 = vmatpush2.xpose.msra.mxu0 0.0
  %6353 = vmatprep.subr.mxu0 0.0
  %6354 = vmatpush2.xpose.msra.mxu0 0.0
  %6355 = vmatprep.subr.mxu0 0.0
  %6356 = vmatpush2.xpose.msra.mxu0 0.0
  %6357 = vmatprep.subr.mxu0 0.0
  %6358 = vmatpush2.xpose.msra.mxu0 0.0
  %6359 = vmatprep.subr.mxu0 0.0
  %6360 = vmatpush2.xpose.msra.mxu0 0.0
  %6361 = vmatprep.subr.mxu0 0.0
  %6362 = vmatpush2.xpose.msra.mxu0 0.0
  %6363 = vmatprep.subr.mxu0 0.0
  %6364 = vmatpush2.xpose.msra.mxu0 0.0
  %6365 = vmatprep.subr.mxu0 0.0
  %6366 = vmatpush2.xpose.msra.mxu0 0.0
  %6367 = vmatprep.subr.mxu0 0.0
  %6368 = vmatpush2.xpose.msra.mxu0 0.0
  %6369 = vmatprep.subr.mxu0 0.0
  %6370 = vmatpush2.xpose.msra.mxu0 0.0
  %6371 = vmatprep.subr.mxu0 0.0
  %6372 = vmatpush2.xpose.msra.mxu0 0.0
  %6373 = vmatprep.subr.mxu0 0.0
  %6374 = vmatpush2.xpose.msra.mxu0 0.0
  %6375 = vmatprep.subr.mxu0 0.0
  %6376 = vmatpush2.xpose.msra.mxu0 0.0
  %6377 = vmatprep.mubr.f32.mxu0 0.0
  %6378 = vmatmul.mubr.f32.gmra.mxu0 %v6304
  %v6379 = vpop.f32.mrf.mxu0
  %v6380 = vadd.f32 %v6244, %v6379
  %v6381 = vpop.f32.mrf.mxu0
  %6382 = vmatprep.mubr.f32.mxu0 0.0
  %6383 = vmatmul.mubr.f32.gmra.mxu0 %v6307
  %v6384 = vpop.f32.mrf.mxu0
  %v6385 = vadd.f32 %v6245, %v6384
  %v6386 = vpop.f32.mrf.mxu0
  %6387 = vdwg.mxu0
  %6390 = vrot.lane.b32.xlu0 %v6175, 96
  %v6391 = vpop.permute.xlu0 %6390
  %6392 = vrot.lane.b32.xlu0 %v6180, 96
  %v6393 = vpop.permute.xlu0 %6392
  %v6395 = vsel %vm748, %v6283, 0
  %v6398 = vsel %vm748, %v6284, 0
  %v6400 = vsel %vm748, %v6391, 0
  %v6402 = vsel %vm748, %v6393, 0
  %6404 = vmatprep.subr.mxu0 0.0
  %6405 = vmatpush1.xpose.msra.mxu0 0.0
  %6406 = vmatprep.subr.mxu0 0.0
  %6407 = vmatpush1.xpose.msra.mxu0 0.0
  %6408 = vmatprep.subr.mxu0 0.0
  %6409 = vmatpush1.xpose.msra.mxu0 0.0
  %6410 = vmatprep.subr.mxu0 0.0
  %6411 = vmatpush1.xpose.msra.mxu0 0.0
  %6412 = vmatprep.subr.mxu0 0.0
  %6413 = vmatpush1.xpose.msra.mxu0 0.0
  %6414 = vmatprep.subr.mxu0 0.0
  %6415 = vmatpush1.xpose.msra.mxu0 0.0
  %6416 = vmatprep.subr.mxu0 0.0
  %6417 = vmatpush1.xpose.msra.mxu0 0.0
  %6418 = vmatprep.subr.mxu0 0.0
  %6419 = vmatpush1.xpose.msra.mxu0 0.0
  %6420 = vmatprep.subr.mxu0 0.0
  %6421 = vmatpush1.xpose.msra.mxu0 0.0
  %6422 = vmatprep.subr.mxu0 0.0
  %6423 = vmatpush1.xpose.msra.mxu0 0.0
  %6424 = vmatprep.subr.mxu0 0.0
  %6425 = vmatpush1.xpose.msra.mxu0 0.0
  %6426 = vmatprep.subr.mxu0 0.0
  %6427 = vmatpush1.xpose.msra.mxu0 0.0
  %6428 = vmatprep.subr.mxu0 0.0
  %6429 = vmatpush1.xpose.msra.mxu0 0.0
  %6430 = vmatprep.subr.mxu0 0.0
  %6431 = vmatpush1.xpose.msra.mxu0 0.0
  %6432 = vmatprep.subr.mxu0 0.0
  %6433 = vmatpush1.xpose.msra.mxu0 %v6402
  %6434 = vmatprep.subr.mxu0 0.0
  %6435 = vmatpush1.xpose.msra.mxu0 %v6400
  %6436 = vmatprep.subr.mxu0 0.0
  %6437 = vmatpush2.xpose.msra.mxu0 0.0
  %6438 = vmatprep.subr.mxu0 0.0
  %6439 = vmatpush2.xpose.msra.mxu0 0.0
  %6440 = vmatprep.subr.mxu0 0.0
  %6441 = vmatpush2.xpose.msra.mxu0 0.0
  %6442 = vmatprep.subr.mxu0 0.0
  %6443 = vmatpush2.xpose.msra.mxu0 0.0
  %6444 = vmatprep.subr.mxu0 0.0
  %6445 = vmatpush2.xpose.msra.mxu0 0.0
  %6446 = vmatprep.subr.mxu0 0.0
  %6447 = vmatpush2.xpose.msra.mxu0 0.0
  %6448 = vmatprep.subr.mxu0 0.0
  %6449 = vmatpush2.xpose.msra.mxu0 0.0
  %6450 = vmatprep.subr.mxu0 0.0
  %6451 = vmatpush2.xpose.msra.mxu0 0.0
  %6452 = vmatprep.subr.mxu0 0.0
  %6453 = vmatpush2.xpose.msra.mxu0 0.0
  %6454 = vmatprep.subr.mxu0 0.0
  %6455 = vmatpush2.xpose.msra.mxu0 0.0
  %6456 = vmatprep.subr.mxu0 0.0
  %6457 = vmatpush2.xpose.msra.mxu0 0.0
  %6458 = vmatprep.subr.mxu0 0.0
  %6459 = vmatpush2.xpose.msra.mxu0 0.0
  %6460 = vmatprep.subr.mxu0 0.0
  %6461 = vmatpush2.xpose.msra.mxu0 0.0
  %6462 = vmatprep.subr.mxu0 0.0
  %6463 = vmatpush2.xpose.msra.mxu0 0.0
  %6464 = vmatprep.subr.mxu0 0.0
  %6465 = vmatpush2.xpose.msra.mxu0 0.0
  %6466 = vmatprep.subr.mxu0 0.0
  %6467 = vmatpush2.xpose.msra.mxu0 0.0
  %6468 = vmatprep.mubr.f32.mxu0 0.0
  %6469 = vmatmul.mubr.f32.gmra.mxu0 %v6395
  %v6470 = vpop.f32.mrf.mxu0
  %v6471 = vadd.f32 %v6246, %v6470
  %v6472 = vpop.f32.mrf.mxu0
  %6473 = vmatprep.mubr.f32.mxu0 0.0
  %6474 = vmatmul.mubr.f32.gmra.mxu0 %v6398
  %v6475 = vpop.f32.mrf.mxu0
  %v6476 = vadd.f32 %v6247, %v6475
  %v6477 = vpop.f32.mrf.mxu0
  %6478 = vdwg.mxu0
  %6481 = vrot.lane.b32.xlu0 %v6185, 96
  %v6482 = vpop.permute.xlu0 %6481
  %6483 = vrot.lane.b32.xlu0 %v6190, 96
  %v6484 = vpop.permute.xlu0 %6483
  %v6486 = vsel %vm748, %v6285, 0
  %v6489 = vsel %vm748, %v6286, 0
  %v6491 = vsel %vm748, %v6482, 0
  %v6493 = vsel %vm748, %v6484, 0
  %6495 = vmatprep.subr.mxu0 0.0
  %6496 = vmatpush1.xpose.msra.mxu0 0.0
  %6497 = vmatprep.subr.mxu0 0.0
  %6498 = vmatpush1.xpose.msra.mxu0 0.0
  %6499 = vmatprep.subr.mxu0 0.0
  %6500 = vmatpush1.xpose.msra.mxu0 0.0
  %6501 = vmatprep.subr.mxu0 0.0
  %6502 = vmatpush1.xpose.msra.mxu0 0.0
  %6503 = vmatprep.subr.mxu0 0.0
  %6504 = vmatpush1.xpose.msra.mxu0 0.0
  %6505 = vmatprep.subr.mxu0 0.0
  %6506 = vmatpush1.xpose.msra.mxu0 0.0
  %6507 = vmatprep.subr.mxu0 0.0
  %6508 = vmatpush1.xpose.msra.mxu0 0.0
  %6509 = vmatprep.subr.mxu0 0.0
  %6510 = vmatpush1.xpose.msra.mxu0 0.0
  %6511 = vmatprep.subr.mxu0 0.0
  %6512 = vmatpush1.xpose.msra.mxu0 0.0
  %6513 = vmatprep.subr.mxu0 0.0
  %6514 = vmatpush1.xpose.msra.mxu0 0.0
  %6515 = vmatprep.subr.mxu0 0.0
  %6516 = vmatpush1.xpose.msra.mxu0 0.0
  %6517 = vmatprep.subr.mxu0 0.0
  %6518 = vmatpush1.xpose.msra.mxu0 0.0
  %6519 = vmatprep.subr.mxu0 0.0
  %6520 = vmatpush1.xpose.msra.mxu0 0.0
  %6521 = vmatprep.subr.mxu0 0.0
  %6522 = vmatpush1.xpose.msra.mxu0 0.0
  %6523 = vmatprep.subr.mxu0 0.0
  %6524 = vmatpush1.xpose.msra.mxu0 %v6493
  %6525 = vmatprep.subr.mxu0 0.0
  %6526 = vmatpush1.xpose.msra.mxu0 %v6491
  %6527 = vmatprep.subr.mxu0 0.0
  %6528 = vmatpush2.xpose.msra.mxu0 0.0
  %6529 = vmatprep.subr.mxu0 0.0
  %6530 = vmatpush2.xpose.msra.mxu0 0.0
  %6531 = vmatprep.subr.mxu0 0.0
  %6532 = vmatpush2.xpose.msra.mxu0 0.0
  %6533 = vmatprep.subr.mxu0 0.0
  %6534 = vmatpush2.xpose.msra.mxu0 0.0
  %6535 = vmatprep.subr.mxu0 0.0
  %6536 = vmatpush2.xpose.msra.mxu0 0.0
  %6537 = vmatprep.subr.mxu0 0.0
  %6538 = vmatpush2.xpose.msra.mxu0 0.0
  %6539 = vmatprep.subr.mxu0 0.0
  %6540 = vmatpush2.xpose.msra.mxu0 0.0
  %6541 = vmatprep.subr.mxu0 0.0
  %6542 = vmatpush2.xpose.msra.mxu0 0.0
  %6543 = vmatprep.subr.mxu0 0.0
  %6544 = vmatpush2.xpose.msra.mxu0 0.0
  %6545 = vmatprep.subr.mxu0 0.0
  %6546 = vmatpush2.xpose.msra.mxu0 0.0
  %6547 = vmatprep.subr.mxu0 0.0
  %6548 = vmatpush2.xpose.msra.mxu0 0.0
  %6549 = vmatprep.subr.mxu0 0.0
  %6550 = vmatpush2.xpose.msra.mxu0 0.0
  %6551 = vmatprep.subr.mxu0 0.0
  %6552 = vmatpush2.xpose.msra.mxu0 0.0
  %6553 = vmatprep.subr.mxu0 0.0
  %6554 = vmatpush2.xpose.msra.mxu0 0.0
  %6555 = vmatprep.subr.mxu0 0.0
  %6556 = vmatpush2.xpose.msra.mxu0 0.0
  %6557 = vmatprep.subr.mxu0 0.0
  %6558 = vmatpush2.xpose.msra.mxu0 0.0
  %6559 = vmatprep.mubr.f32.mxu0 0.0
  %6560 = vmatmul.mubr.f32.gmra.mxu0 %v6486
  %v6561 = vpop.f32.mrf.mxu0
  %v6562 = vadd.f32 %v6248, %v6561
  %v6563 = vpop.f32.mrf.mxu0
  %6564 = vmatprep.mubr.f32.mxu0 0.0
  %6565 = vmatmul.mubr.f32.gmra.mxu0 %v6489
  %v6566 = vpop.f32.mrf.mxu0
  %v6567 = vadd.f32 %v6249, %v6566
  %v6568 = vpop.f32.mrf.mxu0
  %6569 = vdwg.mxu0
  %6572 = vrot.lane.b32.xlu0 %v6195, 96
  %v6573 = vpop.permute.xlu0 %6572
  %6574 = vrot.lane.b32.xlu0 %v6200, 96
  %v6575 = vpop.permute.xlu0 %6574
  %v6577 = vsel %vm748, %v6287, 0
  %v6580 = vsel %vm748, %v6288, 0
  %v6582 = vsel %vm748, %v6573, 0
  %v6584 = vsel %vm748, %v6575, 0
  %6586 = vmatprep.subr.mxu0 0.0
  %6587 = vmatpush1.xpose.msra.mxu0 0.0
  %6588 = vmatprep.subr.mxu0 0.0
  %6589 = vmatpush1.xpose.msra.mxu0 0.0
  %6590 = vmatprep.subr.mxu0 0.0
  %6591 = vmatpush1.xpose.msra.mxu0 0.0
  %6592 = vmatprep.subr.mxu0 0.0
  %6593 = vmatpush1.xpose.msra.mxu0 0.0
  %6594 = vmatprep.subr.mxu0 0.0
  %6595 = vmatpush1.xpose.msra.mxu0 0.0
  %6596 = vmatprep.subr.mxu0 0.0
  %6597 = vmatpush1.xpose.msra.mxu0 0.0
  %6598 = vmatprep.subr.mxu0 0.0
  %6599 = vmatpush1.xpose.msra.mxu0 0.0
  %6600 = vmatprep.subr.mxu0 0.0
  %6601 = vmatpush1.xpose.msra.mxu0 0.0
  %6602 = vmatprep.subr.mxu0 0.0
  %6603 = vmatpush1.xpose.msra.mxu0 0.0
  %6604 = vmatprep.subr.mxu0 0.0
  %6605 = vmatpush1.xpose.msra.mxu0 0.0
  %6606 = vmatprep.subr.mxu0 0.0
  %6607 = vmatpush1.xpose.msra.mxu0 0.0
  %6608 = vmatprep.subr.mxu0 0.0
  %6609 = vmatpush1.xpose.msra.mxu0 0.0
  %6610 = vmatprep.subr.mxu0 0.0
  %6611 = vmatpush1.xpose.msra.mxu0 0.0
  %6612 = vmatprep.subr.mxu0 0.0
  %6613 = vmatpush1.xpose.msra.mxu0 0.0
  %6614 = vmatprep.subr.mxu0 0.0
  %6615 = vmatpush1.xpose.msra.mxu0 %v6584
  %6616 = vmatprep.subr.mxu0 0.0
  %6617 = vmatpush1.xpose.msra.mxu0 %v6582
  %6618 = vmatprep.subr.mxu0 0.0
  %6619 = vmatpush2.xpose.msra.mxu0 0.0
  %6620 = vmatprep.subr.mxu0 0.0
  %6621 = vmatpush2.xpose.msra.mxu0 0.0
  %6622 = vmatprep.subr.mxu0 0.0
  %6623 = vmatpush2.xpose.msra.mxu0 0.0
  %6624 = vmatprep.subr.mxu0 0.0
  %6625 = vmatpush2.xpose.msra.mxu0 0.0
  %6626 = vmatprep.subr.mxu0 0.0
  %6627 = vmatpush2.xpose.msra.mxu0 0.0
  %6628 = vmatprep.subr.mxu0 0.0
  %6629 = vmatpush2.xpose.msra.mxu0 0.0
  %6630 = vmatprep.subr.mxu0 0.0
  %6631 = vmatpush2.xpose.msra.mxu0 0.0
  %6632 = vmatprep.subr.mxu0 0.0
  %6633 = vmatpush2.xpose.msra.mxu0 0.0
  %6634 = vmatprep.subr.mxu0 0.0
  %6635 = vmatpush2.xpose.msra.mxu0 0.0
  %6636 = vmatprep.subr.mxu0 0.0
  %6637 = vmatpush2.xpose.msra.mxu0 0.0
  %6638 = vmatprep.subr.mxu0 0.0
  %6639 = vmatpush2.xpose.msra.mxu0 0.0
  %6640 = vmatprep.subr.mxu0 0.0
  %6641 = vmatpush2.xpose.msra.mxu0 0.0
  %6642 = vmatprep.subr.mxu0 0.0
  %6643 = vmatpush2.xpose.msra.mxu0 0.0
  %6644 = vmatprep.subr.mxu0 0.0
  %6645 = vmatpush2.xpose.msra.mxu0 0.0
  %6646 = vmatprep.subr.mxu0 0.0
  %6647 = vmatpush2.xpose.msra.mxu0 0.0
  %6648 = vmatprep.subr.mxu0 0.0
  %6649 = vmatpush2.xpose.msra.mxu0 0.0
  %6650 = vmatprep.mubr.f32.mxu0 0.0
  %6651 = vmatmul.mubr.f32.gmra.mxu0 %v6577
  %v6652 = vpop.f32.mrf.mxu0
  %v6653 = vadd.f32 %v6250, %v6652
  %v6654 = vpop.f32.mrf.mxu0
  %6655 = vmatprep.mubr.f32.mxu0 0.0
  %6656 = vmatmul.mubr.f32.gmra.mxu0 %v6580
  %v6657 = vpop.f32.mrf.mxu0
  %v6658 = vadd.f32 %v6251, %v6657
  %v6659 = vpop.f32.mrf.mxu0
  %6660 = vdwg.mxu0
  %6663 = vrot.lane.b32.xlu0 %v6205, 96
  %v6664 = vpop.permute.xlu0 %6663
  %6665 = vrot.lane.b32.xlu0 %v6210, 96
  %v6666 = vpop.permute.xlu0 %6665
  %v6668 = vsel %vm748, %v6289, 0
  %v6671 = vsel %vm748, %v6290, 0
  %v6673 = vsel %vm748, %v6664, 0
  %v6675 = vsel %vm748, %v6666, 0
  %6677 = vmatprep.subr.mxu0 0.0
  %6678 = vmatpush1.xpose.msra.mxu0 0.0
  %6679 = vmatprep.subr.mxu0 0.0
  %6680 = vmatpush1.xpose.msra.mxu0 0.0
  %6681 = vmatprep.subr.mxu0 0.0
  %6682 = vmatpush1.xpose.msra.mxu0 0.0
  %6683 = vmatprep.subr.mxu0 0.0
  %6684 = vmatpush1.xpose.msra.mxu0 0.0
  %6685 = vmatprep.subr.mxu0 0.0
  %6686 = vmatpush1.xpose.msra.mxu0 0.0
  %6687 = vmatprep.subr.mxu0 0.0
  %6688 = vmatpush1.xpose.msra.mxu0 0.0
  %6689 = vmatprep.subr.mxu0 0.0
  %6690 = vmatpush1.xpose.msra.mxu0 0.0
  %6691 = vmatprep.subr.mxu0 0.0
  %6692 = vmatpush1.xpose.msra.mxu0 0.0
  %6693 = vmatprep.subr.mxu0 0.0
  %6694 = vmatpush1.xpose.msra.mxu0 0.0
  %6695 = vmatprep.subr.mxu0 0.0
  %6696 = vmatpush1.xpose.msra.mxu0 0.0
  %6697 = vmatprep.subr.mxu0 0.0
  %6698 = vmatpush1.xpose.msra.mxu0 0.0
  %6699 = vmatprep.subr.mxu0 0.0
  %6700 = vmatpush1.xpose.msra.mxu0 0.0
  %6701 = vmatprep.subr.mxu0 0.0
  %6702 = vmatpush1.xpose.msra.mxu0 0.0
  %6703 = vmatprep.subr.mxu0 0.0
  %6704 = vmatpush1.xpose.msra.mxu0 0.0
  %6705 = vmatprep.subr.mxu0 0.0
  %6706 = vmatpush1.xpose.msra.mxu0 %v6675
  %6707 = vmatprep.subr.mxu0 0.0
  %6708 = vmatpush1.xpose.msra.mxu0 %v6673
  %6709 = vmatprep.subr.mxu0 0.0
  %6710 = vmatpush2.xpose.msra.mxu0 0.0
  %6711 = vmatprep.subr.mxu0 0.0
  %6712 = vmatpush2.xpose.msra.mxu0 0.0
  %6713 = vmatprep.subr.mxu0 0.0
  %6714 = vmatpush2.xpose.msra.mxu0 0.0
  %6715 = vmatprep.subr.mxu0 0.0
  %6716 = vmatpush2.xpose.msra.mxu0 0.0
  %6717 = vmatprep.subr.mxu0 0.0
  %6718 = vmatpush2.xpose.msra.mxu0 0.0
  %6719 = vmatprep.subr.mxu0 0.0
  %6720 = vmatpush2.xpose.msra.mxu0 0.0
  %6721 = vmatprep.subr.mxu0 0.0
  %6722 = vmatpush2.xpose.msra.mxu0 0.0
  %6723 = vmatprep.subr.mxu0 0.0
  %6724 = vmatpush2.xpose.msra.mxu0 0.0
  %6725 = vmatprep.subr.mxu0 0.0
  %6726 = vmatpush2.xpose.msra.mxu0 0.0
  %6727 = vmatprep.subr.mxu0 0.0
  %6728 = vmatpush2.xpose.msra.mxu0 0.0
  %6729 = vmatprep.subr.mxu0 0.0
  %6730 = vmatpush2.xpose.msra.mxu0 0.0
  %6731 = vmatprep.subr.mxu0 0.0
  %6732 = vmatpush2.xpose.msra.mxu0 0.0
  %6733 = vmatprep.subr.mxu0 0.0
  %6734 = vmatpush2.xpose.msra.mxu0 0.0
  %6735 = vmatprep.subr.mxu0 0.0
  %6736 = vmatpush2.xpose.msra.mxu0 0.0
  %6737 = vmatprep.subr.mxu0 0.0
  %6738 = vmatpush2.xpose.msra.mxu0 0.0
  %6739 = vmatprep.subr.mxu0 0.0
  %6740 = vmatpush2.xpose.msra.mxu0 0.0
  %6741 = vmatprep.mubr.f32.mxu0 0.0
  %6742 = vmatmul.mubr.f32.gmra.mxu0 %v6668
  %v6743 = vpop.f32.mrf.mxu0
  %v6744 = vadd.f32 %v6252, %v6743
  %v6745 = vpop.f32.mrf.mxu0
  %6746 = vmatprep.mubr.f32.mxu0 0.0
  %6747 = vmatmul.mubr.f32.gmra.mxu0 %v6671
  %v6748 = vpop.f32.mrf.mxu0
  %v6749 = vadd.f32 %v6253, %v6748
  %v6750 = vpop.f32.mrf.mxu0
  %6751 = vdwg.mxu0
  %6754 = vrot.lane.b32.xlu0 %v6215, 96
  %v6755 = vpop.permute.xlu0 %6754
  %6756 = vrot.lane.b32.xlu0 %v6220, 96
  %v6757 = vpop.permute.xlu0 %6756
  %v6759 = vsel %vm748, %v6291, 0
  %v6762 = vsel %vm748, %v6292, 0
  %v6764 = vsel %vm748, %v6755, 0
  %v6766 = vsel %vm748, %v6757, 0
  %6768 = vmatprep.subr.mxu0 0.0
  %6769 = vmatpush1.xpose.msra.mxu0 0.0
  %6770 = vmatprep.subr.mxu0 0.0
  %6771 = vmatpush1.xpose.msra.mxu0 0.0
  %6772 = vmatprep.subr.mxu0 0.0
  %6773 = vmatpush1.xpose.msra.mxu0 0.0
  %6774 = vmatprep.subr.mxu0 0.0
  %6775 = vmatpush1.xpose.msra.mxu0 0.0
  %6776 = vmatprep.subr.mxu0 0.0
  %6777 = vmatpush1.xpose.msra.mxu0 0.0
  %6778 = vmatprep.subr.mxu0 0.0
  %6779 = vmatpush1.xpose.msra.mxu0 0.0
  %6780 = vmatprep.subr.mxu0 0.0
  %6781 = vmatpush1.xpose.msra.mxu0 0.0
  %6782 = vmatprep.subr.mxu0 0.0
  %6783 = vmatpush1.xpose.msra.mxu0 0.0
  %6784 = vmatprep.subr.mxu0 0.0
  %6785 = vmatpush1.xpose.msra.mxu0 0.0
  %6786 = vmatprep.subr.mxu0 0.0
  %6787 = vmatpush1.xpose.msra.mxu0 0.0
  %6788 = vmatprep.subr.mxu0 0.0
  %6789 = vmatpush1.xpose.msra.mxu0 0.0
  %6790 = vmatprep.subr.mxu0 0.0
  %6791 = vmatpush1.xpose.msra.mxu0 0.0
  %6792 = vmatprep.subr.mxu0 0.0
  %6793 = vmatpush1.xpose.msra.mxu0 0.0
  %6794 = vmatprep.subr.mxu0 0.0
  %6795 = vmatpush1.xpose.msra.mxu0 0.0
  %6796 = vmatprep.subr.mxu0 0.0
  %6797 = vmatpush1.xpose.msra.mxu0 %v6766
  %6798 = vmatprep.subr.mxu0 0.0
  %6799 = vmatpush1.xpose.msra.mxu0 %v6764
  %6800 = vmatprep.subr.mxu0 0.0
  %6801 = vmatpush2.xpose.msra.mxu0 0.0
  %6802 = vmatprep.subr.mxu0 0.0
  %6803 = vmatpush2.xpose.msra.mxu0 0.0
  %6804 = vmatprep.subr.mxu0 0.0
  %6805 = vmatpush2.xpose.msra.mxu0 0.0
  %6806 = vmatprep.subr.mxu0 0.0
  %6807 = vmatpush2.xpose.msra.mxu0 0.0
  %6808 = vmatprep.subr.mxu0 0.0
  %6809 = vmatpush2.xpose.msra.mxu0 0.0
  %6810 = vmatprep.subr.mxu0 0.0
  %6811 = vmatpush2.xpose.msra.mxu0 0.0
  %6812 = vmatprep.subr.mxu0 0.0
  %6813 = vmatpush2.xpose.msra.mxu0 0.0
  %6814 = vmatprep.subr.mxu0 0.0
  %6815 = vmatpush2.xpose.msra.mxu0 0.0
  %6816 = vmatprep.subr.mxu0 0.0
  %6817 = vmatpush2.xpose.msra.mxu0 0.0
  %6818 = vmatprep.subr.mxu0 0.0
  %6819 = vmatpush2.xpose.msra.mxu0 0.0
  %6820 = vmatprep.subr.mxu0 0.0
  %6821 = vmatpush2.xpose.msra.mxu0 0.0
  %6822 = vmatprep.subr.mxu0 0.0
  %6823 = vmatpush2.xpose.msra.mxu0 0.0
  %6824 = vmatprep.subr.mxu0 0.0
  %6825 = vmatpush2.xpose.msra.mxu0 0.0
  %6826 = vmatprep.subr.mxu0 0.0
  %6827 = vmatpush2.xpose.msra.mxu0 0.0
  %6828 = vmatprep.subr.mxu0 0.0
  %6829 = vmatpush2.xpose.msra.mxu0 0.0
  %6830 = vmatprep.subr.mxu0 0.0
  %6831 = vmatpush2.xpose.msra.mxu0 0.0
  %6832 = vmatprep.mubr.f32.mxu0 0.0
  %6833 = vmatmul.mubr.f32.gmra.mxu0 %v6759
  %v6834 = vpop.f32.mrf.mxu0
  %v6835 = vadd.f32 %v6254, %v6834
  %v6836 = vpop.f32.mrf.mxu0
  %6837 = vmatprep.mubr.f32.mxu0 0.0
  %6838 = vmatmul.mubr.f32.gmra.mxu0 %v6762
  %v6839 = vpop.f32.mrf.mxu0
  %v6840 = vadd.f32 %v6255, %v6839
  %v6841 = vpop.f32.mrf.mxu0
  %6842 = vdwg.mxu0
  %6845 = vrot.lane.b32.xlu0 %v6225, 96
  %v6846 = vpop.permute.xlu0 %6845
  %6847 = vrot.lane.b32.xlu0 %v6230, 96
  %v6848 = vpop.permute.xlu0 %6847
  %v6850 = vsel %vm748, %v6293, 0
  %v6853 = vsel %vm748, %v6294, 0
  %v6855 = vsel %vm748, %v6846, 0
  %v6857 = vsel %vm748, %v6848, 0
  %6859 = vmatprep.subr.mxu0 0.0
  %6860 = vmatpush1.xpose.msra.mxu0 0.0
  %6861 = vmatprep.subr.mxu0 0.0
  %6862 = vmatpush1.xpose.msra.mxu0 0.0
  %6863 = vmatprep.subr.mxu0 0.0
  %6864 = vmatpush1.xpose.msra.mxu0 0.0
  %6865 = vmatprep.subr.mxu0 0.0
  %6866 = vmatpush1.xpose.msra.mxu0 0.0
  %6867 = vmatprep.subr.mxu0 0.0
  %6868 = vmatpush1.xpose.msra.mxu0 0.0
  %6869 = vmatprep.subr.mxu0 0.0
  %6870 = vmatpush1.xpose.msra.mxu0 0.0
  %6871 = vmatprep.subr.mxu0 0.0
  %6872 = vmatpush1.xpose.msra.mxu0 0.0
  %6873 = vmatprep.subr.mxu0 0.0
  %6874 = vmatpush1.xpose.msra.mxu0 0.0
  %6875 = vmatprep.subr.mxu0 0.0
  %6876 = vmatpush1.xpose.msra.mxu0 0.0
  %6877 = vmatprep.subr.mxu0 0.0
  %6878 = vmatpush1.xpose.msra.mxu0 0.0
  %6879 = vmatprep.subr.mxu0 0.0
  %6880 = vmatpush1.xpose.msra.mxu0 0.0
  %6881 = vmatprep.subr.mxu0 0.0
  %6882 = vmatpush1.xpose.msra.mxu0 0.0
  %6883 = vmatprep.subr.mxu0 0.0
  %6884 = vmatpush1.xpose.msra.mxu0 0.0
  %6885 = vmatprep.subr.mxu0 0.0
  %6886 = vmatpush1.xpose.msra.mxu0 0.0
  %6887 = vmatprep.subr.mxu0 0.0
  %6888 = vmatpush1.xpose.msra.mxu0 %v6857
  %6889 = vmatprep.subr.mxu0 0.0
  %6890 = vmatpush1.xpose.msra.mxu0 %v6855
  %6891 = vmatprep.subr.mxu0 0.0
  %6892 = vmatpush2.xpose.msra.mxu0 0.0
  %6893 = vmatprep.subr.mxu0 0.0
  %6894 = vmatpush2.xpose.msra.mxu0 0.0
  %6895 = vmatprep.subr.mxu0 0.0
  %6896 = vmatpush2.xpose.msra.mxu0 0.0
  %6897 = vmatprep.subr.mxu0 0.0
  %6898 = vmatpush2.xpose.msra.mxu0 0.0
  %6899 = vmatprep.subr.mxu0 0.0
  %6900 = vmatpush2.xpose.msra.mxu0 0.0
  %6901 = vmatprep.subr.mxu0 0.0
  %6902 = vmatpush2.xpose.msra.mxu0 0.0
  %6903 = vmatprep.subr.mxu0 0.0
  %6904 = vmatpush2.xpose.msra.mxu0 0.0
  %6905 = vmatprep.subr.mxu0 0.0
  %6906 = vmatpush2.xpose.msra.mxu0 0.0
  %6907 = vmatprep.subr.mxu0 0.0
  %6908 = vmatpush2.xpose.msra.mxu0 0.0
  %6909 = vmatprep.subr.mxu0 0.0
  %6910 = vmatpush2.xpose.msra.mxu0 0.0
  %6911 = vmatprep.subr.mxu0 0.0
  %6912 = vmatpush2.xpose.msra.mxu0 0.0
  %6913 = vmatprep.subr.mxu0 0.0
  %6914 = vmatpush2.xpose.msra.mxu0 0.0
  %6915 = vmatprep.subr.mxu0 0.0
  %6916 = vmatpush2.xpose.msra.mxu0 0.0
  %6917 = vmatprep.subr.mxu0 0.0
  %6918 = vmatpush2.xpose.msra.mxu0 0.0
  %6919 = vmatprep.subr.mxu0 0.0
  %6920 = vmatpush2.xpose.msra.mxu0 0.0
  %6921 = vmatprep.subr.mxu0 0.0
  %6922 = vmatpush2.xpose.msra.mxu0 0.0
  %6923 = vmatprep.mubr.f32.mxu0 0.0
  %6924 = vmatmul.mubr.f32.gmra.mxu0 %v6850
  %v6925 = vpop.f32.mrf.mxu0
  %v6926 = vadd.f32 %v6256, %v6925
  %v6927 = vpop.f32.mrf.mxu0
  %6928 = vmatprep.mubr.f32.mxu0 0.0
  %6929 = vmatmul.mubr.f32.gmra.mxu0 %v6853
  %v6930 = vpop.f32.mrf.mxu0
  %v6931 = vadd.f32 %v6257, %v6930
  %v6932 = vpop.f32.mrf.mxu0
  %6933 = vdwg.mxu0
  %6936 = vrot.lane.b32.xlu0 %v6235, 96
  %v6937 = vpop.permute.xlu0 %6936
  %6938 = vrot.lane.b32.xlu0 %v6240, 96
  %v6939 = vpop.permute.xlu0 %6938
  %v6941 = vsel %vm748, %v6295, 0
  %v6944 = vsel %vm748, %v6296, 0
  %v6946 = vsel %vm748, %v6937, 0
  %v6948 = vsel %vm748, %v6939, 0
  %6950 = vmatprep.subr.mxu0 0.0
  %6951 = vmatpush1.xpose.msra.mxu0 0.0
  %6952 = vmatprep.subr.mxu0 0.0
  %6953 = vmatpush1.xpose.msra.mxu0 0.0
  %6954 = vmatprep.subr.mxu0 0.0
  %6955 = vmatpush1.xpose.msra.mxu0 0.0
  %6956 = vmatprep.subr.mxu0 0.0
  %6957 = vmatpush1.xpose.msra.mxu0 0.0
  %6958 = vmatprep.subr.mxu0 0.0
  %6959 = vmatpush1.xpose.msra.mxu0 0.0
  %6960 = vmatprep.subr.mxu0 0.0
  %6961 = vmatpush1.xpose.msra.mxu0 0.0
  %6962 = vmatprep.subr.mxu0 0.0
  %6963 = vmatpush1.xpose.msra.mxu0 0.0
  %6964 = vmatprep.subr.mxu0 0.0
  %6965 = vmatpush1.xpose.msra.mxu0 0.0
  %6966 = vmatprep.subr.mxu0 0.0
  %6967 = vmatpush1.xpose.msra.mxu0 0.0
  %6968 = vmatprep.subr.mxu0 0.0
  %6969 = vmatpush1.xpose.msra.mxu0 0.0
  %6970 = vmatprep.subr.mxu0 0.0
  %6971 = vmatpush1.xpose.msra.mxu0 0.0
  %6972 = vmatprep.subr.mxu0 0.0
  %6973 = vmatpush1.xpose.msra.mxu0 0.0
  %6974 = vmatprep.subr.mxu0 0.0
  %6975 = vmatpush1.xpose.msra.mxu0 0.0
  %6976 = vmatprep.subr.mxu0 0.0
  %6977 = vmatpush1.xpose.msra.mxu0 0.0
  %6978 = vmatprep.subr.mxu0 0.0
  %6979 = vmatpush1.xpose.msra.mxu0 %v6948
  %6980 = vmatprep.subr.mxu0 0.0
  %6981 = vmatpush1.xpose.msra.mxu0 %v6946
  %6982 = vmatprep.subr.mxu0 0.0
  %6983 = vmatpush2.xpose.msra.mxu0 0.0
  %6984 = vmatprep.subr.mxu0 0.0
  %6985 = vmatpush2.xpose.msra.mxu0 0.0
  %6986 = vmatprep.subr.mxu0 0.0
  %6987 = vmatpush2.xpose.msra.mxu0 0.0
  %6988 = vmatprep.subr.mxu0 0.0
  %6989 = vmatpush2.xpose.msra.mxu0 0.0
  %6990 = vmatprep.subr.mxu0 0.0
  %6991 = vmatpush2.xpose.msra.mxu0 0.0
  %6992 = vmatprep.subr.mxu0 0.0
  %6993 = vmatpush2.xpose.msra.mxu0 0.0
  %6994 = vmatprep.subr.mxu0 0.0
  %6995 = vmatpush2.xpose.msra.mxu0 0.0
  %6996 = vmatprep.subr.mxu0 0.0
  %6997 = vmatpush2.xpose.msra.mxu0 0.0
  %6998 = vmatprep.subr.mxu0 0.0
  %6999 = vmatpush2.xpose.msra.mxu0 0.0
  %7000 = vmatprep.subr.mxu0 0.0
  %7001 = vmatpush2.xpose.msra.mxu0 0.0
  %7002 = vmatprep.subr.mxu0 0.0
  %7003 = vmatpush2.xpose.msra.mxu0 0.0
  %7004 = vmatprep.subr.mxu0 0.0
  %7005 = vmatpush2.xpose.msra.mxu0 0.0
  %7006 = vmatprep.subr.mxu0 0.0
  %7007 = vmatpush2.xpose.msra.mxu0 0.0
  %7008 = vmatprep.subr.mxu0 0.0
  %7009 = vmatpush2.xpose.msra.mxu0 0.0
  %7010 = vmatprep.subr.mxu0 0.0
  %7011 = vmatpush2.xpose.msra.mxu0 0.0
  %7012 = vmatprep.subr.mxu0 0.0
  %7013 = vmatpush2.xpose.msra.mxu0 0.0
  %7014 = vmatprep.mubr.f32.mxu0 0.0
  %7015 = vmatmul.mubr.f32.gmra.mxu0 %v6941
  %v7016 = vpop.f32.mrf.mxu0
  %v7017 = vadd.f32 %v6258, %v7016
  %v7018 = vpop.f32.mrf.mxu0
  %7019 = vmatprep.mubr.f32.mxu0 0.0
  %7020 = vmatmul.mubr.f32.gmra.mxu0 %v6944
  %v7021 = vpop.f32.mrf.mxu0
  %v7022 = vadd.f32 %v6259, %v7021
  %v7023 = vpop.f32.mrf.mxu0
  %7024 = vdwg.mxu0
  %v7025 = vsel %vm748, %v6380, -inf
  %7026 = vmax.xlane.f32.xlu0 %v7025
  %v7027 = vpop.xlane.xlu0 %7026
  %v7028 = vsel %vm748, %v6385, -inf
  %7029 = vmax.xlane.f32.xlu0 %v7028
  %v7030 = vpop.xlane.xlu0 %7029
  %v7031 = vsel %vm748, %v6471, -inf
  %7032 = vmax.xlane.f32.xlu0 %v7031
  %v7033 = vpop.xlane.xlu0 %7032
  %v7034 = vsel %vm748, %v6476, -inf
  %7035 = vmax.xlane.f32.xlu0 %v7034
  %v7036 = vpop.xlane.xlu0 %7035
  %v7037 = vsel %vm748, %v6562, -inf
  %7038 = vmax.xlane.f32.xlu0 %v7037
  %v7039 = vpop.xlane.xlu0 %7038
  %v7040 = vsel %vm748, %v6567, -inf
  %7041 = vmax.xlane.f32.xlu0 %v7040
  %v7042 = vpop.xlane.xlu0 %7041
  %v7043 = vsel %vm748, %v6653, -inf
  %7044 = vmax.xlane.f32.xlu0 %v7043
  %v7045 = vpop.xlane.xlu0 %7044
  %v7046 = vsel %vm748, %v6658, -inf
  %7047 = vmax.xlane.f32.xlu0 %v7046
  %v7048 = vpop.xlane.xlu0 %7047
  %v7049 = vsel %vm748, %v6744, -inf
  %7050 = vmax.xlane.f32.xlu0 %v7049
  %v7051 = vpop.xlane.xlu0 %7050
  %v7052 = vsel %vm748, %v6749, -inf
  %7053 = vmax.xlane.f32.xlu0 %v7052
  %v7054 = vpop.xlane.xlu0 %7053
  %v7055 = vsel %vm748, %v6835, -inf
  %7056 = vmax.xlane.f32.xlu0 %v7055
  %v7057 = vpop.xlane.xlu0 %7056
  %v7058 = vsel %vm748, %v6840, -inf
  %7059 = vmax.xlane.f32.xlu0 %v7058
  %v7060 = vpop.xlane.xlu0 %7059
  %v7061 = vsel %vm748, %v6926, -inf
  %7062 = vmax.xlane.f32.xlu0 %v7061
  %v7063 = vpop.xlane.xlu0 %7062
  %v7064 = vsel %vm748, %v6931, -inf
  %7065 = vmax.xlane.f32.xlu0 %v7064
  %v7066 = vpop.xlane.xlu0 %7065
  %v7067 = vsel %vm748, %v7017, -inf
  %7068 = vmax.xlane.f32.xlu0 %v7067
  %v7069 = vpop.xlane.xlu0 %7068
  %v7070 = vsel %vm748, %v7022, -inf
  %7071 = vmax.xlane.f32.xlu0 %v7070
  %v7072 = vpop.xlane.xlu0 %7071
  %v7073 = vsub.f32 %v6380, %v7027
  %v7074 = vsub.f32 %v6385, %v7030
  %v7075 = vsub.f32 %v6471, %v7033
  %v7076 = vsub.f32 %v6476, %v7036
  %v7077 = vsub.f32 %v6562, %v7039
  %v7078 = vsub.f32 %v6567, %v7042
  %v7079 = vsub.f32 %v6653, %v7045
  %v7080 = vsub.f32 %v6658, %v7048
  %v7081 = vsub.f32 %v6744, %v7051
  %v7082 = vsub.f32 %v6749, %v7054
  %v7083 = vsub.f32 %v6835, %v7057
  %v7084 = vsub.f32 %v6840, %v7060
  %v7085 = vsub.f32 %v6926, %v7063
  %v7086 = vsub.f32 %v6931, %v7066
  %v7087 = vsub.f32 %v7017, %v7069
  %v7088 = vsub.f32 %v7022, %v7072
  %v7089 = vmul.f32 %v7073, 1.442695
  %v7090 = vpow.pop %v7089
  %v7091 = vmul.f32 %v7074, 1.442695
  %v7092 = vpow.pop %v7091
  %v7093 = vmul.f32 %v7075, 1.442695
  %v7094 = vpow.pop %v7093
  %v7095 = vmul.f32 %v7076, 1.442695
  %v7096 = vpow.pop %v7095
  %v7097 = vmul.f32 %v7077, 1.442695
  %v7098 = vpow.pop %v7097
  %v7099 = vmul.f32 %v7078, 1.442695
  %v7100 = vpow.pop %v7099
  %v7101 = vmul.f32 %v7079, 1.442695
  %v7102 = vpow.pop %v7101
  %v7103 = vmul.f32 %v7080, 1.442695
  %v7104 = vpow.pop %v7103
  %v7105 = vmul.f32 %v7081, 1.442695
  %v7106 = vpow.pop %v7105
  %v7107 = vmul.f32 %v7082, 1.442695
  %v7108 = vpow.pop %v7107
  %v7109 = vmul.f32 %v7083, 1.442695
  %v7110 = vpow.pop %v7109
  %v7111 = vmul.f32 %v7084, 1.442695
  %v7112 = vpow.pop %v7111
  %v7113 = vmul.f32 %v7085, 1.442695
  %v7114 = vpow.pop %v7113
  %v7115 = vmul.f32 %v7086, 1.442695
  %v7116 = vpow.pop %v7115
  %v7117 = vmul.f32 %v7087, 1.442695
  %v7118 = vpow.pop %v7117
  %v7119 = vmul.f32 %v7088, 1.442695
  %v7120 = vpow.pop %v7119
  %v7121 = vsel %vm748, %v7090, 0.0
  %7122 = vadd.xlane.f32.xlu0 %v7121
  %v7123 = vpop.xlane.xlu0 %7122
  %v7124 = vsel %vm748, %v7092, 0.0
  %7125 = vadd.xlane.f32.xlu0 %v7124
  %v7126 = vpop.xlane.xlu0 %7125
  %v7127 = vsel %vm748, %v7094, 0.0
  %7128 = vadd.xlane.f32.xlu0 %v7127
  %v7129 = vpop.xlane.xlu0 %7128
  %v7130 = vsel %vm748, %v7096, 0.0
  %7131 = vadd.xlane.f32.xlu0 %v7130
  %v7132 = vpop.xlane.xlu0 %7131
  %v7133 = vsel %vm748, %v7098, 0.0
  %7134 = vadd.xlane.f32.xlu0 %v7133
  %v7135 = vpop.xlane.xlu0 %7134
  %v7136 = vsel %vm748, %v7100, 0.0
  %7137 = vadd.xlane.f32.xlu0 %v7136
  %v7138 = vpop.xlane.xlu0 %7137
  %v7139 = vsel %vm748, %v7102, 0.0
  %7140 = vadd.xlane.f32.xlu0 %v7139
  %v7141 = vpop.xlane.xlu0 %7140
  %v7142 = vsel %vm748, %v7104, 0.0
  %7143 = vadd.xlane.f32.xlu0 %v7142
  %v7144 = vpop.xlane.xlu0 %7143
  %v7145 = vsel %vm748, %v7106, 0.0
  %7146 = vadd.xlane.f32.xlu0 %v7145
  %v7147 = vpop.xlane.xlu0 %7146
  %v7148 = vsel %vm748, %v7108, 0.0
  %7149 = vadd.xlane.f32.xlu0 %v7148
  %v7150 = vpop.xlane.xlu0 %7149
  %v7151 = vsel %vm748, %v7110, 0.0
  %7152 = vadd.xlane.f32.xlu0 %v7151
  %v7153 = vpop.xlane.xlu0 %7152
  %v7154 = vsel %vm748, %v7112, 0.0
  %7155 = vadd.xlane.f32.xlu0 %v7154
  %v7156 = vpop.xlane.xlu0 %7155
  %v7157 = vsel %vm748, %v7114, 0.0
  %7158 = vadd.xlane.f32.xlu0 %v7157
  %v7159 = vpop.xlane.xlu0 %7158
  %v7160 = vsel %vm748, %v7116, 0.0
  %7161 = vadd.xlane.f32.xlu0 %v7160
  %v7162 = vpop.xlane.xlu0 %7161
  %v7163 = vsel %vm748, %v7118, 0.0
  %7164 = vadd.xlane.f32.xlu0 %v7163
  %v7165 = vpop.xlane.xlu0 %7164
  %v7166 = vsel %vm748, %v7120, 0.0
  %7167 = vadd.xlane.f32.xlu0 %v7166
  %v7168 = vpop.xlane.xlu0 %7167
  %v7169 = vrcp.pop %v7123
  %v7170 = vrcp.pop %v7126
  %v7171 = vrcp.pop %v7129
  %v7172 = vrcp.pop %v7132
  %v7173 = vrcp.pop %v7135
  %v7174 = vrcp.pop %v7138
  %v7175 = vrcp.pop %v7141
  %v7176 = vrcp.pop %v7144
  %v7177 = vrcp.pop %v7147
  %v7178 = vrcp.pop %v7150
  %v7179 = vrcp.pop %v7153
  %v7180 = vrcp.pop %v7156
  %v7181 = vrcp.pop %v7159
  %v7182 = vrcp.pop %v7162
  %v7183 = vrcp.pop %v7165
  %v7184 = vrcp.pop %v7168
  %v7185 = vmul.f32 %v7090, %v7169
  %v7186 = vmul.f32 %v7092, %v7170
  %v7187 = vmul.f32 %v7094, %v7171
  %v7188 = vmul.f32 %v7096, %v7172
  %v7189 = vmul.f32 %v7098, %v7173
  %v7190 = vmul.f32 %v7100, %v7174
  %v7191 = vmul.f32 %v7102, %v7175
  %v7192 = vmul.f32 %v7104, %v7176
  %v7193 = vmul.f32 %v7106, %v7177
  %v7194 = vmul.f32 %v7108, %v7178
  %v7195 = vmul.f32 %v7110, %v7179
  %v7196 = vmul.f32 %v7112, %v7180
  %v7197 = vmul.f32 %v7114, %v7181
  %v7198 = vmul.f32 %v7116, %v7182
  %v7199 = vmul.f32 %v7118, %v7183
  %v7200 = vmul.f32 %v7120, %v7184
  %7201 = vrot.lane.b32.xlu0 %v6165, 64
  %v7202 = vpop.permute.xlu0 %7201
  %7203 = vrot.lane.b32.xlu0 %v6170, 64
  %v7204 = vpop.permute.xlu0 %7203
  %v7208 = vsel %vm748, %v7185, 0
  %v7211 = vsel %vm748, %v7186, 0
  %7213 = vmatprep.subr.mxu0 0.0
  %7214 = vmatpush1.msra.mxu0 0.0
  %7215 = vmatprep.subr.mxu0 0.0
  %7216 = vmatpush1.msra.mxu0 0.0
  %7217 = vmatprep.subr.mxu0 0.0
  %7218 = vmatpush1.msra.mxu0 0.0
  %7219 = vmatprep.subr.mxu0 0.0
  %7220 = vmatpush1.msra.mxu0 0.0
  %7221 = vmatprep.subr.mxu0 0.0
  %7222 = vmatpush1.msra.mxu0 0.0
  %7223 = vmatprep.subr.mxu0 0.0
  %7224 = vmatpush1.msra.mxu0 0.0
  %7225 = vmatprep.subr.mxu0 0.0
  %7226 = vmatpush1.msra.mxu0 0.0
  %7227 = vmatprep.subr.mxu0 0.0
  %7228 = vmatpush1.msra.mxu0 0.0
  %7229 = vmatprep.subr.mxu0 0.0
  %7230 = vmatpush1.msra.mxu0 0.0
  %7231 = vmatprep.subr.mxu0 0.0
  %7232 = vmatpush1.msra.mxu0 0.0
  %7233 = vmatprep.subr.mxu0 0.0
  %7234 = vmatpush1.msra.mxu0 0.0
  %7235 = vmatprep.subr.mxu0 0.0
  %7236 = vmatpush1.msra.mxu0 0.0
  %7237 = vmatprep.subr.mxu0 0.0
  %7238 = vmatpush1.msra.mxu0 0.0
  %7239 = vmatprep.subr.mxu0 0.0
  %7240 = vmatpush1.msra.mxu0 0.0
  %7241 = vmatprep.subr.mxu0 0.0
  %7242 = vmatpush1.msra.mxu0 %v7204
  %7243 = vmatprep.subr.mxu0 0.0
  %7244 = vmatpush1.msra.mxu0 %v7202
  %7245 = vmatprep.subr.mxu0 0.0
  %7246 = vmatpush2.msra.mxu0 0.0
  %7247 = vmatprep.subr.mxu0 0.0
  %7248 = vmatpush2.msra.mxu0 0.0
  %7249 = vmatprep.subr.mxu0 0.0
  %7250 = vmatpush2.msra.mxu0 0.0
  %7251 = vmatprep.subr.mxu0 0.0
  %7252 = vmatpush2.msra.mxu0 0.0
  %7253 = vmatprep.subr.mxu0 0.0
  %7254 = vmatpush2.msra.mxu0 0.0
  %7255 = vmatprep.subr.mxu0 0.0
  %7256 = vmatpush2.msra.mxu0 0.0
  %7257 = vmatprep.subr.mxu0 0.0
  %7258 = vmatpush2.msra.mxu0 0.0
  %7259 = vmatprep.subr.mxu0 0.0
  %7260 = vmatpush2.msra.mxu0 0.0
  %7261 = vmatprep.subr.mxu0 0.0
  %7262 = vmatpush2.msra.mxu0 0.0
  %7263 = vmatprep.subr.mxu0 0.0
  %7264 = vmatpush2.msra.mxu0 0.0
  %7265 = vmatprep.subr.mxu0 0.0
  %7266 = vmatpush2.msra.mxu0 0.0
  %7267 = vmatprep.subr.mxu0 0.0
  %7268 = vmatpush2.msra.mxu0 0.0
  %7269 = vmatprep.subr.mxu0 0.0
  %7270 = vmatpush2.msra.mxu0 0.0
  %7271 = vmatprep.subr.mxu0 0.0
  %7272 = vmatpush2.msra.mxu0 0.0
  %7273 = vmatprep.subr.mxu0 0.0
  %7274 = vmatpush2.msra.mxu0 0.0
  %7275 = vmatprep.subr.mxu0 0.0
  %7276 = vmatpush2.msra.mxu0 0.0
  %7277 = vmatprep.mubr.f32.mxu0 0.0
  %7278 = vmatmul.mubr.f32.gmra.mxu0 %v7208
  %v7279 = vpop.f32.mrf.mxu0
  %v7280 = vadd.f32 0.0, %v7279
  %v7281 = vpop.f32.mrf.mxu0
  %7282 = vmatprep.mubr.f32.mxu0 0.0
  %7283 = vmatmul.mubr.f32.gmra.mxu0 %v7211
  %v7284 = vpop.f32.mrf.mxu0
  %v7285 = vadd.f32 0.0, %v7284
  %v7286 = vpop.f32.mrf.mxu0
  %7287 = vdwg.mxu0
  %7288 = vrot.lane.b32.xlu0 %v6175, 64
  %v7289 = vpop.permute.xlu0 %7288
  %7290 = vrot.lane.b32.xlu0 %v6180, 64
  %v7291 = vpop.permute.xlu0 %7290
  %v7295 = vsel %vm748, %v7187, 0
  %v7298 = vsel %vm748, %v7188, 0
  %7300 = vmatprep.subr.mxu0 0.0
  %7301 = vmatpush1.msra.mxu0 0.0
  %7302 = vmatprep.subr.mxu0 0.0
  %7303 = vmatpush1.msra.mxu0 0.0
  %7304 = vmatprep.subr.mxu0 0.0
  %7305 = vmatpush1.msra.mxu0 0.0
  %7306 = vmatprep.subr.mxu0 0.0
  %7307 = vmatpush1.msra.mxu0 0.0
  %7308 = vmatprep.subr.mxu0 0.0
  %7309 = vmatpush1.msra.mxu0 0.0
  %7310 = vmatprep.subr.mxu0 0.0
  %7311 = vmatpush1.msra.mxu0 0.0
  %7312 = vmatprep.subr.mxu0 0.0
  %7313 = vmatpush1.msra.mxu0 0.0
  %7314 = vmatprep.subr.mxu0 0.0
  %7315 = vmatpush1.msra.mxu0 0.0
  %7316 = vmatprep.subr.mxu0 0.0
  %7317 = vmatpush1.msra.mxu0 0.0
  %7318 = vmatprep.subr.mxu0 0.0
  %7319 = vmatpush1.msra.mxu0 0.0
  %7320 = vmatprep.subr.mxu0 0.0
  %7321 = vmatpush1.msra.mxu0 0.0
  %7322 = vmatprep.subr.mxu0 0.0
  %7323 = vmatpush1.msra.mxu0 0.0
  %7324 = vmatprep.subr.mxu0 0.0
  %7325 = vmatpush1.msra.mxu0 0.0
  %7326 = vmatprep.subr.mxu0 0.0
  %7327 = vmatpush1.msra.mxu0 0.0
  %7328 = vmatprep.subr.mxu0 0.0
  %7329 = vmatpush1.msra.mxu0 %v7291
  %7330 = vmatprep.subr.mxu0 0.0
  %7331 = vmatpush1.msra.mxu0 %v7289
  %7332 = vmatprep.subr.mxu0 0.0
  %7333 = vmatpush2.msra.mxu0 0.0
  %7334 = vmatprep.subr.mxu0 0.0
  %7335 = vmatpush2.msra.mxu0 0.0
  %7336 = vmatprep.subr.mxu0 0.0
  %7337 = vmatpush2.msra.mxu0 0.0
  %7338 = vmatprep.subr.mxu0 0.0
  %7339 = vmatpush2.msra.mxu0 0.0
  %7340 = vmatprep.subr.mxu0 0.0
  %7341 = vmatpush2.msra.mxu0 0.0
  %7342 = vmatprep.subr.mxu0 0.0
  %7343 = vmatpush2.msra.mxu0 0.0
  %7344 = vmatprep.subr.mxu0 0.0
  %7345 = vmatpush2.msra.mxu0 0.0
  %7346 = vmatprep.subr.mxu0 0.0
  %7347 = vmatpush2.msra.mxu0 0.0
  %7348 = vmatprep.subr.mxu0 0.0
  %7349 = vmatpush2.msra.mxu0 0.0
  %7350 = vmatprep.subr.mxu0 0.0
  %7351 = vmatpush2.msra.mxu0 0.0
  %7352 = vmatprep.subr.mxu0 0.0
  %7353 = vmatpush2.msra.mxu0 0.0
  %7354 = vmatprep.subr.mxu0 0.0
  %7355 = vmatpush2.msra.mxu0 0.0
  %7356 = vmatprep.subr.mxu0 0.0
  %7357 = vmatpush2.msra.mxu0 0.0
  %7358 = vmatprep.subr.mxu0 0.0
  %7359 = vmatpush2.msra.mxu0 0.0
  %7360 = vmatprep.subr.mxu0 0.0
  %7361 = vmatpush2.msra.mxu0 0.0
  %7362 = vmatprep.subr.mxu0 0.0
  %7363 = vmatpush2.msra.mxu0 0.0
  %7364 = vmatprep.mubr.f32.mxu0 0.0
  %7365 = vmatmul.mubr.f32.gmra.mxu0 %v7295
  %v7366 = vpop.f32.mrf.mxu0
  %v7367 = vadd.f32 0.0, %v7366
  %v7368 = vpop.f32.mrf.mxu0
  %7369 = vmatprep.mubr.f32.mxu0 0.0
  %7370 = vmatmul.mubr.f32.gmra.mxu0 %v7298
  %v7371 = vpop.f32.mrf.mxu0
  %v7372 = vadd.f32 0.0, %v7371
  %v7373 = vpop.f32.mrf.mxu0
  %7374 = vdwg.mxu0
  %7375 = vrot.lane.b32.xlu0 %v6185, 64
  %v7376 = vpop.permute.xlu0 %7375
  %7377 = vrot.lane.b32.xlu0 %v6190, 64
  %v7378 = vpop.permute.xlu0 %7377
  %v7382 = vsel %vm748, %v7189, 0
  %v7385 = vsel %vm748, %v7190, 0
  %7387 = vmatprep.subr.mxu0 0.0
  %7388 = vmatpush1.msra.mxu0 0.0
  %7389 = vmatprep.subr.mxu0 0.0
  %7390 = vmatpush1.msra.mxu0 0.0
  %7391 = vmatprep.subr.mxu0 0.0
  %7392 = vmatpush1.msra.mxu0 0.0
  %7393 = vmatprep.subr.mxu0 0.0
  %7394 = vmatpush1.msra.mxu0 0.0
  %7395 = vmatprep.subr.mxu0 0.0
  %7396 = vmatpush1.msra.mxu0 0.0
  %7397 = vmatprep.subr.mxu0 0.0
  %7398 = vmatpush1.msra.mxu0 0.0
  %7399 = vmatprep.subr.mxu0 0.0
  %7400 = vmatpush1.msra.mxu0 0.0
  %7401 = vmatprep.subr.mxu0 0.0
  %7402 = vmatpush1.msra.mxu0 0.0
  %7403 = vmatprep.subr.mxu0 0.0
  %7404 = vmatpush1.msra.mxu0 0.0
  %7405 = vmatprep.subr.mxu0 0.0
  %7406 = vmatpush1.msra.mxu0 0.0
  %7407 = vmatprep.subr.mxu0 0.0
  %7408 = vmatpush1.msra.mxu0 0.0
  %7409 = vmatprep.subr.mxu0 0.0
  %7410 = vmatpush1.msra.mxu0 0.0
  %7411 = vmatprep.subr.mxu0 0.0
  %7412 = vmatpush1.msra.mxu0 0.0
  %7413 = vmatprep.subr.mxu0 0.0
  %7414 = vmatpush1.msra.mxu0 0.0
  %7415 = vmatprep.subr.mxu0 0.0
  %7416 = vmatpush1.msra.mxu0 %v7378
  %7417 = vmatprep.subr.mxu0 0.0
  %7418 = vmatpush1.msra.mxu0 %v7376
  %7419 = vmatprep.subr.mxu0 0.0
  %7420 = vmatpush2.msra.mxu0 0.0
  %7421 = vmatprep.subr.mxu0 0.0
  %7422 = vmatpush2.msra.mxu0 0.0
  %7423 = vmatprep.subr.mxu0 0.0
  %7424 = vmatpush2.msra.mxu0 0.0
  %7425 = vmatprep.subr.mxu0 0.0
  %7426 = vmatpush2.msra.mxu0 0.0
  %7427 = vmatprep.subr.mxu0 0.0
  %7428 = vmatpush2.msra.mxu0 0.0
  %7429 = vmatprep.subr.mxu0 0.0
  %7430 = vmatpush2.msra.mxu0 0.0
  %7431 = vmatprep.subr.mxu0 0.0
  %7432 = vmatpush2.msra.mxu0 0.0
  %7433 = vmatprep.subr.mxu0 0.0
  %7434 = vmatpush2.msra.mxu0 0.0
  %7435 = vmatprep.subr.mxu0 0.0
  %7436 = vmatpush2.msra.mxu0 0.0
  %7437 = vmatprep.subr.mxu0 0.0
  %7438 = vmatpush2.msra.mxu0 0.0
  %7439 = vmatprep.subr.mxu0 0.0
  %7440 = vmatpush2.msra.mxu0 0.0
  %7441 = vmatprep.subr.mxu0 0.0
  %7442 = vmatpush2.msra.mxu0 0.0
  %7443 = vmatprep.subr.mxu0 0.0
  %7444 = vmatpush2.msra.mxu0 0.0
  %7445 = vmatprep.subr.mxu0 0.0
  %7446 = vmatpush2.msra.mxu0 0.0
  %7447 = vmatprep.subr.mxu0 0.0
  %7448 = vmatpush2.msra.mxu0 0.0
  %7449 = vmatprep.subr.mxu0 0.0
  %7450 = vmatpush2.msra.mxu0 0.0
  %7451 = vmatprep.mubr.f32.mxu0 0.0
  %7452 = vmatmul.mubr.f32.gmra.mxu0 %v7382
  %v7453 = vpop.f32.mrf.mxu0
  %v7454 = vadd.f32 0.0, %v7453
  %v7455 = vpop.f32.mrf.mxu0
  %7456 = vmatprep.mubr.f32.mxu0 0.0
  %7457 = vmatmul.mubr.f32.gmra.mxu0 %v7385
  %v7458 = vpop.f32.mrf.mxu0
  %v7459 = vadd.f32 0.0, %v7458
  %v7460 = vpop.f32.mrf.mxu0
  %7461 = vdwg.mxu0
  %7462 = vrot.lane.b32.xlu0 %v6195, 64
  %v7463 = vpop.permute.xlu0 %7462
  %7464 = vrot.lane.b32.xlu0 %v6200, 64
  %v7465 = vpop.permute.xlu0 %7464
  %v7469 = vsel %vm748, %v7191, 0
  %v7472 = vsel %vm748, %v7192, 0
  %7474 = vmatprep.subr.mxu0 0.0
  %7475 = vmatpush1.msra.mxu0 0.0
  %7476 = vmatprep.subr.mxu0 0.0
  %7477 = vmatpush1.msra.mxu0 0.0
  %7478 = vmatprep.subr.mxu0 0.0
  %7479 = vmatpush1.msra.mxu0 0.0
  %7480 = vmatprep.subr.mxu0 0.0
  %7481 = vmatpush1.msra.mxu0 0.0
  %7482 = vmatprep.subr.mxu0 0.0
  %7483 = vmatpush1.msra.mxu0 0.0
  %7484 = vmatprep.subr.mxu0 0.0
  %7485 = vmatpush1.msra.mxu0 0.0
  %7486 = vmatprep.subr.mxu0 0.0
  %7487 = vmatpush1.msra.mxu0 0.0
  %7488 = vmatprep.subr.mxu0 0.0
  %7489 = vmatpush1.msra.mxu0 0.0
  %7490 = vmatprep.subr.mxu0 0.0
  %7491 = vmatpush1.msra.mxu0 0.0
  %7492 = vmatprep.subr.mxu0 0.0
  %7493 = vmatpush1.msra.mxu0 0.0
  %7494 = vmatprep.subr.mxu0 0.0
  %7495 = vmatpush1.msra.mxu0 0.0
  %7496 = vmatprep.subr.mxu0 0.0
  %7497 = vmatpush1.msra.mxu0 0.0
  %7498 = vmatprep.subr.mxu0 0.0
  %7499 = vmatpush1.msra.mxu0 0.0
  %7500 = vmatprep.subr.mxu0 0.0
  %7501 = vmatpush1.msra.mxu0 0.0
  %7502 = vmatprep.subr.mxu0 0.0
  %7503 = vmatpush1.msra.mxu0 %v7465
  %7504 = vmatprep.subr.mxu0 0.0
  %7505 = vmatpush1.msra.mxu0 %v7463
  %7506 = vmatprep.subr.mxu0 0.0
  %7507 = vmatpush2.msra.mxu0 0.0
  %7508 = vmatprep.subr.mxu0 0.0
  %7509 = vmatpush2.msra.mxu0 0.0
  %7510 = vmatprep.subr.mxu0 0.0
  %7511 = vmatpush2.msra.mxu0 0.0
  %7512 = vmatprep.subr.mxu0 0.0
  %7513 = vmatpush2.msra.mxu0 0.0
  %7514 = vmatprep.subr.mxu0 0.0
  %7515 = vmatpush2.msra.mxu0 0.0
  %7516 = vmatprep.subr.mxu0 0.0
  %7517 = vmatpush2.msra.mxu0 0.0
  %7518 = vmatprep.subr.mxu0 0.0
  %7519 = vmatpush2.msra.mxu0 0.0
  %7520 = vmatprep.subr.mxu0 0.0
  %7521 = vmatpush2.msra.mxu0 0.0
  %7522 = vmatprep.subr.mxu0 0.0
  %7523 = vmatpush2.msra.mxu0 0.0
  %7524 = vmatprep.subr.mxu0 0.0
  %7525 = vmatpush2.msra.mxu0 0.0
  %7526 = vmatprep.subr.mxu0 0.0
  %7527 = vmatpush2.msra.mxu0 0.0
  %7528 = vmatprep.subr.mxu0 0.0
  %7529 = vmatpush2.msra.mxu0 0.0
  %7530 = vmatprep.subr.mxu0 0.0
  %7531 = vmatpush2.msra.mxu0 0.0
  %7532 = vmatprep.subr.mxu0 0.0
  %7533 = vmatpush2.msra.mxu0 0.0
  %7534 = vmatprep.subr.mxu0 0.0
  %7535 = vmatpush2.msra.mxu0 0.0
  %7536 = vmatprep.subr.mxu0 0.0
  %7537 = vmatpush2.msra.mxu0 0.0
  %7538 = vmatprep.mubr.f32.mxu0 0.0
  %7539 = vmatmul.mubr.f32.gmra.mxu0 %v7469
  %v7540 = vpop.f32.mrf.mxu0
  %v7541 = vadd.f32 0.0, %v7540
  %v7542 = vpop.f32.mrf.mxu0
  %7543 = vmatprep.mubr.f32.mxu0 0.0
  %7544 = vmatmul.mubr.f32.gmra.mxu0 %v7472
  %v7545 = vpop.f32.mrf.mxu0
  %v7546 = vadd.f32 0.0, %v7545
  %v7547 = vpop.f32.mrf.mxu0
  %7548 = vdwg.mxu0
  %7549 = vrot.lane.b32.xlu0 %v6205, 64
  %v7550 = vpop.permute.xlu0 %7549
  %7551 = vrot.lane.b32.xlu0 %v6210, 64
  %v7552 = vpop.permute.xlu0 %7551
  %v7556 = vsel %vm748, %v7193, 0
  %v7559 = vsel %vm748, %v7194, 0
  %7561 = vmatprep.subr.mxu0 0.0
  %7562 = vmatpush1.msra.mxu0 0.0
  %7563 = vmatprep.subr.mxu0 0.0
  %7564 = vmatpush1.msra.mxu0 0.0
  %7565 = vmatprep.subr.mxu0 0.0
  %7566 = vmatpush1.msra.mxu0 0.0
  %7567 = vmatprep.subr.mxu0 0.0
  %7568 = vmatpush1.msra.mxu0 0.0
  %7569 = vmatprep.subr.mxu0 0.0
  %7570 = vmatpush1.msra.mxu0 0.0
  %7571 = vmatprep.subr.mxu0 0.0
  %7572 = vmatpush1.msra.mxu0 0.0
  %7573 = vmatprep.subr.mxu0 0.0
  %7574 = vmatpush1.msra.mxu0 0.0
  %7575 = vmatprep.subr.mxu0 0.0
  %7576 = vmatpush1.msra.mxu0 0.0
  %7577 = vmatprep.subr.mxu0 0.0
  %7578 = vmatpush1.msra.mxu0 0.0
  %7579 = vmatprep.subr.mxu0 0.0
  %7580 = vmatpush1.msra.mxu0 0.0
  %7581 = vmatprep.subr.mxu0 0.0
  %7582 = vmatpush1.msra.mxu0 0.0
  %7583 = vmatprep.subr.mxu0 0.0
  %7584 = vmatpush1.msra.mxu0 0.0
  %7585 = vmatprep.subr.mxu0 0.0
  %7586 = vmatpush1.msra.mxu0 0.0
  %7587 = vmatprep.subr.mxu0 0.0
  %7588 = vmatpush1.msra.mxu0 0.0
  %7589 = vmatprep.subr.mxu0 0.0
  %7590 = vmatpush1.msra.mxu0 %v7552
  %7591 = vmatprep.subr.mxu0 0.0
  %7592 = vmatpush1.msra.mxu0 %v7550
  %7593 = vmatprep.subr.mxu0 0.0
  %7594 = vmatpush2.msra.mxu0 0.0
  %7595 = vmatprep.subr.mxu0 0.0
  %7596 = vmatpush2.msra.mxu0 0.0
  %7597 = vmatprep.subr.mxu0 0.0
  %7598 = vmatpush2.msra.mxu0 0.0
  %7599 = vmatprep.subr.mxu0 0.0
  %7600 = vmatpush2.msra.mxu0 0.0
  %7601 = vmatprep.subr.mxu0 0.0
  %7602 = vmatpush2.msra.mxu0 0.0
  %7603 = vmatprep.subr.mxu0 0.0
  %7604 = vmatpush2.msra.mxu0 0.0
  %7605 = vmatprep.subr.mxu0 0.0
  %7606 = vmatpush2.msra.mxu0 0.0
  %7607 = vmatprep.subr.mxu0 0.0
  %7608 = vmatpush2.msra.mxu0 0.0
  %7609 = vmatprep.subr.mxu0 0.0
  %7610 = vmatpush2.msra.mxu0 0.0
  %7611 = vmatprep.subr.mxu0 0.0
  %7612 = vmatpush2.msra.mxu0 0.0
  %7613 = vmatprep.subr.mxu0 0.0
  %7614 = vmatpush2.msra.mxu0 0.0
  %7615 = vmatprep.subr.mxu0 0.0
  %7616 = vmatpush2.msra.mxu0 0.0
  %7617 = vmatprep.subr.mxu0 0.0
  %7618 = vmatpush2.msra.mxu0 0.0
  %7619 = vmatprep.subr.mxu0 0.0
  %7620 = vmatpush2.msra.mxu0 0.0
  %7621 = vmatprep.subr.mxu0 0.0
  %7622 = vmatpush2.msra.mxu0 0.0
  %7623 = vmatprep.subr.mxu0 0.0
  %7624 = vmatpush2.msra.mxu0 0.0
  %7625 = vmatprep.mubr.f32.mxu0 0.0
  %7626 = vmatmul.mubr.f32.gmra.mxu0 %v7556
  %v7627 = vpop.f32.mrf.mxu0
  %v7628 = vadd.f32 0.0, %v7627
  %v7629 = vpop.f32.mrf.mxu0
  %7630 = vmatprep.mubr.f32.mxu0 0.0
  %7631 = vmatmul.mubr.f32.gmra.mxu0 %v7559
  %v7632 = vpop.f32.mrf.mxu0
  %v7633 = vadd.f32 0.0, %v7632
  %v7634 = vpop.f32.mrf.mxu0
  %7635 = vdwg.mxu0
  %7636 = vrot.lane.b32.xlu0 %v6215, 64
  %v7637 = vpop.permute.xlu0 %7636
  %7638 = vrot.lane.b32.xlu0 %v6220, 64
  %v7639 = vpop.permute.xlu0 %7638
  %v7643 = vsel %vm748, %v7195, 0
  %v7646 = vsel %vm748, %v7196, 0
  %7648 = vmatprep.subr.mxu0 0.0
  %7649 = vmatpush1.msra.mxu0 0.0
  %7650 = vmatprep.subr.mxu0 0.0
  %7651 = vmatpush1.msra.mxu0 0.0
  %7652 = vmatprep.subr.mxu0 0.0
  %7653 = vmatpush1.msra.mxu0 0.0
  %7654 = vmatprep.subr.mxu0 0.0
  %7655 = vmatpush1.msra.mxu0 0.0
  %7656 = vmatprep.subr.mxu0 0.0
  %7657 = vmatpush1.msra.mxu0 0.0
  %7658 = vmatprep.subr.mxu0 0.0
  %7659 = vmatpush1.msra.mxu0 0.0
  %7660 = vmatprep.subr.mxu0 0.0
  %7661 = vmatpush1.msra.mxu0 0.0
  %7662 = vmatprep.subr.mxu0 0.0
  %7663 = vmatpush1.msra.mxu0 0.0
  %7664 = vmatprep.subr.mxu0 0.0
  %7665 = vmatpush1.msra.mxu0 0.0
  %7666 = vmatprep.subr.mxu0 0.0
  %7667 = vmatpush1.msra.mxu0 0.0
  %7668 = vmatprep.subr.mxu0 0.0
  %7669 = vmatpush1.msra.mxu0 0.0
  %7670 = vmatprep.subr.mxu0 0.0
  %7671 = vmatpush1.msra.mxu0 0.0
  %7672 = vmatprep.subr.mxu0 0.0
  %7673 = vmatpush1.msra.mxu0 0.0
  %7674 = vmatprep.subr.mxu0 0.0
  %7675 = vmatpush1.msra.mxu0 0.0
  %7676 = vmatprep.subr.mxu0 0.0
  %7677 = vmatpush1.msra.mxu0 %v7639
  %7678 = vmatprep.subr.mxu0 0.0
  %7679 = vmatpush1.msra.mxu0 %v7637
  %7680 = vmatprep.subr.mxu0 0.0
  %7681 = vmatpush2.msra.mxu0 0.0
  %7682 = vmatprep.subr.mxu0 0.0
  %7683 = vmatpush2.msra.mxu0 0.0
  %7684 = vmatprep.subr.mxu0 0.0
  %7685 = vmatpush2.msra.mxu0 0.0
  %7686 = vmatprep.subr.mxu0 0.0
  %7687 = vmatpush2.msra.mxu0 0.0
  %7688 = vmatprep.subr.mxu0 0.0
  %7689 = vmatpush2.msra.mxu0 0.0
  %7690 = vmatprep.subr.mxu0 0.0
  %7691 = vmatpush2.msra.mxu0 0.0
  %7692 = vmatprep.subr.mxu0 0.0
  %7693 = vmatpush2.msra.mxu0 0.0
  %7694 = vmatprep.subr.mxu0 0.0
  %7695 = vmatpush2.msra.mxu0 0.0
  %7696 = vmatprep.subr.mxu0 0.0
  %7697 = vmatpush2.msra.mxu0 0.0
  %7698 = vmatprep.subr.mxu0 0.0
  %7699 = vmatpush2.msra.mxu0 0.0
  %7700 = vmatprep.subr.mxu0 0.0
  %7701 = vmatpush2.msra.mxu0 0.0
  %7702 = vmatprep.subr.mxu0 0.0
  %7703 = vmatpush2.msra.mxu0 0.0
  %7704 = vmatprep.subr.mxu0 0.0
  %7705 = vmatpush2.msra.mxu0 0.0
  %7706 = vmatprep.subr.mxu0 0.0
  %7707 = vmatpush2.msra.mxu0 0.0
  %7708 = vmatprep.subr.mxu0 0.0
  %7709 = vmatpush2.msra.mxu0 0.0
  %7710 = vmatprep.subr.mxu0 0.0
  %7711 = vmatpush2.msra.mxu0 0.0
  %7712 = vmatprep.mubr.f32.mxu0 0.0
  %7713 = vmatmul.mubr.f32.gmra.mxu0 %v7643
  %v7714 = vpop.f32.mrf.mxu0
  %v7715 = vadd.f32 0.0, %v7714
  %v7716 = vpop.f32.mrf.mxu0
  %7717 = vmatprep.mubr.f32.mxu0 0.0
  %7718 = vmatmul.mubr.f32.gmra.mxu0 %v7646
  %v7719 = vpop.f32.mrf.mxu0
  %v7720 = vadd.f32 0.0, %v7719
  %v7721 = vpop.f32.mrf.mxu0
  %7722 = vdwg.mxu0
  %7723 = vrot.lane.b32.xlu0 %v6225, 64
  %v7724 = vpop.permute.xlu0 %7723
  %7725 = vrot.lane.b32.xlu0 %v6230, 64
  %v7726 = vpop.permute.xlu0 %7725
  %v7730 = vsel %vm748, %v7197, 0
  %v7733 = vsel %vm748, %v7198, 0
  %7735 = vmatprep.subr.mxu0 0.0
  %7736 = vmatpush1.msra.mxu0 0.0
  %7737 = vmatprep.subr.mxu0 0.0
  %7738 = vmatpush1.msra.mxu0 0.0
  %7739 = vmatprep.subr.mxu0 0.0
  %7740 = vmatpush1.msra.mxu0 0.0
  %7741 = vmatprep.subr.mxu0 0.0
  %7742 = vmatpush1.msra.mxu0 0.0
  %7743 = vmatprep.subr.mxu0 0.0
  %7744 = vmatpush1.msra.mxu0 0.0
  %7745 = vmatprep.subr.mxu0 0.0
  %7746 = vmatpush1.msra.mxu0 0.0
  %7747 = vmatprep.subr.mxu0 0.0
  %7748 = vmatpush1.msra.mxu0 0.0
  %7749 = vmatprep.subr.mxu0 0.0
  %7750 = vmatpush1.msra.mxu0 0.0
  %7751 = vmatprep.subr.mxu0 0.0
  %7752 = vmatpush1.msra.mxu0 0.0
  %7753 = vmatprep.subr.mxu0 0.0
  %7754 = vmatpush1.msra.mxu0 0.0
  %7755 = vmatprep.subr.mxu0 0.0
  %7756 = vmatpush1.msra.mxu0 0.0
  %7757 = vmatprep.subr.mxu0 0.0
  %7758 = vmatpush1.msra.mxu0 0.0
  %7759 = vmatprep.subr.mxu0 0.0
  %7760 = vmatpush1.msra.mxu0 0.0
  %7761 = vmatprep.subr.mxu0 0.0
  %7762 = vmatpush1.msra.mxu0 0.0
  %7763 = vmatprep.subr.mxu0 0.0
  %7764 = vmatpush1.msra.mxu0 %v7726
  %7765 = vmatprep.subr.mxu0 0.0
  %7766 = vmatpush1.msra.mxu0 %v7724
  %7767 = vmatprep.subr.mxu0 0.0
  %7768 = vmatpush2.msra.mxu0 0.0
  %7769 = vmatprep.subr.mxu0 0.0
  %7770 = vmatpush2.msra.mxu0 0.0
  %7771 = vmatprep.subr.mxu0 0.0
  %7772 = vmatpush2.msra.mxu0 0.0
  %7773 = vmatprep.subr.mxu0 0.0
  %7774 = vmatpush2.msra.mxu0 0.0
  %7775 = vmatprep.subr.mxu0 0.0
  %7776 = vmatpush2.msra.mxu0 0.0
  %7777 = vmatprep.subr.mxu0 0.0
  %7778 = vmatpush2.msra.mxu0 0.0
  %7779 = vmatprep.subr.mxu0 0.0
  %7780 = vmatpush2.msra.mxu0 0.0
  %7781 = vmatprep.subr.mxu0 0.0
  %7782 = vmatpush2.msra.mxu0 0.0
  %7783 = vmatprep.subr.mxu0 0.0
  %7784 = vmatpush2.msra.mxu0 0.0
  %7785 = vmatprep.subr.mxu0 0.0
  %7786 = vmatpush2.msra.mxu0 0.0
  %7787 = vmatprep.subr.mxu0 0.0
  %7788 = vmatpush2.msra.mxu0 0.0
  %7789 = vmatprep.subr.mxu0 0.0
  %7790 = vmatpush2.msra.mxu0 0.0
  %7791 = vmatprep.subr.mxu0 0.0
  %7792 = vmatpush2.msra.mxu0 0.0
  %7793 = vmatprep.subr.mxu0 0.0
  %7794 = vmatpush2.msra.mxu0 0.0
  %7795 = vmatprep.subr.mxu0 0.0
  %7796 = vmatpush2.msra.mxu0 0.0
  %7797 = vmatprep.subr.mxu0 0.0
  %7798 = vmatpush2.msra.mxu0 0.0
  %7799 = vmatprep.mubr.f32.mxu0 0.0
  %7800 = vmatmul.mubr.f32.gmra.mxu0 %v7730
  %v7801 = vpop.f32.mrf.mxu0
  %v7802 = vadd.f32 0.0, %v7801
  %v7803 = vpop.f32.mrf.mxu0
  %7804 = vmatprep.mubr.f32.mxu0 0.0
  %7805 = vmatmul.mubr.f32.gmra.mxu0 %v7733
  %v7806 = vpop.f32.mrf.mxu0
  %v7807 = vadd.f32 0.0, %v7806
  %v7808 = vpop.f32.mrf.mxu0
  %7809 = vdwg.mxu0
  %7810 = vrot.lane.b32.xlu0 %v6235, 64
  %v7811 = vpop.permute.xlu0 %7810
  %7812 = vrot.lane.b32.xlu0 %v6240, 64
  %v7813 = vpop.permute.xlu0 %7812
  %v7817 = vsel %vm748, %v7199, 0
  %v7820 = vsel %vm748, %v7200, 0
  %7822 = vmatprep.subr.mxu0 0.0
  %7823 = vmatpush1.msra.mxu0 0.0
  %7824 = vmatprep.subr.mxu0 0.0
  %7825 = vmatpush1.msra.mxu0 0.0
  %7826 = vmatprep.subr.mxu0 0.0
  %7827 = vmatpush1.msra.mxu0 0.0
  %7828 = vmatprep.subr.mxu0 0.0
  %7829 = vmatpush1.msra.mxu0 0.0
  %7830 = vmatprep.subr.mxu0 0.0
  %7831 = vmatpush1.msra.mxu0 0.0
  %7832 = vmatprep.subr.mxu0 0.0
  %7833 = vmatpush1.msra.mxu0 0.0
  %7834 = vmatprep.subr.mxu0 0.0
  %7835 = vmatpush1.msra.mxu0 0.0
  %7836 = vmatprep.subr.mxu0 0.0
  %7837 = vmatpush1.msra.mxu0 0.0
  %7838 = vmatprep.subr.mxu0 0.0
  %7839 = vmatpush1.msra.mxu0 0.0
  %7840 = vmatprep.subr.mxu0 0.0
  %7841 = vmatpush1.msra.mxu0 0.0
  %7842 = vmatprep.subr.mxu0 0.0
  %7843 = vmatpush1.msra.mxu0 0.0
  %7844 = vmatprep.subr.mxu0 0.0
  %7845 = vmatpush1.msra.mxu0 0.0
  %7846 = vmatprep.subr.mxu0 0.0
  %7847 = vmatpush1.msra.mxu0 0.0
  %7848 = vmatprep.subr.mxu0 0.0
  %7849 = vmatpush1.msra.mxu0 0.0
  %7850 = vmatprep.subr.mxu0 0.0
  %7851 = vmatpush1.msra.mxu0 %v7813
  %7852 = vmatprep.subr.mxu0 0.0
  %7853 = vmatpush1.msra.mxu0 %v7811
  %7854 = vmatprep.subr.mxu0 0.0
  %7855 = vmatpush2.msra.mxu0 0.0
  %7856 = vmatprep.subr.mxu0 0.0
  %7857 = vmatpush2.msra.mxu0 0.0
  %7858 = vmatprep.subr.mxu0 0.0
  %7859 = vmatpush2.msra.mxu0 0.0
  %7860 = vmatprep.subr.mxu0 0.0
  %7861 = vmatpush2.msra.mxu0 0.0
  %7862 = vmatprep.subr.mxu0 0.0
  %7863 = vmatpush2.msra.mxu0 0.0
  %7864 = vmatprep.subr.mxu0 0.0
  %7865 = vmatpush2.msra.mxu0 0.0
  %7866 = vmatprep.subr.mxu0 0.0
  %7867 = vmatpush2.msra.mxu0 0.0
  %7868 = vmatprep.subr.mxu0 0.0
  %7869 = vmatpush2.msra.mxu0 0.0
  %7870 = vmatprep.subr.mxu0 0.0
  %7871 = vmatpush2.msra.mxu0 0.0
  %7872 = vmatprep.subr.mxu0 0.0
  %7873 = vmatpush2.msra.mxu0 0.0
  %7874 = vmatprep.subr.mxu0 0.0
  %7875 = vmatpush2.msra.mxu0 0.0
  %7876 = vmatprep.subr.mxu0 0.0
  %7877 = vmatpush2.msra.mxu0 0.0
  %7878 = vmatprep.subr.mxu0 0.0
  %7879 = vmatpush2.msra.mxu0 0.0
  %7880 = vmatprep.subr.mxu0 0.0
  %7881 = vmatpush2.msra.mxu0 0.0
  %7882 = vmatprep.subr.mxu0 0.0
  %7883 = vmatpush2.msra.mxu0 0.0
  %7884 = vmatprep.subr.mxu0 0.0
  %7885 = vmatpush2.msra.mxu0 0.0
  %7886 = vmatprep.mubr.f32.mxu0 0.0
  %7887 = vmatmul.mubr.f32.gmra.mxu0 %v7817
  %v7888 = vpop.f32.mrf.mxu0
  %v7889 = vadd.f32 0.0, %v7888
  %v7890 = vpop.f32.mrf.mxu0
  %7891 = vmatprep.mubr.f32.mxu0 0.0
  %7892 = vmatmul.mubr.f32.gmra.mxu0 %v7820
  %v7893 = vpop.f32.mrf.mxu0
  %v7894 = vadd.f32 0.0, %v7893
  %v7895 = vpop.f32.mrf.mxu0
  %7896 = vdwg.mxu0
  %7897 = vrot.lane.b32.xlu0 %v6281, 112
  %v7898 = vpop.permute.xlu0 %7897
  %7899 = vrot.lane.b32.xlu0 %v6282, 112
  %v7900 = vpop.permute.xlu0 %7899
  %7901 = vrot.lane.b32.xlu0 %v6165, 80
  %v7902 = vpop.permute.xlu0 %7901
  %7903 = vrot.lane.b32.xlu0 %v6170, 80
  %v7904 = vpop.permute.xlu0 %7903
  %v7905 = vsel %vm748, %v7898, 0
  %v7907 = vsel %vm748, %v7900, 0
  %v7909 = vsel %vm748, %v7902, 0
  %v7911 = vsel %vm748, %v7904, 0
  %7913 = vmatprep.subr.mxu0 0.0
  %7914 = vmatpush1.xpose.msra.mxu0 0.0
  %7915 = vmatprep.subr.mxu0 0.0
  %7916 = vmatpush1.xpose.msra.mxu0 0.0
  %7917 = vmatprep.subr.mxu0 0.0
  %7918 = vmatpush1.xpose.msra.mxu0 0.0
  %7919 = vmatprep.subr.mxu0 0.0
  %7920 = vmatpush1.xpose.msra.mxu0 0.0
  %7921 = vmatprep.subr.mxu0 0.0
  %7922 = vmatpush1.xpose.msra.mxu0 0.0
  %7923 = vmatprep.subr.mxu0 0.0
  %7924 = vmatpush1.xpose.msra.mxu0 0.0
  %7925 = vmatprep.subr.mxu0 0.0
  %7926 = vmatpush1.xpose.msra.mxu0 0.0
  %7927 = vmatprep.subr.mxu0 0.0
  %7928 = vmatpush1.xpose.msra.mxu0 0.0
  %7929 = vmatprep.subr.mxu0 0.0
  %7930 = vmatpush1.xpose.msra.mxu0 0.0
  %7931 = vmatprep.subr.mxu0 0.0
  %7932 = vmatpush1.xpose.msra.mxu0 0.0
  %7933 = vmatprep.subr.mxu0 0.0
  %7934 = vmatpush1.xpose.msra.mxu0 0.0
  %7935 = vmatprep.subr.mxu0 0.0
  %7936 = vmatpush1.xpose.msra.mxu0 0.0
  %7937 = vmatprep.subr.mxu0 0.0
  %7938 = vmatpush1.xpose.msra.mxu0 0.0
  %7939 = vmatprep.subr.mxu0 0.0
  %7940 = vmatpush1.xpose.msra.mxu0 0.0
  %7941 = vmatprep.subr.mxu0 0.0
  %7942 = vmatpush1.xpose.msra.mxu0 %v7911
  %7943 = vmatprep.subr.mxu0 0.0
  %7944 = vmatpush1.xpose.msra.mxu0 %v7909
  %7945 = vmatprep.subr.mxu0 0.0
  %7946 = vmatpush2.xpose.msra.mxu0 0.0
  %7947 = vmatprep.subr.mxu0 0.0
  %7948 = vmatpush2.xpose.msra.mxu0 0.0
  %7949 = vmatprep.subr.mxu0 0.0
  %7950 = vmatpush2.xpose.msra.mxu0 0.0
  %7951 = vmatprep.subr.mxu0 0.0
  %7952 = vmatpush2.xpose.msra.mxu0 0.0
  %7953 = vmatprep.subr.mxu0 0.0
  %7954 = vmatpush2.xpose.msra.mxu0 0.0
  %7955 = vmatprep.subr.mxu0 0.0
  %7956 = vmatpush2.xpose.msra.mxu0 0.0
  %7957 = vmatprep.subr.mxu0 0.0
  %7958 = vmatpush2.xpose.msra.mxu0 0.0
  %7959 = vmatprep.subr.mxu0 0.0
  %7960 = vmatpush2.xpose.msra.mxu0 0.0
  %7961 = vmatprep.subr.mxu0 0.0
  %7962 = vmatpush2.xpose.msra.mxu0 0.0
  %7963 = vmatprep.subr.mxu0 0.0
  %7964 = vmatpush2.xpose.msra.mxu0 0.0
  %7965 = vmatprep.subr.mxu0 0.0
  %7966 = vmatpush2.xpose.msra.mxu0 0.0
  %7967 = vmatprep.subr.mxu0 0.0
  %7968 = vmatpush2.xpose.msra.mxu0 0.0
  %7969 = vmatprep.subr.mxu0 0.0
  %7970 = vmatpush2.xpose.msra.mxu0 0.0
  %7971 = vmatprep.subr.mxu0 0.0
  %7972 = vmatpush2.xpose.msra.mxu0 0.0
  %7973 = vmatprep.subr.mxu0 0.0
  %7974 = vmatpush2.xpose.msra.mxu0 0.0
  %7975 = vmatprep.subr.mxu0 0.0
  %7976 = vmatpush2.xpose.msra.mxu0 0.0
  %7977 = vmatprep.mubr.f32.mxu0 0.0
  %7978 = vmatmul.mubr.f32.gmra.mxu0 %v7905
  %v7979 = vpop.f32.mrf.mxu0
  %v7980 = vadd.f32 %v6260, %v7979
  %v7981 = vpop.f32.mrf.mxu0
  %7982 = vmatprep.mubr.f32.mxu0 0.0
  %7983 = vmatmul.mubr.f32.gmra.mxu0 %v7907
  %v7984 = vpop.f32.mrf.mxu0
  %v7985 = vadd.f32 %v6261, %v7984
  %v7986 = vpop.f32.mrf.mxu0
  %7987 = vdwg.mxu0
  %7988 = vrot.lane.b32.xlu0 %v6283, 112
  %v7989 = vpop.permute.xlu0 %7988
  %7990 = vrot.lane.b32.xlu0 %v6284, 112
  %v7991 = vpop.permute.xlu0 %7990
  %7992 = vrot.lane.b32.xlu0 %v6175, 80
  %v7993 = vpop.permute.xlu0 %7992
  %7994 = vrot.lane.b32.xlu0 %v6180, 80
  %v7995 = vpop.permute.xlu0 %7994
  %v7996 = vsel %vm748, %v7989, 0
  %v7998 = vsel %vm748, %v7991, 0
  %v8000 = vsel %vm748, %v7993, 0
  %v8002 = vsel %vm748, %v7995, 0
  %8004 = vmatprep.subr.mxu0 0.0
  %8005 = vmatpush1.xpose.msra.mxu0 0.0
  %8006 = vmatprep.subr.mxu0 0.0
  %8007 = vmatpush1.xpose.msra.mxu0 0.0
  %8008 = vmatprep.subr.mxu0 0.0
  %8009 = vmatpush1.xpose.msra.mxu0 0.0
  %8010 = vmatprep.subr.mxu0 0.0
  %8011 = vmatpush1.xpose.msra.mxu0 0.0
  %8012 = vmatprep.subr.mxu0 0.0
  %8013 = vmatpush1.xpose.msra.mxu0 0.0
  %8014 = vmatprep.subr.mxu0 0.0
  %8015 = vmatpush1.xpose.msra.mxu0 0.0
  %8016 = vmatprep.subr.mxu0 0.0
  %8017 = vmatpush1.xpose.msra.mxu0 0.0
  %8018 = vmatprep.subr.mxu0 0.0
  %8019 = vmatpush1.xpose.msra.mxu0 0.0
  %8020 = vmatprep.subr.mxu0 0.0
  %8021 = vmatpush1.xpose.msra.mxu0 0.0
  %8022 = vmatprep.subr.mxu0 0.0
  %8023 = vmatpush1.xpose.msra.mxu0 0.0
  %8024 = vmatprep.subr.mxu0 0.0
  %8025 = vmatpush1.xpose.msra.mxu0 0.0
  %8026 = vmatprep.subr.mxu0 0.0
  %8027 = vmatpush1.xpose.msra.mxu0 0.0
  %8028 = vmatprep.subr.mxu0 0.0
  %8029 = vmatpush1.xpose.msra.mxu0 0.0
  %8030 = vmatprep.subr.mxu0 0.0
  %8031 = vmatpush1.xpose.msra.mxu0 0.0
  %8032 = vmatprep.subr.mxu0 0.0
  %8033 = vmatpush1.xpose.msra.mxu0 %v8002
  %8034 = vmatprep.subr.mxu0 0.0
  %8035 = vmatpush1.xpose.msra.mxu0 %v8000
  %8036 = vmatprep.subr.mxu0 0.0
  %8037 = vmatpush2.xpose.msra.mxu0 0.0
  %8038 = vmatprep.subr.mxu0 0.0
  %8039 = vmatpush2.xpose.msra.mxu0 0.0
  %8040 = vmatprep.subr.mxu0 0.0
  %8041 = vmatpush2.xpose.msra.mxu0 0.0
  %8042 = vmatprep.subr.mxu0 0.0
  %8043 = vmatpush2.xpose.msra.mxu0 0.0
  %8044 = vmatprep.subr.mxu0 0.0
  %8045 = vmatpush2.xpose.msra.mxu0 0.0
  %8046 = vmatprep.subr.mxu0 0.0
  %8047 = vmatpush2.xpose.msra.mxu0 0.0
  %8048 = vmatprep.subr.mxu0 0.0
  %8049 = vmatpush2.xpose.msra.mxu0 0.0
  %8050 = vmatprep.subr.mxu0 0.0
  %8051 = vmatpush2.xpose.msra.mxu0 0.0
  %8052 = vmatprep.subr.mxu0 0.0
  %8053 = vmatpush2.xpose.msra.mxu0 0.0
  %8054 = vmatprep.subr.mxu0 0.0
  %8055 = vmatpush2.xpose.msra.mxu0 0.0
  %8056 = vmatprep.subr.mxu0 0.0
  %8057 = vmatpush2.xpose.msra.mxu0 0.0
  %8058 = vmatprep.subr.mxu0 0.0
  %8059 = vmatpush2.xpose.msra.mxu0 0.0
  %8060 = vmatprep.subr.mxu0 0.0
  %8061 = vmatpush2.xpose.msra.mxu0 0.0
  %8062 = vmatprep.subr.mxu0 0.0
  %8063 = vmatpush2.xpose.msra.mxu0 0.0
  %8064 = vmatprep.subr.mxu0 0.0
  %8065 = vmatpush2.xpose.msra.mxu0 0.0
  %8066 = vmatprep.subr.mxu0 0.0
  %8067 = vmatpush2.xpose.msra.mxu0 0.0
  %8068 = vmatprep.mubr.f32.mxu0 0.0
  %8069 = vmatmul.mubr.f32.gmra.mxu0 %v7996
  %v8070 = vpop.f32.mrf.mxu0
  %v8071 = vadd.f32 %v6262, %v8070
  %v8072 = vpop.f32.mrf.mxu0
  %8073 = vmatprep.mubr.f32.mxu0 0.0
  %8074 = vmatmul.mubr.f32.gmra.mxu0 %v7998
  %v8075 = vpop.f32.mrf.mxu0
  %v8076 = vadd.f32 %v6263, %v8075
  %v8077 = vpop.f32.mrf.mxu0
  %8078 = vdwg.mxu0
  %8079 = vrot.lane.b32.xlu0 %v6285, 112
  %v8080 = vpop.permute.xlu0 %8079
  %8081 = vrot.lane.b32.xlu0 %v6286, 112
  %v8082 = vpop.permute.xlu0 %8081
  %8083 = vrot.lane.b32.xlu0 %v6185, 80
  %v8084 = vpop.permute.xlu0 %8083
  %8085 = vrot.lane.b32.xlu0 %v6190, 80
  %v8086 = vpop.permute.xlu0 %8085
  %v8087 = vsel %vm748, %v8080, 0
  %v8089 = vsel %vm748, %v8082, 0
  %v8091 = vsel %vm748, %v8084, 0
  %v8093 = vsel %vm748, %v8086, 0
  %8095 = vmatprep.subr.mxu0 0.0
  %8096 = vmatpush1.xpose.msra.mxu0 0.0
  %8097 = vmatprep.subr.mxu0 0.0
  %8098 = vmatpush1.xpose.msra.mxu0 0.0
  %8099 = vmatprep.subr.mxu0 0.0
  %8100 = vmatpush1.xpose.msra.mxu0 0.0
  %8101 = vmatprep.subr.mxu0 0.0
  %8102 = vmatpush1.xpose.msra.mxu0 0.0
  %8103 = vmatprep.subr.mxu0 0.0
  %8104 = vmatpush1.xpose.msra.mxu0 0.0
  %8105 = vmatprep.subr.mxu0 0.0
  %8106 = vmatpush1.xpose.msra.mxu0 0.0
  %8107 = vmatprep.subr.mxu0 0.0
  %8108 = vmatpush1.xpose.msra.mxu0 0.0
  %8109 = vmatprep.subr.mxu0 0.0
  %8110 = vmatpush1.xpose.msra.mxu0 0.0
  %8111 = vmatprep.subr.mxu0 0.0
  %8112 = vmatpush1.xpose.msra.mxu0 0.0
  %8113 = vmatprep.subr.mxu0 0.0
  %8114 = vmatpush1.xpose.msra.mxu0 0.0
  %8115 = vmatprep.subr.mxu0 0.0
  %8116 = vmatpush1.xpose.msra.mxu0 0.0
  %8117 = vmatprep.subr.mxu0 0.0
  %8118 = vmatpush1.xpose.msra.mxu0 0.0
  %8119 = vmatprep.subr.mxu0 0.0
  %8120 = vmatpush1.xpose.msra.mxu0 0.0
  %8121 = vmatprep.subr.mxu0 0.0
  %8122 = vmatpush1.xpose.msra.mxu0 0.0
  %8123 = vmatprep.subr.mxu0 0.0
  %8124 = vmatpush1.xpose.msra.mxu0 %v8093
  %8125 = vmatprep.subr.mxu0 0.0
  %8126 = vmatpush1.xpose.msra.mxu0 %v8091
  %8127 = vmatprep.subr.mxu0 0.0
  %8128 = vmatpush2.xpose.msra.mxu0 0.0
  %8129 = vmatprep.subr.mxu0 0.0
  %8130 = vmatpush2.xpose.msra.mxu0 0.0
  %8131 = vmatprep.subr.mxu0 0.0
  %8132 = vmatpush2.xpose.msra.mxu0 0.0
  %8133 = vmatprep.subr.mxu0 0.0
  %8134 = vmatpush2.xpose.msra.mxu0 0.0
  %8135 = vmatprep.subr.mxu0 0.0
  %8136 = vmatpush2.xpose.msra.mxu0 0.0
  %8137 = vmatprep.subr.mxu0 0.0
  %8138 = vmatpush2.xpose.msra.mxu0 0.0
  %8139 = vmatprep.subr.mxu0 0.0
  %8140 = vmatpush2.xpose.msra.mxu0 0.0
  %8141 = vmatprep.subr.mxu0 0.0
  %8142 = vmatpush2.xpose.msra.mxu0 0.0
  %8143 = vmatprep.subr.mxu0 0.0
  %8144 = vmatpush2.xpose.msra.mxu0 0.0
  %8145 = vmatprep.subr.mxu0 0.0
  %8146 = vmatpush2.xpose.msra.mxu0 0.0
  %8147 = vmatprep.subr.mxu0 0.0
  %8148 = vmatpush2.xpose.msra.mxu0 0.0
  %8149 = vmatprep.subr.mxu0 0.0
  %8150 = vmatpush2.xpose.msra.mxu0 0.0
  %8151 = vmatprep.subr.mxu0 0.0
  %8152 = vmatpush2.xpose.msra.mxu0 0.0
  %8153 = vmatprep.subr.mxu0 0.0
  %8154 = vmatpush2.xpose.msra.mxu0 0.0
  %8155 = vmatprep.subr.mxu0 0.0
  %8156 = vmatpush2.xpose.msra.mxu0 0.0
  %8157 = vmatprep.subr.mxu0 0.0
  %8158 = vmatpush2.xpose.msra.mxu0 0.0
  %8159 = vmatprep.mubr.f32.mxu0 0.0
  %8160 = vmatmul.mubr.f32.gmra.mxu0 %v8087
  %v8161 = vpop.f32.mrf.mxu0
  %v8162 = vadd.f32 %v6264, %v8161
  %v8163 = vpop.f32.mrf.mxu0
  %8164 = vmatprep.mubr.f32.mxu0 0.0
  %8165 = vmatmul.mubr.f32.gmra.mxu0 %v8089
  %v8166 = vpop.f32.mrf.mxu0
  %v8167 = vadd.f32 %v6265, %v8166
  %v8168 = vpop.f32.mrf.mxu0
  %8169 = vdwg.mxu0
  %8170 = vrot.lane.b32.xlu0 %v6287, 112
  %v8171 = vpop.permute.xlu0 %8170
  %8172 = vrot.lane.b32.xlu0 %v6288, 112
  %v8173 = vpop.permute.xlu0 %8172
  %8174 = vrot.lane.b32.xlu0 %v6195, 80
  %v8175 = vpop.permute.xlu0 %8174
  %8176 = vrot.lane.b32.xlu0 %v6200, 80
  %v8177 = vpop.permute.xlu0 %8176
  %v8178 = vsel %vm748, %v8171, 0
  %v8180 = vsel %vm748, %v8173, 0
  %v8182 = vsel %vm748, %v8175, 0
  %v8184 = vsel %vm748, %v8177, 0
  %8186 = vmatprep.subr.mxu0 0.0
  %8187 = vmatpush1.xpose.msra.mxu0 0.0
  %8188 = vmatprep.subr.mxu0 0.0
  %8189 = vmatpush1.xpose.msra.mxu0 0.0
  %8190 = vmatprep.subr.mxu0 0.0
  %8191 = vmatpush1.xpose.msra.mxu0 0.0
  %8192 = vmatprep.subr.mxu0 0.0
  %8193 = vmatpush1.xpose.msra.mxu0 0.0
  %8194 = vmatprep.subr.mxu0 0.0
  %8195 = vmatpush1.xpose.msra.mxu0 0.0
  %8196 = vmatprep.subr.mxu0 0.0
  %8197 = vmatpush1.xpose.msra.mxu0 0.0
  %8198 = vmatprep.subr.mxu0 0.0
  %8199 = vmatpush1.xpose.msra.mxu0 0.0
  %8200 = vmatprep.subr.mxu0 0.0
  %8201 = vmatpush1.xpose.msra.mxu0 0.0
  %8202 = vmatprep.subr.mxu0 0.0
  %8203 = vmatpush1.xpose.msra.mxu0 0.0
  %8204 = vmatprep.subr.mxu0 0.0
  %8205 = vmatpush1.xpose.msra.mxu0 0.0
  %8206 = vmatprep.subr.mxu0 0.0
  %8207 = vmatpush1.xpose.msra.mxu0 0.0
  %8208 = vmatprep.subr.mxu0 0.0
  %8209 = vmatpush1.xpose.msra.mxu0 0.0
  %8210 = vmatprep.subr.mxu0 0.0
  %8211 = vmatpush1.xpose.msra.mxu0 0.0
  %8212 = vmatprep.subr.mxu0 0.0
  %8213 = vmatpush1.xpose.msra.mxu0 0.0
  %8214 = vmatprep.subr.mxu0 0.0
  %8215 = vmatpush1.xpose.msra.mxu0 %v8184
  %8216 = vmatprep.subr.mxu0 0.0
  %8217 = vmatpush1.xpose.msra.mxu0 %v8182
  %8218 = vmatprep.subr.mxu0 0.0
  %8219 = vmatpush2.xpose.msra.mxu0 0.0
  %8220 = vmatprep.subr.mxu0 0.0
  %8221 = vmatpush2.xpose.msra.mxu0 0.0
  %8222 = vmatprep.subr.mxu0 0.0
  %8223 = vmatpush2.xpose.msra.mxu0 0.0
  %8224 = vmatprep.subr.mxu0 0.0
  %8225 = vmatpush2.xpose.msra.mxu0 0.0
  %8226 = vmatprep.subr.mxu0 0.0
  %8227 = vmatpush2.xpose.msra.mxu0 0.0
  %8228 = vmatprep.subr.mxu0 0.0
  %8229 = vmatpush2.xpose.msra.mxu0 0.0
  %8230 = vmatprep.subr.mxu0 0.0
  %8231 = vmatpush2.xpose.msra.mxu0 0.0
  %8232 = vmatprep.subr.mxu0 0.0
  %8233 = vmatpush2.xpose.msra.mxu0 0.0
  %8234 = vmatprep.subr.mxu0 0.0
  %8235 = vmatpush2.xpose.msra.mxu0 0.0
  %8236 = vmatprep.subr.mxu0 0.0
  %8237 = vmatpush2.xpose.msra.mxu0 0.0
  %8238 = vmatprep.subr.mxu0 0.0
  %8239 = vmatpush2.xpose.msra.mxu0 0.0
  %8240 = vmatprep.subr.mxu0 0.0
  %8241 = vmatpush2.xpose.msra.mxu0 0.0
  %8242 = vmatprep.subr.mxu0 0.0
  %8243 = vmatpush2.xpose.msra.mxu0 0.0
  %8244 = vmatprep.subr.mxu0 0.0
  %8245 = vmatpush2.xpose.msra.mxu0 0.0
  %8246 = vmatprep.subr.mxu0 0.0
  %8247 = vmatpush2.xpose.msra.mxu0 0.0
  %8248 = vmatprep.subr.mxu0 0.0
  %8249 = vmatpush2.xpose.msra.mxu0 0.0
  %8250 = vmatprep.mubr.f32.mxu0 0.0
  %8251 = vmatmul.mubr.f32.gmra.mxu0 %v8178
  %v8252 = vpop.f32.mrf.mxu0
  %v8253 = vadd.f32 %v6266, %v8252
  %v8254 = vpop.f32.mrf.mxu0
  %8255 = vmatprep.mubr.f32.mxu0 0.0
  %8256 = vmatmul.mubr.f32.gmra.mxu0 %v8180
  %v8257 = vpop.f32.mrf.mxu0
  %v8258 = vadd.f32 %v6267, %v8257
  %v8259 = vpop.f32.mrf.mxu0
  %8260 = vdwg.mxu0
  %8261 = vrot.lane.b32.xlu0 %v6289, 112
  %v8262 = vpop.permute.xlu0 %8261
  %8263 = vrot.lane.b32.xlu0 %v6290, 112
  %v8264 = vpop.permute.xlu0 %8263
  %8265 = vrot.lane.b32.xlu0 %v6205, 80
  %v8266 = vpop.permute.xlu0 %8265
  %8267 = vrot.lane.b32.xlu0 %v6210, 80
  %v8268 = vpop.permute.xlu0 %8267
  %v8269 = vsel %vm748, %v8262, 0
  %v8271 = vsel %vm748, %v8264, 0
  %v8273 = vsel %vm748, %v8266, 0
  %v8275 = vsel %vm748, %v8268, 0
  %8277 = vmatprep.subr.mxu0 0.0
  %8278 = vmatpush1.xpose.msra.mxu0 0.0
  %8279 = vmatprep.subr.mxu0 0.0
  %8280 = vmatpush1.xpose.msra.mxu0 0.0
  %8281 = vmatprep.subr.mxu0 0.0
  %8282 = vmatpush1.xpose.msra.mxu0 0.0
  %8283 = vmatprep.subr.mxu0 0.0
  %8284 = vmatpush1.xpose.msra.mxu0 0.0
  %8285 = vmatprep.subr.mxu0 0.0
  %8286 = vmatpush1.xpose.msra.mxu0 0.0
  %8287 = vmatprep.subr.mxu0 0.0
  %8288 = vmatpush1.xpose.msra.mxu0 0.0
  %8289 = vmatprep.subr.mxu0 0.0
  %8290 = vmatpush1.xpose.msra.mxu0 0.0
  %8291 = vmatprep.subr.mxu0 0.0
  %8292 = vmatpush1.xpose.msra.mxu0 0.0
  %8293 = vmatprep.subr.mxu0 0.0
  %8294 = vmatpush1.xpose.msra.mxu0 0.0
  %8295 = vmatprep.subr.mxu0 0.0
  %8296 = vmatpush1.xpose.msra.mxu0 0.0
  %8297 = vmatprep.subr.mxu0 0.0
  %8298 = vmatpush1.xpose.msra.mxu0 0.0
  %8299 = vmatprep.subr.mxu0 0.0
  %8300 = vmatpush1.xpose.msra.mxu0 0.0
  %8301 = vmatprep.subr.mxu0 0.0
  %8302 = vmatpush1.xpose.msra.mxu0 0.0
  %8303 = vmatprep.subr.mxu0 0.0
  %8304 = vmatpush1.xpose.msra.mxu0 0.0
  %8305 = vmatprep.subr.mxu0 0.0
  %8306 = vmatpush1.xpose.msra.mxu0 %v8275
  %8307 = vmatprep.subr.mxu0 0.0
  %8308 = vmatpush1.xpose.msra.mxu0 %v8273
  %8309 = vmatprep.subr.mxu0 0.0
  %8310 = vmatpush2.xpose.msra.mxu0 0.0
  %8311 = vmatprep.subr.mxu0 0.0
  %8312 = vmatpush2.xpose.msra.mxu0 0.0
  %8313 = vmatprep.subr.mxu0 0.0
  %8314 = vmatpush2.xpose.msra.mxu0 0.0
  %8315 = vmatprep.subr.mxu0 0.0
  %8316 = vmatpush2.xpose.msra.mxu0 0.0
  %8317 = vmatprep.subr.mxu0 0.0
  %8318 = vmatpush2.xpose.msra.mxu0 0.0
  %8319 = vmatprep.subr.mxu0 0.0
  %8320 = vmatpush2.xpose.msra.mxu0 0.0
  %8321 = vmatprep.subr.mxu0 0.0
  %8322 = vmatpush2.xpose.msra.mxu0 0.0
  %8323 = vmatprep.subr.mxu0 0.0
  %8324 = vmatpush2.xpose.msra.mxu0 0.0
  %8325 = vmatprep.subr.mxu0 0.0
  %8326 = vmatpush2.xpose.msra.mxu0 0.0
  %8327 = vmatprep.subr.mxu0 0.0
  %8328 = vmatpush2.xpose.msra.mxu0 0.0
  %8329 = vmatprep.subr.mxu0 0.0
  %8330 = vmatpush2.xpose.msra.mxu0 0.0
  %8331 = vmatprep.subr.mxu0 0.0
  %8332 = vmatpush2.xpose.msra.mxu0 0.0
  %8333 = vmatprep.subr.mxu0 0.0
  %8334 = vmatpush2.xpose.msra.mxu0 0.0
  %8335 = vmatprep.subr.mxu0 0.0
  %8336 = vmatpush2.xpose.msra.mxu0 0.0
  %8337 = vmatprep.subr.mxu0 0.0
  %8338 = vmatpush2.xpose.msra.mxu0 0.0
  %8339 = vmatprep.subr.mxu0 0.0
  %8340 = vmatpush2.xpose.msra.mxu0 0.0
  %8341 = vmatprep.mubr.f32.mxu0 0.0
  %8342 = vmatmul.mubr.f32.gmra.mxu0 %v8269
  %v8343 = vpop.f32.mrf.mxu0
  %v8344 = vadd.f32 %v6268, %v8343
  %v8345 = vpop.f32.mrf.mxu0
  %8346 = vmatprep.mubr.f32.mxu0 0.0
  %8347 = vmatmul.mubr.f32.gmra.mxu0 %v8271
  %v8348 = vpop.f32.mrf.mxu0
  %v8349 = vadd.f32 %v6269, %v8348
  %v8350 = vpop.f32.mrf.mxu0
  %8351 = vdwg.mxu0
  %8352 = vrot.lane.b32.xlu0 %v6291, 112
  %v8353 = vpop.permute.xlu0 %8352
  %8354 = vrot.lane.b32.xlu0 %v6292, 112
  %v8355 = vpop.permute.xlu0 %8354
  %8356 = vrot.lane.b32.xlu0 %v6215, 80
  %v8357 = vpop.permute.xlu0 %8356
  %8358 = vrot.lane.b32.xlu0 %v6220, 80
  %v8359 = vpop.permute.xlu0 %8358
  %v8360 = vsel %vm748, %v8353, 0
  %v8362 = vsel %vm748, %v8355, 0
  %v8364 = vsel %vm748, %v8357, 0
  %v8366 = vsel %vm748, %v8359, 0
  %8368 = vmatprep.subr.mxu0 0.0
  %8369 = vmatpush1.xpose.msra.mxu0 0.0
  %8370 = vmatprep.subr.mxu0 0.0
  %8371 = vmatpush1.xpose.msra.mxu0 0.0
  %8372 = vmatprep.subr.mxu0 0.0
  %8373 = vmatpush1.xpose.msra.mxu0 0.0
  %8374 = vmatprep.subr.mxu0 0.0
  %8375 = vmatpush1.xpose.msra.mxu0 0.0
  %8376 = vmatprep.subr.mxu0 0.0
  %8377 = vmatpush1.xpose.msra.mxu0 0.0
  %8378 = vmatprep.subr.mxu0 0.0
  %8379 = vmatpush1.xpose.msra.mxu0 0.0
  %8380 = vmatprep.subr.mxu0 0.0
  %8381 = vmatpush1.xpose.msra.mxu0 0.0
  %8382 = vmatprep.subr.mxu0 0.0
  %8383 = vmatpush1.xpose.msra.mxu0 0.0
  %8384 = vmatprep.subr.mxu0 0.0
  %8385 = vmatpush1.xpose.msra.mxu0 0.0
  %8386 = vmatprep.subr.mxu0 0.0
  %8387 = vmatpush1.xpose.msra.mxu0 0.0
  %8388 = vmatprep.subr.mxu0 0.0
  %8389 = vmatpush1.xpose.msra.mxu0 0.0
  %8390 = vmatprep.subr.mxu0 0.0
  %8391 = vmatpush1.xpose.msra.mxu0 0.0
  %8392 = vmatprep.subr.mxu0 0.0
  %8393 = vmatpush1.xpose.msra.mxu0 0.0
  %8394 = vmatprep.subr.mxu0 0.0
  %8395 = vmatpush1.xpose.msra.mxu0 0.0
  %8396 = vmatprep.subr.mxu0 0.0
  %8397 = vmatpush1.xpose.msra.mxu0 %v8366
  %8398 = vmatprep.subr.mxu0 0.0
  %8399 = vmatpush1.xpose.msra.mxu0 %v8364
  %8400 = vmatprep.subr.mxu0 0.0
  %8401 = vmatpush2.xpose.msra.mxu0 0.0
  %8402 = vmatprep.subr.mxu0 0.0
  %8403 = vmatpush2.xpose.msra.mxu0 0.0
  %8404 = vmatprep.subr.mxu0 0.0
  %8405 = vmatpush2.xpose.msra.mxu0 0.0
  %8406 = vmatprep.subr.mxu0 0.0
  %8407 = vmatpush2.xpose.msra.mxu0 0.0
  %8408 = vmatprep.subr.mxu0 0.0
  %8409 = vmatpush2.xpose.msra.mxu0 0.0
  %8410 = vmatprep.subr.mxu0 0.0
  %8411 = vmatpush2.xpose.msra.mxu0 0.0
  %8412 = vmatprep.subr.mxu0 0.0
  %8413 = vmatpush2.xpose.msra.mxu0 0.0
  %8414 = vmatprep.subr.mxu0 0.0
  %8415 = vmatpush2.xpose.msra.mxu0 0.0
  %8416 = vmatprep.subr.mxu0 0.0
  %8417 = vmatpush2.xpose.msra.mxu0 0.0
  %8418 = vmatprep.subr.mxu0 0.0
  %8419 = vmatpush2.xpose.msra.mxu0 0.0
  %8420 = vmatprep.subr.mxu0 0.0
  %8421 = vmatpush2.xpose.msra.mxu0 0.0
  %8422 = vmatprep.subr.mxu0 0.0
  %8423 = vmatpush2.xpose.msra.mxu0 0.0
  %8424 = vmatprep.subr.mxu0 0.0
  %8425 = vmatpush2.xpose.msra.mxu0 0.0
  %8426 = vmatprep.subr.mxu0 0.0
  %8427 = vmatpush2.xpose.msra.mxu0 0.0
  %8428 = vmatprep.subr.mxu0 0.0
  %8429 = vmatpush2.xpose.msra.mxu0 0.0
  %8430 = vmatprep.subr.mxu0 0.0
  %8431 = vmatpush2.xpose.msra.mxu0 0.0
  %8432 = vmatprep.mubr.f32.mxu0 0.0
  %8433 = vmatmul.mubr.f32.gmra.mxu0 %v8360
  %v8434 = vpop.f32.mrf.mxu0
  %v8435 = vadd.f32 %v6270, %v8434
  %v8436 = vpop.f32.mrf.mxu0
  %8437 = vmatprep.mubr.f32.mxu0 0.0
  %8438 = vmatmul.mubr.f32.gmra.mxu0 %v8362
  %v8439 = vpop.f32.mrf.mxu0
  %v8440 = vadd.f32 %v6271, %v8439
  %v8441 = vpop.f32.mrf.mxu0
  %8442 = vdwg.mxu0
  %8443 = vrot.lane.b32.xlu0 %v6293, 112
  %v8444 = vpop.permute.xlu0 %8443
  %8445 = vrot.lane.b32.xlu0 %v6294, 112
  %v8446 = vpop.permute.xlu0 %8445
  %8447 = vrot.lane.b32.xlu0 %v6225, 80
  %v8448 = vpop.permute.xlu0 %8447
  %8449 = vrot.lane.b32.xlu0 %v6230, 80
  %v8450 = vpop.permute.xlu0 %8449
  %v8451 = vsel %vm748, %v8444, 0
  %v8453 = vsel %vm748, %v8446, 0
  %v8455 = vsel %vm748, %v8448, 0
  %v8457 = vsel %vm748, %v8450, 0
  %8459 = vmatprep.subr.mxu0 0.0
  %8460 = vmatpush1.xpose.msra.mxu0 0.0
  %8461 = vmatprep.subr.mxu0 0.0
  %8462 = vmatpush1.xpose.msra.mxu0 0.0
  %8463 = vmatprep.subr.mxu0 0.0
  %8464 = vmatpush1.xpose.msra.mxu0 0.0
  %8465 = vmatprep.subr.mxu0 0.0
  %8466 = vmatpush1.xpose.msra.mxu0 0.0
  %8467 = vmatprep.subr.mxu0 0.0
  %8468 = vmatpush1.xpose.msra.mxu0 0.0
  %8469 = vmatprep.subr.mxu0 0.0
  %8470 = vmatpush1.xpose.msra.mxu0 0.0
  %8471 = vmatprep.subr.mxu0 0.0
  %8472 = vmatpush1.xpose.msra.mxu0 0.0
  %8473 = vmatprep.subr.mxu0 0.0
  %8474 = vmatpush1.xpose.msra.mxu0 0.0
  %8475 = vmatprep.subr.mxu0 0.0
  %8476 = vmatpush1.xpose.msra.mxu0 0.0
  %8477 = vmatprep.subr.mxu0 0.0
  %8478 = vmatpush1.xpose.msra.mxu0 0.0
  %8479 = vmatprep.subr.mxu0 0.0
  %8480 = vmatpush1.xpose.msra.mxu0 0.0
  %8481 = vmatprep.subr.mxu0 0.0
  %8482 = vmatpush1.xpose.msra.mxu0 0.0
  %8483 = vmatprep.subr.mxu0 0.0
  %8484 = vmatpush1.xpose.msra.mxu0 0.0
  %8485 = vmatprep.subr.mxu0 0.0
  %8486 = vmatpush1.xpose.msra.mxu0 0.0
  %8487 = vmatprep.subr.mxu0 0.0
  %8488 = vmatpush1.xpose.msra.mxu0 %v8457
  %8489 = vmatprep.subr.mxu0 0.0
  %8490 = vmatpush1.xpose.msra.mxu0 %v8455
  %8491 = vmatprep.subr.mxu0 0.0
  %8492 = vmatpush2.xpose.msra.mxu0 0.0
  %8493 = vmatprep.subr.mxu0 0.0
  %8494 = vmatpush2.xpose.msra.mxu0 0.0
  %8495 = vmatprep.subr.mxu0 0.0
  %8496 = vmatpush2.xpose.msra.mxu0 0.0
  %8497 = vmatprep.subr.mxu0 0.0
  %8498 = vmatpush2.xpose.msra.mxu0 0.0
  %8499 = vmatprep.subr.mxu0 0.0
  %8500 = vmatpush2.xpose.msra.mxu0 0.0
  %8501 = vmatprep.subr.mxu0 0.0
  %8502 = vmatpush2.xpose.msra.mxu0 0.0
  %8503 = vmatprep.subr.mxu0 0.0
  %8504 = vmatpush2.xpose.msra.mxu0 0.0
  %8505 = vmatprep.subr.mxu0 0.0
  %8506 = vmatpush2.xpose.msra.mxu0 0.0
  %8507 = vmatprep.subr.mxu0 0.0
  %8508 = vmatpush2.xpose.msra.mxu0 0.0
  %8509 = vmatprep.subr.mxu0 0.0
  %8510 = vmatpush2.xpose.msra.mxu0 0.0
  %8511 = vmatprep.subr.mxu0 0.0
  %8512 = vmatpush2.xpose.msra.mxu0 0.0
  %8513 = vmatprep.subr.mxu0 0.0
  %8514 = vmatpush2.xpose.msra.mxu0 0.0
  %8515 = vmatprep.subr.mxu0 0.0
  %8516 = vmatpush2.xpose.msra.mxu0 0.0
  %8517 = vmatprep.subr.mxu0 0.0
  %8518 = vmatpush2.xpose.msra.mxu0 0.0
  %8519 = vmatprep.subr.mxu0 0.0
  %8520 = vmatpush2.xpose.msra.mxu0 0.0
  %8521 = vmatprep.subr.mxu0 0.0
  %8522 = vmatpush2.xpose.msra.mxu0 0.0
  %8523 = vmatprep.mubr.f32.mxu0 0.0
  %8524 = vmatmul.mubr.f32.gmra.mxu0 %v8451
  %v8525 = vpop.f32.mrf.mxu0
  %v8526 = vadd.f32 %v6272, %v8525
  %v8527 = vpop.f32.mrf.mxu0
  %8528 = vmatprep.mubr.f32.mxu0 0.0
  %8529 = vmatmul.mubr.f32.gmra.mxu0 %v8453
  %v8530 = vpop.f32.mrf.mxu0
  %v8531 = vadd.f32 %v6273, %v8530
  %v8532 = vpop.f32.mrf.mxu0
  %8533 = vdwg.mxu0
  %8534 = vrot.lane.b32.xlu0 %v6295, 112
  %v8535 = vpop.permute.xlu0 %8534
  %8536 = vrot.lane.b32.xlu0 %v6296, 112
  %v8537 = vpop.permute.xlu0 %8536
  %8538 = vrot.lane.b32.xlu0 %v6235, 80
  %v8539 = vpop.permute.xlu0 %8538
  %8540 = vrot.lane.b32.xlu0 %v6240, 80
  %v8541 = vpop.permute.xlu0 %8540
  %v8542 = vsel %vm748, %v8535, 0
  %v8544 = vsel %vm748, %v8537, 0
  %v8546 = vsel %vm748, %v8539, 0
  %v8548 = vsel %vm748, %v8541, 0
  %8550 = vmatprep.subr.mxu0 0.0
  %8551 = vmatpush1.xpose.msra.mxu0 0.0
  %8552 = vmatprep.subr.mxu0 0.0
  %8553 = vmatpush1.xpose.msra.mxu0 0.0
  %8554 = vmatprep.subr.mxu0 0.0
  %8555 = vmatpush1.xpose.msra.mxu0 0.0
  %8556 = vmatprep.subr.mxu0 0.0
  %8557 = vmatpush1.xpose.msra.mxu0 0.0
  %8558 = vmatprep.subr.mxu0 0.0
  %8559 = vmatpush1.xpose.msra.mxu0 0.0
  %8560 = vmatprep.subr.mxu0 0.0
  %8561 = vmatpush1.xpose.msra.mxu0 0.0
  %8562 = vmatprep.subr.mxu0 0.0
  %8563 = vmatpush1.xpose.msra.mxu0 0.0
  %8564 = vmatprep.subr.mxu0 0.0
  %8565 = vmatpush1.xpose.msra.mxu0 0.0
  %8566 = vmatprep.subr.mxu0 0.0
  %8567 = vmatpush1.xpose.msra.mxu0 0.0
  %8568 = vmatprep.subr.mxu0 0.0
  %8569 = vmatpush1.xpose.msra.mxu0 0.0
  %8570 = vmatprep.subr.mxu0 0.0
  %8571 = vmatpush1.xpose.msra.mxu0 0.0
  %8572 = vmatprep.subr.mxu0 0.0
  %8573 = vmatpush1.xpose.msra.mxu0 0.0
  %8574 = vmatprep.subr.mxu0 0.0
  %8575 = vmatpush1.xpose.msra.mxu0 0.0
  %8576 = vmatprep.subr.mxu0 0.0
  %8577 = vmatpush1.xpose.msra.mxu0 0.0
  %8578 = vmatprep.subr.mxu0 0.0
  %8579 = vmatpush1.xpose.msra.mxu0 %v8548
  %8580 = vmatprep.subr.mxu0 0.0
  %8581 = vmatpush1.xpose.msra.mxu0 %v8546
  %8582 = vmatprep.subr.mxu0 0.0
  %8583 = vmatpush2.xpose.msra.mxu0 0.0
  %8584 = vmatprep.subr.mxu0 0.0
  %8585 = vmatpush2.xpose.msra.mxu0 0.0
  %8586 = vmatprep.subr.mxu0 0.0
  %8587 = vmatpush2.xpose.msra.mxu0 0.0
  %8588 = vmatprep.subr.mxu0 0.0
  %8589 = vmatpush2.xpose.msra.mxu0 0.0
  %8590 = vmatprep.subr.mxu0 0.0
  %8591 = vmatpush2.xpose.msra.mxu0 0.0
  %8592 = vmatprep.subr.mxu0 0.0
  %8593 = vmatpush2.xpose.msra.mxu0 0.0
  %8594 = vmatprep.subr.mxu0 0.0
  %8595 = vmatpush2.xpose.msra.mxu0 0.0
  %8596 = vmatprep.subr.mxu0 0.0
  %8597 = vmatpush2.xpose.msra.mxu0 0.0
  %8598 = vmatprep.subr.mxu0 0.0
  %8599 = vmatpush2.xpose.msra.mxu0 0.0
  %8600 = vmatprep.subr.mxu0 0.0
  %8601 = vmatpush2.xpose.msra.mxu0 0.0
  %8602 = vmatprep.subr.mxu0 0.0
  %8603 = vmatpush2.xpose.msra.mxu0 0.0
  %8604 = vmatprep.subr.mxu0 0.0
  %8605 = vmatpush2.xpose.msra.mxu0 0.0
  %8606 = vmatprep.subr.mxu0 0.0
  %8607 = vmatpush2.xpose.msra.mxu0 0.0
  %8608 = vmatprep.subr.mxu0 0.0
  %8609 = vmatpush2.xpose.msra.mxu0 0.0
  %8610 = vmatprep.subr.mxu0 0.0
  %8611 = vmatpush2.xpose.msra.mxu0 0.0
  %8612 = vmatprep.subr.mxu0 0.0
  %8613 = vmatpush2.xpose.msra.mxu0 0.0
  %8614 = vmatprep.mubr.f32.mxu0 0.0
  %8615 = vmatmul.mubr.f32.gmra.mxu0 %v8542
  %v8616 = vpop.f32.mrf.mxu0
  %v8617 = vadd.f32 %v6274, %v8616
  %v8618 = vpop.f32.mrf.mxu0
  %8619 = vmatprep.mubr.f32.mxu0 0.0
  %8620 = vmatmul.mubr.f32.gmra.mxu0 %v8544
  %v8621 = vpop.f32.mrf.mxu0
  %v8622 = vadd.f32 %v6275, %v8621
  %v8623 = vpop.f32.mrf.mxu0
  %8624 = vdwg.mxu0
  %v8625 = vsel %vm748, %v7980, -inf
  %8626 = vmax.xlane.f32.xlu0 %v8625
  %v8627 = vpop.xlane.xlu0 %8626
  %v8628 = vsel %vm748, %v7985, -inf
  %8629 = vmax.xlane.f32.xlu0 %v8628
  %v8630 = vpop.xlane.xlu0 %8629
  %v8631 = vsel %vm748, %v8071, -inf
  %8632 = vmax.xlane.f32.xlu0 %v8631
  %v8633 = vpop.xlane.xlu0 %8632
  %v8634 = vsel %vm748, %v8076, -inf
  %8635 = vmax.xlane.f32.xlu0 %v8634
  %v8636 = vpop.xlane.xlu0 %8635
  %v8637 = vsel %vm748, %v8162, -inf
  %8638 = vmax.xlane.f32.xlu0 %v8637
  %v8639 = vpop.xlane.xlu0 %8638
  %v8640 = vsel %vm748, %v8167, -inf
  %8641 = vmax.xlane.f32.xlu0 %v8640
  %v8642 = vpop.xlane.xlu0 %8641
  %v8643 = vsel %vm748, %v8253, -inf
  %8644 = vmax.xlane.f32.xlu0 %v8643
  %v8645 = vpop.xlane.xlu0 %8644
  %v8646 = vsel %vm748, %v8258, -inf
  %8647 = vmax.xlane.f32.xlu0 %v8646
  %v8648 = vpop.xlane.xlu0 %8647
  %v8649 = vsel %vm748, %v8344, -inf
  %8650 = vmax.xlane.f32.xlu0 %v8649
  %v8651 = vpop.xlane.xlu0 %8650
  %v8652 = vsel %vm748, %v8349, -inf
  %8653 = vmax.xlane.f32.xlu0 %v8652
  %v8654 = vpop.xlane.xlu0 %8653
  %v8655 = vsel %vm748, %v8435, -inf
  %8656 = vmax.xlane.f32.xlu0 %v8655
  %v8657 = vpop.xlane.xlu0 %8656
  %v8658 = vsel %vm748, %v8440, -inf
  %8659 = vmax.xlane.f32.xlu0 %v8658
  %v8660 = vpop.xlane.xlu0 %8659
  %v8661 = vsel %vm748, %v8526, -inf
  %8662 = vmax.xlane.f32.xlu0 %v8661
  %v8663 = vpop.xlane.xlu0 %8662
  %v8664 = vsel %vm748, %v8531, -inf
  %8665 = vmax.xlane.f32.xlu0 %v8664
  %v8666 = vpop.xlane.xlu0 %8665
  %v8667 = vsel %vm748, %v8617, -inf
  %8668 = vmax.xlane.f32.xlu0 %v8667
  %v8669 = vpop.xlane.xlu0 %8668
  %v8670 = vsel %vm748, %v8622, -inf
  %8671 = vmax.xlane.f32.xlu0 %v8670
  %v8672 = vpop.xlane.xlu0 %8671
  %v8673 = vsub.f32 %v7980, %v8627
  %v8674 = vsub.f32 %v7985, %v8630
  %v8675 = vsub.f32 %v8071, %v8633
  %v8676 = vsub.f32 %v8076, %v8636
  %v8677 = vsub.f32 %v8162, %v8639
  %v8678 = vsub.f32 %v8167, %v8642
  %v8679 = vsub.f32 %v8253, %v8645
  %v8680 = vsub.f32 %v8258, %v8648
  %v8681 = vsub.f32 %v8344, %v8651
  %v8682 = vsub.f32 %v8349, %v8654
  %v8683 = vsub.f32 %v8435, %v8657
  %v8684 = vsub.f32 %v8440, %v8660
  %v8685 = vsub.f32 %v8526, %v8663
  %v8686 = vsub.f32 %v8531, %v8666
  %v8687 = vsub.f32 %v8617, %v8669
  %v8688 = vsub.f32 %v8622, %v8672
  %v8689 = vmul.f32 %v8673, 1.442695
  %v8690 = vpow.pop %v8689
  %v8691 = vmul.f32 %v8674, 1.442695
  %v8692 = vpow.pop %v8691
  %v8693 = vmul.f32 %v8675, 1.442695
  %v8694 = vpow.pop %v8693
  %v8695 = vmul.f32 %v8676, 1.442695
  %v8696 = vpow.pop %v8695
  %v8697 = vmul.f32 %v8677, 1.442695
  %v8698 = vpow.pop %v8697
  %v8699 = vmul.f32 %v8678, 1.442695
  %v8700 = vpow.pop %v8699
  %v8701 = vmul.f32 %v8679, 1.442695
  %v8702 = vpow.pop %v8701
  %v8703 = vmul.f32 %v8680, 1.442695
  %v8704 = vpow.pop %v8703
  %v8705 = vmul.f32 %v8681, 1.442695
  %v8706 = vpow.pop %v8705
  %v8707 = vmul.f32 %v8682, 1.442695
  %v8708 = vpow.pop %v8707
  %v8709 = vmul.f32 %v8683, 1.442695
  %v8710 = vpow.pop %v8709
  %v8711 = vmul.f32 %v8684, 1.442695
  %v8712 = vpow.pop %v8711
  %v8713 = vmul.f32 %v8685, 1.442695
  %v8714 = vpow.pop %v8713
  %v8715 = vmul.f32 %v8686, 1.442695
  %v8716 = vpow.pop %v8715
  %v8717 = vmul.f32 %v8687, 1.442695
  %v8718 = vpow.pop %v8717
  %v8719 = vmul.f32 %v8688, 1.442695
  %v8720 = vpow.pop %v8719
  %v8721 = vsel %vm748, %v8690, 0.0
  %8722 = vadd.xlane.f32.xlu0 %v8721
  %v8723 = vpop.xlane.xlu0 %8722
  %v8724 = vsel %vm748, %v8692, 0.0
  %8725 = vadd.xlane.f32.xlu0 %v8724
  %v8726 = vpop.xlane.xlu0 %8725
  %v8727 = vsel %vm748, %v8694, 0.0
  %8728 = vadd.xlane.f32.xlu0 %v8727
  %v8729 = vpop.xlane.xlu0 %8728
  %v8730 = vsel %vm748, %v8696, 0.0
  %8731 = vadd.xlane.f32.xlu0 %v8730
  %v8732 = vpop.xlane.xlu0 %8731
  %v8733 = vsel %vm748, %v8698, 0.0
  %8734 = vadd.xlane.f32.xlu0 %v8733
  %v8735 = vpop.xlane.xlu0 %8734
  %v8736 = vsel %vm748, %v8700, 0.0
  %8737 = vadd.xlane.f32.xlu0 %v8736
  %v8738 = vpop.xlane.xlu0 %8737
  %v8739 = vsel %vm748, %v8702, 0.0
  %8740 = vadd.xlane.f32.xlu0 %v8739
  %v8741 = vpop.xlane.xlu0 %8740
  %v8742 = vsel %vm748, %v8704, 0.0
  %8743 = vadd.xlane.f32.xlu0 %v8742
  %v8744 = vpop.xlane.xlu0 %8743
  %v8745 = vsel %vm748, %v8706, 0.0
  %8746 = vadd.xlane.f32.xlu0 %v8745
  %v8747 = vpop.xlane.xlu0 %8746
  %v8748 = vsel %vm748, %v8708, 0.0
  %8749 = vadd.xlane.f32.xlu0 %v8748
  %v8750 = vpop.xlane.xlu0 %8749
  %v8751 = vsel %vm748, %v8710, 0.0
  %8752 = vadd.xlane.f32.xlu0 %v8751
  %v8753 = vpop.xlane.xlu0 %8752
  %v8754 = vsel %vm748, %v8712, 0.0
  %8755 = vadd.xlane.f32.xlu0 %v8754
  %v8756 = vpop.xlane.xlu0 %8755
  %v8757 = vsel %vm748, %v8714, 0.0
  %8758 = vadd.xlane.f32.xlu0 %v8757
  %v8759 = vpop.xlane.xlu0 %8758
  %v8760 = vsel %vm748, %v8716, 0.0
  %8761 = vadd.xlane.f32.xlu0 %v8760
  %v8762 = vpop.xlane.xlu0 %8761
  %v8763 = vsel %vm748, %v8718, 0.0
  %8764 = vadd.xlane.f32.xlu0 %v8763
  %v8765 = vpop.xlane.xlu0 %8764
  %v8766 = vsel %vm748, %v8720, 0.0
  %8767 = vadd.xlane.f32.xlu0 %v8766
  %v8768 = vpop.xlane.xlu0 %8767
  %v8769 = vrcp.pop %v8723
  %v8770 = vrcp.pop %v8726
  %v8771 = vrcp.pop %v8729
  %v8772 = vrcp.pop %v8732
  %v8773 = vrcp.pop %v8735
  %v8774 = vrcp.pop %v8738
  %v8775 = vrcp.pop %v8741
  %v8776 = vrcp.pop %v8744
  %v8777 = vrcp.pop %v8747
  %v8778 = vrcp.pop %v8750
  %v8779 = vrcp.pop %v8753
  %v8780 = vrcp.pop %v8756
  %v8781 = vrcp.pop %v8759
  %v8782 = vrcp.pop %v8762
  %v8783 = vrcp.pop %v8765
  %v8784 = vrcp.pop %v8768
  %v8785 = vmul.f32 %v8690, %v8769
  %v8786 = vmul.f32 %v8692, %v8770
  %v8787 = vmul.f32 %v8694, %v8771
  %v8788 = vmul.f32 %v8696, %v8772
  %v8789 = vmul.f32 %v8698, %v8773
  %v8790 = vmul.f32 %v8700, %v8774
  %v8791 = vmul.f32 %v8702, %v8775
  %v8792 = vmul.f32 %v8704, %v8776
  %v8793 = vmul.f32 %v8706, %v8777
  %v8794 = vmul.f32 %v8708, %v8778
  %v8795 = vmul.f32 %v8710, %v8779
  %v8796 = vmul.f32 %v8712, %v8780
  %v8797 = vmul.f32 %v8714, %v8781
  %v8798 = vmul.f32 %v8716, %v8782
  %v8799 = vmul.f32 %v8718, %v8783
  %v8800 = vmul.f32 %v8720, %v8784
  %8801 = vrot.lane.b32.xlu0 %v6165, 48
  %v8802 = vpop.permute.xlu0 %8801
  %8803 = vrot.lane.b32.xlu0 %v6170, 48
  %v8804 = vpop.permute.xlu0 %8803
  %v8808 = vsel %vm748, %v8785, 0
  %v8811 = vsel %vm748, %v8786, 0
  %8813 = vmatprep.subr.mxu0 0.0
  %8814 = vmatpush1.msra.mxu0 0.0
  %8815 = vmatprep.subr.mxu0 0.0
  %8816 = vmatpush1.msra.mxu0 0.0
  %8817 = vmatprep.subr.mxu0 0.0
  %8818 = vmatpush1.msra.mxu0 0.0
  %8819 = vmatprep.subr.mxu0 0.0
  %8820 = vmatpush1.msra.mxu0 0.0
  %8821 = vmatprep.subr.mxu0 0.0
  %8822 = vmatpush1.msra.mxu0 0.0
  %8823 = vmatprep.subr.mxu0 0.0
  %8824 = vmatpush1.msra.mxu0 0.0
  %8825 = vmatprep.subr.mxu0 0.0
  %8826 = vmatpush1.msra.mxu0 0.0
  %8827 = vmatprep.subr.mxu0 0.0
  %8828 = vmatpush1.msra.mxu0 0.0
  %8829 = vmatprep.subr.mxu0 0.0
  %8830 = vmatpush1.msra.mxu0 0.0
  %8831 = vmatprep.subr.mxu0 0.0
  %8832 = vmatpush1.msra.mxu0 0.0
  %8833 = vmatprep.subr.mxu0 0.0
  %8834 = vmatpush1.msra.mxu0 0.0
  %8835 = vmatprep.subr.mxu0 0.0
  %8836 = vmatpush1.msra.mxu0 0.0
  %8837 = vmatprep.subr.mxu0 0.0
  %8838 = vmatpush1.msra.mxu0 0.0
  %8839 = vmatprep.subr.mxu0 0.0
  %8840 = vmatpush1.msra.mxu0 0.0
  %8841 = vmatprep.subr.mxu0 0.0
  %8842 = vmatpush1.msra.mxu0 %v8804
  %8843 = vmatprep.subr.mxu0 0.0
  %8844 = vmatpush1.msra.mxu0 %v8802
  %8845 = vmatprep.subr.mxu0 0.0
  %8846 = vmatpush2.msra.mxu0 0.0
  %8847 = vmatprep.subr.mxu0 0.0
  %8848 = vmatpush2.msra.mxu0 0.0
  %8849 = vmatprep.subr.mxu0 0.0
  %8850 = vmatpush2.msra.mxu0 0.0
  %8851 = vmatprep.subr.mxu0 0.0
  %8852 = vmatpush2.msra.mxu0 0.0
  %8853 = vmatprep.subr.mxu0 0.0
  %8854 = vmatpush2.msra.mxu0 0.0
  %8855 = vmatprep.subr.mxu0 0.0
  %8856 = vmatpush2.msra.mxu0 0.0
  %8857 = vmatprep.subr.mxu0 0.0
  %8858 = vmatpush2.msra.mxu0 0.0
  %8859 = vmatprep.subr.mxu0 0.0
  %8860 = vmatpush2.msra.mxu0 0.0
  %8861 = vmatprep.subr.mxu0 0.0
  %8862 = vmatpush2.msra.mxu0 0.0
  %8863 = vmatprep.subr.mxu0 0.0
  %8864 = vmatpush2.msra.mxu0 0.0
  %8865 = vmatprep.subr.mxu0 0.0
  %8866 = vmatpush2.msra.mxu0 0.0
  %8867 = vmatprep.subr.mxu0 0.0
  %8868 = vmatpush2.msra.mxu0 0.0
  %8869 = vmatprep.subr.mxu0 0.0
  %8870 = vmatpush2.msra.mxu0 0.0
  %8871 = vmatprep.subr.mxu0 0.0
  %8872 = vmatpush2.msra.mxu0 0.0
  %8873 = vmatprep.subr.mxu0 0.0
  %8874 = vmatpush2.msra.mxu0 0.0
  %8875 = vmatprep.subr.mxu0 0.0
  %8876 = vmatpush2.msra.mxu0 0.0
  %8877 = vmatprep.mubr.f32.mxu0 0.0
  %8878 = vmatmul.mubr.f32.gmra.mxu0 %v8808
  %v8879 = vpop.f32.mrf.mxu0
  %v8880 = vadd.f32 0.0, %v8879
  %v8881 = vpop.f32.mrf.mxu0
  %8882 = vmatprep.mubr.f32.mxu0 0.0
  %8883 = vmatmul.mubr.f32.gmra.mxu0 %v8811
  %v8884 = vpop.f32.mrf.mxu0
  %v8885 = vadd.f32 0.0, %v8884
  %v8886 = vpop.f32.mrf.mxu0
  %8887 = vdwg.mxu0
  %8888 = vrot.lane.b32.xlu0 %v6175, 48
  %v8889 = vpop.permute.xlu0 %8888
  %8890 = vrot.lane.b32.xlu0 %v6180, 48
  %v8891 = vpop.permute.xlu0 %8890
  %v8895 = vsel %vm748, %v8787, 0
  %v8898 = vsel %vm748, %v8788, 0
  %8900 = vmatprep.subr.mxu0 0.0
  %8901 = vmatpush1.msra.mxu0 0.0
  %8902 = vmatprep.subr.mxu0 0.0
  %8903 = vmatpush1.msra.mxu0 0.0
  %8904 = vmatprep.subr.mxu0 0.0
  %8905 = vmatpush1.msra.mxu0 0.0
  %8906 = vmatprep.subr.mxu0 0.0
  %8907 = vmatpush1.msra.mxu0 0.0
  %8908 = vmatprep.subr.mxu0 0.0
  %8909 = vmatpush1.msra.mxu0 0.0
  %8910 = vmatprep.subr.mxu0 0.0
  %8911 = vmatpush1.msra.mxu0 0.0
  %8912 = vmatprep.subr.mxu0 0.0
  %8913 = vmatpush1.msra.mxu0 0.0
  %8914 = vmatprep.subr.mxu0 0.0
  %8915 = vmatpush1.msra.mxu0 0.0
  %8916 = vmatprep.subr.mxu0 0.0
  %8917 = vmatpush1.msra.mxu0 0.0
  %8918 = vmatprep.subr.mxu0 0.0
  %8919 = vmatpush1.msra.mxu0 0.0
  %8920 = vmatprep.subr.mxu0 0.0
  %8921 = vmatpush1.msra.mxu0 0.0
  %8922 = vmatprep.subr.mxu0 0.0
  %8923 = vmatpush1.msra.mxu0 0.0
  %8924 = vmatprep.subr.mxu0 0.0
  %8925 = vmatpush1.msra.mxu0 0.0
  %8926 = vmatprep.subr.mxu0 0.0
  %8927 = vmatpush1.msra.mxu0 0.0
  %8928 = vmatprep.subr.mxu0 0.0
  %8929 = vmatpush1.msra.mxu0 %v8891
  %8930 = vmatprep.subr.mxu0 0.0
  %8931 = vmatpush1.msra.mxu0 %v8889
  %8932 = vmatprep.subr.mxu0 0.0
  %8933 = vmatpush2.msra.mxu0 0.0
  %8934 = vmatprep.subr.mxu0 0.0
  %8935 = vmatpush2.msra.mxu0 0.0
  %8936 = vmatprep.subr.mxu0 0.0
  %8937 = vmatpush2.msra.mxu0 0.0
  %8938 = vmatprep.subr.mxu0 0.0
  %8939 = vmatpush2.msra.mxu0 0.0
  %8940 = vmatprep.subr.mxu0 0.0
  %8941 = vmatpush2.msra.mxu0 0.0
  %8942 = vmatprep.subr.mxu0 0.0
  %8943 = vmatpush2.msra.mxu0 0.0
  %8944 = vmatprep.subr.mxu0 0.0
  %8945 = vmatpush2.msra.mxu0 0.0
  %8946 = vmatprep.subr.mxu0 0.0
  %8947 = vmatpush2.msra.mxu0 0.0
  %8948 = vmatprep.subr.mxu0 0.0
  %8949 = vmatpush2.msra.mxu0 0.0
  %8950 = vmatprep.subr.mxu0 0.0
  %8951 = vmatpush2.msra.mxu0 0.0
  %8952 = vmatprep.subr.mxu0 0.0
  %8953 = vmatpush2.msra.mxu0 0.0
  %8954 = vmatprep.subr.mxu0 0.0
  %8955 = vmatpush2.msra.mxu0 0.0
  %8956 = vmatprep.subr.mxu0 0.0
  %8957 = vmatpush2.msra.mxu0 0.0
  %8958 = vmatprep.subr.mxu0 0.0
  %8959 = vmatpush2.msra.mxu0 0.0
  %8960 = vmatprep.subr.mxu0 0.0
  %8961 = vmatpush2.msra.mxu0 0.0
  %8962 = vmatprep.subr.mxu0 0.0
  %8963 = vmatpush2.msra.mxu0 0.0
  %8964 = vmatprep.mubr.f32.mxu0 0.0
  %8965 = vmatmul.mubr.f32.gmra.mxu0 %v8895
  %v8966 = vpop.f32.mrf.mxu0
  %v8967 = vadd.f32 0.0, %v8966
  %v8968 = vpop.f32.mrf.mxu0
  %8969 = vmatprep.mubr.f32.mxu0 0.0
  %8970 = vmatmul.mubr.f32.gmra.mxu0 %v8898
  %v8971 = vpop.f32.mrf.mxu0
  %v8972 = vadd.f32 0.0, %v8971
  %v8973 = vpop.f32.mrf.mxu0
  %8974 = vdwg.mxu0
  %8975 = vrot.lane.b32.xlu0 %v6185, 48
  %v8976 = vpop.permute.xlu0 %8975
  %8977 = vrot.lane.b32.xlu0 %v6190, 48
  %v8978 = vpop.permute.xlu0 %8977
  %v8982 = vsel %vm748, %v8789, 0
  %v8985 = vsel %vm748, %v8790, 0
  %8987 = vmatprep.subr.mxu0 0.0
  %8988 = vmatpush1.msra.mxu0 0.0
  %8989 = vmatprep.subr.mxu0 0.0
  %8990 = vmatpush1.msra.mxu0 0.0
  %8991 = vmatprep.subr.mxu0 0.0
  %8992 = vmatpush1.msra.mxu0 0.0
  %8993 = vmatprep.subr.mxu0 0.0
  %8994 = vmatpush1.msra.mxu0 0.0
  %8995 = vmatprep.subr.mxu0 0.0
  %8996 = vmatpush1.msra.mxu0 0.0
  %8997 = vmatprep.subr.mxu0 0.0
  %8998 = vmatpush1.msra.mxu0 0.0
  %8999 = vmatprep.subr.mxu0 0.0
  %9000 = vmatpush1.msra.mxu0 0.0
  %9001 = vmatprep.subr.mxu0 0.0
  %9002 = vmatpush1.msra.mxu0 0.0
  %9003 = vmatprep.subr.mxu0 0.0
  %9004 = vmatpush1.msra.mxu0 0.0
  %9005 = vmatprep.subr.mxu0 0.0
  %9006 = vmatpush1.msra.mxu0 0.0
  %9007 = vmatprep.subr.mxu0 0.0
  %9008 = vmatpush1.msra.mxu0 0.0
  %9009 = vmatprep.subr.mxu0 0.0
  %9010 = vmatpush1.msra.mxu0 0.0
  %9011 = vmatprep.subr.mxu0 0.0
  %9012 = vmatpush1.msra.mxu0 0.0
  %9013 = vmatprep.subr.mxu0 0.0
  %9014 = vmatpush1.msra.mxu0 0.0
  %9015 = vmatprep.subr.mxu0 0.0
  %9016 = vmatpush1.msra.mxu0 %v8978
  %9017 = vmatprep.subr.mxu0 0.0
  %9018 = vmatpush1.msra.mxu0 %v8976
  %9019 = vmatprep.subr.mxu0 0.0
  %9020 = vmatpush2.msra.mxu0 0.0
  %9021 = vmatprep.subr.mxu0 0.0
  %9022 = vmatpush2.msra.mxu0 0.0
  %9023 = vmatprep.subr.mxu0 0.0
  %9024 = vmatpush2.msra.mxu0 0.0
  %9025 = vmatprep.subr.mxu0 0.0
  %9026 = vmatpush2.msra.mxu0 0.0
  %9027 = vmatprep.subr.mxu0 0.0
  %9028 = vmatpush2.msra.mxu0 0.0
  %9029 = vmatprep.subr.mxu0 0.0
  %9030 = vmatpush2.msra.mxu0 0.0
  %9031 = vmatprep.subr.mxu0 0.0
  %9032 = vmatpush2.msra.mxu0 0.0
  %9033 = vmatprep.subr.mxu0 0.0
  %9034 = vmatpush2.msra.mxu0 0.0
  %9035 = vmatprep.subr.mxu0 0.0
  %9036 = vmatpush2.msra.mxu0 0.0
  %9037 = vmatprep.subr.mxu0 0.0
  %9038 = vmatpush2.msra.mxu0 0.0
  %9039 = vmatprep.subr.mxu0 0.0
  %9040 = vmatpush2.msra.mxu0 0.0
  %9041 = vmatprep.subr.mxu0 0.0
  %9042 = vmatpush2.msra.mxu0 0.0
  %9043 = vmatprep.subr.mxu0 0.0
  %9044 = vmatpush2.msra.mxu0 0.0
  %9045 = vmatprep.subr.mxu0 0.0
  %9046 = vmatpush2.msra.mxu0 0.0
  %9047 = vmatprep.subr.mxu0 0.0
  %9048 = vmatpush2.msra.mxu0 0.0
  %9049 = vmatprep.subr.mxu0 0.0
  %9050 = vmatpush2.msra.mxu0 0.0
  %9051 = vmatprep.mubr.f32.mxu0 0.0
  %9052 = vmatmul.mubr.f32.gmra.mxu0 %v8982
  %v9053 = vpop.f32.mrf.mxu0
  %v9054 = vadd.f32 0.0, %v9053
  %v9055 = vpop.f32.mrf.mxu0
  %9056 = vmatprep.mubr.f32.mxu0 0.0
  %9057 = vmatmul.mubr.f32.gmra.mxu0 %v8985
  %v9058 = vpop.f32.mrf.mxu0
  %v9059 = vadd.f32 0.0, %v9058
  %v9060 = vpop.f32.mrf.mxu0
  %9061 = vdwg.mxu0
  %9062 = vrot.lane.b32.xlu0 %v6195, 48
  %v9063 = vpop.permute.xlu0 %9062
  %9064 = vrot.lane.b32.xlu0 %v6200, 48
  %v9065 = vpop.permute.xlu0 %9064
  %v9069 = vsel %vm748, %v8791, 0
  %v9072 = vsel %vm748, %v8792, 0
  %9074 = vmatprep.subr.mxu0 0.0
  %9075 = vmatpush1.msra.mxu0 0.0
  %9076 = vmatprep.subr.mxu0 0.0
  %9077 = vmatpush1.msra.mxu0 0.0
  %9078 = vmatprep.subr.mxu0 0.0
  %9079 = vmatpush1.msra.mxu0 0.0
  %9080 = vmatprep.subr.mxu0 0.0
  %9081 = vmatpush1.msra.mxu0 0.0
  %9082 = vmatprep.subr.mxu0 0.0
  %9083 = vmatpush1.msra.mxu0 0.0
  %9084 = vmatprep.subr.mxu0 0.0
  %9085 = vmatpush1.msra.mxu0 0.0
  %9086 = vmatprep.subr.mxu0 0.0
  %9087 = vmatpush1.msra.mxu0 0.0
  %9088 = vmatprep.subr.mxu0 0.0
  %9089 = vmatpush1.msra.mxu0 0.0
  %9090 = vmatprep.subr.mxu0 0.0
  %9091 = vmatpush1.msra.mxu0 0.0
  %9092 = vmatprep.subr.mxu0 0.0
  %9093 = vmatpush1.msra.mxu0 0.0
  %9094 = vmatprep.subr.mxu0 0.0
  %9095 = vmatpush1.msra.mxu0 0.0
  %9096 = vmatprep.subr.mxu0 0.0
  %9097 = vmatpush1.msra.mxu0 0.0
  %9098 = vmatprep.subr.mxu0 0.0
  %9099 = vmatpush1.msra.mxu0 0.0
  %9100 = vmatprep.subr.mxu0 0.0
  %9101 = vmatpush1.msra.mxu0 0.0
  %9102 = vmatprep.subr.mxu0 0.0
  %9103 = vmatpush1.msra.mxu0 %v9065
  %9104 = vmatprep.subr.mxu0 0.0
  %9105 = vmatpush1.msra.mxu0 %v9063
  %9106 = vmatprep.subr.mxu0 0.0
  %9107 = vmatpush2.msra.mxu0 0.0
  %9108 = vmatprep.subr.mxu0 0.0
  %9109 = vmatpush2.msra.mxu0 0.0
  %9110 = vmatprep.subr.mxu0 0.0
  %9111 = vmatpush2.msra.mxu0 0.0
  %9112 = vmatprep.subr.mxu0 0.0
  %9113 = vmatpush2.msra.mxu0 0.0
  %9114 = vmatprep.subr.mxu0 0.0
  %9115 = vmatpush2.msra.mxu0 0.0
  %9116 = vmatprep.subr.mxu0 0.0
  %9117 = vmatpush2.msra.mxu0 0.0
  %9118 = vmatprep.subr.mxu0 0.0
  %9119 = vmatpush2.msra.mxu0 0.0
  %9120 = vmatprep.subr.mxu0 0.0
  %9121 = vmatpush2.msra.mxu0 0.0
  %9122 = vmatprep.subr.mxu0 0.0
  %9123 = vmatpush2.msra.mxu0 0.0
  %9124 = vmatprep.subr.mxu0 0.0
  %9125 = vmatpush2.msra.mxu0 0.0
  %9126 = vmatprep.subr.mxu0 0.0
  %9127 = vmatpush2.msra.mxu0 0.0
  %9128 = vmatprep.subr.mxu0 0.0
  %9129 = vmatpush2.msra.mxu0 0.0
  %9130 = vmatprep.subr.mxu0 0.0
  %9131 = vmatpush2.msra.mxu0 0.0
  %9132 = vmatprep.subr.mxu0 0.0
  %9133 = vmatpush2.msra.mxu0 0.0
  %9134 = vmatprep.subr.mxu0 0.0
  %9135 = vmatpush2.msra.mxu0 0.0
  %9136 = vmatprep.subr.mxu0 0.0
  %9137 = vmatpush2.msra.mxu0 0.0
  %9138 = vmatprep.mubr.f32.mxu0 0.0
  %9139 = vmatmul.mubr.f32.gmra.mxu0 %v9069
  %v9140 = vpop.f32.mrf.mxu0
  %v9141 = vadd.f32 0.0, %v9140
  %v9142 = vpop.f32.mrf.mxu0
  %9143 = vmatprep.mubr.f32.mxu0 0.0
  %9144 = vmatmul.mubr.f32.gmra.mxu0 %v9072
  %v9145 = vpop.f32.mrf.mxu0
  %v9146 = vadd.f32 0.0, %v9145
  %v9147 = vpop.f32.mrf.mxu0
  %9148 = vdwg.mxu0
  %9149 = vrot.lane.b32.xlu0 %v6205, 48
  %v9150 = vpop.permute.xlu0 %9149
  %9151 = vrot.lane.b32.xlu0 %v6210, 48
  %v9152 = vpop.permute.xlu0 %9151
  %v9156 = vsel %vm748, %v8793, 0
  %v9159 = vsel %vm748, %v8794, 0
  %9161 = vmatprep.subr.mxu0 0.0
  %9162 = vmatpush1.msra.mxu0 0.0
  %9163 = vmatprep.subr.mxu0 0.0
  %9164 = vmatpush1.msra.mxu0 0.0
  %9165 = vmatprep.subr.mxu0 0.0
  %9166 = vmatpush1.msra.mxu0 0.0
  %9167 = vmatprep.subr.mxu0 0.0
  %9168 = vmatpush1.msra.mxu0 0.0
  %9169 = vmatprep.subr.mxu0 0.0
  %9170 = vmatpush1.msra.mxu0 0.0
  %9171 = vmatprep.subr.mxu0 0.0
  %9172 = vmatpush1.msra.mxu0 0.0
  %9173 = vmatprep.subr.mxu0 0.0
  %9174 = vmatpush1.msra.mxu0 0.0
  %9175 = vmatprep.subr.mxu0 0.0
  %9176 = vmatpush1.msra.mxu0 0.0
  %9177 = vmatprep.subr.mxu0 0.0
  %9178 = vmatpush1.msra.mxu0 0.0
  %9179 = vmatprep.subr.mxu0 0.0
  %9180 = vmatpush1.msra.mxu0 0.0
  %9181 = vmatprep.subr.mxu0 0.0
  %9182 = vmatpush1.msra.mxu0 0.0
  %9183 = vmatprep.subr.mxu0 0.0
  %9184 = vmatpush1.msra.mxu0 0.0
  %9185 = vmatprep.subr.mxu0 0.0
  %9186 = vmatpush1.msra.mxu0 0.0
  %9187 = vmatprep.subr.mxu0 0.0
  %9188 = vmatpush1.msra.mxu0 0.0
  %9189 = vmatprep.subr.mxu0 0.0
  %9190 = vmatpush1.msra.mxu0 %v9152
  %9191 = vmatprep.subr.mxu0 0.0
  %9192 = vmatpush1.msra.mxu0 %v9150
  %9193 = vmatprep.subr.mxu0 0.0
  %9194 = vmatpush2.msra.mxu0 0.0
  %9195 = vmatprep.subr.mxu0 0.0
  %9196 = vmatpush2.msra.mxu0 0.0
  %9197 = vmatprep.subr.mxu0 0.0
  %9198 = vmatpush2.msra.mxu0 0.0
  %9199 = vmatprep.subr.mxu0 0.0
  %9200 = vmatpush2.msra.mxu0 0.0
  %9201 = vmatprep.subr.mxu0 0.0
  %9202 = vmatpush2.msra.mxu0 0.0
  %9203 = vmatprep.subr.mxu0 0.0
  %9204 = vmatpush2.msra.mxu0 0.0
  %9205 = vmatprep.subr.mxu0 0.0
  %9206 = vmatpush2.msra.mxu0 0.0
  %9207 = vmatprep.subr.mxu0 0.0
  %9208 = vmatpush2.msra.mxu0 0.0
  %9209 = vmatprep.subr.mxu0 0.0
  %9210 = vmatpush2.msra.mxu0 0.0
  %9211 = vmatprep.subr.mxu0 0.0
  %9212 = vmatpush2.msra.mxu0 0.0
  %9213 = vmatprep.subr.mxu0 0.0
  %9214 = vmatpush2.msra.mxu0 0.0
  %9215 = vmatprep.subr.mxu0 0.0
  %9216 = vmatpush2.msra.mxu0 0.0
  %9217 = vmatprep.subr.mxu0 0.0
  %9218 = vmatpush2.msra.mxu0 0.0
  %9219 = vmatprep.subr.mxu0 0.0
  %9220 = vmatpush2.msra.mxu0 0.0
  %9221 = vmatprep.subr.mxu0 0.0
  %9222 = vmatpush2.msra.mxu0 0.0
  %9223 = vmatprep.subr.mxu0 0.0
  %9224 = vmatpush2.msra.mxu0 0.0
  %9225 = vmatprep.mubr.f32.mxu0 0.0
  %9226 = vmatmul.mubr.f32.gmra.mxu0 %v9156
  %v9227 = vpop.f32.mrf.mxu0
  %v9228 = vadd.f32 0.0, %v9227
  %v9229 = vpop.f32.mrf.mxu0
  %9230 = vmatprep.mubr.f32.mxu0 0.0
  %9231 = vmatmul.mubr.f32.gmra.mxu0 %v9159
  %v9232 = vpop.f32.mrf.mxu0
  %v9233 = vadd.f32 0.0, %v9232
  %v9234 = vpop.f32.mrf.mxu0
  %9235 = vdwg.mxu0
  %9236 = vrot.lane.b32.xlu0 %v6215, 48
  %v9237 = vpop.permute.xlu0 %9236
  %9238 = vrot.lane.b32.xlu0 %v6220, 48
  %v9239 = vpop.permute.xlu0 %9238
  %v9243 = vsel %vm748, %v8795, 0
  %v9246 = vsel %vm748, %v8796, 0
  %9248 = vmatprep.subr.mxu0 0.0
  %9249 = vmatpush1.msra.mxu0 0.0
  %9250 = vmatprep.subr.mxu0 0.0
  %9251 = vmatpush1.msra.mxu0 0.0
  %9252 = vmatprep.subr.mxu0 0.0
  %9253 = vmatpush1.msra.mxu0 0.0
  %9254 = vmatprep.subr.mxu0 0.0
  %9255 = vmatpush1.msra.mxu0 0.0
  %9256 = vmatprep.subr.mxu0 0.0
  %9257 = vmatpush1.msra.mxu0 0.0
  %9258 = vmatprep.subr.mxu0 0.0
  %9259 = vmatpush1.msra.mxu0 0.0
  %9260 = vmatprep.subr.mxu0 0.0
  %9261 = vmatpush1.msra.mxu0 0.0
  %9262 = vmatprep.subr.mxu0 0.0
  %9263 = vmatpush1.msra.mxu0 0.0
  %9264 = vmatprep.subr.mxu0 0.0
  %9265 = vmatpush1.msra.mxu0 0.0
  %9266 = vmatprep.subr.mxu0 0.0
  %9267 = vmatpush1.msra.mxu0 0.0
  %9268 = vmatprep.subr.mxu0 0.0
  %9269 = vmatpush1.msra.mxu0 0.0
  %9270 = vmatprep.subr.mxu0 0.0
  %9271 = vmatpush1.msra.mxu0 0.0
  %9272 = vmatprep.subr.mxu0 0.0
  %9273 = vmatpush1.msra.mxu0 0.0
  %9274 = vmatprep.subr.mxu0 0.0
  %9275 = vmatpush1.msra.mxu0 0.0
  %9276 = vmatprep.subr.mxu0 0.0
  %9277 = vmatpush1.msra.mxu0 %v9239
  %9278 = vmatprep.subr.mxu0 0.0
  %9279 = vmatpush1.msra.mxu0 %v9237
  %9280 = vmatprep.subr.mxu0 0.0
  %9281 = vmatpush2.msra.mxu0 0.0
  %9282 = vmatprep.subr.mxu0 0.0
  %9283 = vmatpush2.msra.mxu0 0.0
  %9284 = vmatprep.subr.mxu0 0.0
  %9285 = vmatpush2.msra.mxu0 0.0
  %9286 = vmatprep.subr.mxu0 0.0
  %9287 = vmatpush2.msra.mxu0 0.0
  %9288 = vmatprep.subr.mxu0 0.0
  %9289 = vmatpush2.msra.mxu0 0.0
  %9290 = vmatprep.subr.mxu0 0.0
  %9291 = vmatpush2.msra.mxu0 0.0
  %9292 = vmatprep.subr.mxu0 0.0
  %9293 = vmatpush2.msra.mxu0 0.0
  %9294 = vmatprep.subr.mxu0 0.0
  %9295 = vmatpush2.msra.mxu0 0.0
  %9296 = vmatprep.subr.mxu0 0.0
  %9297 = vmatpush2.msra.mxu0 0.0
  %9298 = vmatprep.subr.mxu0 0.0
  %9299 = vmatpush2.msra.mxu0 0.0
  %9300 = vmatprep.subr.mxu0 0.0
  %9301 = vmatpush2.msra.mxu0 0.0
  %9302 = vmatprep.subr.mxu0 0.0
  %9303 = vmatpush2.msra.mxu0 0.0
  %9304 = vmatprep.subr.mxu0 0.0
  %9305 = vmatpush2.msra.mxu0 0.0
  %9306 = vmatprep.subr.mxu0 0.0
  %9307 = vmatpush2.msra.mxu0 0.0
  %9308 = vmatprep.subr.mxu0 0.0
  %9309 = vmatpush2.msra.mxu0 0.0
  %9310 = vmatprep.subr.mxu0 0.0
  %9311 = vmatpush2.msra.mxu0 0.0
  %9312 = vmatprep.mubr.f32.mxu0 0.0
  %9313 = vmatmul.mubr.f32.gmra.mxu0 %v9243
  %v9314 = vpop.f32.mrf.mxu0
  %v9315 = vadd.f32 0.0, %v9314
  %v9316 = vpop.f32.mrf.mxu0
  %9317 = vmatprep.mubr.f32.mxu0 0.0
  %9318 = vmatmul.mubr.f32.gmra.mxu0 %v9246
  %v9319 = vpop.f32.mrf.mxu0
  %v9320 = vadd.f32 0.0, %v9319
  %v9321 = vpop.f32.mrf.mxu0
  %9322 = vdwg.mxu0
  %9323 = vrot.lane.b32.xlu0 %v6225, 48
  %v9324 = vpop.permute.xlu0 %9323
  %9325 = vrot.lane.b32.xlu0 %v6230, 48
  %v9326 = vpop.permute.xlu0 %9325
  %v9330 = vsel %vm748, %v8797, 0
  %v9333 = vsel %vm748, %v8798, 0
  %9335 = vmatprep.subr.mxu0 0.0
  %9336 = vmatpush1.msra.mxu0 0.0
  %9337 = vmatprep.subr.mxu0 0.0
  %9338 = vmatpush1.msra.mxu0 0.0
  %9339 = vmatprep.subr.mxu0 0.0
  %9340 = vmatpush1.msra.mxu0 0.0
  %9341 = vmatprep.subr.mxu0 0.0
  %9342 = vmatpush1.msra.mxu0 0.0
  %9343 = vmatprep.subr.mxu0 0.0
  %9344 = vmatpush1.msra.mxu0 0.0
  %9345 = vmatprep.subr.mxu0 0.0
  %9346 = vmatpush1.msra.mxu0 0.0
  %9347 = vmatprep.subr.mxu0 0.0
  %9348 = vmatpush1.msra.mxu0 0.0
  %9349 = vmatprep.subr.mxu0 0.0
  %9350 = vmatpush1.msra.mxu0 0.0
  %9351 = vmatprep.subr.mxu0 0.0
  %9352 = vmatpush1.msra.mxu0 0.0
  %9353 = vmatprep.subr.mxu0 0.0
  %9354 = vmatpush1.msra.mxu0 0.0
  %9355 = vmatprep.subr.mxu0 0.0
  %9356 = vmatpush1.msra.mxu0 0.0
  %9357 = vmatprep.subr.mxu0 0.0
  %9358 = vmatpush1.msra.mxu0 0.0
  %9359 = vmatprep.subr.mxu0 0.0
  %9360 = vmatpush1.msra.mxu0 0.0
  %9361 = vmatprep.subr.mxu0 0.0
  %9362 = vmatpush1.msra.mxu0 0.0
  %9363 = vmatprep.subr.mxu0 0.0
  %9364 = vmatpush1.msra.mxu0 %v9326
  %9365 = vmatprep.subr.mxu0 0.0
  %9366 = vmatpush1.msra.mxu0 %v9324
  %9367 = vmatprep.subr.mxu0 0.0
  %9368 = vmatpush2.msra.mxu0 0.0
  %9369 = vmatprep.subr.mxu0 0.0
  %9370 = vmatpush2.msra.mxu0 0.0
  %9371 = vmatprep.subr.mxu0 0.0
  %9372 = vmatpush2.msra.mxu0 0.0
  %9373 = vmatprep.subr.mxu0 0.0
  %9374 = vmatpush2.msra.mxu0 0.0
  %9375 = vmatprep.subr.mxu0 0.0
  %9376 = vmatpush2.msra.mxu0 0.0
  %9377 = vmatprep.subr.mxu0 0.0
  %9378 = vmatpush2.msra.mxu0 0.0
  %9379 = vmatprep.subr.mxu0 0.0
  %9380 = vmatpush2.msra.mxu0 0.0
  %9381 = vmatprep.subr.mxu0 0.0
  %9382 = vmatpush2.msra.mxu0 0.0
  %9383 = vmatprep.subr.mxu0 0.0
  %9384 = vmatpush2.msra.mxu0 0.0
  %9385 = vmatprep.subr.mxu0 0.0
  %9386 = vmatpush2.msra.mxu0 0.0
  %9387 = vmatprep.subr.mxu0 0.0
  %9388 = vmatpush2.msra.mxu0 0.0
  %9389 = vmatprep.subr.mxu0 0.0
  %9390 = vmatpush2.msra.mxu0 0.0
  %9391 = vmatprep.subr.mxu0 0.0
  %9392 = vmatpush2.msra.mxu0 0.0
  %9393 = vmatprep.subr.mxu0 0.0
  %9394 = vmatpush2.msra.mxu0 0.0
  %9395 = vmatprep.subr.mxu0 0.0
  %9396 = vmatpush2.msra.mxu0 0.0
  %9397 = vmatprep.subr.mxu0 0.0
  %9398 = vmatpush2.msra.mxu0 0.0
  %9399 = vmatprep.mubr.f32.mxu0 0.0
  %9400 = vmatmul.mubr.f32.gmra.mxu0 %v9330
  %v9401 = vpop.f32.mrf.mxu0
  %v9402 = vadd.f32 0.0, %v9401
  %v9403 = vpop.f32.mrf.mxu0
  %9404 = vmatprep.mubr.f32.mxu0 0.0
  %9405 = vmatmul.mubr.f32.gmra.mxu0 %v9333
  %v9406 = vpop.f32.mrf.mxu0
  %v9407 = vadd.f32 0.0, %v9406
  %v9408 = vpop.f32.mrf.mxu0
  %9409 = vdwg.mxu0
  %9410 = vrot.lane.b32.xlu0 %v6235, 48
  %v9411 = vpop.permute.xlu0 %9410
  %9412 = vrot.lane.b32.xlu0 %v6240, 48
  %v9413 = vpop.permute.xlu0 %9412
  %v9417 = vsel %vm748, %v8799, 0
  %v9420 = vsel %vm748, %v8800, 0
  %9422 = vmatprep.subr.mxu0 0.0
  %9423 = vmatpush1.msra.mxu0 0.0
  %9424 = vmatprep.subr.mxu0 0.0
  %9425 = vmatpush1.msra.mxu0 0.0
  %9426 = vmatprep.subr.mxu0 0.0
  %9427 = vmatpush1.msra.mxu0 0.0
  %9428 = vmatprep.subr.mxu0 0.0
  %9429 = vmatpush1.msra.mxu0 0.0
  %9430 = vmatprep.subr.mxu0 0.0
  %9431 = vmatpush1.msra.mxu0 0.0
  %9432 = vmatprep.subr.mxu0 0.0
  %9433 = vmatpush1.msra.mxu0 0.0
  %9434 = vmatprep.subr.mxu0 0.0
  %9435 = vmatpush1.msra.mxu0 0.0
  %9436 = vmatprep.subr.mxu0 0.0
  %9437 = vmatpush1.msra.mxu0 0.0
  %9438 = vmatprep.subr.mxu0 0.0
  %9439 = vmatpush1.msra.mxu0 0.0
  %9440 = vmatprep.subr.mxu0 0.0
  %9441 = vmatpush1.msra.mxu0 0.0
  %9442 = vmatprep.subr.mxu0 0.0
  %9443 = vmatpush1.msra.mxu0 0.0
  %9444 = vmatprep.subr.mxu0 0.0
  %9445 = vmatpush1.msra.mxu0 0.0
  %9446 = vmatprep.subr.mxu0 0.0
  %9447 = vmatpush1.msra.mxu0 0.0
  %9448 = vmatprep.subr.mxu0 0.0
  %9449 = vmatpush1.msra.mxu0 0.0
  %9450 = vmatprep.subr.mxu0 0.0
  %9451 = vmatpush1.msra.mxu0 %v9413
  %9452 = vmatprep.subr.mxu0 0.0
  %9453 = vmatpush1.msra.mxu0 %v9411
  %9454 = vmatprep.subr.mxu0 0.0
  %9455 = vmatpush2.msra.mxu0 0.0
  %9456 = vmatprep.subr.mxu0 0.0
  %9457 = vmatpush2.msra.mxu0 0.0
  %9458 = vmatprep.subr.mxu0 0.0
  %9459 = vmatpush2.msra.mxu0 0.0
  %9460 = vmatprep.subr.mxu0 0.0
  %9461 = vmatpush2.msra.mxu0 0.0
  %9462 = vmatprep.subr.mxu0 0.0
  %9463 = vmatpush2.msra.mxu0 0.0
  %9464 = vmatprep.subr.mxu0 0.0
  %9465 = vmatpush2.msra.mxu0 0.0
  %9466 = vmatprep.subr.mxu0 0.0
  %9467 = vmatpush2.msra.mxu0 0.0
  %9468 = vmatprep.subr.mxu0 0.0
  %9469 = vmatpush2.msra.mxu0 0.0
  %9470 = vmatprep.subr.mxu0 0.0
  %9471 = vmatpush2.msra.mxu0 0.0
  %9472 = vmatprep.subr.mxu0 0.0
  %9473 = vmatpush2.msra.mxu0 0.0
  %9474 = vmatprep.subr.mxu0 0.0
  %9475 = vmatpush2.msra.mxu0 0.0
  %9476 = vmatprep.subr.mxu0 0.0
  %9477 = vmatpush2.msra.mxu0 0.0
  %9478 = vmatprep.subr.mxu0 0.0
  %9479 = vmatpush2.msra.mxu0 0.0
  %9480 = vmatprep.subr.mxu0 0.0
  %9481 = vmatpush2.msra.mxu0 0.0
  %9482 = vmatprep.subr.mxu0 0.0
  %9483 = vmatpush2.msra.mxu0 0.0
  %9484 = vmatprep.subr.mxu0 0.0
  %9485 = vmatpush2.msra.mxu0 0.0
  %9486 = vmatprep.mubr.f32.mxu0 0.0
  %9487 = vmatmul.mubr.f32.gmra.mxu0 %v9417
  %v9488 = vpop.f32.mrf.mxu0
  %v9489 = vadd.f32 0.0, %v9488
  %v9490 = vpop.f32.mrf.mxu0
  %9491 = vmatprep.mubr.f32.mxu0 0.0
  %9492 = vmatmul.mubr.f32.gmra.mxu0 %v9420
  %v9493 = vpop.f32.mrf.mxu0
  %v9494 = vadd.f32 0.0, %v9493
  %v9495 = vpop.f32.mrf.mxu0
  %9496 = vdwg.mxu0
  %v9498 = vsel %vm748, %v8880, 0
  %v9501 = vsel %vm748, %v8885, 0
  %v9504 = vsel %vm748, %v8967, 0
  %v9507 = vsel %vm748, %v8972, 0
  %v9510 = vsel %vm748, %v9054, 0
  %v9513 = vsel %vm748, %v9059, 0
  %v9516 = vsel %vm748, %v9141, 0
  %v9519 = vsel %vm748, %v9146, 0
  %v9522 = vsel %vm748, %v9228, 0
  %v9525 = vsel %vm748, %v9233, 0
  %v9528 = vsel %vm748, %v9315, 0
  %v9531 = vsel %vm748, %v9320, 0
  %v9534 = vsel %vm748, %v9402, 0
  %v9537 = vsel %vm748, %v9407, 0
  %v9540 = vsel %vm748, %v9489, 0
  %v9543 = vsel %vm748, %v9494, 0
  %9545 = vmatprep.subr.mxu0 0.0
  %9546 = vmatpush1.msra.mxu0 0.0
  %9547 = vmatprep.subr.mxu0 0.0
  %9548 = vmatpush1.msra.mxu0 0.0
  %9549 = vmatprep.subr.mxu0 0.0
  %9550 = vmatpush1.msra.mxu0 0.0
  %9551 = vmatprep.subr.mxu0 0.0
  %9552 = vmatpush1.msra.mxu0 0.0
  %9553 = vmatprep.subr.mxu0 0.0
  %9554 = vmatpush1.msra.mxu0 0.0
  %9555 = vmatprep.subr.mxu0 0.0
  %9556 = vmatpush1.msra.mxu0 0.0
  %9557 = vmatprep.subr.mxu0 0.0
  %9558 = vmatpush1.msra.mxu0 0.0
  %9559 = vmatprep.subr.mxu0 0.0
  %9560 = vmatpush1.msra.mxu0 0.0
  %9561 = vmatprep.subr.mxu0 0.0
  %9562 = vmatpush1.msra.mxu0 0.0
  %9563 = vmatprep.subr.mxu0 0.0
  %9564 = vmatpush1.msra.mxu0 0.0
  %9565 = vmatprep.subr.mxu0 0.0
  %9566 = vmatpush1.msra.mxu0 0.0
  %9567 = vmatprep.subr.mxu0 0.0
  %9568 = vmatpush1.msra.mxu0 0.0
  %9569 = vmatprep.subr.mxu0 0.0
  %9570 = vmatpush1.msra.mxu0 0.0
  %9571 = vmatprep.subr.mxu0 0.0
  %9572 = vmatpush1.msra.mxu0 0.0
  %9573 = vmatprep.subr.mxu0 0.0
  %9574 = vmatpush1.msra.mxu0 %v6280
  %9575 = vmatprep.subr.mxu0 0.0
  %9576 = vmatpush1.msra.mxu0 %v6279
  %9577 = vmatprep.subr.mxu0 0.0
  %9578 = vmatpush2.msra.mxu0 0.0
  %9579 = vmatprep.subr.mxu0 0.0
  %9580 = vmatpush2.msra.mxu0 0.0
  %9581 = vmatprep.subr.mxu0 0.0
  %9582 = vmatpush2.msra.mxu0 0.0
  %9583 = vmatprep.subr.mxu0 0.0
  %9584 = vmatpush2.msra.mxu0 0.0
  %9585 = vmatprep.subr.mxu0 0.0
  %9586 = vmatpush2.msra.mxu0 0.0
  %9587 = vmatprep.subr.mxu0 0.0
  %9588 = vmatpush2.msra.mxu0 0.0
  %9589 = vmatprep.subr.mxu0 0.0
  %9590 = vmatpush2.msra.mxu0 0.0
  %9591 = vmatprep.subr.mxu0 0.0
  %9592 = vmatpush2.msra.mxu0 0.0
  %9593 = vmatprep.subr.mxu0 0.0
  %9594 = vmatpush2.msra.mxu0 0.0
  %9595 = vmatprep.subr.mxu0 0.0
  %9596 = vmatpush2.msra.mxu0 0.0
  %9597 = vmatprep.subr.mxu0 0.0
  %9598 = vmatpush2.msra.mxu0 0.0
  %9599 = vmatprep.subr.mxu0 0.0
  %9600 = vmatpush2.msra.mxu0 0.0
  %9601 = vmatprep.subr.mxu0 0.0
  %9602 = vmatpush2.msra.mxu0 0.0
  %9603 = vmatprep.subr.mxu0 0.0
  %9604 = vmatpush2.msra.mxu0 0.0
  %9605 = vmatprep.subr.mxu0 0.0
  %9606 = vmatpush2.msra.mxu0 0.0
  %9607 = vmatprep.subr.mxu0 0.0
  %9608 = vmatpush2.msra.mxu0 0.0
  %9609 = vmatprep.mubr.f32.mxu0 0.0
  %9610 = vmatmul.mubr.f32.gmra.mxu0 %v9498
  %v9611 = vpop.f32.mrf.mxu0
  %v9612 = vadd.f32 0.0, %v9611
  %v9613 = vpop.f32.mrf.mxu0
  %9614 = vmatprep.mubr.f32.mxu0 0.0
  %9615 = vmatmul.mubr.f32.gmra.mxu0 %v9501
  %v9616 = vpop.f32.mrf.mxu0
  %v9617 = vadd.f32 0.0, %v9616
  %v9618 = vpop.f32.mrf.mxu0
  %9619 = vmatprep.mubr.f32.mxu0 0.0
  %9620 = vmatmul.mubr.f32.gmra.mxu0 %v9504
  %v9621 = vpop.f32.mrf.mxu0
  %v9622 = vadd.f32 0.0, %v9621
  %v9623 = vpop.f32.mrf.mxu0
  %9624 = vmatprep.mubr.f32.mxu0 0.0
  %9625 = vmatmul.mubr.f32.gmra.mxu0 %v9507
  %v9626 = vpop.f32.mrf.mxu0
  %v9627 = vadd.f32 0.0, %v9626
  %v9628 = vpop.f32.mrf.mxu0
  %9629 = vmatprep.mubr.f32.mxu0 0.0
  %9630 = vmatmul.mubr.f32.gmra.mxu0 %v9510
  %v9631 = vpop.f32.mrf.mxu0
  %v9632 = vadd.f32 0.0, %v9631
  %v9633 = vpop.f32.mrf.mxu0
  %9634 = vmatprep.mubr.f32.mxu0 0.0
  %9635 = vmatmul.mubr.f32.gmra.mxu0 %v9513
  %v9636 = vpop.f32.mrf.mxu0
  %v9637 = vadd.f32 0.0, %v9636
  %v9638 = vpop.f32.mrf.mxu0
  %9639 = vmatprep.mubr.f32.mxu0 0.0
  %9640 = vmatmul.mubr.f32.gmra.mxu0 %v9516
  %v9641 = vpop.f32.mrf.mxu0
  %v9642 = vadd.f32 0.0, %v9641
  %v9643 = vpop.f32.mrf.mxu0
  %9644 = vmatprep.mubr.f32.mxu0 0.0
  %9645 = vmatmul.mubr.f32.gmra.mxu0 %v9519
  %v9646 = vpop.f32.mrf.mxu0
  %v9647 = vadd.f32 0.0, %v9646
  %v9648 = vpop.f32.mrf.mxu0
  %9649 = vmatprep.mubr.f32.mxu0 0.0
  %9650 = vmatmul.mubr.f32.gmra.mxu0 %v9522
  %v9651 = vpop.f32.mrf.mxu0
  %v9652 = vadd.f32 0.0, %v9651
  %v9653 = vpop.f32.mrf.mxu0
  %9654 = vmatprep.mubr.f32.mxu0 0.0
  %9655 = vmatmul.mubr.f32.gmra.mxu0 %v9525
  %v9656 = vpop.f32.mrf.mxu0
  %v9657 = vadd.f32 0.0, %v9656
  %v9658 = vpop.f32.mrf.mxu0
  %9659 = vmatprep.mubr.f32.mxu0 0.0
  %9660 = vmatmul.mubr.f32.gmra.mxu0 %v9528
  %v9661 = vpop.f32.mrf.mxu0
  %v9662 = vadd.f32 0.0, %v9661
  %v9663 = vpop.f32.mrf.mxu0
  %9664 = vmatprep.mubr.f32.mxu0 0.0
  %9665 = vmatmul.mubr.f32.gmra.mxu0 %v9531
  %v9666 = vpop.f32.mrf.mxu0
  %v9667 = vadd.f32 0.0, %v9666
  %v9668 = vpop.f32.mrf.mxu0
  %9669 = vmatprep.mubr.f32.mxu0 0.0
  %9670 = vmatmul.mubr.f32.gmra.mxu0 %v9534
  %v9671 = vpop.f32.mrf.mxu0
  %v9672 = vadd.f32 0.0, %v9671
  %v9673 = vpop.f32.mrf.mxu0
  %9674 = vmatprep.mubr.f32.mxu0 0.0
  %9675 = vmatmul.mubr.f32.gmra.mxu0 %v9537
  %v9676 = vpop.f32.mrf.mxu0
  %v9677 = vadd.f32 0.0, %v9676
  %v9678 = vpop.f32.mrf.mxu0
  %9679 = vmatprep.mubr.f32.mxu0 0.0
  %9680 = vmatmul.mubr.f32.gmra.mxu0 %v9540
  %v9681 = vpop.f32.mrf.mxu0
  %v9682 = vadd.f32 0.0, %v9681
  %v9683 = vpop.f32.mrf.mxu0
  %9684 = vmatprep.mubr.f32.mxu0 0.0
  %9685 = vmatmul.mubr.f32.gmra.mxu0 %v9543
  %v9686 = vpop.f32.mrf.mxu0
  %v9687 = vadd.f32 0.0, %v9686
  %v9688 = vpop.f32.mrf.mxu0
  %9689 = vdwg.mxu0
  %v9691 = vsel %vm748, %v7280, 0
  %v9694 = vsel %vm748, %v7285, 0
  %v9697 = vsel %vm748, %v7367, 0
  %v9700 = vsel %vm748, %v7372, 0
  %v9703 = vsel %vm748, %v7454, 0
  %v9706 = vsel %vm748, %v7459, 0
  %v9709 = vsel %vm748, %v7541, 0
  %v9712 = vsel %vm748, %v7546, 0
  %v9715 = vsel %vm748, %v7628, 0
  %v9718 = vsel %vm748, %v7633, 0
  %v9721 = vsel %vm748, %v7715, 0
  %v9724 = vsel %vm748, %v7720, 0
  %v9727 = vsel %vm748, %v7802, 0
  %v9730 = vsel %vm748, %v7807, 0
  %v9733 = vsel %vm748, %v7889, 0
  %v9736 = vsel %vm748, %v7894, 0
  %9738 = vmatprep.subr.mxu0 0.0
  %9739 = vmatpush1.msra.mxu0 0.0
  %9740 = vmatprep.subr.mxu0 0.0
  %9741 = vmatpush1.msra.mxu0 0.0
  %9742 = vmatprep.subr.mxu0 0.0
  %9743 = vmatpush1.msra.mxu0 0.0
  %9744 = vmatprep.subr.mxu0 0.0
  %9745 = vmatpush1.msra.mxu0 0.0
  %9746 = vmatprep.subr.mxu0 0.0
  %9747 = vmatpush1.msra.mxu0 0.0
  %9748 = vmatprep.subr.mxu0 0.0
  %9749 = vmatpush1.msra.mxu0 0.0
  %9750 = vmatprep.subr.mxu0 0.0
  %9751 = vmatpush1.msra.mxu0 0.0
  %9752 = vmatprep.subr.mxu0 0.0
  %9753 = vmatpush1.msra.mxu0 0.0
  %9754 = vmatprep.subr.mxu0 0.0
  %9755 = vmatpush1.msra.mxu0 0.0
  %9756 = vmatprep.subr.mxu0 0.0
  %9757 = vmatpush1.msra.mxu0 0.0
  %9758 = vmatprep.subr.mxu0 0.0
  %9759 = vmatpush1.msra.mxu0 0.0
  %9760 = vmatprep.subr.mxu0 0.0
  %9761 = vmatpush1.msra.mxu0 0.0
  %9762 = vmatprep.subr.mxu0 0.0
  %9763 = vmatpush1.msra.mxu0 0.0
  %9764 = vmatprep.subr.mxu0 0.0
  %9765 = vmatpush1.msra.mxu0 0.0
  %9766 = vmatprep.subr.mxu0 0.0
  %9767 = vmatpush1.msra.mxu0 %v6278
  %9768 = vmatprep.subr.mxu0 0.0
  %9769 = vmatpush1.msra.mxu0 %v6277
  %9770 = vmatprep.subr.mxu0 0.0
  %9771 = vmatpush2.msra.mxu0 0.0
  %9772 = vmatprep.subr.mxu0 0.0
  %9773 = vmatpush2.msra.mxu0 0.0
  %9774 = vmatprep.subr.mxu0 0.0
  %9775 = vmatpush2.msra.mxu0 0.0
  %9776 = vmatprep.subr.mxu0 0.0
  %9777 = vmatpush2.msra.mxu0 0.0
  %9778 = vmatprep.subr.mxu0 0.0
  %9779 = vmatpush2.msra.mxu0 0.0
  %9780 = vmatprep.subr.mxu0 0.0
  %9781 = vmatpush2.msra.mxu0 0.0
  %9782 = vmatprep.subr.mxu0 0.0
  %9783 = vmatpush2.msra.mxu0 0.0
  %9784 = vmatprep.subr.mxu0 0.0
  %9785 = vmatpush2.msra.mxu0 0.0
  %9786 = vmatprep.subr.mxu0 0.0
  %9787 = vmatpush2.msra.mxu0 0.0
  %9788 = vmatprep.subr.mxu0 0.0
  %9789 = vmatpush2.msra.mxu0 0.0
  %9790 = vmatprep.subr.mxu0 0.0
  %9791 = vmatpush2.msra.mxu0 0.0
  %9792 = vmatprep.subr.mxu0 0.0
  %9793 = vmatpush2.msra.mxu0 0.0
  %9794 = vmatprep.subr.mxu0 0.0
  %9795 = vmatpush2.msra.mxu0 0.0
  %9796 = vmatprep.subr.mxu0 0.0
  %9797 = vmatpush2.msra.mxu0 0.0
  %9798 = vmatprep.subr.mxu0 0.0
  %9799 = vmatpush2.msra.mxu0 0.0
  %9800 = vmatprep.subr.mxu0 0.0
  %9801 = vmatpush2.msra.mxu0 0.0
  %9802 = vmatprep.mubr.f32.mxu0 0.0
  %9803 = vmatmul.mubr.f32.gmra.mxu0 %v9691
  %v9804 = vpop.f32.mrf.mxu0
  %v9805 = vadd.f32 %v9612, %v9804
  %v9806 = vpop.f32.mrf.mxu0
  %9807 = vmatprep.mubr.f32.mxu0 0.0
  %9808 = vmatmul.mubr.f32.gmra.mxu0 %v9694
  %v9809 = vpop.f32.mrf.mxu0
  %v9810 = vadd.f32 %v9617, %v9809
  %v9811 = vpop.f32.mrf.mxu0
  %9812 = vmatprep.mubr.f32.mxu0 0.0
  %9813 = vmatmul.mubr.f32.gmra.mxu0 %v9697
  %v9814 = vpop.f32.mrf.mxu0
  %v9815 = vadd.f32 %v9622, %v9814
  %v9816 = vpop.f32.mrf.mxu0
  %9817 = vmatprep.mubr.f32.mxu0 0.0
  %9818 = vmatmul.mubr.f32.gmra.mxu0 %v9700
  %v9819 = vpop.f32.mrf.mxu0
  %v9820 = vadd.f32 %v9627, %v9819
  %v9821 = vpop.f32.mrf.mxu0
  %9822 = vmatprep.mubr.f32.mxu0 0.0
  %9823 = vmatmul.mubr.f32.gmra.mxu0 %v9703
  %v9824 = vpop.f32.mrf.mxu0
  %v9825 = vadd.f32 %v9632, %v9824
  %v9826 = vpop.f32.mrf.mxu0
  %9827 = vmatprep.mubr.f32.mxu0 0.0
  %9828 = vmatmul.mubr.f32.gmra.mxu0 %v9706
  %v9829 = vpop.f32.mrf.mxu0
  %v9830 = vadd.f32 %v9637, %v9829
  %v9831 = vpop.f32.mrf.mxu0
  %9832 = vmatprep.mubr.f32.mxu0 0.0
  %9833 = vmatmul.mubr.f32.gmra.mxu0 %v9709
  %v9834 = vpop.f32.mrf.mxu0
  %v9835 = vadd.f32 %v9642, %v9834
  %v9836 = vpop.f32.mrf.mxu0
  %9837 = vmatprep.mubr.f32.mxu0 0.0
  %9838 = vmatmul.mubr.f32.gmra.mxu0 %v9712
  %v9839 = vpop.f32.mrf.mxu0
  %v9840 = vadd.f32 %v9647, %v9839
  %v9841 = vpop.f32.mrf.mxu0
  %9842 = vmatprep.mubr.f32.mxu0 0.0
  %9843 = vmatmul.mubr.f32.gmra.mxu0 %v9715
  %v9844 = vpop.f32.mrf.mxu0
  %v9845 = vadd.f32 %v9652, %v9844
  %v9846 = vpop.f32.mrf.mxu0
  %9847 = vmatprep.mubr.f32.mxu0 0.0
  %9848 = vmatmul.mubr.f32.gmra.mxu0 %v9718
  %v9849 = vpop.f32.mrf.mxu0
  %v9850 = vadd.f32 %v9657, %v9849
  %v9851 = vpop.f32.mrf.mxu0
  %9852 = vmatprep.mubr.f32.mxu0 0.0
  %9853 = vmatmul.mubr.f32.gmra.mxu0 %v9721
  %v9854 = vpop.f32.mrf.mxu0
  %v9855 = vadd.f32 %v9662, %v9854
  %v9856 = vpop.f32.mrf.mxu0
  %9857 = vmatprep.mubr.f32.mxu0 0.0
  %9858 = vmatmul.mubr.f32.gmra.mxu0 %v9724
  %v9859 = vpop.f32.mrf.mxu0
  %v9860 = vadd.f32 %v9667, %v9859
  %v9861 = vpop.f32.mrf.mxu0
  %9862 = vmatprep.mubr.f32.mxu0 0.0
  %9863 = vmatmul.mubr.f32.gmra.mxu0 %v9727
  %v9864 = vpop.f32.mrf.mxu0
  %v9865 = vadd.f32 %v9672, %v9864
  %v9866 = vpop.f32.mrf.mxu0
  %9867 = vmatprep.mubr.f32.mxu0 0.0
  %9868 = vmatmul.mubr.f32.gmra.mxu0 %v9730
  %v9869 = vpop.f32.mrf.mxu0
  %v9870 = vadd.f32 %v9677, %v9869
  %v9871 = vpop.f32.mrf.mxu0
  %9872 = vmatprep.mubr.f32.mxu0 0.0
  %9873 = vmatmul.mubr.f32.gmra.mxu0 %v9733
  %v9874 = vpop.f32.mrf.mxu0
  %v9875 = vadd.f32 %v9682, %v9874
  %v9876 = vpop.f32.mrf.mxu0
  %9877 = vmatprep.mubr.f32.mxu0 0.0
  %9878 = vmatmul.mubr.f32.gmra.mxu0 %v9736
  %v9879 = vpop.f32.mrf.mxu0
  %v9880 = vadd.f32 %v9687, %v9879
  %v9881 = vpop.f32.mrf.mxu0
  %9882 = vdwg.mxu0
  %s9883 = scalar_lea.vmem %s9, 1
  %v9884 = vld [vmem:[%s9883] sm:$0x1]
  %v9886 = vlaneseq
  %v9887 = vshrl.u32 %v9886, 7
  %v9888 = vsub.s32 0, %v9887
  %v9889 = vrot.slane %v9884, %v9888
  %v9891 = vadd.f32 %v9805, %v9889
  %v9892 = vadd.f32 %v9810, %v9889
  %v9893 = vadd.f32 %v9815, %v9889
  %v9894 = vadd.f32 %v9820, %v9889
  %v9895 = vadd.f32 %v9825, %v9889
  %v9896 = vadd.f32 %v9830, %v9889
  %v9897 = vadd.f32 %v9835, %v9889
  %v9898 = vadd.f32 %v9840, %v9889
  %v9899 = vadd.f32 %v9845, %v9889
  %v9900 = vadd.f32 %v9850, %v9889
  %v9901 = vadd.f32 %v9855, %v9889
  %v9902 = vadd.f32 %v9860, %v9889
  %v9903 = vadd.f32 %v9865, %v9889
  %v9904 = vadd.f32 %v9870, %v9889
  %v9905 = vadd.f32 %v9875, %v9889
  %v9906 = vadd.f32 %v9880, %v9889
  %s9907 = scalar_lea.vmem %s2, 128
  %v9908 = vld [vmem:[%s9907] sm:$0xff]
  %v9909 = vld [vmem:[%s9907 + $0x8] sm:$0xff]
  %v9910 = vld [vmem:[%s9907 + $0x10] sm:$0xff]
  %v9911 = vld [vmem:[%s9907 + $0x18] sm:$0xff]
  %v9912 = vld [vmem:[%s9907 + $0x20] sm:$0xff]
  %v9913 = vld [vmem:[%s9907 + $0x28] sm:$0xff]
  %v9914 = vld [vmem:[%s9907 + $0x30] sm:$0xff]
  %v9915 = vld [vmem:[%s9907 + $0x38] sm:$0xff]
  %v9916 = vld [vmem:[%s9907 + $0x40] sm:$0xff]
  %v9917 = vld [vmem:[%s9907 + $0x48] sm:$0xff]
  %v9918 = vld [vmem:[%s9907 + $0x50] sm:$0xff]
  %v9919 = vld [vmem:[%s9907 + $0x58] sm:$0xff]
  %v9920 = vld [vmem:[%s9907 + $0x60] sm:$0xff]
  %v9921 = vld [vmem:[%s9907 + $0x68] sm:$0xff]
  %v9922 = vld [vmem:[%s9907 + $0x70] sm:$0xff]
  %v9923 = vld [vmem:[%s9907 + $0x78] sm:$0xff]
  %9924 = vmatprep.subr.mxu0 0.0
  %9925 = vmatpush1.msra.mxu0 %v9906
  %9926 = vmatprep.subr.mxu0 0.0
  %9927 = vmatpush1.msra.mxu0 %v9905
  %9928 = vmatprep.subr.mxu0 0.0
  %9929 = vmatpush1.msra.mxu0 %v9904
  %9930 = vmatprep.subr.mxu0 0.0
  %9931 = vmatpush1.msra.mxu0 %v9903
  %9932 = vmatprep.subr.mxu0 0.0
  %9933 = vmatpush1.msra.mxu0 %v9902
  %9934 = vmatprep.subr.mxu0 0.0
  %9935 = vmatpush1.msra.mxu0 %v9901
  %9936 = vmatprep.subr.mxu0 0.0
  %9937 = vmatpush1.msra.mxu0 %v9900
  %9938 = vmatprep.subr.mxu0 0.0
  %9939 = vmatpush1.msra.mxu0 %v9899
  %9940 = vmatprep.subr.mxu0 0.0
  %9941 = vmatpush1.msra.mxu0 %v9898
  %9942 = vmatprep.subr.mxu0 0.0
  %9943 = vmatpush1.msra.mxu0 %v9897
  %9944 = vmatprep.subr.mxu0 0.0
  %9945 = vmatpush1.msra.mxu0 %v9896
  %9946 = vmatprep.subr.mxu0 0.0
  %9947 = vmatpush1.msra.mxu0 %v9895
  %9948 = vmatprep.subr.mxu0 0.0
  %9949 = vmatpush1.msra.mxu0 %v9894
  %9950 = vmatprep.subr.mxu0 0.0
  %9951 = vmatpush1.msra.mxu0 %v9893
  %9952 = vmatprep.subr.mxu0 0.0
  %9953 = vmatpush1.msra.mxu0 %v9892
  %9954 = vmatprep.subr.mxu0 0.0
  %9955 = vmatpush1.msra.mxu0 %v9891
  %9956 = vmatprep.subr.mxu0 0.0
  %9957 = vmatpush2.msra.mxu0 0.0
  %9958 = vmatprep.subr.mxu0 0.0
  %9959 = vmatpush2.msra.mxu0 0.0
  %9960 = vmatprep.subr.mxu0 0.0
  %9961 = vmatpush2.msra.mxu0 0.0
  %9962 = vmatprep.subr.mxu0 0.0
  %9963 = vmatpush2.msra.mxu0 0.0
  %9964 = vmatprep.subr.mxu0 0.0
  %9965 = vmatpush2.msra.mxu0 0.0
  %9966 = vmatprep.subr.mxu0 0.0
  %9967 = vmatpush2.msra.mxu0 0.0
  %9968 = vmatprep.subr.mxu0 0.0
  %9969 = vmatpush2.msra.mxu0 0.0
  %9970 = vmatprep.subr.mxu0 0.0
  %9971 = vmatpush2.msra.mxu0 0.0
  %9972 = vmatprep.subr.mxu0 0.0
  %9973 = vmatpush2.msra.mxu0 0.0
  %9974 = vmatprep.subr.mxu0 0.0
  %9975 = vmatpush2.msra.mxu0 0.0
  %9976 = vmatprep.subr.mxu0 0.0
  %9977 = vmatpush2.msra.mxu0 0.0
  %9978 = vmatprep.subr.mxu0 0.0
  %9979 = vmatpush2.msra.mxu0 0.0
  %9980 = vmatprep.subr.mxu0 0.0
  %9981 = vmatpush2.msra.mxu0 0.0
  %9982 = vmatprep.subr.mxu0 0.0
  %9983 = vmatpush2.msra.mxu0 0.0
  %9984 = vmatprep.subr.mxu0 0.0
  %9985 = vmatpush2.msra.mxu0 0.0
  %9986 = vmatprep.subr.mxu0 0.0
  %9987 = vmatpush2.msra.mxu0 0.0
  %9988 = vmatprep.mubr.f32.mxu0 0.0
  %9989 = vmatmul.mubr.f32.gmra.mxu0 %v9908
  %v9990 = vpop.f32.mrf.mxu0
  %v9991 = vadd.f32 0.0, %v9990
  %v9992 = vpop.f32.mrf.mxu0
  %9993 = vmatprep.mubr.f32.mxu0 0.0
  %9994 = vmatmul.mubr.f32.gmra.mxu0 %v9909
  %v9995 = vpop.f32.mrf.mxu0
  %v9996 = vadd.f32 0.0, %v9995
  %v9997 = vpop.f32.mrf.mxu0
  %9998 = vmatprep.mubr.f32.mxu0 0.0
  %9999 = vmatmul.mubr.f32.gmra.mxu0 %v9910
  %v10000 = vpop.f32.mrf.mxu0
  %v10001 = vadd.f32 0.0, %v10000
  %v10002 = vpop.f32.mrf.mxu0
  %10003 = vmatprep.mubr.f32.mxu0 0.0
  %10004 = vmatmul.mubr.f32.gmra.mxu0 %v9911
  %v10005 = vpop.f32.mrf.mxu0
  %v10006 = vadd.f32 0.0, %v10005
  %v10007 = vpop.f32.mrf.mxu0
  %10008 = vmatprep.mubr.f32.mxu0 0.0
  %10009 = vmatmul.mubr.f32.gmra.mxu0 %v9912
  %v10010 = vpop.f32.mrf.mxu0
  %v10011 = vadd.f32 0.0, %v10010
  %v10012 = vpop.f32.mrf.mxu0
  %10013 = vmatprep.mubr.f32.mxu0 0.0
  %10014 = vmatmul.mubr.f32.gmra.mxu0 %v9913
  %v10015 = vpop.f32.mrf.mxu0
  %v10016 = vadd.f32 0.0, %v10015
  %v10017 = vpop.f32.mrf.mxu0
  %10018 = vmatprep.mubr.f32.mxu0 0.0
  %10019 = vmatmul.mubr.f32.gmra.mxu0 %v9914
  %v10020 = vpop.f32.mrf.mxu0
  %v10021 = vadd.f32 0.0, %v10020
  %v10022 = vpop.f32.mrf.mxu0
  %10023 = vmatprep.mubr.f32.mxu0 0.0
  %10024 = vmatmul.mubr.f32.gmra.mxu0 %v9915
  %v10025 = vpop.f32.mrf.mxu0
  %v10026 = vadd.f32 0.0, %v10025
  %v10027 = vpop.f32.mrf.mxu0
  %10028 = vmatprep.mubr.f32.mxu0 0.0
  %10029 = vmatmul.mubr.f32.gmra.mxu0 %v9916
  %v10030 = vpop.f32.mrf.mxu0
  %v10031 = vadd.f32 0.0, %v10030
  %v10032 = vpop.f32.mrf.mxu0
  %10033 = vmatprep.mubr.f32.mxu0 0.0
  %10034 = vmatmul.mubr.f32.gmra.mxu0 %v9917
  %v10035 = vpop.f32.mrf.mxu0
  %v10036 = vadd.f32 0.0, %v10035
  %v10037 = vpop.f32.mrf.mxu0
  %10038 = vmatprep.mubr.f32.mxu0 0.0
  %10039 = vmatmul.mubr.f32.gmra.mxu0 %v9918
  %v10040 = vpop.f32.mrf.mxu0
  %v10041 = vadd.f32 0.0, %v10040
  %v10042 = vpop.f32.mrf.mxu0
  %10043 = vmatprep.mubr.f32.mxu0 0.0
  %10044 = vmatmul.mubr.f32.gmra.mxu0 %v9919
  %v10045 = vpop.f32.mrf.mxu0
  %v10046 = vadd.f32 0.0, %v10045
  %v10047 = vpop.f32.mrf.mxu0
  %10048 = vmatprep.mubr.f32.mxu0 0.0
  %10049 = vmatmul.mubr.f32.gmra.mxu0 %v9920
  %v10050 = vpop.f32.mrf.mxu0
  %v10051 = vadd.f32 0.0, %v10050
  %v10052 = vpop.f32.mrf.mxu0
  %10053 = vmatprep.mubr.f32.mxu0 0.0
  %10054 = vmatmul.mubr.f32.gmra.mxu0 %v9921
  %v10055 = vpop.f32.mrf.mxu0
  %v10056 = vadd.f32 0.0, %v10055
  %v10057 = vpop.f32.mrf.mxu0
  %10058 = vmatprep.mubr.f32.mxu0 0.0
  %10059 = vmatmul.mubr.f32.gmra.mxu0 %v9922
  %v10060 = vpop.f32.mrf.mxu0
  %v10061 = vadd.f32 0.0, %v10060
  %v10062 = vpop.f32.mrf.mxu0
  %10063 = vmatprep.mubr.f32.mxu0 0.0
  %10064 = vmatmul.mubr.f32.gmra.mxu0 %v9923
  %v10065 = vpop.f32.mrf.mxu0
  %v10066 = vadd.f32 0.0, %v10065
  %v10067 = vpop.f32.mrf.mxu0
  %10068 = vdwg.mxu0
  %v10069 = vadd.f32 %v5603, %v9991
  %v10070 = vadd.f32 %v5604, %v9996
  %v10071 = vadd.f32 %v5605, %v10001
  %v10072 = vadd.f32 %v5606, %v10006
  %v10073 = vadd.f32 %v5607, %v10011
  %v10074 = vadd.f32 %v5608, %v10016
  %v10075 = vadd.f32 %v5609, %v10021
  %v10076 = vadd.f32 %v5610, %v10026
  %v10077 = vadd.f32 %v5611, %v10031
  %v10078 = vadd.f32 %v5612, %v10036
  %v10079 = vadd.f32 %v5613, %v10041
  %v10080 = vadd.f32 %v5614, %v10046
  %v10081 = vadd.f32 %v5615, %v10051
  %v10082 = vadd.f32 %v5616, %v10056
  %v10083 = vadd.f32 %v5617, %v10061
  %v10084 = vadd.f32 %v5618, %v10066
  %s10085 = scalar_lea.vmem %s10, 1
  %v10086 = vld [vmem:[%s10085] sm:$0x1]
  %s10087 = scalar_lea.vmem %s11, 1
  %v10088 = vld [vmem:[%s10087] sm:$0x1]
  %v10089 = vsel %vm71, %v10069, 0.0
  %10090 = vadd.xlane.f32.xlu0 %v10089
  %v10091 = vpop.xlane.xlu0 %10090
  %v10092 = vsel %vm71, %v10070, 0.0
  %10093 = vadd.xlane.f32.xlu0 %v10092
  %v10094 = vpop.xlane.xlu0 %10093
  %v10095 = vsel %vm71, %v10071, 0.0
  %10096 = vadd.xlane.f32.xlu0 %v10095
  %v10097 = vpop.xlane.xlu0 %10096
  %v10098 = vsel %vm71, %v10072, 0.0
  %10099 = vadd.xlane.f32.xlu0 %v10098
  %v10100 = vpop.xlane.xlu0 %10099
  %v10101 = vsel %vm71, %v10073, 0.0
  %10102 = vadd.xlane.f32.xlu0 %v10101
  %v10103 = vpop.xlane.xlu0 %10102
  %v10104 = vsel %vm71, %v10074, 0.0
  %10105 = vadd.xlane.f32.xlu0 %v10104
  %v10106 = vpop.xlane.xlu0 %10105
  %v10107 = vsel %vm71, %v10075, 0.0
  %10108 = vadd.xlane.f32.xlu0 %v10107
  %v10109 = vpop.xlane.xlu0 %10108
  %v10110 = vsel %vm71, %v10076, 0.0
  %10111 = vadd.xlane.f32.xlu0 %v10110
  %v10112 = vpop.xlane.xlu0 %10111
  %v10113 = vsel %vm71, %v10077, 0.0
  %10114 = vadd.xlane.f32.xlu0 %v10113
  %v10115 = vpop.xlane.xlu0 %10114
  %v10116 = vsel %vm71, %v10078, 0.0
  %10117 = vadd.xlane.f32.xlu0 %v10116
  %v10118 = vpop.xlane.xlu0 %10117
  %v10119 = vsel %vm71, %v10079, 0.0
  %10120 = vadd.xlane.f32.xlu0 %v10119
  %v10121 = vpop.xlane.xlu0 %10120
  %v10122 = vsel %vm71, %v10080, 0.0
  %10123 = vadd.xlane.f32.xlu0 %v10122
  %v10124 = vpop.xlane.xlu0 %10123
  %v10125 = vsel %vm71, %v10081, 0.0
  %10126 = vadd.xlane.f32.xlu0 %v10125
  %v10127 = vpop.xlane.xlu0 %10126
  %v10128 = vsel %vm71, %v10082, 0.0
  %10129 = vadd.xlane.f32.xlu0 %v10128
  %v10130 = vpop.xlane.xlu0 %10129
  %v10131 = vsel %vm71, %v10083, 0.0
  %10132 = vadd.xlane.f32.xlu0 %v10131
  %v10133 = vpop.xlane.xlu0 %10132
  %v10134 = vsel %vm71, %v10084, 0.0
  %10135 = vadd.xlane.f32.xlu0 %v10134
  %v10136 = vpop.xlane.xlu0 %10135
  %v10137 = vmul.f32 %v10091, %v120
  %v10138 = vmul.f32 %v10094, %v120
  %v10139 = vmul.f32 %v10097, %v120
  %v10140 = vmul.f32 %v10100, %v120
  %v10141 = vmul.f32 %v10103, %v120
  %v10142 = vmul.f32 %v10106, %v120
  %v10143 = vmul.f32 %v10109, %v120
  %v10144 = vmul.f32 %v10112, %v120
  %v10145 = vmul.f32 %v10115, %v120
  %v10146 = vmul.f32 %v10118, %v120
  %v10147 = vmul.f32 %v10121, %v120
  %v10148 = vmul.f32 %v10124, %v120
  %v10149 = vmul.f32 %v10127, %v120
  %v10150 = vmul.f32 %v10130, %v120
  %v10151 = vmul.f32 %v10133, %v120
  %v10152 = vmul.f32 %v10136, %v120
  %v10153 = vsub.f32 %v10069, %v10137
  %v10154 = vsub.f32 %v10070, %v10138
  %v10155 = vsub.f32 %v10071, %v10139
  %v10156 = vsub.f32 %v10072, %v10140
  %v10157 = vsub.f32 %v10073, %v10141
  %v10158 = vsub.f32 %v10074, %v10142
  %v10159 = vsub.f32 %v10075, %v10143
  %v10160 = vsub.f32 %v10076, %v10144
  %v10161 = vsub.f32 %v10077, %v10145
  %v10162 = vsub.f32 %v10078, %v10146
  %v10163 = vsub.f32 %v10079, %v10147
  %v10164 = vsub.f32 %v10080, %v10148
  %v10165 = vsub.f32 %v10081, %v10149
  %v10166 = vsub.f32 %v10082, %v10150
  %v10167 = vsub.f32 %v10083, %v10151
  %v10168 = vsub.f32 %v10084, %v10152
  %v10169 = vmul.f32 %v10153, %v10153
  %v10170 = vmul.f32 %v10154, %v10154
  %v10171 = vmul.f32 %v10155, %v10155
  %v10172 = vmul.f32 %v10156, %v10156
  %v10173 = vmul.f32 %v10157, %v10157
  %v10174 = vmul.f32 %v10158, %v10158
  %v10175 = vmul.f32 %v10159, %v10159
  %v10176 = vmul.f32 %v10160, %v10160
  %v10177 = vmul.f32 %v10161, %v10161
  %v10178 = vmul.f32 %v10162, %v10162
  %v10179 = vmul.f32 %v10163, %v10163
  %v10180 = vmul.f32 %v10164, %v10164
  %v10181 = vmul.f32 %v10165, %v10165
  %v10182 = vmul.f32 %v10166, %v10166
  %v10183 = vmul.f32 %v10167, %v10167
  %v10184 = vmul.f32 %v10168, %v10168
  %v10185 = vsel %vm71, %v10169, 0.0
  %10186 = vadd.xlane.f32.xlu0 %v10185
  %v10187 = vpop.xlane.xlu0 %10186
  %v10188 = vsel %vm71, %v10170, 0.0
  %10189 = vadd.xlane.f32.xlu0 %v10188
  %v10190 = vpop.xlane.xlu0 %10189
  %v10191 = vsel %vm71, %v10171, 0.0
  %10192 = vadd.xlane.f32.xlu0 %v10191
  %v10193 = vpop.xlane.xlu0 %10192
  %v10194 = vsel %vm71, %v10172, 0.0
  %10195 = vadd.xlane.f32.xlu0 %v10194
  %v10196 = vpop.xlane.xlu0 %10195
  %v10197 = vsel %vm71, %v10173, 0.0
  %10198 = vadd.xlane.f32.xlu0 %v10197
  %v10199 = vpop.xlane.xlu0 %10198
  %v10200 = vsel %vm71, %v10174, 0.0
  %10201 = vadd.xlane.f32.xlu0 %v10200
  %v10202 = vpop.xlane.xlu0 %10201
  %v10203 = vsel %vm71, %v10175, 0.0
  %10204 = vadd.xlane.f32.xlu0 %v10203
  %v10205 = vpop.xlane.xlu0 %10204
  %v10206 = vsel %vm71, %v10176, 0.0
  %10207 = vadd.xlane.f32.xlu0 %v10206
  %v10208 = vpop.xlane.xlu0 %10207
  %v10209 = vsel %vm71, %v10177, 0.0
  %10210 = vadd.xlane.f32.xlu0 %v10209
  %v10211 = vpop.xlane.xlu0 %10210
  %v10212 = vsel %vm71, %v10178, 0.0
  %10213 = vadd.xlane.f32.xlu0 %v10212
  %v10214 = vpop.xlane.xlu0 %10213
  %v10215 = vsel %vm71, %v10179, 0.0
  %10216 = vadd.xlane.f32.xlu0 %v10215
  %v10217 = vpop.xlane.xlu0 %10216
  %v10218 = vsel %vm71, %v10180, 0.0
  %10219 = vadd.xlane.f32.xlu0 %v10218
  %v10220 = vpop.xlane.xlu0 %10219
  %v10221 = vsel %vm71, %v10181, 0.0
  %10222 = vadd.xlane.f32.xlu0 %v10221
  %v10223 = vpop.xlane.xlu0 %10222
  %v10224 = vsel %vm71, %v10182, 0.0
  %10225 = vadd.xlane.f32.xlu0 %v10224
  %v10226 = vpop.xlane.xlu0 %10225
  %v10227 = vsel %vm71, %v10183, 0.0
  %10228 = vadd.xlane.f32.xlu0 %v10227
  %v10229 = vpop.xlane.xlu0 %10228
  %v10230 = vsel %vm71, %v10184, 0.0
  %10231 = vadd.xlane.f32.xlu0 %v10230
  %v10232 = vpop.xlane.xlu0 %10231
  %v10233 = vmul.f32 %v10187, %v120
  %v10234 = vmul.f32 %v10190, %v120
  %v10235 = vmul.f32 %v10193, %v120
  %v10236 = vmul.f32 %v10196, %v120
  %v10237 = vmul.f32 %v10199, %v120
  %v10238 = vmul.f32 %v10202, %v120
  %v10239 = vmul.f32 %v10205, %v120
  %v10240 = vmul.f32 %v10208, %v120
  %v10241 = vmul.f32 %v10211, %v120
  %v10242 = vmul.f32 %v10214, %v120
  %v10243 = vmul.f32 %v10217, %v120
  %v10244 = vmul.f32 %v10220, %v120
  %v10245 = vmul.f32 %v10223, %v120
  %v10246 = vmul.f32 %v10226, %v120
  %v10247 = vmul.f32 %v10229, %v120
  %v10248 = vmul.f32 %v10232, %v120
  %v10249 = vadd.f32 %v10233, 1e-05
  %v10250 = vadd.f32 %v10234, 1e-05
  %v10251 = vadd.f32 %v10235, 1e-05
  %v10252 = vadd.f32 %v10236, 1e-05
  %v10253 = vadd.f32 %v10237, 1e-05
  %v10254 = vadd.f32 %v10238, 1e-05
  %v10255 = vadd.f32 %v10239, 1e-05
  %v10256 = vadd.f32 %v10240, 1e-05
  %v10257 = vadd.f32 %v10241, 1e-05
  %v10258 = vadd.f32 %v10242, 1e-05
  %v10259 = vadd.f32 %v10243, 1e-05
  %v10260 = vadd.f32 %v10244, 1e-05
  %v10261 = vadd.f32 %v10245, 1e-05
  %v10262 = vadd.f32 %v10246, 1e-05
  %v10263 = vadd.f32 %v10247, 1e-05
  %v10264 = vadd.f32 %v10248, 1e-05
  %v10265 = vrsqrt.pop %v10249
  %v10266 = vrsqrt.pop %v10250
  %v10267 = vrsqrt.pop %v10251
  %v10268 = vrsqrt.pop %v10252
  %v10269 = vrsqrt.pop %v10253
  %v10270 = vrsqrt.pop %v10254
  %v10271 = vrsqrt.pop %v10255
  %v10272 = vrsqrt.pop %v10256
  %v10273 = vrsqrt.pop %v10257
  %v10274 = vrsqrt.pop %v10258
  %v10275 = vrsqrt.pop %v10259
  %v10276 = vrsqrt.pop %v10260
  %v10277 = vrsqrt.pop %v10261
  %v10278 = vrsqrt.pop %v10262
  %v10279 = vrsqrt.pop %v10263
  %v10280 = vrsqrt.pop %v10264
  %v10281 = vmul.f32 %v10153, %v10265
  %v10282 = vmul.f32 %v10154, %v10266
  %v10283 = vmul.f32 %v10155, %v10267
  %v10284 = vmul.f32 %v10156, %v10268
  %v10285 = vmul.f32 %v10157, %v10269
  %v10286 = vmul.f32 %v10158, %v10270
  %v10287 = vmul.f32 %v10159, %v10271
  %v10288 = vmul.f32 %v10160, %v10272
  %v10289 = vmul.f32 %v10161, %v10273
  %v10290 = vmul.f32 %v10162, %v10274
  %v10291 = vmul.f32 %v10163, %v10275
  %v10292 = vmul.f32 %v10164, %v10276
  %v10293 = vmul.f32 %v10165, %v10277
  %v10294 = vmul.f32 %v10166, %v10278
  %v10295 = vmul.f32 %v10167, %v10279
  %v10296 = vmul.f32 %v10168, %v10280
  %v10298 = vlaneseq
  %v10299 = vshrl.u32 %v10298, 7
  %v10300 = vsub.s32 0, %v10299
  %v10301 = vrot.slane %v10086, %v10300
  %v10303 = vmul.f32 %v10281, %v10301
  %v10304 = vmul.f32 %v10282, %v10301
  %v10305 = vmul.f32 %v10283, %v10301
  %v10306 = vmul.f32 %v10284, %v10301
  %v10307 = vmul.f32 %v10285, %v10301
  %v10308 = vmul.f32 %v10286, %v10301
  %v10309 = vmul.f32 %v10287, %v10301
  %v10310 = vmul.f32 %v10288, %v10301
  %v10311 = vmul.f32 %v10289, %v10301
  %v10312 = vmul.f32 %v10290, %v10301
  %v10313 = vmul.f32 %v10291, %v10301
  %v10314 = vmul.f32 %v10292, %v10301
  %v10315 = vmul.f32 %v10293, %v10301
  %v10316 = vmul.f32 %v10294, %v10301
  %v10317 = vmul.f32 %v10295, %v10301
  %v10318 = vmul.f32 %v10296, %v10301
  %v10320 = vlaneseq
  %v10321 = vshrl.u32 %v10320, 7
  %v10322 = vsub.s32 0, %v10321
  %v10323 = vrot.slane %v10088, %v10322
  %v10325 = vadd.f32 %v10303, %v10323
  %v10326 = vadd.f32 %v10304, %v10323
  %v10327 = vadd.f32 %v10305, %v10323
  %v10328 = vadd.f32 %v10306, %v10323
  %v10329 = vadd.f32 %v10307, %v10323
  %v10330 = vadd.f32 %v10308, %v10323
  %v10331 = vadd.f32 %v10309, %v10323
  %v10332 = vadd.f32 %v10310, %v10323
  %v10333 = vadd.f32 %v10311, %v10323
  %v10334 = vadd.f32 %v10312, %v10323
  %v10335 = vadd.f32 %v10313, %v10323
  %v10336 = vadd.f32 %v10314, %v10323
  %v10337 = vadd.f32 %v10315, %v10323
  %v10338 = vadd.f32 %v10316, %v10323
  %v10339 = vadd.f32 %v10317, %v10323
  %v10340 = vadd.f32 %v10318, %v10323
  %s10341 = scalar_lea.vmem %s12, 32
  %v10342 = vld [vmem:[%s10341] sm:$0xff]
  %v10343 = vld [vmem:[%s10341 + $0x8] sm:$0xff]
  %v10344 = vld [vmem:[%s10341 + $0x10] sm:$0xff]
  %v10345 = vld [vmem:[%s10341 + $0x18] sm:$0xff]
  %s10346 = scalar_lea.vmem %s13, 1
  %v10347 = vld [vmem:[%s10346] sm:$0x1]
  %v10349 = vlaneseq
  %v10350 = vshrl.u32 %v10349, 7
  %v10351 = vsub.s32 0, %v10350
  %v10352 = vrot.slane %v10347, %v10351
  %v10355 = vsel %vm71, %v10325, 0
  %v10358 = vsel %vm71, %v10326, 0
  %v10361 = vsel %vm71, %v10327, 0
  %v10364 = vsel %vm71, %v10328, 0
  %v10367 = vsel %vm71, %v10329, 0
  %v10370 = vsel %vm71, %v10330, 0
  %v10373 = vsel %vm71, %v10331, 0
  %v10376 = vsel %vm71, %v10332, 0
  %v10379 = vsel %vm71, %v10333, 0
  %v10382 = vsel %vm71, %v10334, 0
  %v10385 = vsel %vm71, %v10335, 0
  %v10388 = vsel %vm71, %v10336, 0
  %v10391 = vsel %vm71, %v10337, 0
  %v10394 = vsel %vm71, %v10338, 0
  %v10397 = vsel %vm71, %v10339, 0
  %v10400 = vsel %vm71, %v10340, 0
  %10402 = vmatprep.subr.mxu0 0.0
  %10403 = vmatpush1.msra.mxu0 0.0
  %10404 = vmatprep.subr.mxu0 0.0
  %10405 = vmatpush1.msra.mxu0 0.0
  %10406 = vmatprep.subr.mxu0 0.0
  %10407 = vmatpush1.msra.mxu0 0.0
  %10408 = vmatprep.subr.mxu0 0.0
  %10409 = vmatpush1.msra.mxu0 0.0
  %10410 = vmatprep.subr.mxu0 0.0
  %10411 = vmatpush1.msra.mxu0 0.0
  %10412 = vmatprep.subr.mxu0 0.0
  %10413 = vmatpush1.msra.mxu0 0.0
  %10414 = vmatprep.subr.mxu0 0.0
  %10415 = vmatpush1.msra.mxu0 0.0
  %10416 = vmatprep.subr.mxu0 0.0
  %10417 = vmatpush1.msra.mxu0 0.0
  %10418 = vmatprep.subr.mxu0 0.0
  %10419 = vmatpush1.msra.mxu0 0.0
  %10420 = vmatprep.subr.mxu0 0.0
  %10421 = vmatpush1.msra.mxu0 0.0
  %10422 = vmatprep.subr.mxu0 0.0
  %10423 = vmatpush1.msra.mxu0 0.0
  %10424 = vmatprep.subr.mxu0 0.0
  %10425 = vmatpush1.msra.mxu0 0.0
  %10426 = vmatprep.subr.mxu0 0.0
  %10427 = vmatpush1.msra.mxu0 %v10345
  %10428 = vmatprep.subr.mxu0 0.0
  %10429 = vmatpush1.msra.mxu0 %v10344
  %10430 = vmatprep.subr.mxu0 0.0
  %10431 = vmatpush1.msra.mxu0 %v10343
  %10432 = vmatprep.subr.mxu0 0.0
  %10433 = vmatpush1.msra.mxu0 %v10342
  %10434 = vmatprep.subr.mxu0 0.0
  %10435 = vmatpush2.msra.mxu0 0.0
  %10436 = vmatprep.subr.mxu0 0.0
  %10437 = vmatpush2.msra.mxu0 0.0
  %10438 = vmatprep.subr.mxu0 0.0
  %10439 = vmatpush2.msra.mxu0 0.0
  %10440 = vmatprep.subr.mxu0 0.0
  %10441 = vmatpush2.msra.mxu0 0.0
  %10442 = vmatprep.subr.mxu0 0.0
  %10443 = vmatpush2.msra.mxu0 0.0
  %10444 = vmatprep.subr.mxu0 0.0
  %10445 = vmatpush2.msra.mxu0 0.0
  %10446 = vmatprep.subr.mxu0 0.0
  %10447 = vmatpush2.msra.mxu0 0.0
  %10448 = vmatprep.subr.mxu0 0.0
  %10449 = vmatpush2.msra.mxu0 0.0
  %10450 = vmatprep.subr.mxu0 0.0
  %10451 = vmatpush2.msra.mxu0 0.0
  %10452 = vmatprep.subr.mxu0 0.0
  %10453 = vmatpush2.msra.mxu0 0.0
  %10454 = vmatprep.subr.mxu0 0.0
  %10455 = vmatpush2.msra.mxu0 0.0
  %10456 = vmatprep.subr.mxu0 0.0
  %10457 = vmatpush2.msra.mxu0 0.0
  %10458 = vmatprep.subr.mxu0 0.0
  %10459 = vmatpush2.msra.mxu0 0.0
  %10460 = vmatprep.subr.mxu0 0.0
  %10461 = vmatpush2.msra.mxu0 0.0
  %10462 = vmatprep.subr.mxu0 0.0
  %10463 = vmatpush2.msra.mxu0 0.0
  %10464 = vmatprep.subr.mxu0 0.0
  %10465 = vmatpush2.msra.mxu0 0.0
  %10466 = vmatprep.mubr.f32.mxu0 0.0
  %10467 = vmatmul.mubr.f32.gmra.mxu0 %v10355
  %v10468 = vpop.f32.mrf.mxu0
  %v10469 = vadd.f32 %v10352, %v10468
  %v10470 = vpop.f32.mrf.mxu0
  %10471 = vmatprep.mubr.f32.mxu0 0.0
  %10472 = vmatmul.mubr.f32.gmra.mxu0 %v10358
  %v10473 = vpop.f32.mrf.mxu0
  %v10474 = vadd.f32 %v10352, %v10473
  %v10475 = vpop.f32.mrf.mxu0
  %10476 = vmatprep.mubr.f32.mxu0 0.0
  %10477 = vmatmul.mubr.f32.gmra.mxu0 %v10361
  %v10478 = vpop.f32.mrf.mxu0
  %v10479 = vadd.f32 %v10352, %v10478
  %v10480 = vpop.f32.mrf.mxu0
  %10481 = vmatprep.mubr.f32.mxu0 0.0
  %10482 = vmatmul.mubr.f32.gmra.mxu0 %v10364
  %v10483 = vpop.f32.mrf.mxu0
  %v10484 = vadd.f32 %v10352, %v10483
  %v10485 = vpop.f32.mrf.mxu0
  %10486 = vmatprep.mubr.f32.mxu0 0.0
  %10487 = vmatmul.mubr.f32.gmra.mxu0 %v10367
  %v10488 = vpop.f32.mrf.mxu0
  %v10489 = vadd.f32 %v10352, %v10488
  %v10490 = vpop.f32.mrf.mxu0
  %10491 = vmatprep.mubr.f32.mxu0 0.0
  %10492 = vmatmul.mubr.f32.gmra.mxu0 %v10370
  %v10493 = vpop.f32.mrf.mxu0
  %v10494 = vadd.f32 %v10352, %v10493
  %v10495 = vpop.f32.mrf.mxu0
  %10496 = vmatprep.mubr.f32.mxu0 0.0
  %10497 = vmatmul.mubr.f32.gmra.mxu0 %v10373
  %v10498 = vpop.f32.mrf.mxu0
  %v10499 = vadd.f32 %v10352, %v10498
  %v10500 = vpop.f32.mrf.mxu0
  %10501 = vmatprep.mubr.f32.mxu0 0.0
  %10502 = vmatmul.mubr.f32.gmra.mxu0 %v10376
  %v10503 = vpop.f32.mrf.mxu0
  %v10504 = vadd.f32 %v10352, %v10503
  %v10505 = vpop.f32.mrf.mxu0
  %10506 = vmatprep.mubr.f32.mxu0 0.0
  %10507 = vmatmul.mubr.f32.gmra.mxu0 %v10379
  %v10508 = vpop.f32.mrf.mxu0
  %v10509 = vadd.f32 %v10352, %v10508
  %v10510 = vpop.f32.mrf.mxu0
  %10511 = vmatprep.mubr.f32.mxu0 0.0
  %10512 = vmatmul.mubr.f32.gmra.mxu0 %v10382
  %v10513 = vpop.f32.mrf.mxu0
  %v10514 = vadd.f32 %v10352, %v10513
  %v10515 = vpop.f32.mrf.mxu0
  %10516 = vmatprep.mubr.f32.mxu0 0.0
  %10517 = vmatmul.mubr.f32.gmra.mxu0 %v10385
  %v10518 = vpop.f32.mrf.mxu0
  %v10519 = vadd.f32 %v10352, %v10518
  %v10520 = vpop.f32.mrf.mxu0
  %10521 = vmatprep.mubr.f32.mxu0 0.0
  %10522 = vmatmul.mubr.f32.gmra.mxu0 %v10388
  %v10523 = vpop.f32.mrf.mxu0
  %v10524 = vadd.f32 %v10352, %v10523
  %v10525 = vpop.f32.mrf.mxu0
  %10526 = vmatprep.mubr.f32.mxu0 0.0
  %10527 = vmatmul.mubr.f32.gmra.mxu0 %v10391
  %v10528 = vpop.f32.mrf.mxu0
  %v10529 = vadd.f32 %v10352, %v10528
  %v10530 = vpop.f32.mrf.mxu0
  %10531 = vmatprep.mubr.f32.mxu0 0.0
  %10532 = vmatmul.mubr.f32.gmra.mxu0 %v10394
  %v10533 = vpop.f32.mrf.mxu0
  %v10534 = vadd.f32 %v10352, %v10533
  %v10535 = vpop.f32.mrf.mxu0
  %10536 = vmatprep.mubr.f32.mxu0 0.0
  %10537 = vmatmul.mubr.f32.gmra.mxu0 %v10397
  %v10538 = vpop.f32.mrf.mxu0
  %v10539 = vadd.f32 %v10352, %v10538
  %v10540 = vpop.f32.mrf.mxu0
  %10541 = vmatprep.mubr.f32.mxu0 0.0
  %10542 = vmatmul.mubr.f32.gmra.mxu0 %v10400
  %v10543 = vpop.f32.mrf.mxu0
  %v10544 = vadd.f32 %v10352, %v10543
  %v10545 = vpop.f32.mrf.mxu0
  %10546 = vdwg.mxu0
  %v10547 = vmul.f32 %v10469, 0.5
  %v10548 = vmul.f32 %v10474, 0.5
  %v10549 = vmul.f32 %v10479, 0.5
  %v10550 = vmul.f32 %v10484, 0.5
  %v10551 = vmul.f32 %v10489, 0.5
  %v10552 = vmul.f32 %v10494, 0.5
  %v10553 = vmul.f32 %v10499, 0.5
  %v10554 = vmul.f32 %v10504, 0.5
  %v10555 = vmul.f32 %v10509, 0.5
  %v10556 = vmul.f32 %v10514, 0.5
  %v10557 = vmul.f32 %v10519, 0.5
  %v10558 = vmul.f32 %v10524, 0.5
  %v10559 = vmul.f32 %v10529, 0.5
  %v10560 = vmul.f32 %v10534, 0.5
  %v10561 = vmul.f32 %v10539, 0.5
  %v10562 = vmul.f32 %v10544, 0.5
  %v10563 = vmul.f32 %v10469, 0.70710677
  %v10564 = vmul.f32 %v10474, 0.70710677
  %v10565 = vmul.f32 %v10479, 0.70710677
  %v10566 = vmul.f32 %v10484, 0.70710677
  %v10567 = vmul.f32 %v10489, 0.70710677
  %v10568 = vmul.f32 %v10494, 0.70710677
  %v10569 = vmul.f32 %v10499, 0.70710677
  %v10570 = vmul.f32 %v10504, 0.70710677
  %v10571 = vmul.f32 %v10509, 0.70710677
  %v10572 = vmul.f32 %v10514, 0.70710677
  %v10573 = vmul.f32 %v10519, 0.70710677
  %v10574 = vmul.f32 %v10524, 0.70710677
  %v10575 = vmul.f32 %v10529, 0.70710677
  %v10576 = vmul.f32 %v10534, 0.70710677
  %v10577 = vmul.f32 %v10539, 0.70710677
  %v10578 = vmul.f32 %v10544, 0.70710677
  %v10579 = vand.u32 2147483647, %v10563
  %v10580 = vand.u32 2147483647, %v10564
  %v10581 = vand.u32 2147483647, %v10565
  %v10582 = vand.u32 2147483647, %v10566
  %v10583 = vand.u32 2147483647, %v10567
  %v10584 = vand.u32 2147483647, %v10568
  %v10585 = vand.u32 2147483647, %v10569
  %v10586 = vand.u32 2147483647, %v10570
  %v10587 = vand.u32 2147483647, %v10571
  %v10588 = vand.u32 2147483647, %v10572
  %v10589 = vand.u32 2147483647, %v10573
  %v10590 = vand.u32 2147483647, %v10574
  %v10591 = vand.u32 2147483647, %v10575
  %v10592 = vand.u32 2147483647, %v10576
  %v10593 = vand.u32 2147483647, %v10577
  %v10594 = vand.u32 2147483647, %v10578
  %v10595 = vmul.f32 %v10579, 0.3275911
  %v10596 = vmul.f32 %v10580, 0.3275911
  %v10597 = vmul.f32 %v10581, 0.3275911
  %v10598 = vmul.f32 %v10582, 0.3275911
  %v10599 = vmul.f32 %v10583, 0.3275911
  %v10600 = vmul.f32 %v10584, 0.3275911
  %v10601 = vmul.f32 %v10585, 0.3275911
  %v10602 = vmul.f32 %v10586, 0.3275911
  %v10603 = vmul.f32 %v10587, 0.3275911
  %v10604 = vmul.f32 %v10588, 0.3275911
  %v10605 = vmul.f32 %v10589, 0.3275911
  %v10606 = vmul.f32 %v10590, 0.3275911
  %v10607 = vmul.f32 %v10591, 0.3275911
  %v10608 = vmul.f32 %v10592, 0.3275911
  %v10609 = vmul.f32 %v10593, 0.3275911
  %v10610 = vmul.f32 %v10594, 0.3275911
  %v10611 = vadd.f32 %v10595, 1.0
  %v10612 = vadd.f32 %v10596, 1.0
  %v10613 = vadd.f32 %v10597, 1.0
  %v10614 = vadd.f32 %v10598, 1.0
  %v10615 = vadd.f32 %v10599, 1.0
  %v10616 = vadd.f32 %v10600, 1.0
  %v10617 = vadd.f32 %v10601, 1.0
  %v10618 = vadd.f32 %v10602, 1.0
  %v10619 = vadd.f32 %v10603, 1.0
  %v10620 = vadd.f32 %v10604, 1.0
  %v10621 = vadd.f32 %v10605, 1.0
  %v10622 = vadd.f32 %v10606, 1.0
  %v10623 = vadd.f32 %v10607, 1.0
  %v10624 = vadd.f32 %v10608, 1.0
  %v10625 = vadd.f32 %v10609, 1.0
  %v10626 = vadd.f32 %v10610, 1.0
  %v10627 = vrcp.pop %v10611
  %v10628 = vmul.f32 1.0, %v10627
  %v10629 = vrcp.pop %v10612
  %v10630 = vmul.f32 1.0, %v10629
  %v10631 = vrcp.pop %v10613
  %v10632 = vmul.f32 1.0, %v10631
  %v10633 = vrcp.pop %v10614
  %v10634 = vmul.f32 1.0, %v10633
  %v10635 = vrcp.pop %v10615
  %v10636 = vmul.f32 1.0, %v10635
  %v10637 = vrcp.pop %v10616
  %v10638 = vmul.f32 1.0, %v10637
  %v10639 = vrcp.pop %v10617
  %v10640 = vmul.f32 1.0, %v10639
  %v10641 = vrcp.pop %v10618
  %v10642 = vmul.f32 1.0, %v10641
  %v10643 = vrcp.pop %v10619
  %v10644 = vmul.f32 1.0, %v10643
  %v10645 = vrcp.pop %v10620
  %v10646 = vmul.f32 1.0, %v10645
  %v10647 = vrcp.pop %v10621
  %v10648 = vmul.f32 1.0, %v10647
  %v10649 = vrcp.pop %v10622
  %v10650 = vmul.f32 1.0, %v10649
  %v10651 = vrcp.pop %v10623
  %v10652 = vmul.f32 1.0, %v10651
  %v10653 = vrcp.pop %v10624
  %v10654 = vmul.f32 1.0, %v10653
  %v10655 = vrcp.pop %v10625
  %v10656 = vmul.f32 1.0, %v10655
  %v10657 = vrcp.pop %v10626
  %v10658 = vmul.f32 1.0, %v10657
  %v10659 = vmul.f32 %v10628, 1.0614054
  %v10660 = vmul.f32 %v10630, 1.0614054
  %v10661 = vmul.f32 %v10632, 1.0614054
  %v10662 = vmul.f32 %v10634, 1.0614054
  %v10663 = vmul.f32 %v10636, 1.0614054
  %v10664 = vmul.f32 %v10638, 1.0614054
  %v10665 = vmul.f32 %v10640, 1.0614054
  %v10666 = vmul.f32 %v10642, 1.0614054
  %v10667 = vmul.f32 %v10644, 1.0614054
  %v10668 = vmul.f32 %v10646, 1.0614054
  %v10669 = vmul.f32 %v10648, 1.0614054
  %v10670 = vmul.f32 %v10650, 1.0614054
  %v10671 = vmul.f32 %v10652, 1.0614054
  %v10672 = vmul.f32 %v10654, 1.0614054
  %v10673 = vmul.f32 %v10656, 1.0614054
  %v10674 = vmul.f32 %v10658, 1.0614054
  %v10675 = vadd.f32 %v10659, -1.4531521
  %v10676 = vadd.f32 %v10660, -1.4531521
  %v10677 = vadd.f32 %v10661, -1.4531521
  %v10678 = vadd.f32 %v10662, -1.4531521
  %v10679 = vadd.f32 %v10663, -1.4531521
  %v10680 = vadd.f32 %v10664, -1.4531521
  %v10681 = vadd.f32 %v10665, -1.4531521
  %v10682 = vadd.f32 %v10666, -1.4531521
  %v10683 = vadd.f32 %v10667, -1.4531521
  %v10684 = vadd.f32 %v10668, -1.4531521
  %v10685 = vadd.f32 %v10669, -1.4531521
  %v10686 = vadd.f32 %v10670, -1.4531521
  %v10687 = vadd.f32 %v10671, -1.4531521
  %v10688 = vadd.f32 %v10672, -1.4531521
  %v10689 = vadd.f32 %v10673, -1.4531521
  %v10690 = vadd.f32 %v10674, -1.4531521
  %v10691 = vmul.f32 %v10675, %v10628
  %v10692 = vmul.f32 %v10676, %v10630
  %v10693 = vmul.f32 %v10677, %v10632
  %v10694 = vmul.f32 %v10678, %v10634
  %v10695 = vmul.f32 %v10679, %v10636
  %v10696 = vmul.f32 %v10680, %v10638
  %v10697 = vmul.f32 %v10681, %v10640
  %v10698 = vmul.f32 %v10682, %v10642
  %v10699 = vmul.f32 %v10683, %v10644
  %v10700 = vmul.f32 %v10684, %v10646
  %v10701 = vmul.f32 %v10685, %v10648
  %v10702 = vmul.f32 %v10686, %v10650
  %v10703 = vmul.f32 %v10687, %v10652
  %v10704 = vmul.f32 %v10688, %v10654
  %v10705 = vmul.f32 %v10689, %v10656
  %v10706 = vmul.f32 %v10690, %v10658
  %v10707 = vadd.f32 %v10691, 1.4214138
  %v10708 = vadd.f32 %v10692, 1.4214138
  %v10709 = vadd.f32 %v10693, 1.4214138
  %v10710 = vadd.f32 %v10694, 1.4214138
  %v10711 = vadd.f32 %v10695, 1.4214138
  %v10712 = vadd.f32 %v10696, 1.4214138
  %v10713 = vadd.f32 %v10697, 1.4214138
  %v10714 = vadd.f32 %v10698, 1.4214138
  %v10715 = vadd.f32 %v10699, 1.4214138
  %v10716 = vadd.f32 %v10700, 1.4214138
  %v10717 = vadd.f32 %v10701, 1.4214138
  %v10718 = vadd.f32 %v10702, 1.4214138
  %v10719 = vadd.f32 %v10703, 1.4214138
  %v10720 = vadd.f32 %v10704, 1.4214138
  %v10721 = vadd.f32 %v10705, 1.4214138
  %v10722 = vadd.f32 %v10706, 1.4214138
  %v10723 = vmul.f32 %v10707, %v10628
  %v10724 = vmul.f32 %v10708, %v10630
  %v10725 = vmul.f32 %v10709, %v10632
  %v10726 = vmul.f32 %v10710, %v10634
  %v10727 = vmul.f32 %v10711, %v10636
  %v10728 = vmul.f32 %v10712, %v10638
  %v10729 = vmul.f32 %v10713, %v10640
  %v10730 = vmul.f32 %v10714, %v10642
  %v10731 = vmul.f32 %v10715, %v10644
  %v10732 = vmul.f32 %v10716, %v10646
  %v10733 = vmul.f32 %v10717, %v10648
  %v10734 = vmul.f32 %v10718, %v10650
  %v10735 = vmul.f32 %v10719, %v10652
  %v10736 = vmul.f32 %v10720, %v10654
  %v10737 = vmul.f32 %v10721, %v10656
  %v10738 = vmul.f32 %v10722, %v10658
  %v10739 = vadd.f32 %v10723, -0.28449672
  %v10740 = vadd.f32 %v10724, -0.28449672
  %v10741 = vadd.f32 %v10725, -0.28449672
  %v10742 = vadd.f32 %v10726, -0.28449672
  %v10743 = vadd.f32 %v10727, -0.28449672
  %v10744 = vadd.f32 %v10728, -0.28449672
  %v10745 = vadd.f32 %v10729, -0.28449672
  %v10746 = vadd.f32 %v10730, -0.28449672
  %v10747 = vadd.f32 %v10731, -0.28449672
  %v10748 = vadd.f32 %v10732, -0.28449672
  %v10749 = vadd.f32 %v10733, -0.28449672
  %v10750 = vadd.f32 %v10734, -0.28449672
  %v10751 = vadd.f32 %v10735, -0.28449672
  %v10752 = vadd.f32 %v10736, -0.28449672
  %v10753 = vadd.f32 %v10737, -0.28449672
  %v10754 = vadd.f32 %v10738, -0.28449672
  %v10755 = vmul.f32 %v10739, %v10628
  %v10756 = vmul.f32 %v10740, %v10630
  %v10757 = vmul.f32 %v10741, %v10632
  %v10758 = vmul.f32 %v10742, %v10634
  %v10759 = vmul.f32 %v10743, %v10636
  %v10760 = vmul.f32 %v10744, %v10638
  %v10761 = vmul.f32 %v10745, %v10640
  %v10762 = vmul.f32 %v10746, %v10642
  %v10763 = vmul.f32 %v10747, %v10644
  %v10764 = vmul.f32 %v10748, %v10646
  %v10765 = vmul.f32 %v10749, %v10648
  %v10766 = vmul.f32 %v10750, %v10650
  %v10767 = vmul.f32 %v10751, %v10652
  %v10768 = vmul.f32 %v10752, %v10654
  %v10769 = vmul.f32 %v10753, %v10656
  %v10770 = vmul.f32 %v10754, %v10658
  %v10771 = vadd.f32 %v10755, 0.2548296
  %v10772 = vadd.f32 %v10756, 0.2548296
  %v10773 = vadd.f32 %v10757, 0.2548296
  %v10774 = vadd.f32 %v10758, 0.2548296
  %v10775 = vadd.f32 %v10759, 0.2548296
  %v10776 = vadd.f32 %v10760, 0.2548296
  %v10777 = vadd.f32 %v10761, 0.2548296
  %v10778 = vadd.f32 %v10762, 0.2548296
  %v10779 = vadd.f32 %v10763, 0.2548296
  %v10780 = vadd.f32 %v10764, 0.2548296
  %v10781 = vadd.f32 %v10765, 0.2548296
  %v10782 = vadd.f32 %v10766, 0.2548296
  %v10783 = vadd.f32 %v10767, 0.2548296
  %v10784 = vadd.f32 %v10768, 0.2548296
  %v10785 = vadd.f32 %v10769, 0.2548296
  %v10786 = vadd.f32 %v10770, 0.2548296
  %v10787 = vmul.f32 %v10771, %v10628
  %v10788 = vmul.f32 %v10772, %v10630
  %v10789 = vmul.f32 %v10773, %v10632
  %v10790 = vmul.f32 %v10774, %v10634
  %v10791 = vmul.f32 %v10775, %v10636
  %v10792 = vmul.f32 %v10776, %v10638
  %v10793 = vmul.f32 %v10777, %v10640
  %v10794 = vmul.f32 %v10778, %v10642
  %v10795 = vmul.f32 %v10779, %v10644
  %v10796 = vmul.f32 %v10780, %v10646
  %v10797 = vmul.f32 %v10781, %v10648
  %v10798 = vmul.f32 %v10782, %v10650
  %v10799 = vmul.f32 %v10783, %v10652
  %v10800 = vmul.f32 %v10784, %v10654
  %v10801 = vmul.f32 %v10785, %v10656
  %v10802 = vmul.f32 %v10786, %v10658
  %v10803 = vsub.f32 0.0, %v10579
  %v10804 = vsub.f32 0.0, %v10580
  %v10805 = vsub.f32 0.0, %v10581
  %v10806 = vsub.f32 0.0, %v10582
  %v10807 = vsub.f32 0.0, %v10583
  %v10808 = vsub.f32 0.0, %v10584
  %v10809 = vsub.f32 0.0, %v10585
  %v10810 = vsub.f32 0.0, %v10586
  %v10811 = vsub.f32 0.0, %v10587
  %v10812 = vsub.f32 0.0, %v10588
  %v10813 = vsub.f32 0.0, %v10589
  %v10814 = vsub.f32 0.0, %v10590
  %v10815 = vsub.f32 0.0, %v10591
  %v10816 = vsub.f32 0.0, %v10592
  %v10817 = vsub.f32 0.0, %v10593
  %v10818 = vsub.f32 0.0, %v10594
  %v10819 = vmul.f32 %v10803, %v10579
  %v10820 = vmul.f32 %v10804, %v10580
  %v10821 = vmul.f32 %v10805, %v10581
  %v10822 = vmul.f32 %v10806, %v10582
  %v10823 = vmul.f32 %v10807, %v10583
  %v10824 = vmul.f32 %v10808, %v10584
  %v10825 = vmul.f32 %v10809, %v10585
  %v10826 = vmul.f32 %v10810, %v10586
  %v10827 = vmul.f32 %v10811, %v10587
  %v10828 = vmul.f32 %v10812, %v10588
  %v10829 = vmul.f32 %v10813, %v10589
  %v10830 = vmul.f32 %v10814, %v10590
  %v10831 = vmul.f32 %v10815, %v10591
  %v10832 = vmul.f32 %v10816, %v10592
  %v10833 = vmul.f32 %v10817, %v10593
  %v10834 = vmul.f32 %v10818, %v10594
  %v10835 = vmul.f32 %v10819, 1.442695
  %v10836 = vpow.pop %v10835
  %v10837 = vmul.f32 %v10820, 1.442695
  %v10838 = vpow.pop %v10837
  %v10839 = vmul.f32 %v10821, 1.442695
  %v10840 = vpow.pop %v10839
  %v10841 = vmul.f32 %v10822, 1.442695
  %v10842 = vpow.pop %v10841
  %v10843 = vmul.f32 %v10823, 1.442695
  %v10844 = vpow.pop %v10843
  %v10845 = vmul.f32 %v10824, 1.442695
  %v10846 = vpow.pop %v10845
  %v10847 = vmul.f32 %v10825, 1.442695
  %v10848 = vpow.pop %v10847
  %v10849 = vmul.f32 %v10826, 1.442695
  %v10850 = vpow.pop %v10849
  %v10851 = vmul.f32 %v10827, 1.442695
  %v10852 = vpow.pop %v10851
  %v10853 = vmul.f32 %v10828, 1.442695
  %v10854 = vpow.pop %v10853
  %v10855 = vmul.f32 %v10829, 1.442695
  %v10856 = vpow.pop %v10855
  %v10857 = vmul.f32 %v10830, 1.442695
  %v10858 = vpow.pop %v10857
  %v10859 = vmul.f32 %v10831, 1.442695
  %v10860 = vpow.pop %v10859
  %v10861 = vmul.f32 %v10832, 1.442695
  %v10862 = vpow.pop %v10861
  %v10863 = vmul.f32 %v10833, 1.442695
  %v10864 = vpow.pop %v10863
  %v10865 = vmul.f32 %v10834, 1.442695
  %v10866 = vpow.pop %v10865
  %v10867 = vmul.f32 %v10787, %v10836
  %v10868 = vmul.f32 %v10788, %v10838
  %v10869 = vmul.f32 %v10789, %v10840
  %v10870 = vmul.f32 %v10790, %v10842
  %v10871 = vmul.f32 %v10791, %v10844
  %v10872 = vmul.f32 %v10792, %v10846
  %v10873 = vmul.f32 %v10793, %v10848
  %v10874 = vmul.f32 %v10794, %v10850
  %v10875 = vmul.f32 %v10795, %v10852
  %v10876 = vmul.f32 %v10796, %v10854
  %v10877 = vmul.f32 %v10797, %v10856
  %v10878 = vmul.f32 %v10798, %v10858
  %v10879 = vmul.f32 %v10799, %v10860
  %v10880 = vmul.f32 %v10800, %v10862
  %v10881 = vmul.f32 %v10801, %v10864
  %v10882 = vmul.f32 %v10802, %v10866
  %v10883 = vsub.f32 1.0, %v10867
  %v10884 = vsub.f32 1.0, %v10868
  %v10885 = vsub.f32 1.0, %v10869
  %v10886 = vsub.f32 1.0, %v10870
  %v10887 = vsub.f32 1.0, %v10871
  %v10888 = vsub.f32 1.0, %v10872
  %v10889 = vsub.f32 1.0, %v10873
  %v10890 = vsub.f32 1.0, %v10874
  %v10891 = vsub.f32 1.0, %v10875
  %v10892 = vsub.f32 1.0, %v10876
  %v10893 = vsub.f32 1.0, %v10877
  %v10894 = vsub.f32 1.0, %v10878
  %v10895 = vsub.f32 1.0, %v10879
  %v10896 = vsub.f32 1.0, %v10880
  %v10897 = vsub.f32 1.0, %v10881
  %v10898 = vsub.f32 1.0, %v10882
  %vm10899 = vcmp.ge.f32.partialorder %v10563, 0.0
  %vm10900 = vcmp.ge.f32.partialorder %v10564, 0.0
  %vm10901 = vcmp.ge.f32.partialorder %v10565, 0.0
  %vm10902 = vcmp.ge.f32.partialorder %v10566, 0.0
  %vm10903 = vcmp.ge.f32.partialorder %v10567, 0.0
  %vm10904 = vcmp.ge.f32.partialorder %v10568, 0.0
  %vm10905 = vcmp.ge.f32.partialorder %v10569, 0.0
  %vm10906 = vcmp.ge.f32.partialorder %v10570, 0.0
  %vm10907 = vcmp.ge.f32.partialorder %v10571, 0.0
  %vm10908 = vcmp.ge.f32.partialorder %v10572, 0.0
  %vm10909 = vcmp.ge.f32.partialorder %v10573, 0.0
  %vm10910 = vcmp.ge.f32.partialorder %v10574, 0.0
  %vm10911 = vcmp.ge.f32.partialorder %v10575, 0.0
  %vm10912 = vcmp.ge.f32.partialorder %v10576, 0.0
  %vm10913 = vcmp.ge.f32.partialorder %v10577, 0.0
  %vm10914 = vcmp.ge.f32.partialorder %v10578, 0.0
  %v10915 = vsub.f32 0.0, %v10883
  %v10916 = vsub.f32 0.0, %v10884
  %v10917 = vsub.f32 0.0, %v10885
  %v10918 = vsub.f32 0.0, %v10886
  %v10919 = vsub.f32 0.0, %v10887
  %v10920 = vsub.f32 0.0, %v10888
  %v10921 = vsub.f32 0.0, %v10889
  %v10922 = vsub.f32 0.0, %v10890
  %v10923 = vsub.f32 0.0, %v10891
  %v10924 = vsub.f32 0.0, %v10892
  %v10925 = vsub.f32 0.0, %v10893
  %v10926 = vsub.f32 0.0, %v10894
  %v10927 = vsub.f32 0.0, %v10895
  %v10928 = vsub.f32 0.0, %v10896
  %v10929 = vsub.f32 0.0, %v10897
  %v10930 = vsub.f32 0.0, %v10898
  %v10931 = vsel %vm10899, %v10883, %v10915
  %v10932 = vsel %vm10900, %v10884, %v10916
  %v10933 = vsel %vm10901, %v10885, %v10917
  %v10934 = vsel %vm10902, %v10886, %v10918
  %v10935 = vsel %vm10903, %v10887, %v10919
  %v10936 = vsel %vm10904, %v10888, %v10920
  %v10937 = vsel %vm10905, %v10889, %v10921
  %v10938 = vsel %vm10906, %v10890, %v10922
  %v10939 = vsel %vm10907, %v10891, %v10923
  %v10940 = vsel %vm10908, %v10892, %v10924
  %v10941 = vsel %vm10909, %v10893, %v10925
  %v10942 = vsel %vm10910, %v10894, %v10926
  %v10943 = vsel %vm10911, %v10895, %v10927
  %v10944 = vsel %vm10912, %v10896, %v10928
  %v10945 = vsel %vm10913, %v10897, %v10929
  %v10946 = vsel %vm10914, %v10898, %v10930
  %v10947 = vadd.f32 %v10931, 1.0
  %v10948 = vadd.f32 %v10932, 1.0
  %v10949 = vadd.f32 %v10933, 1.0
  %v10950 = vadd.f32 %v10934, 1.0
  %v10951 = vadd.f32 %v10935, 1.0
  %v10952 = vadd.f32 %v10936, 1.0
  %v10953 = vadd.f32 %v10937, 1.0
  %v10954 = vadd.f32 %v10938, 1.0
  %v10955 = vadd.f32 %v10939, 1.0
  %v10956 = vadd.f32 %v10940, 1.0
  %v10957 = vadd.f32 %v10941, 1.0
  %v10958 = vadd.f32 %v10942, 1.0
  %v10959 = vadd.f32 %v10943, 1.0
  %v10960 = vadd.f32 %v10944, 1.0
  %v10961 = vadd.f32 %v10945, 1.0
  %v10962 = vadd.f32 %v10946, 1.0
  %v10963 = vmul.f32 %v10547, %v10947
  %v10964 = vmul.f32 %v10548, %v10948
  %v10965 = vmul.f32 %v10549, %v10949
  %v10966 = vmul.f32 %v10550, %v10950
  %v10967 = vmul.f32 %v10551, %v10951
  %v10968 = vmul.f32 %v10552, %v10952
  %v10969 = vmul.f32 %v10553, %v10953
  %v10970 = vmul.f32 %v10554, %v10954
  %v10971 = vmul.f32 %v10555, %v10955
  %v10972 = vmul.f32 %v10556, %v10956
  %v10973 = vmul.f32 %v10557, %v10957
  %v10974 = vmul.f32 %v10558, %v10958
  %v10975 = vmul.f32 %v10559, %v10959
  %v10976 = vmul.f32 %v10560, %v10960
  %v10977 = vmul.f32 %v10561, %v10961
  %v10978 = vmul.f32 %v10562, %v10962
  %s10979 = scalar_lea.vmem %s14, 128
  %v10980 = vld [vmem:[%s10979] sm:$0xff]
  %v10981 = vld [vmem:[%s10979 + $0x8] sm:$0xff]
  %v10982 = vld [vmem:[%s10979 + $0x10] sm:$0xff]
  %v10983 = vld [vmem:[%s10979 + $0x18] sm:$0xff]
  %v10984 = vld [vmem:[%s10979 + $0x20] sm:$0xff]
  %v10985 = vld [vmem:[%s10979 + $0x28] sm:$0xff]
  %v10986 = vld [vmem:[%s10979 + $0x30] sm:$0xff]
  %v10987 = vld [vmem:[%s10979 + $0x38] sm:$0xff]
  %v10988 = vld [vmem:[%s10979 + $0x40] sm:$0xff]
  %v10989 = vld [vmem:[%s10979 + $0x48] sm:$0xff]
  %v10990 = vld [vmem:[%s10979 + $0x50] sm:$0xff]
  %v10991 = vld [vmem:[%s10979 + $0x58] sm:$0xff]
  %v10992 = vld [vmem:[%s10979 + $0x60] sm:$0xff]
  %v10993 = vld [vmem:[%s10979 + $0x68] sm:$0xff]
  %v10994 = vld [vmem:[%s10979 + $0x70] sm:$0xff]
  %v10995 = vld [vmem:[%s10979 + $0x78] sm:$0xff]
  %10996 = vmatprep.subr.mxu0 0.0
  %10997 = vmatpush1.msra.mxu0 %v10995
  %10998 = vmatprep.subr.mxu0 0.0
  %10999 = vmatpush1.msra.mxu0 %v10994
  %11000 = vmatprep.subr.mxu0 0.0
  %11001 = vmatpush1.msra.mxu0 %v10993
  %11002 = vmatprep.subr.mxu0 0.0
  %11003 = vmatpush1.msra.mxu0 %v10992
  %11004 = vmatprep.subr.mxu0 0.0
  %11005 = vmatpush1.msra.mxu0 %v10991
  %11006 = vmatprep.subr.mxu0 0.0
  %11007 = vmatpush1.msra.mxu0 %v10990
  %11008 = vmatprep.subr.mxu0 0.0
  %11009 = vmatpush1.msra.mxu0 %v10989
  %11010 = vmatprep.subr.mxu0 0.0
  %11011 = vmatpush1.msra.mxu0 %v10988
  %11012 = vmatprep.subr.mxu0 0.0
  %11013 = vmatpush1.msra.mxu0 %v10987
  %11014 = vmatprep.subr.mxu0 0.0
  %11015 = vmatpush1.msra.mxu0 %v10986
  %11016 = vmatprep.subr.mxu0 0.0
  %11017 = vmatpush1.msra.mxu0 %v10985
  %11018 = vmatprep.subr.mxu0 0.0
  %11019 = vmatpush1.msra.mxu0 %v10984
  %11020 = vmatprep.subr.mxu0 0.0
  %11021 = vmatpush1.msra.mxu0 %v10983
  %11022 = vmatprep.subr.mxu0 0.0
  %11023 = vmatpush1.msra.mxu0 %v10982
  %11024 = vmatprep.subr.mxu0 0.0
  %11025 = vmatpush1.msra.mxu0 %v10981
  %11026 = vmatprep.subr.mxu0 0.0
  %11027 = vmatpush1.msra.mxu0 %v10980
  %11028 = vmatprep.subr.mxu0 0.0
  %11029 = vmatpush2.msra.mxu0 0.0
  %11030 = vmatprep.subr.mxu0 0.0
  %11031 = vmatpush2.msra.mxu0 0.0
  %11032 = vmatprep.subr.mxu0 0.0
  %11033 = vmatpush2.msra.mxu0 0.0
  %11034 = vmatprep.subr.mxu0 0.0
  %11035 = vmatpush2.msra.mxu0 0.0
  %11036 = vmatprep.subr.mxu0 0.0
  %11037 = vmatpush2.msra.mxu0 0.0
  %11038 = vmatprep.subr.mxu0 0.0
  %11039 = vmatpush2.msra.mxu0 0.0
  %11040 = vmatprep.subr.mxu0 0.0
  %11041 = vmatpush2.msra.mxu0 0.0
  %11042 = vmatprep.subr.mxu0 0.0
  %11043 = vmatpush2.msra.mxu0 0.0
  %11044 = vmatprep.subr.mxu0 0.0
  %11045 = vmatpush2.msra.mxu0 0.0
  %11046 = vmatprep.subr.mxu0 0.0
  %11047 = vmatpush2.msra.mxu0 0.0
  %11048 = vmatprep.subr.mxu0 0.0
  %11049 = vmatpush2.msra.mxu0 0.0
  %11050 = vmatprep.subr.mxu0 0.0
  %11051 = vmatpush2.msra.mxu0 0.0
  %11052 = vmatprep.subr.mxu0 0.0
  %11053 = vmatpush2.msra.mxu0 0.0
  %11054 = vmatprep.subr.mxu0 0.0
  %11055 = vmatpush2.msra.mxu0 0.0
  %11056 = vmatprep.subr.mxu0 0.0
  %11057 = vmatpush2.msra.mxu0 0.0
  %11058 = vmatprep.subr.mxu0 0.0
  %11059 = vmatpush2.msra.mxu0 0.0
  %11060 = vmatprep.mubr.f32.mxu0 0.0
  %11061 = vmatmul.mubr.f32.gmra.mxu0 %v10963
  %v11062 = vpop.f32.mrf.mxu0
  %v11063 = vadd.f32 0.0, %v11062
  %v11064 = vpop.f32.mrf.mxu0
  %11065 = vmatprep.mubr.f32.mxu0 0.0
  %11066 = vmatmul.mubr.f32.gmra.mxu0 %v10964
  %v11067 = vpop.f32.mrf.mxu0
  %v11068 = vadd.f32 0.0, %v11067
  %v11069 = vpop.f32.mrf.mxu0
  %11070 = vmatprep.mubr.f32.mxu0 0.0
  %11071 = vmatmul.mubr.f32.gmra.mxu0 %v10965
  %v11072 = vpop.f32.mrf.mxu0
  %v11073 = vadd.f32 0.0, %v11072
  %v11074 = vpop.f32.mrf.mxu0
  %11075 = vmatprep.mubr.f32.mxu0 0.0
  %11076 = vmatmul.mubr.f32.gmra.mxu0 %v10966
  %v11077 = vpop.f32.mrf.mxu0
  %v11078 = vadd.f32 0.0, %v11077
  %v11079 = vpop.f32.mrf.mxu0
  %11080 = vmatprep.mubr.f32.mxu0 0.0
  %11081 = vmatmul.mubr.f32.gmra.mxu0 %v10967
  %v11082 = vpop.f32.mrf.mxu0
  %v11083 = vadd.f32 0.0, %v11082
  %v11084 = vpop.f32.mrf.mxu0
  %11085 = vmatprep.mubr.f32.mxu0 0.0
  %11086 = vmatmul.mubr.f32.gmra.mxu0 %v10968
  %v11087 = vpop.f32.mrf.mxu0
  %v11088 = vadd.f32 0.0, %v11087
  %v11089 = vpop.f32.mrf.mxu0
  %11090 = vmatprep.mubr.f32.mxu0 0.0
  %11091 = vmatmul.mubr.f32.gmra.mxu0 %v10969
  %v11092 = vpop.f32.mrf.mxu0
  %v11093 = vadd.f32 0.0, %v11092
  %v11094 = vpop.f32.mrf.mxu0
  %11095 = vmatprep.mubr.f32.mxu0 0.0
  %11096 = vmatmul.mubr.f32.gmra.mxu0 %v10970
  %v11097 = vpop.f32.mrf.mxu0
  %v11098 = vadd.f32 0.0, %v11097
  %v11099 = vpop.f32.mrf.mxu0
  %11100 = vmatprep.mubr.f32.mxu0 0.0
  %11101 = vmatmul.mubr.f32.gmra.mxu0 %v10971
  %v11102 = vpop.f32.mrf.mxu0
  %v11103 = vadd.f32 0.0, %v11102
  %v11104 = vpop.f32.mrf.mxu0
  %11105 = vmatprep.mubr.f32.mxu0 0.0
  %11106 = vmatmul.mubr.f32.gmra.mxu0 %v10972
  %v11107 = vpop.f32.mrf.mxu0
  %v11108 = vadd.f32 0.0, %v11107
  %v11109 = vpop.f32.mrf.mxu0
  %11110 = vmatprep.mubr.f32.mxu0 0.0
  %11111 = vmatmul.mubr.f32.gmra.mxu0 %v10973
  %v11112 = vpop.f32.mrf.mxu0
  %v11113 = vadd.f32 0.0, %v11112
  %v11114 = vpop.f32.mrf.mxu0
  %11115 = vmatprep.mubr.f32.mxu0 0.0
  %11116 = vmatmul.mubr.f32.gmra.mxu0 %v10974
  %v11117 = vpop.f32.mrf.mxu0
  %v11118 = vadd.f32 0.0, %v11117
  %v11119 = vpop.f32.mrf.mxu0
  %11120 = vmatprep.mubr.f32.mxu0 0.0
  %11121 = vmatmul.mubr.f32.gmra.mxu0 %v10975
  %v11122 = vpop.f32.mrf.mxu0
  %v11123 = vadd.f32 0.0, %v11122
  %v11124 = vpop.f32.mrf.mxu0
  %11125 = vmatprep.mubr.f32.mxu0 0.0
  %11126 = vmatmul.mubr.f32.gmra.mxu0 %v10976
  %v11127 = vpop.f32.mrf.mxu0
  %v11128 = vadd.f32 0.0, %v11127
  %v11129 = vpop.f32.mrf.mxu0
  %11130 = vmatprep.mubr.f32.mxu0 0.0
  %11131 = vmatmul.mubr.f32.gmra.mxu0 %v10977
  %v11132 = vpop.f32.mrf.mxu0
  %v11133 = vadd.f32 0.0, %v11132
  %v11134 = vpop.f32.mrf.mxu0
  %11135 = vmatprep.mubr.f32.mxu0 0.0
  %11136 = vmatmul.mubr.f32.gmra.mxu0 %v10978
  %v11137 = vpop.f32.mrf.mxu0
  %v11138 = vadd.f32 0.0, %v11137
  %v11139 = vpop.f32.mrf.mxu0
  %11140 = vdwg.mxu0
  %v11141 = vadd.f32 %v10069, %v11063
  %v11142 = vadd.f32 %v10070, %v11068
  %v11143 = vadd.f32 %v10071, %v11073
  %v11144 = vadd.f32 %v10072, %v11078
  %v11145 = vadd.f32 %v10073, %v11083
  %v11146 = vadd.f32 %v10074, %v11088
  %v11147 = vadd.f32 %v10075, %v11093
  %v11148 = vadd.f32 %v10076, %v11098
  %v11149 = vadd.f32 %v10077, %v11103
  %v11150 = vadd.f32 %v10078, %v11108
  %v11151 = vadd.f32 %v10079, %v11113
  %v11152 = vadd.f32 %v10080, %v11118
  %v11153 = vadd.f32 %v10081, %v11123
  %v11154 = vadd.f32 %v10082, %v11128
  %v11155 = vadd.f32 %v10083, %v11133
  %v11156 = vadd.f32 %v10084, %v11138
  %s11157 = scalar_lea.vmem %s15, 1
  %v11158 = vld [vmem:[%s11157] sm:$0x1]
  %v11160 = vlaneseq
  %v11161 = vshrl.u32 %v11160, 7
  %v11162 = vsub.s32 0, %v11161
  %v11163 = vrot.slane %v11158, %v11162
  %v11165 = vadd.f32 %v11141, %v11163
  %v11166 = vadd.f32 %v11142, %v11163
  %v11167 = vadd.f32 %v11143, %v11163
  %v11168 = vadd.f32 %v11144, %v11163
  %v11169 = vadd.f32 %v11145, %v11163
  %v11170 = vadd.f32 %v11146, %v11163
  %v11171 = vadd.f32 %v11147, %v11163
  %v11172 = vadd.f32 %v11148, %v11163
  %v11173 = vadd.f32 %v11149, %v11163
  %v11174 = vadd.f32 %v11150, %v11163
  %v11175 = vadd.f32 %v11151, %v11163
  %v11176 = vadd.f32 %v11152, %v11163
  %v11177 = vadd.f32 %v11153, %v11163
  %v11178 = vadd.f32 %v11154, %v11163
  %v11179 = vadd.f32 %v11155, %v11163
  %v11180 = vadd.f32 %v11156, %v11163
  %11181 = vst.msk [vmem:[%s16] sm:$0xff] %vm71, %v11165
  %11182 = vst.msk [vmem:[%s16 + $0x8] sm:$0xff] %vm71, %v11166
  %11183 = vst.msk [vmem:[%s16 + $0x10] sm:$0xff] %vm71, %v11167
  %11184 = vst.msk [vmem:[%s16 + $0x18] sm:$0xff] %vm71, %v11168
  %11185 = vst.msk [vmem:[%s16 + $0x20] sm:$0xff] %vm71, %v11169
  %11186 = vst.msk [vmem:[%s16 + $0x28] sm:$0xff] %vm71, %v11170
  %11187 = vst.msk [vmem:[%s16 + $0x30] sm:$0xff] %vm71, %v11171
  %11188 = vst.msk [vmem:[%s16 + $0x38] sm:$0xff] %vm71, %v11172
  %11189 = vst.msk [vmem:[%s16 + $0x40] sm:$0xff] %vm71, %v11173
  %11190 = vst.msk [vmem:[%s16 + $0x48] sm:$0xff] %vm71, %v11174
  %11191 = vst.msk [vmem:[%s16 + $0x50] sm:$0xff] %vm71, %v11175
  %11192 = vst.msk [vmem:[%s16 + $0x58] sm:$0xff] %vm71, %v11176
  %11193 = vst.msk [vmem:[%s16 + $0x60] sm:$0xff] %vm71, %v11177
  %11194 = vst.msk [vmem:[%s16 + $0x68] sm:$0xff] %vm71, %v11178
  %11195 = vst.msk [vmem:[%s16 + $0x70] sm:$0xff] %vm71, %v11179
  %11196 = vst.msk [vmem:[%s16 + $0x78] sm:$0xff] %vm71, %v11180
  // Predicated region
  $region66: #{_lambda_.1} parent=0 // pred_check
    _
  $region67: #{_lambda_.1} parent=0 // pred_check_branch
    %11198 = sbr.rel (0) target = $region69
  $region68: #{_lambda_.1} parent=0 // pred_region
    _
  $region69: #{_lambda_.1} parent=0 // pred_fallthru
    _
  // Predicated region
  $region70: #{_lambda_.1} parent=0 // pred_check
    _
  $region71: #{_lambda_.1} parent=0 // pred_check_branch
    %11200 = sbr.rel (0) target = $region73
  $region72: #{_lambda_.1} parent=0 // pred_region
    _
  $region73: #{_lambda_.1} parent=0 // pred_fallthru
    _

</llo_original>
